<compile_context>
chip_gen: v7x
topology: tpu7x:2x2x1
jax: 0.10.0
libtpu: 0.0.40
codegen_flags: <defaults>
</compile_context>

<pallas_src>
import numpy as np
import jax
import jax.numpy as jnp
from jax.experimental import pallas as pl
from jax.experimental.pallas import tpu as pltpu


HEAD_PAD = 128  # lane padding for z_mean / z_lsig (lane-dense output stores)


# ----------------------------------------------------------------------------
# deterministic synthetic parameters
# ----------------------------------------------------------------------------
class KeyGen:
    def __init__(self, key):
        self.key = key
        self.i = 0

    def __call__(self):
        k = jax.random.fold_in(self.key, self.i)
        self.i += 1
        return k


def bn_affine(kg, C, eps=1e-5):
    """Deterministic BatchNorm (inference) -> per-channel scale/shift."""
    gamma = 1.0 + 0.1 * jax.random.normal(kg(), (C,), jnp.float32)
    beta = 0.1 * jax.random.normal(kg(), (C,), jnp.float32)
    rmean = 0.1 * jax.random.normal(kg(), (C,), jnp.float32)
    rvar = 0.5 + jax.nn.softplus(jax.random.normal(kg(), (C,), jnp.float32))
    scale = gamma / jnp.sqrt(rvar + eps)
    shift = beta - rmean * scale
    return scale, shift


def make_params(key, *, C, V, K, kt, n_z):
    kg = KeyGen(key)

    def nrm(shape, scale=1.0):
        return scale * jax.random.normal(kg(), shape, jnp.float32)

    params = {}

    # synthetic Graph adjacency (K, V, V), row-normalized
    A = jax.random.uniform(kg(), (K, V, V), jnp.float32, 0.0, 1.0)
    A = A / jnp.sum(A, axis=-1, keepdims=True)
    params['A'] = A

    # data_bn over V*C channels (channel index = v*C + c, per PyTorch view)
    dbs, dbh = bn_affine(kg, V * C)
    params['db_scale'], params['db_shift'] = dbs, dbh

    chans = [(C, 64), (64, 32), (32, 32)]
    layers = []
    for ci, co in chans:
        lp = {'C_in': ci, 'C_out': co}
        lp['wg'] = nrm((K, co, ci), 0.5 / np.sqrt(ci))
        lp['bg'] = nrm((K, co), 0.1)
        lp['s1'], lp['h1'] = bn_affine(kg, co)
        lp['wt'] = nrm((kt, co, co), 1.0 / np.sqrt(co * kt))
        lp['bt'] = nrm((co,), 0.1)
        lp['s2'], lp['h2'] = bn_affine(kg, co)
        if ci != co:                            # residual = Conv2d 1x1 + BN
            lp['wr'] = nrm((co, ci), 1.0 / np.sqrt(ci))
            lp['br'] = nrm((co,), 0.1)
            lp['sr'], lp['hr'] = bn_affine(kg, co)
        layers.append(lp)
    params['layers'] = layers

    params['wm'] = nrm((32, n_z), 1.0 / np.sqrt(32))
    params['bm'] = nrm((1, n_z), 0.1)
    params['wl'] = nrm((32, n_z), 1.0 / np.sqrt(32))
    params['bl'] = nrm((1, n_z), 0.1)
    return params


# ----------------------------------------------------------------------------
# host-side operand prep: fold BN affines into weights, build batched constants
# ----------------------------------------------------------------------------
def build_operands(params, cfg, *, N, M, T, V):
    K, kt, n_z = cfg['K'], cfg['kt'], cfg['n_z']
    assert n_z <= HEAD_PAD
    NM, TV = N * M, T * V
    L = NM * TV
    pad = (kt - 1) // 2

    A = np.asarray(params['A'], np.float32)                       # (K, V, V)
    eye = np.eye(NM * T, dtype=np.float32)
    abig = np.stack([np.kron(eye, A[k]) for k in range(K)])       # (K, L, L), block-diag

    # temporal validity masks: mask[dt, 0, nm*TV + t*V + v] = 1 iff 0 <= t + dt - pad < T
    t_of_lane = (np.arange(L) % TV) // V
    tmask = np.stack([
        (((t_of_lane + dt - pad) >= 0) & ((t_of_lane + dt - pad) < T))
        .astype(np.float32).reshape(1, L)
        for dt in range(kt)])                                     # (kt, 1, L)

    # data_bn affine tiled to the (C_in, L) layout (BN1d channel index = v*C + c)
    C_in = params['layers'][0]['C_in']
    dbs = np.asarray(params['db_scale'], np.float32).reshape(V, C_in).T   # (C, V)
    dbh = np.asarray(params['db_shift'], np.float32).reshape(V, C_in).T
    dbs_full = np.tile(dbs, (1, NM * T))                          # (C_in, L)
    dbh_full = np.tile(dbh, (1, NM * T))

    colsum = A.sum(axis=1)                                        # (K, V): sum_v A[k,v,w]
    colsum_tiled = np.tile(colsum, (1, NM * T))                   # (K, L)

    ops = []
    for li, lp in enumerate(params['layers']):
        ci, co = lp['C_in'], lp['C_out']
        wg = np.asarray(lp['wg'], np.float32)                     # (K, co, ci)
        bg = np.asarray(lp['bg'], np.float32)                     # (K, co)
        s1 = np.asarray(lp['s1'], np.float32)
        h1 = np.asarray(lp['h1'], np.float32)
        wt = np.asarray(lp['wt'], np.float32)                     # (kt, co, co)
        bt = np.asarray(lp['bt'], np.float32)
        s2 = np.asarray(lp['s2'], np.float32)
        h2 = np.asarray(lp['h2'], np.float32)

        wg_f = s1[None, :, None] * wg                             # fold BN1 scale
        # gcn bias after A-contraction: sum_k b_k (x) colsum(A_k), then BN1 affine
        bg_eff = s1[:, None] * np.einsum('ko,kl->ol', bg, colsum_tiled) + h1[:, None]
        # temporal conv weights, BN2 folded, flattened for one stacked matmul
        wt_f = np.concatenate([s2[:, None] * wt[dt] for dt in range(kt)], axis=1)
        bt_eff = (s2 * bt + h2)[:, None]

        if li == 0:
            ops += [wg_f, bg_eff, wt_f, bt_eff]                   # layer 1 keeps (K, co, ci)
        else:
            ops += [wg_f.reshape(K * co, ci), bg_eff, wt_f, bt_eff]

        if 'wr' in lp:                                            # conv + BN residual branch
            sr = np.asarray(lp['sr'], np.float32)
            hr = np.asarray(lp['hr'], np.float32)
            wr_eff = sr[:, None] * np.asarray(lp['wr'], np.float32)
            br_eff = (sr * np.asarray(lp['br'], np.float32) + hr)[:, None]
            ops += [wr_eff, br_eff]

    # head weights, lane-padded and concatenated for one lane-dense output store
    def pad_lanes(a):
        out = np.zeros((a.shape[0], HEAD_PAD), np.float32)
        out[:, :a.shape[1]] = a
        return out

    wh = np.concatenate([pad_lanes(np.asarray(params['wm'], np.float32)),
                         pad_lanes(np.asarray(params['wl'], np.float32))], axis=1)
    bh = np.concatenate([pad_lanes(np.asarray(params['bm'], np.float32)),
                         pad_lanes(np.asarray(params['bl'], np.float32))], axis=1)

    consts = [dbs_full, dbh_full, abig, tmask]
    return [jnp.asarray(a) for a in consts + ops + [wh, bh]]


# ----------------------------------------------------------------------------
# fused encoder kernel
# ----------------------------------------------------------------------------
def make_encoder_kernel(*, K, kt, T, V, N, M):
    TV = T * V
    L = N * M * TV
    pad = (kt - 1) // 2
    f32 = jnp.float32

    def tshift_stack(h, tmask_ref):
        # h: (C, L).  Block dt of the result holds h shifted in time by (dt - pad)
        # inside each per-sample (T, V) lane block, zeroed where t + dt - pad is
        # out of range (the mask also kills cross-sample wrap from the global roll).
        parts = []
        for dt in range(kt):
            s = dt - pad
            if s == 0:
                parts.append(h)
            else:
                shifted = pltpu.roll(h, (-s * V) % L, 1)          # jnp.roll semantics
                parts.append(shifted * tmask_ref[dt])
        return jnp.concatenate(parts, axis=0)                     # (kt*C, L)

    def graph_conv(y, abig_ref, bg_ref, co):
        # y: (K*co, L) stacked per-k 1x1-conv outputs; contract each block with A_k.
        z = bg_ref[...]
        for k in range(K):
            z = z + jnp.dot(y[k * co:(k + 1) * co], abig_ref[k],
                            preferred_element_type=f32)
        return jnp.maximum(z, 0.0)                                # BN1 folded; ReLU

    def kernel(x_ref, dbs_ref, dbh_ref, abig_ref, tmask_ref,
               wg1_ref, bg1_ref, wt1_ref, bt1_ref, wr1_ref, br1_ref,
               wg2_ref, bg2_ref, wt2_ref, bt2_ref, wr2_ref, br2_ref,
               wg3_ref, bg3_ref, wt3_ref, bt3_ref,
               wh_ref, bh_ref, out_ref):
        # data_bn (inference affine)
        x = x_ref[...] * dbs_ref[...] + dbh_ref[...]              # (C_in, L)

        # ---- layer 1 (C_in -> 64): graph conv reordered as W_k @ (x @ A_k) ----
        z = bg1_ref[...]
        for k in range(K):
            xa = jnp.dot(x, abig_ref[k], preferred_element_type=f32)        # (C_in, L)
            z = z + jnp.dot(wg1_ref[k], xa, preferred_element_type=f32)     # (64, L)
        h = jnp.maximum(z, 0.0)
        out = jnp.dot(wt1_ref[...], tshift_stack(h, tmask_ref),
                      preferred_element_type=f32) + bt1_ref[...]
        res = jnp.dot(wr1_ref[...], x, preferred_element_type=f32) + br1_ref[...]
        a1 = jnp.maximum(out + res, 0.0)                          # (64, L)

        # ---- layer 2 (64 -> 32) ----
        co2 = bt2_ref.shape[0]
        y = jnp.dot(wg2_ref[...], a1, preferred_element_type=f32)            # (K*32, L)
        h = graph_conv(y, abig_ref, bg2_ref, co2)
        out = jnp.dot(wt2_ref[...], tshift_stack(h, tmask_ref),
                      preferred_element_type=f32) + bt2_ref[...]
        res = jnp.dot(wr2_ref[...], a1, preferred_element_type=f32) + br2_ref[...]
        a2 = jnp.maximum(out + res, 0.0)                          # (32, L)

        # ---- layer 3 (32 -> 32, identity residual) ----
        co3 = bt3_ref.shape[0]
        y = jnp.dot(wg3_ref[...], a2, preferred_element_type=f32)
        h = graph_conv(y, abig_ref, bg3_ref, co3)
        out = jnp.dot(wt3_ref[...], tshift_stack(h, tmask_ref),
                      preferred_element_type=f32) + bt3_ref[...]
        a3 = jnp.maximum(out + a2, 0.0)                           # (32, L)

        # ---- head: avg pool over (T, V), mean over M, z_mean / z_lsig (lane-padded) ----
        blk = M * TV
        for n in range(N):
            p = jnp.mean(a3[:, n * blk:(n + 1) * blk], axis=1, keepdims=True)   # (32, 1)
            row = jnp.sum(p * wh_ref[...], axis=0, keepdims=True) + bh_ref[...]  # (1, 256)
            out_ref[pl.ds(n, 1), :] = row

    return kernel


# ----------------------------------------------------------------------------
# full Encoder forward (single fused Pallas call)
# ----------------------------------------------------------------------------
def encoder_forward_pallas(x, l, params, cfg):
    N, _, T, V, M = x.shape
    K, kt, n_z = cfg['K'], cfg['kt'], cfg['n_z']
    L = N * M * T * V

    xcat = jnp.concatenate([x, l], axis=1)                        # (N, C, T, V, M)
    C = xcat.shape[1]
    # -> (C, N, M, T, V) -> (C, N*M*T*V): channels on sublanes, samples batched on lanes
    x2 = jnp.transpose(xcat, (1, 0, 4, 2, 3)).reshape(C, L)

    ops = build_operands(params, cfg, N=N, M=M, T=T, V=V)
    kernel = make_encoder_kernel(K=K, kt=kt, T=T, V=V, N=N, M=M)

    n_in = 1 + len(ops)
    out = pl.pallas_call(
        kernel,
        out_shape=jax.ShapeDtypeStruct((N, 2 * HEAD_PAD), jnp.float32),
        in_specs=[pl.BlockSpec(memory_space=pltpu.MemorySpace.VMEM)] * n_in,
        out_specs=pl.BlockSpec(memory_space=pltpu.MemorySpace.VMEM),
    )(x2, *ops)

    mean = out[:, :n_z]
    lsig = out[:, HEAD_PAD:HEAD_PAD + n_z]
    return mean, lsig


# ----------------------------------------------------------------------------
# pure-JAX reference (mirrors the PyTorch forward, for validation)
# ----------------------------------------------------------------------------
def encoder_forward_ref(x, l, params, cfg):
    xcat = jnp.concatenate([x, l], axis=1)
    N, C, T, V, M = xcat.shape
    A = params['A']
    K, kt = cfg['K'], cfg['kt']
    pad = (kt - 1) // 2
    hp_ = jnp.transpose(xcat, (0, 4, 3, 1, 2)).reshape(N * M, V * C, T)
    hp_ = hp_ * params['db_scale'][None, :, None] + params['db_shift'][None, :, None]
    h = hp_.reshape(N, M, V, C, T).transpose(0, 1, 3, 4, 2).reshape(N * M, C, T, V)
    for li, lp in enumerate(params['layers']):
        res_id = (li == 2)
        y = jnp.einsum('koc,nctv->nkotv', lp['wg'], h, precision='highest')
        y = y + lp['bg'][None, :, :, None, None]
        z = jnp.einsum('nkotv,kvw->notw', y, A, precision='highest')
        zz = jnp.maximum(lp['s1'][None, :, None, None] * z
                         + lp['h1'][None, :, None, None], 0.0)
        zp = jnp.pad(zz, ((0, 0), (0, 0), (pad, pad), (0, 0)))
        out = jnp.zeros_like(z)
        for dt in range(kt):
            out = out + jnp.einsum('oc,nctv->notv', lp['wt'][dt],
                                   zp[:, :, dt:dt + T, :], precision='highest')
        out = out + lp['bt'][None, :, None, None]
        out = lp['s2'][None, :, None, None] * out + lp['h2'][None, :, None, None]
        if res_id:
            res = h
        else:
            r = jnp.einsum('oc,nctv->notv', lp['wr'], h, precision='highest')
            r = r + lp['br'][None, :, None, None]
            res = lp['sr'][None, :, None, None] * r + lp['hr'][None, :, None, None]
        h = jnp.maximum(out + res, 0.0)
    pooled = h.mean(axis=(2, 3)).reshape(N, M, -1).mean(axis=1)
    mean = pooled @ params['wm'] + params['bm'][0]
    lsig = pooled @ params['wl'] + params['bl'][0]
    return mean, lsig


# ----------------------------------------------------------------------------
if __name__ == "__main__":
    N, M = 2, 2           # batch, persons per frame
    Cx, Cl = 3, 1         # x channels, label channels (concatenated -> C=4)
    T, V = 8, 16          # time steps, graph nodes (T*V = 128 lanes per sample)
    K, kt = 3, 5          # spatial kernel (A.shape[0]), temporal kernel size
    n_z = 8
    C = Cx + Cl

    key = jax.random.PRNGKey(0)
    kx, kl, kp = jax.random.split(key, 3)
    x = jax.random.normal(kx, (N, Cx, T, V, M), jnp.float32)
    l = jax.random.normal(kl, (N, Cl, T, V, M), jnp.float32)

    params = make_params(kp, C=C, V=V, K=K, kt=kt, n_z=n_z)
    cfg = {'K': K, 'kt': kt, 'n_z': n_z}

    mean, lsig = encoder_forward_pallas(x, l, params, cfg)
    jax.block_until_ready((mean, lsig))

    mean_ref, lsig_ref = encoder_forward_ref(x, l, params, cfg)
    assert mean.shape == (N, n_z) and lsig.shape == (N, n_z)
    np.testing.assert_allclose(np.asarray(mean), np.asarray(mean_ref), rtol=2e-2, atol=2e-2)
    np.testing.assert_allclose(np.asarray(lsig), np.asarray(lsig_ref), rtol=2e-2, atol=2e-2)

    print("KERNEL_OK")
</pallas_src>

<mosaic_0001>
module attributes {stable_mosaic.version = 11 : i64} {
  func.func @kernel(%arg0: memref<4x512xf32, #tpu.memory_space<vmem>>, %arg1: memref<4x512xf32, #tpu.memory_space<vmem>>, %arg2: memref<4x512xf32, #tpu.memory_space<vmem>>, %arg3: memref<3x512x512xf32, #tpu.memory_space<vmem>>, %arg4: memref<5x1x512xf32, #tpu.memory_space<vmem>>, %arg5: memref<3x64x4xf32, #tpu.memory_space<vmem>>, %arg6: memref<64x512xf32, #tpu.memory_space<vmem>>, %arg7: memref<64x320xf32, #tpu.memory_space<vmem>>, %arg8: memref<64x1xf32, #tpu.memory_space<vmem>>, %arg9: memref<64x4xf32, #tpu.memory_space<vmem>>, %arg10: memref<64x1xf32, #tpu.memory_space<vmem>>, %arg11: memref<96x64xf32, #tpu.memory_space<vmem>>, %arg12: memref<32x512xf32, #tpu.memory_space<vmem>>, %arg13: memref<32x160xf32, #tpu.memory_space<vmem>>, %arg14: memref<32x1xf32, #tpu.memory_space<vmem>>, %arg15: memref<32x64xf32, #tpu.memory_space<vmem>>, %arg16: memref<32x1xf32, #tpu.memory_space<vmem>>, %arg17: memref<96x32xf32, #tpu.memory_space<vmem>>, %arg18: memref<32x512xf32, #tpu.memory_space<vmem>>, %arg19: memref<32x160xf32, #tpu.memory_space<vmem>>, %arg20: memref<32x1xf32, #tpu.memory_space<vmem>>, %arg21: memref<32x256xf32, #tpu.memory_space<vmem>>, %arg22: memref<1x256xf32, #tpu.memory_space<vmem>>, %arg23: memref<2x256xf32, #tpu.memory_space<vmem>>) attributes {dimension_semantics = [], scalar_prefetch = 0 : i64, scratch_operands = 0 : i64, tpu.core_type = #tpu.core_type<tc>} {
    %c0 = arith.constant 0 : index
    %c0_0 = arith.constant 0 : index
    %0 = vector.load %arg0[%c0, %c0_0] : memref<4x512xf32, #tpu.memory_space<vmem>>, vector<4x512xf32>
    %c0_1 = arith.constant 0 : index
    %c0_2 = arith.constant 0 : index
    %1 = vector.load %arg1[%c0_1, %c0_2] : memref<4x512xf32, #tpu.memory_space<vmem>>, vector<4x512xf32>
    %2 = arith.mulf %0, %1 : vector<4x512xf32>
    %c0_3 = arith.constant 0 : index
    %c0_4 = arith.constant 0 : index
    %3 = vector.load %arg2[%c0_3, %c0_4] : memref<4x512xf32, #tpu.memory_space<vmem>>, vector<4x512xf32>
    %4 = arith.addf %2, %3 : vector<4x512xf32>
    %c0_5 = arith.constant 0 : index
    %c0_6 = arith.constant 0 : index
    %5 = vector.load %arg6[%c0_5, %c0_6] : memref<64x512xf32, #tpu.memory_space<vmem>>, vector<64x512xf32>
    %c0_7 = arith.constant 0 : index
    %c0_8 = arith.constant 0 : index
    %c0_9 = arith.constant 0 : index
    %6 = vector.load %arg3[%c0_7, %c0_8, %c0_9] : memref<3x512x512xf32, #tpu.memory_space<vmem>>, vector<1x512x512xf32>
    %7 = vector.shape_cast %6 : vector<1x512x512xf32> to vector<512x512xf32>
    %cst = arith.constant dense<0.000000e+00> : vector<4x512xf32>
    %8 = tpu.matmul %4, %7, %cst {dimension_numbers = #tpu.dot_dimension_numbers<[1], [0], [0], [1], [0, 0, 1, 1], [], []>} : vector<4x512xf32>, vector<512x512xf32>, vector<4x512xf32> -> vector<4x512xf32>
    %c0_10 = arith.constant 0 : index
    %c0_11 = arith.constant 0 : index
    %c0_12 = arith.constant 0 : index
    %9 = vector.load %arg5[%c0_10, %c0_11, %c0_12] : memref<3x64x4xf32, #tpu.memory_space<vmem>>, vector<1x64x4xf32>
    %10 = vector.shape_cast %9 : vector<1x64x4xf32> to vector<64x4xf32>
    %cst_13 = arith.constant dense<0.000000e+00> : vector<64x512xf32>
    %11 = tpu.matmul %10, %8, %cst_13 {dimension_numbers = #tpu.dot_dimension_numbers<[1], [0], [0], [1], [0, 0, 1, 1], [], []>} : vector<64x4xf32>, vector<4x512xf32>, vector<64x512xf32> -> vector<64x512xf32>
    %12 = arith.addf %5, %11 : vector<64x512xf32>
    %c1 = arith.constant 1 : index
    %c0_14 = arith.constant 0 : index
    %c0_15 = arith.constant 0 : index
    %13 = vector.load %arg3[%c1, %c0_14, %c0_15] : memref<3x512x512xf32, #tpu.memory_space<vmem>>, vector<1x512x512xf32>
    %14 = vector.shape_cast %13 : vector<1x512x512xf32> to vector<512x512xf32>
    %cst_16 = arith.constant dense<0.000000e+00> : vector<4x512xf32>
    %15 = tpu.matmul %4, %14, %cst_16 {dimension_numbers = #tpu.dot_dimension_numbers<[1], [0], [0], [1], [0, 0, 1, 1], [], []>} : vector<4x512xf32>, vector<512x512xf32>, vector<4x512xf32> -> vector<4x512xf32>
    %c1_17 = arith.constant 1 : index
    %c0_18 = arith.constant 0 : index
    %c0_19 = arith.constant 0 : index
    %16 = vector.load %arg5[%c1_17, %c0_18, %c0_19] : memref<3x64x4xf32, #tpu.memory_space<vmem>>, vector<1x64x4xf32>
    %17 = vector.shape_cast %16 : vector<1x64x4xf32> to vector<64x4xf32>
    %cst_20 = arith.constant dense<0.000000e+00> : vector<64x512xf32>
    %18 = tpu.matmul %17, %15, %cst_20 {dimension_numbers = #tpu.dot_dimension_numbers<[1], [0], [0], [1], [0, 0, 1, 1], [], []>} : vector<64x4xf32>, vector<4x512xf32>, vector<64x512xf32> -> vector<64x512xf32>
    %19 = arith.addf %12, %18 : vector<64x512xf32>
    %c2 = arith.constant 2 : index
    %c0_21 = arith.constant 0 : index
    %c0_22 = arith.constant 0 : index
    %20 = vector.load %arg3[%c2, %c0_21, %c0_22] : memref<3x512x512xf32, #tpu.memory_space<vmem>>, vector<1x512x512xf32>
    %21 = vector.shape_cast %20 : vector<1x512x512xf32> to vector<512x512xf32>
    %cst_23 = arith.constant dense<0.000000e+00> : vector<4x512xf32>
    %22 = tpu.matmul %4, %21, %cst_23 {dimension_numbers = #tpu.dot_dimension_numbers<[1], [0], [0], [1], [0, 0, 1, 1], [], []>} : vector<4x512xf32>, vector<512x512xf32>, vector<4x512xf32> -> vector<4x512xf32>
    %c2_24 = arith.constant 2 : index
    %c0_25 = arith.constant 0 : index
    %c0_26 = arith.constant 0 : index
    %23 = vector.load %arg5[%c2_24, %c0_25, %c0_26] : memref<3x64x4xf32, #tpu.memory_space<vmem>>, vector<1x64x4xf32>
    %24 = vector.shape_cast %23 : vector<1x64x4xf32> to vector<64x4xf32>
    %cst_27 = arith.constant dense<0.000000e+00> : vector<64x512xf32>
    %25 = tpu.matmul %24, %22, %cst_27 {dimension_numbers = #tpu.dot_dimension_numbers<[1], [0], [0], [1], [0, 0, 1, 1], [], []>} : vector<64x4xf32>, vector<4x512xf32>, vector<64x512xf32> -> vector<64x512xf32>
    %26 = arith.addf %19, %25 : vector<64x512xf32>
    %cst_28 = arith.constant 0.000000e+00 : f32
    %27 = vector.broadcast %cst_28 : f32 to vector<64x512xf32>
    %28 = arith.maximumf %26, %27 : vector<64x512xf32>
    %c0_29 = arith.constant 0 : index
    %c0_30 = arith.constant 0 : index
    %29 = vector.load %arg7[%c0_29, %c0_30] : memref<64x320xf32, #tpu.memory_space<vmem>>, vector<64x320xf32>
    %c32_i32 = arith.constant 32 : i32
    %30 = tpu.dynamic_rotate %28 by %c32_i32 dim 1 : vector<64x512xf32>, i32 -> vector<64x512xf32>
    %c0_31 = arith.constant 0 : index
    %c0_32 = arith.constant 0 : index
    %c0_33 = arith.constant 0 : index
    %31 = vector.load %arg4[%c0_31, %c0_32, %c0_33] : memref<5x1x512xf32, #tpu.memory_space<vmem>>, vector<1x1x512xf32>
    %32 = vector.shape_cast %31 : vector<1x1x512xf32> to vector<1x512xf32>
    %33 = vector.broadcast %32 : vector<1x512xf32> to vector<64x512xf32>
    %34 = arith.mulf %30, %33 : vector<64x512xf32>
    %c16_i32 = arith.constant 16 : i32
    %35 = tpu.dynamic_rotate %28 by %c16_i32 dim 1 : vector<64x512xf32>, i32 -> vector<64x512xf32>
    %c1_34 = arith.constant 1 : index
    %c0_35 = arith.constant 0 : index
    %c0_36 = arith.constant 0 : index
    %36 = vector.load %arg4[%c1_34, %c0_35, %c0_36] : memref<5x1x512xf32, #tpu.memory_space<vmem>>, vector<1x1x512xf32>
    %37 = vector.shape_cast %36 : vector<1x1x512xf32> to vector<1x512xf32>
    %38 = vector.broadcast %37 : vector<1x512xf32> to vector<64x512xf32>
    %39 = arith.mulf %35, %38 : vector<64x512xf32>
    %c496_i32 = arith.constant 496 : i32
    %40 = tpu.dynamic_rotate %28 by %c496_i32 dim 1 : vector<64x512xf32>, i32 -> vector<64x512xf32>
    %c3 = arith.constant 3 : index
    %c0_37 = arith.constant 0 : index
    %c0_38 = arith.constant 0 : index
    %41 = vector.load %arg4[%c3, %c0_37, %c0_38] : memref<5x1x512xf32, #tpu.memory_space<vmem>>, vector<1x1x512xf32>
    %42 = vector.shape_cast %41 : vector<1x1x512xf32> to vector<1x512xf32>
    %43 = vector.broadcast %42 : vector<1x512xf32> to vector<64x512xf32>
    %44 = arith.mulf %40, %43 : vector<64x512xf32>
    %c480_i32 = arith.constant 480 : i32
    %45 = tpu.dynamic_rotate %28 by %c480_i32 dim 1 : vector<64x512xf32>, i32 -> vector<64x512xf32>
    %c4 = arith.constant 4 : index
    %c0_39 = arith.constant 0 : index
    %c0_40 = arith.constant 0 : index
    %46 = vector.load %arg4[%c4, %c0_39, %c0_40] : memref<5x1x512xf32, #tpu.memory_space<vmem>>, vector<1x1x512xf32>
    %47 = vector.shape_cast %46 : vector<1x1x512xf32> to vector<1x512xf32>
    %48 = vector.broadcast %47 : vector<1x512xf32> to vector<64x512xf32>
    %49 = arith.mulf %45, %48 : vector<64x512xf32>
    %50 = tpu.concatenate %34, %39, %28, %44, %49 in 0 : vector<64x512xf32>, vector<64x512xf32>, vector<64x512xf32>, vector<64x512xf32>, vector<64x512xf32> -> vector<320x512xf32>
    %cst_41 = arith.constant dense<0.000000e+00> : vector<64x512xf32>
    %51 = tpu.matmul %29, %50, %cst_41 {dimension_numbers = #tpu.dot_dimension_numbers<[1], [0], [0], [1], [0, 0, 1, 1], [], []>} : vector<64x320xf32>, vector<320x512xf32>, vector<64x512xf32> -> vector<64x512xf32>
    %c0_42 = arith.constant 0 : index
    %c0_43 = arith.constant 0 : index
    %52 = vector.load %arg8[%c0_42, %c0_43] : memref<64x1xf32, #tpu.memory_space<vmem>>, vector<64x1xf32>
    %53 = vector.broadcast %52 : vector<64x1xf32> to vector<64x512xf32>
    %54 = arith.addf %51, %53 : vector<64x512xf32>
    %c0_44 = arith.constant 0 : index
    %c0_45 = arith.constant 0 : index
    %55 = vector.load %arg9[%c0_44, %c0_45] : memref<64x4xf32, #tpu.memory_space<vmem>>, vector<64x4xf32>
    %cst_46 = arith.constant dense<0.000000e+00> : vector<64x512xf32>
    %56 = tpu.matmul %55, %4, %cst_46 {dimension_numbers = #tpu.dot_dimension_numbers<[1], [0], [0], [1], [0, 0, 1, 1], [], []>} : vector<64x4xf32>, vector<4x512xf32>, vector<64x512xf32> -> vector<64x512xf32>
    %c0_47 = arith.constant 0 : index
    %c0_48 = arith.constant 0 : index
    %57 = vector.load %arg10[%c0_47, %c0_48] : memref<64x1xf32, #tpu.memory_space<vmem>>, vector<64x1xf32>
    %58 = vector.broadcast %57 : vector<64x1xf32> to vector<64x512xf32>
    %59 = arith.addf %56, %58 : vector<64x512xf32>
    %60 = arith.addf %54, %59 : vector<64x512xf32>
    %cst_49 = arith.constant 0.000000e+00 : f32
    %61 = vector.broadcast %cst_49 : f32 to vector<64x512xf32>
    %62 = arith.maximumf %60, %61 : vector<64x512xf32>
    %c0_50 = arith.constant 0 : index
    %c0_51 = arith.constant 0 : index
    %63 = vector.load %arg11[%c0_50, %c0_51] : memref<96x64xf32, #tpu.memory_space<vmem>>, vector<96x64xf32>
    %cst_52 = arith.constant dense<0.000000e+00> : vector<96x512xf32>
    %64 = tpu.matmul %63, %62, %cst_52 {dimension_numbers = #tpu.dot_dimension_numbers<[1], [0], [0], [1], [0, 0, 1, 1], [], []>} : vector<96x64xf32>, vector<64x512xf32>, vector<96x512xf32> -> vector<96x512xf32>
    %c0_53 = arith.constant 0 : index
    %c0_54 = arith.constant 0 : index
    %65 = vector.load %arg12[%c0_53, %c0_54] : memref<32x512xf32, #tpu.memory_space<vmem>>, vector<32x512xf32>
    %66 = vector.extract_strided_slice %64 {offsets = [0, 0], sizes = [32, 512], strides = [1, 1]} : vector<96x512xf32> to vector<32x512xf32>
    %c0_55 = arith.constant 0 : index
    %c0_56 = arith.constant 0 : index
    %c0_57 = arith.constant 0 : index
    %67 = vector.load %arg3[%c0_55, %c0_56, %c0_57] : memref<3x512x512xf32, #tpu.memory_space<vmem>>, vector<1x512x512xf32>
    %68 = vector.shape_cast %67 : vector<1x512x512xf32> to vector<512x512xf32>
    %cst_58 = arith.constant dense<0.000000e+00> : vector<32x512xf32>
    %69 = tpu.matmul %66, %68, %cst_58 {dimension_numbers = #tpu.dot_dimension_numbers<[1], [0], [0], [1], [0, 0, 1, 1], [], []>} : vector<32x512xf32>, vector<512x512xf32>, vector<32x512xf32> -> vector<32x512xf32>
    %70 = arith.addf %65, %69 : vector<32x512xf32>
    %71 = vector.extract_strided_slice %64 {offsets = [32, 0], sizes = [32, 512], strides = [1, 1]} : vector<96x512xf32> to vector<32x512xf32>
    %c1_59 = arith.constant 1 : index
    %c0_60 = arith.constant 0 : index
    %c0_61 = arith.constant 0 : index
    %72 = vector.load %arg3[%c1_59, %c0_60, %c0_61] : memref<3x512x512xf32, #tpu.memory_space<vmem>>, vector<1x512x512xf32>
    %73 = vector.shape_cast %72 : vector<1x512x512xf32> to vector<512x512xf32>
    %cst_62 = arith.constant dense<0.000000e+00> : vector<32x512xf32>
    %74 = tpu.matmul %71, %73, %cst_62 {dimension_numbers = #tpu.dot_dimension_numbers<[1], [0], [0], [1], [0, 0, 1, 1], [], []>} : vector<32x512xf32>, vector<512x512xf32>, vector<32x512xf32> -> vector<32x512xf32>
    %75 = arith.addf %70, %74 : vector<32x512xf32>
    %76 = vector.extract_strided_slice %64 {offsets = [64, 0], sizes = [32, 512], strides = [1, 1]} : vector<96x512xf32> to vector<32x512xf32>
    %c2_63 = arith.constant 2 : index
    %c0_64 = arith.constant 0 : index
    %c0_65 = arith.constant 0 : index
    %77 = vector.load %arg3[%c2_63, %c0_64, %c0_65] : memref<3x512x512xf32, #tpu.memory_space<vmem>>, vector<1x512x512xf32>
    %78 = vector.shape_cast %77 : vector<1x512x512xf32> to vector<512x512xf32>
    %cst_66 = arith.constant dense<0.000000e+00> : vector<32x512xf32>
    %79 = tpu.matmul %76, %78, %cst_66 {dimension_numbers = #tpu.dot_dimension_numbers<[1], [0], [0], [1], [0, 0, 1, 1], [], []>} : vector<32x512xf32>, vector<512x512xf32>, vector<32x512xf32> -> vector<32x512xf32>
    %80 = arith.addf %75, %79 : vector<32x512xf32>
    %cst_67 = arith.constant 0.000000e+00 : f32
    %81 = vector.broadcast %cst_67 : f32 to vector<32x512xf32>
    %82 = arith.maximumf %80, %81 : vector<32x512xf32>
    %c0_68 = arith.constant 0 : index
    %c0_69 = arith.constant 0 : index
    %83 = vector.load %arg13[%c0_68, %c0_69] : memref<32x160xf32, #tpu.memory_space<vmem>>, vector<32x160xf32>
    %c32_i32_70 = arith.constant 32 : i32
    %84 = tpu.dynamic_rotate %82 by %c32_i32_70 dim 1 : vector<32x512xf32>, i32 -> vector<32x512xf32>
    %c0_71 = arith.constant 0 : index
    %c0_72 = arith.constant 0 : index
    %c0_73 = arith.constant 0 : index
    %85 = vector.load %arg4[%c0_71, %c0_72, %c0_73] : memref<5x1x512xf32, #tpu.memory_space<vmem>>, vector<1x1x512xf32>
    %86 = vector.shape_cast %85 : vector<1x1x512xf32> to vector<1x512xf32>
    %87 = vector.broadcast %86 : vector<1x512xf32> to vector<32x512xf32>
    %88 = arith.mulf %84, %87 : vector<32x512xf32>
    %c16_i32_74 = arith.constant 16 : i32
    %89 = tpu.dynamic_rotate %82 by %c16_i32_74 dim 1 : vector<32x512xf32>, i32 -> vector<32x512xf32>
    %c1_75 = arith.constant 1 : index
    %c0_76 = arith.constant 0 : index
    %c0_77 = arith.constant 0 : index
    %90 = vector.load %arg4[%c1_75, %c0_76, %c0_77] : memref<5x1x512xf32, #tpu.memory_space<vmem>>, vector<1x1x512xf32>
    %91 = vector.shape_cast %90 : vector<1x1x512xf32> to vector<1x512xf32>
    %92 = vector.broadcast %91 : vector<1x512xf32> to vector<32x512xf32>
    %93 = arith.mulf %89, %92 : vector<32x512xf32>
    %c496_i32_78 = arith.constant 496 : i32
    %94 = tpu.dynamic_rotate %82 by %c496_i32_78 dim 1 : vector<32x512xf32>, i32 -> vector<32x512xf32>
    %c3_79 = arith.constant 3 : index
    %c0_80 = arith.constant 0 : index
    %c0_81 = arith.constant 0 : index
    %95 = vector.load %arg4[%c3_79, %c0_80, %c0_81] : memref<5x1x512xf32, #tpu.memory_space<vmem>>, vector<1x1x512xf32>
    %96 = vector.shape_cast %95 : vector<1x1x512xf32> to vector<1x512xf32>
    %97 = vector.broadcast %96 : vector<1x512xf32> to vector<32x512xf32>
    %98 = arith.mulf %94, %97 : vector<32x512xf32>
    %c480_i32_82 = arith.constant 480 : i32
    %99 = tpu.dynamic_rotate %82 by %c480_i32_82 dim 1 : vector<32x512xf32>, i32 -> vector<32x512xf32>
    %c4_83 = arith.constant 4 : index
    %c0_84 = arith.constant 0 : index
    %c0_85 = arith.constant 0 : index
    %100 = vector.load %arg4[%c4_83, %c0_84, %c0_85] : memref<5x1x512xf32, #tpu.memory_space<vmem>>, vector<1x1x512xf32>
    %101 = vector.shape_cast %100 : vector<1x1x512xf32> to vector<1x512xf32>
    %102 = vector.broadcast %101 : vector<1x512xf32> to vector<32x512xf32>
    %103 = arith.mulf %99, %102 : vector<32x512xf32>
    %104 = tpu.concatenate %88, %93, %82, %98, %103 in 0 : vector<32x512xf32>, vector<32x512xf32>, vector<32x512xf32>, vector<32x512xf32>, vector<32x512xf32> -> vector<160x512xf32>
    %cst_86 = arith.constant dense<0.000000e+00> : vector<32x512xf32>
    %105 = tpu.matmul %83, %104, %cst_86 {dimension_numbers = #tpu.dot_dimension_numbers<[1], [0], [0], [1], [0, 0, 1, 1], [], []>} : vector<32x160xf32>, vector<160x512xf32>, vector<32x512xf32> -> vector<32x512xf32>
    %c0_87 = arith.constant 0 : index
    %c0_88 = arith.constant 0 : index
    %106 = vector.load %arg14[%c0_87, %c0_88] : memref<32x1xf32, #tpu.memory_space<vmem>>, vector<32x1xf32>
    %107 = vector.broadcast %106 : vector<32x1xf32> to vector<32x512xf32>
    %108 = arith.addf %105, %107 : vector<32x512xf32>
    %c0_89 = arith.constant 0 : index
    %c0_90 = arith.constant 0 : index
    %109 = vector.load %arg15[%c0_89, %c0_90] : memref<32x64xf32, #tpu.memory_space<vmem>>, vector<32x64xf32>
    %cst_91 = arith.constant dense<0.000000e+00> : vector<32x512xf32>
    %110 = tpu.matmul %109, %62, %cst_91 {dimension_numbers = #tpu.dot_dimension_numbers<[1], [0], [0], [1], [0, 0, 1, 1], [], []>} : vector<32x64xf32>, vector<64x512xf32>, vector<32x512xf32> -> vector<32x512xf32>
    %c0_92 = arith.constant 0 : index
    %c0_93 = arith.constant 0 : index
    %111 = vector.load %arg16[%c0_92, %c0_93] : memref<32x1xf32, #tpu.memory_space<vmem>>, vector<32x1xf32>
    %112 = vector.broadcast %111 : vector<32x1xf32> to vector<32x512xf32>
    %113 = arith.addf %110, %112 : vector<32x512xf32>
    %114 = arith.addf %108, %113 : vector<32x512xf32>
    %cst_94 = arith.constant 0.000000e+00 : f32
    %115 = vector.broadcast %cst_94 : f32 to vector<32x512xf32>
    %116 = arith.maximumf %114, %115 : vector<32x512xf32>
    %c0_95 = arith.constant 0 : index
    %c0_96 = arith.constant 0 : index
    %117 = vector.load %arg17[%c0_95, %c0_96] : memref<96x32xf32, #tpu.memory_space<vmem>>, vector<96x32xf32>
    %cst_97 = arith.constant dense<0.000000e+00> : vector<96x512xf32>
    %118 = tpu.matmul %117, %116, %cst_97 {dimension_numbers = #tpu.dot_dimension_numbers<[1], [0], [0], [1], [0, 0, 1, 1], [], []>} : vector<96x32xf32>, vector<32x512xf32>, vector<96x512xf32> -> vector<96x512xf32>
    %c0_98 = arith.constant 0 : index
    %c0_99 = arith.constant 0 : index
    %119 = vector.load %arg18[%c0_98, %c0_99] : memref<32x512xf32, #tpu.memory_space<vmem>>, vector<32x512xf32>
    %120 = vector.extract_strided_slice %118 {offsets = [0, 0], sizes = [32, 512], strides = [1, 1]} : vector<96x512xf32> to vector<32x512xf32>
    %c0_100 = arith.constant 0 : index
    %c0_101 = arith.constant 0 : index
    %c0_102 = arith.constant 0 : index
    %121 = vector.load %arg3[%c0_100, %c0_101, %c0_102] : memref<3x512x512xf32, #tpu.memory_space<vmem>>, vector<1x512x512xf32>
    %122 = vector.shape_cast %121 : vector<1x512x512xf32> to vector<512x512xf32>
    %cst_103 = arith.constant dense<0.000000e+00> : vector<32x512xf32>
    %123 = tpu.matmul %120, %122, %cst_103 {dimension_numbers = #tpu.dot_dimension_numbers<[1], [0], [0], [1], [0, 0, 1, 1], [], []>} : vector<32x512xf32>, vector<512x512xf32>, vector<32x512xf32> -> vector<32x512xf32>
    %124 = arith.addf %119, %123 : vector<32x512xf32>
    %125 = vector.extract_strided_slice %118 {offsets = [32, 0], sizes = [32, 512], strides = [1, 1]} : vector<96x512xf32> to vector<32x512xf32>
    %c1_104 = arith.constant 1 : index
    %c0_105 = arith.constant 0 : index
    %c0_106 = arith.constant 0 : index
    %126 = vector.load %arg3[%c1_104, %c0_105, %c0_106] : memref<3x512x512xf32, #tpu.memory_space<vmem>>, vector<1x512x512xf32>
    %127 = vector.shape_cast %126 : vector<1x512x512xf32> to vector<512x512xf32>
    %cst_107 = arith.constant dense<0.000000e+00> : vector<32x512xf32>
    %128 = tpu.matmul %125, %127, %cst_107 {dimension_numbers = #tpu.dot_dimension_numbers<[1], [0], [0], [1], [0, 0, 1, 1], [], []>} : vector<32x512xf32>, vector<512x512xf32>, vector<32x512xf32> -> vector<32x512xf32>
    %129 = arith.addf %124, %128 : vector<32x512xf32>
    %130 = vector.extract_strided_slice %118 {offsets = [64, 0], sizes = [32, 512], strides = [1, 1]} : vector<96x512xf32> to vector<32x512xf32>
    %c2_108 = arith.constant 2 : index
    %c0_109 = arith.constant 0 : index
    %c0_110 = arith.constant 0 : index
    %131 = vector.load %arg3[%c2_108, %c0_109, %c0_110] : memref<3x512x512xf32, #tpu.memory_space<vmem>>, vector<1x512x512xf32>
    %132 = vector.shape_cast %131 : vector<1x512x512xf32> to vector<512x512xf32>
    %cst_111 = arith.constant dense<0.000000e+00> : vector<32x512xf32>
    %133 = tpu.matmul %130, %132, %cst_111 {dimension_numbers = #tpu.dot_dimension_numbers<[1], [0], [0], [1], [0, 0, 1, 1], [], []>} : vector<32x512xf32>, vector<512x512xf32>, vector<32x512xf32> -> vector<32x512xf32>
    %134 = arith.addf %129, %133 : vector<32x512xf32>
    %cst_112 = arith.constant 0.000000e+00 : f32
    %135 = vector.broadcast %cst_112 : f32 to vector<32x512xf32>
    %136 = arith.maximumf %134, %135 : vector<32x512xf32>
    %c0_113 = arith.constant 0 : index
    %c0_114 = arith.constant 0 : index
    %137 = vector.load %arg19[%c0_113, %c0_114] : memref<32x160xf32, #tpu.memory_space<vmem>>, vector<32x160xf32>
    %c32_i32_115 = arith.constant 32 : i32
    %138 = tpu.dynamic_rotate %136 by %c32_i32_115 dim 1 : vector<32x512xf32>, i32 -> vector<32x512xf32>
    %c0_116 = arith.constant 0 : index
    %c0_117 = arith.constant 0 : index
    %c0_118 = arith.constant 0 : index
    %139 = vector.load %arg4[%c0_116, %c0_117, %c0_118] : memref<5x1x512xf32, #tpu.memory_space<vmem>>, vector<1x1x512xf32>
    %140 = vector.shape_cast %139 : vector<1x1x512xf32> to vector<1x512xf32>
    %141 = vector.broadcast %140 : vector<1x512xf32> to vector<32x512xf32>
    %142 = arith.mulf %138, %141 : vector<32x512xf32>
    %c16_i32_119 = arith.constant 16 : i32
    %143 = tpu.dynamic_rotate %136 by %c16_i32_119 dim 1 : vector<32x512xf32>, i32 -> vector<32x512xf32>
    %c1_120 = arith.constant 1 : index
    %c0_121 = arith.constant 0 : index
    %c0_122 = arith.constant 0 : index
    %144 = vector.load %arg4[%c1_120, %c0_121, %c0_122] : memref<5x1x512xf32, #tpu.memory_space<vmem>>, vector<1x1x512xf32>
    %145 = vector.shape_cast %144 : vector<1x1x512xf32> to vector<1x512xf32>
    %146 = vector.broadcast %145 : vector<1x512xf32> to vector<32x512xf32>
    %147 = arith.mulf %143, %146 : vector<32x512xf32>
    %c496_i32_123 = arith.constant 496 : i32
    %148 = tpu.dynamic_rotate %136 by %c496_i32_123 dim 1 : vector<32x512xf32>, i32 -> vector<32x512xf32>
    %c3_124 = arith.constant 3 : index
    %c0_125 = arith.constant 0 : index
    %c0_126 = arith.constant 0 : index
    %149 = vector.load %arg4[%c3_124, %c0_125, %c0_126] : memref<5x1x512xf32, #tpu.memory_space<vmem>>, vector<1x1x512xf32>
    %150 = vector.shape_cast %149 : vector<1x1x512xf32> to vector<1x512xf32>
    %151 = vector.broadcast %150 : vector<1x512xf32> to vector<32x512xf32>
    %152 = arith.mulf %148, %151 : vector<32x512xf32>
    %c480_i32_127 = arith.constant 480 : i32
    %153 = tpu.dynamic_rotate %136 by %c480_i32_127 dim 1 : vector<32x512xf32>, i32 -> vector<32x512xf32>
    %c4_128 = arith.constant 4 : index
    %c0_129 = arith.constant 0 : index
    %c0_130 = arith.constant 0 : index
    %154 = vector.load %arg4[%c4_128, %c0_129, %c0_130] : memref<5x1x512xf32, #tpu.memory_space<vmem>>, vector<1x1x512xf32>
    %155 = vector.shape_cast %154 : vector<1x1x512xf32> to vector<1x512xf32>
    %156 = vector.broadcast %155 : vector<1x512xf32> to vector<32x512xf32>
    %157 = arith.mulf %153, %156 : vector<32x512xf32>
    %158 = tpu.concatenate %142, %147, %136, %152, %157 in 0 : vector<32x512xf32>, vector<32x512xf32>, vector<32x512xf32>, vector<32x512xf32>, vector<32x512xf32> -> vector<160x512xf32>
    %cst_131 = arith.constant dense<0.000000e+00> : vector<32x512xf32>
    %159 = tpu.matmul %137, %158, %cst_131 {dimension_numbers = #tpu.dot_dimension_numbers<[1], [0], [0], [1], [0, 0, 1, 1], [], []>} : vector<32x160xf32>, vector<160x512xf32>, vector<32x512xf32> -> vector<32x512xf32>
    %c0_132 = arith.constant 0 : index
    %c0_133 = arith.constant 0 : index
    %160 = vector.load %arg20[%c0_132, %c0_133] : memref<32x1xf32, #tpu.memory_space<vmem>>, vector<32x1xf32>
    %161 = vector.broadcast %160 : vector<32x1xf32> to vector<32x512xf32>
    %162 = arith.addf %159, %161 : vector<32x512xf32>
    %163 = arith.addf %162, %116 : vector<32x512xf32>
    %cst_134 = arith.constant 0.000000e+00 : f32
    %164 = vector.broadcast %cst_134 : f32 to vector<32x512xf32>
    %165 = arith.maximumf %163, %164 : vector<32x512xf32>
    %166 = vector.extract_strided_slice %165 {offsets = [0, 0], sizes = [32, 256], strides = [1, 1]} : vector<32x512xf32> to vector<32x256xf32>
    %cst_135 = arith.constant dense<0.000000e+00> : vector<32xf32>
    %167 = vector.multi_reduction <add>, %166, %cst_135 [1] : vector<32x256xf32> to vector<32xf32>
    %168 = vector.shape_cast %167 : vector<32xf32> to vector<32x1xf32>
    %cst_136 = arith.constant 2.560000e+02 : f32
    %169 = vector.broadcast %cst_136 : f32 to vector<32x1xf32>
    %170 = arith.divf %168, %169 : vector<32x1xf32>
    %c0_137 = arith.constant 0 : index
    %c0_138 = arith.constant 0 : index
    %171 = vector.load %arg21[%c0_137, %c0_138] : memref<32x256xf32, #tpu.memory_space<vmem>>, vector<32x256xf32>
    %172 = vector.broadcast %170 : vector<32x1xf32> to vector<32x256xf32>
    %173 = arith.mulf %172, %171 : vector<32x256xf32>
    %cst_139 = arith.constant dense<0.000000e+00> : vector<256xf32>
    %174 = vector.multi_reduction <add>, %173, %cst_139 [0] : vector<32x256xf32> to vector<256xf32>
    %175 = vector.shape_cast %174 : vector<256xf32> to vector<1x256xf32>
    %c0_140 = arith.constant 0 : index
    %c0_141 = arith.constant 0 : index
    %176 = vector.load %arg22[%c0_140, %c0_141] : memref<1x256xf32, #tpu.memory_space<vmem>>, vector<1x256xf32>
    %177 = arith.addf %175, %176 : vector<1x256xf32>
    %c0_142 = arith.constant 0 : index
    %c0_143 = arith.constant 0 : index
    %178 = vector.load %arg23[%c0_142, %c0_143] : memref<2x256xf32, #tpu.memory_space<vmem>>, vector<1x256xf32>
    tpu.vector_store %arg23[%c0_142, %c0_143], %177 {strides = array<i32>} : memref<2x256xf32, #tpu.memory_space<vmem>>, vector<1x256xf32>,
    %179 = vector.extract_strided_slice %165 {offsets = [0, 256], sizes = [32, 256], strides = [1, 1]} : vector<32x512xf32> to vector<32x256xf32>
    %cst_144 = arith.constant dense<0.000000e+00> : vector<32xf32>
    %180 = vector.multi_reduction <add>, %179, %cst_144 [1] : vector<32x256xf32> to vector<32xf32>
    %181 = vector.shape_cast %180 : vector<32xf32> to vector<32x1xf32>
    %cst_145 = arith.constant 2.560000e+02 : f32
    %182 = vector.broadcast %cst_145 : f32 to vector<32x1xf32>
    %183 = arith.divf %181, %182 : vector<32x1xf32>
    %c0_146 = arith.constant 0 : index
    %c0_147 = arith.constant 0 : index
    %184 = vector.load %arg21[%c0_146, %c0_147] : memref<32x256xf32, #tpu.memory_space<vmem>>, vector<32x256xf32>
    %185 = vector.broadcast %183 : vector<32x1xf32> to vector<32x256xf32>
    %186 = arith.mulf %185, %184 : vector<32x256xf32>
    %cst_148 = arith.constant dense<0.000000e+00> : vector<256xf32>
    %187 = vector.multi_reduction <add>, %186, %cst_148 [0] : vector<32x256xf32> to vector<256xf32>
    %188 = vector.shape_cast %187 : vector<256xf32> to vector<1x256xf32>
    %c0_149 = arith.constant 0 : index
    %c0_150 = arith.constant 0 : index
    %189 = vector.load %arg22[%c0_149, %c0_150] : memref<1x256xf32, #tpu.memory_space<vmem>>, vector<1x256xf32>
    %190 = arith.addf %188, %189 : vector<1x256xf32>
    %c1_151 = arith.constant 1 : index
    %c0_152 = arith.constant 0 : index
    %191 = vector.load %arg23[%c1_151, %c0_152] : memref<2x256xf32, #tpu.memory_space<vmem>>, vector<1x256xf32>
    tpu.vector_store %arg23[%c1_151, %c0_152], %190 {strides = array<i32>} : memref<2x256xf32, #tpu.memory_space<vmem>>, vector<1x256xf32>,
    return
  }
}

</mosaic_0001>

<llo_original>
// kernel: tpu_custom_call.1
$region0: #{tpu_custom_call.1}
  #allocation0 [shape = 'u32[]', space=smem, size = 0x4, offset = 0x4, fixed_abs, tag = 'smem constant byte address 0x4 - core index']
  #allocation1 [shape = 'u32[144,128]{1,0:T(1,128)}', space=vmem, size = 0x12000, scoped, tag = 'internal scratch']
  %s0 = inlined_call_operand.hbm [shape: f32[4,512], index: 0, kind: input, shape index: {}]
  %s1 = inlined_call_operand.hbm [shape: f32[4,512], index: 1, kind: input, shape index: {}]
  %s2 = inlined_call_operand.hbm [shape: f32[4,512], index: 2, kind: input, shape index: {}]
  %s3 = inlined_call_operand.hbm [shape: f32[3,512,512], index: 3, kind: input, shape index: {}]
  %s4 = inlined_call_operand.hbm [shape: f32[5,1,512], index: 4, kind: input, shape index: {}]
  %s5 = inlined_call_operand.vmem [shape: f32[3,64,4], index: 5, kind: input, shape index: {}]
  %s6 = inlined_call_operand.hbm [shape: f32[64,512], index: 6, kind: input, shape index: {}]
  %s7 = inlined_call_operand.hbm [shape: f32[64,320], index: 7, kind: input, shape index: {}]
  %s8 = inlined_call_operand.vmem [shape: f32[64,1], index: 8, kind: input, shape index: {}]
  %s9 = inlined_call_operand.vmem [shape: f32[64,4], index: 9, kind: input, shape index: {}]
  %s10 = inlined_call_operand.vmem [shape: f32[64,1], index: 10, kind: input, shape index: {}]
  %s11 = inlined_call_operand.vmem [shape: f32[96,64], index: 11, kind: input, shape index: {}]
  %s12 = inlined_call_operand.hbm [shape: f32[32,512], index: 12, kind: input, shape index: {}]
  %s13 = inlined_call_operand.hbm [shape: f32[32,160], index: 13, kind: input, shape index: {}]
  %s14 = inlined_call_operand.vmem [shape: f32[32,1], index: 14, kind: input, shape index: {}]
  %s15 = inlined_call_operand.hbm [shape: f32[32,64], index: 15, kind: input, shape index: {}]
  %s16 = inlined_call_operand.vmem [shape: f32[32,1], index: 16, kind: input, shape index: {}]
  %s17 = inlined_call_operand.vmem [shape: f32[96,32], index: 17, kind: input, shape index: {}]
  %s18 = inlined_call_operand.hbm [shape: f32[32,512], index: 18, kind: input, shape index: {}]
  %s19 = inlined_call_operand.hbm [shape: f32[32,160], index: 19, kind: input, shape index: {}]
  %s20 = inlined_call_operand.vmem [shape: f32[32,1], index: 20, kind: input, shape index: {}]
  %s21 = inlined_call_operand.hbm [shape: f32[32,256], index: 21, kind: input, shape index: {}]
  %s22 = inlined_call_operand.hbm [shape: f32[1,256], index: 22, kind: input, shape index: {}]
  %s23 = inlined_call_operand.hbm [shape: f32[2,256], index: 23, kind: output, shape index: {}]
  %s24 = sld [smem:[#allocation0]]
  $region158: #{tpu_custom_call.1} parent=0
    _
  %s26 = ssub.s32 1, %s24
  %s27 = scalar_select 0, %s26, %s24
  $region1: #{tpu_custom_call.1} parent=0
    #allocation2 [shape = 'u8[8192]{0}', space=vmem, size = 0x2000, scoped, tag = 'input window, operand 0, single buffered']
    #allocation3 [shape = 's32[1]{0}', space=sflag, size = 0x4, scoped, tag = 'scoped memory for tpu_custom_call.1']
    #allocation4 [shape = 's32[1]{0}', space=sflag, size = 0x4, scoped, tag = 'scoped memory for tpu_custom_call.1']
    #allocation5 [shape = 'u8[8192]{0}', space=vmem, size = 0x2000, scoped, tag = 'input window, operand 1, single buffered']
    #allocation6 [shape = 's32[1]{0}', space=sflag, size = 0x4, scoped, tag = 'scoped memory for tpu_custom_call.1']
    #allocation7 [shape = 'u8[8192]{0}', space=vmem, size = 0x2000, scoped, tag = 'input window, operand 2, single buffered']
    #allocation8 [shape = 'u8[3145728]{0}', space=vmem, size = 0x300000, scoped, tag = 'input window, operand 3, single buffered']
    #allocation9 [shape = 's32[1]{0}', space=sflag, size = 0x4, scoped, tag = 'scoped memory for tpu_custom_call.1']
    #allocation10 [shape = 'u8[10240]{0}', space=vmem, size = 0x2800, scoped, tag = 'input window, operand 4, single buffered']
    #allocation11 [shape = 'u8[131072]{0}', space=vmem, size = 0x20000, scoped, tag = 'input window, operand 6, single buffered']
    #allocation12 [shape = 's32[1]{0}', space=sflag, size = 0x4, scoped, tag = 'scoped memory for tpu_custom_call.1']
    #allocation13 [shape = 'u8[98304]{0}', space=vmem, size = 0x18000, scoped, tag = 'input window, operand 7, single buffered']
    #allocation14 [shape = 'u8[65536]{0}', space=vmem, size = 0x10000, scoped, tag = 'input window, operand 12, single buffered']
    #allocation15 [shape = 's32[1]{0}', space=sflag, size = 0x4, scoped, tag = 'scoped memory for tpu_custom_call.1']
    #allocation16 [shape = 'u8[32768]{0}', space=vmem, size = 0x8000, scoped, tag = 'input window, operand 13, single buffered']
    #allocation17 [shape = 'u8[16384]{0}', space=vmem, size = 0x4000, scoped, tag = 'input window, operand 15, single buffered']
    #allocation18 [shape = 's32[1]{0}', space=sflag, size = 0x4, scoped, tag = 'scoped memory for tpu_custom_call.1']
    #allocation19 [shape = 'u8[65536]{0}', space=vmem, size = 0x10000, scoped, tag = 'input window, operand 18, single buffered']
    #allocation20 [shape = 'u8[32768]{0}', space=vmem, size = 0x8000, scoped, tag = 'input window, operand 19, single buffered']
    #allocation21 [shape = 's32[1]{0}', space=sflag, size = 0x4, scoped, tag = 'scoped memory for tpu_custom_call.1']
    #allocation22 [shape = 'u8[32768]{0}', space=vmem, size = 0x8000, scoped, tag = 'input window, operand 21, single buffered']
    #allocation23 [shape = 'u8[1024]{0}', space=vmem, size = 0x400, scoped, tag = 'input window, operand 22, single buffered']
    #allocation24 [shape = 's32[1]{0}', space=sflag, size = 0x4, scoped, tag = 'scoped memory for tpu_custom_call.1']
    #allocation25 [shape = 'u8[2048]{0}', space=vmem, size = 0x800, scoped, tag = 'output window, operand 0, single buffered']
    %28 = vsyncpa [#allocation3], 0
    %29 = vsyncpa [#allocation6], 0
    %30 = vsyncpa [#allocation9], 0
    %31 = vsyncpa [#allocation12], 0
    %32 = vsyncpa [#allocation15], 0
    %33 = vsyncpa [#allocation18], 0
    %34 = vsyncpa [#allocation21], 0
    %35 = vsyncpa [#allocation24], 0
    %36 = vsyncpa [#allocation4], 0
    // Predicated region
    $region2: #{tpu_custom_call.1} parent=1 // pred_check
      _
    $region3: #{tpu_custom_call.1} parent=1 // pred_check_branch
      %38 = sbr.rel (0) target = $region5
    $region4: #{tpu_custom_call.1} parent=1 // pred_region
      %s40 = ssub.s32 256, 256
      %41 = vsyncadd [#allocation3], %s40
      %s43 = sshll.u32 [#allocation2], 4
      %s44 = int_to_ptr.vmem [resolvable:$true] %s43
      %46 = dma.hbm_to_vmem [thread:$0]  %s0, 256, %s44, [#allocation3]
    $region5: #{tpu_custom_call.1} parent=1 // pred_fallthru
      _
    // Predicated region
    $region6: #{tpu_custom_call.1} parent=1 // pred_check
      _
    $region7: #{tpu_custom_call.1} parent=1 // pred_check_branch
      %48 = sbr.rel (0) target = $region9
    $region8: #{tpu_custom_call.1} parent=1 // pred_region
      %s50 = ssub.s32 256, 256
      %51 = vsyncadd [#allocation6], %s50
      %s53 = sshll.u32 [#allocation5], 4
      %s54 = int_to_ptr.vmem [resolvable:$true] %s53
      %56 = dma.hbm_to_vmem [thread:$0]  %s1, 256, %s54, [#allocation6]
    $region9: #{tpu_custom_call.1} parent=1 // pred_fallthru
      _
    // Predicated region
    $region10: #{tpu_custom_call.1} parent=1 // pred_check
      _
    $region11: #{tpu_custom_call.1} parent=1 // pred_check_branch
      %58 = sbr.rel (0) target = $region13
    $region12: #{tpu_custom_call.1} parent=1 // pred_region
      %s60 = ssub.s32 256, 256
      %61 = vsyncadd [#allocation6], %s60
      %s63 = sshll.u32 [#allocation7], 4
      %s64 = int_to_ptr.vmem [resolvable:$true] %s63
      %66 = dma.hbm_to_vmem [thread:$0]  %s2, 256, %s64, [#allocation6]
    $region13: #{tpu_custom_call.1} parent=1 // pred_fallthru
      _
    // Predicated region
    $region14: #{tpu_custom_call.1} parent=1 // pred_check
      _
    $region15: #{tpu_custom_call.1} parent=1 // pred_check_branch
      %68 = sbr.rel (0) target = $region17
    $region16: #{tpu_custom_call.1} parent=1 // pred_region
      %s70 = ssub.s32 98304, 98304
      %71 = vsyncadd [#allocation9], %s70
      %s72 = sshll.u32 [#allocation8], 4
      %s73 = int_to_ptr.vmem [resolvable:$true] %s72
      %78 = dma.hbm_to_vmem [thread:$0]  %s3, 98304, %s73, [#allocation9], 512, 512, 32
    $region17: #{tpu_custom_call.1} parent=1 // pred_fallthru
      _
    // Predicated region
    $region18: #{tpu_custom_call.1} parent=1 // pred_check
      _
    $region19: #{tpu_custom_call.1} parent=1 // pred_check_branch
      %80 = sbr.rel (0) target = $region21
    $region20: #{tpu_custom_call.1} parent=1 // pred_region
      %s82 = ssub.s32 320, 320
      %83 = vsyncadd [#allocation9], %s82
      %s84 = sshll.u32 [#allocation10], 4
      %s85 = int_to_ptr.vmem [resolvable:$true] %s84
      %90 = dma.hbm_to_vmem [thread:$0]  %s4, 320, %s85, [#allocation9], 64, 64, 4
    $region21: #{tpu_custom_call.1} parent=1 // pred_fallthru
      _
    // Predicated region
    $region22: #{tpu_custom_call.1} parent=1 // pred_check
      _
    $region23: #{tpu_custom_call.1} parent=1 // pred_check_branch
      %92 = sbr.rel (0) target = $region25
    $region24: #{tpu_custom_call.1} parent=1 // pred_region
      _
    $region25: #{tpu_custom_call.1} parent=1 // pred_fallthru
      _
    // Predicated region
    $region26: #{tpu_custom_call.1} parent=1 // pred_check
      _
    $region27: #{tpu_custom_call.1} parent=1 // pred_check_branch
      %94 = sbr.rel (0) target = $region29
    $region28: #{tpu_custom_call.1} parent=1 // pred_region
      %s96 = ssub.s32 4096, 4096
      %97 = vsyncadd [#allocation12], %s96
      %s98 = sshll.u32 [#allocation11], 4
      %s99 = int_to_ptr.vmem [resolvable:$true] %s98
      %104 = dma.hbm_to_vmem [thread:$0]  %s6, 4096, %s99, [#allocation12], 512, 512, 32
    $region29: #{tpu_custom_call.1} parent=1 // pred_fallthru
      _
    // Predicated region
    $region30: #{tpu_custom_call.1} parent=1 // pred_check
      _
    $region31: #{tpu_custom_call.1} parent=1 // pred_check_branch
      %106 = sbr.rel (0) target = $region33
    $region32: #{tpu_custom_call.1} parent=1 // pred_region
      %s108 = ssub.s32 3072, 3072
      %109 = vsyncadd [#allocation12], %s108
      %s110 = sshll.u32 [#allocation13], 4
      %s111 = int_to_ptr.vmem [resolvable:$true] %s110
      %116 = dma.hbm_to_vmem [thread:$0]  %s7, 3072, %s111, [#allocation12], 384, 384, 24
    $region33: #{tpu_custom_call.1} parent=1 // pred_fallthru
      _
    // Predicated region
    $region34: #{tpu_custom_call.1} parent=1 // pred_check
      _
    $region35: #{tpu_custom_call.1} parent=1 // pred_check_branch
      %118 = sbr.rel (0) target = $region37
    $region36: #{tpu_custom_call.1} parent=1 // pred_region
      _
    $region37: #{tpu_custom_call.1} parent=1 // pred_fallthru
      _
    // Predicated region
    $region38: #{tpu_custom_call.1} parent=1 // pred_check
      _
    $region39: #{tpu_custom_call.1} parent=1 // pred_check_branch
      %120 = sbr.rel (0) target = $region41
    $region40: #{tpu_custom_call.1} parent=1 // pred_region
      _
    $region41: #{tpu_custom_call.1} parent=1 // pred_fallthru
      _
    // Predicated region
    $region42: #{tpu_custom_call.1} parent=1 // pred_check
      _
    $region43: #{tpu_custom_call.1} parent=1 // pred_check_branch
      %122 = sbr.rel (0) target = $region45
    $region44: #{tpu_custom_call.1} parent=1 // pred_region
      _
    $region45: #{tpu_custom_call.1} parent=1 // pred_fallthru
      _
    // Predicated region
    $region46: #{tpu_custom_call.1} parent=1 // pred_check
      _
    $region47: #{tpu_custom_call.1} parent=1 // pred_check_branch
      %124 = sbr.rel (0) target = $region49
    $region48: #{tpu_custom_call.1} parent=1 // pred_region
      _
    $region49: #{tpu_custom_call.1} parent=1 // pred_fallthru
      _
    // Predicated region
    $region50: #{tpu_custom_call.1} parent=1 // pred_check
      _
    $region51: #{tpu_custom_call.1} parent=1 // pred_check_branch
      %126 = sbr.rel (0) target = $region53
    $region52: #{tpu_custom_call.1} parent=1 // pred_region
      %s128 = ssub.s32 2048, 2048
      %129 = vsyncadd [#allocation15], %s128
      %s130 = sshll.u32 [#allocation14], 4
      %s131 = int_to_ptr.vmem [resolvable:$true] %s130
      %136 = dma.hbm_to_vmem [thread:$0]  %s12, 2048, %s131, [#allocation15], 512, 512, 32
    $region53: #{tpu_custom_call.1} parent=1 // pred_fallthru
      _
    // Predicated region
    $region54: #{tpu_custom_call.1} parent=1 // pred_check
      _
    $region55: #{tpu_custom_call.1} parent=1 // pred_check_branch
      %138 = sbr.rel (0) target = $region57
    $region56: #{tpu_custom_call.1} parent=1 // pred_region
      %s140 = ssub.s32 1024, 1024
      %141 = vsyncadd [#allocation15], %s140
      %s142 = sshll.u32 [#allocation16], 4
      %s143 = int_to_ptr.vmem [resolvable:$true] %s142
      %148 = dma.hbm_to_vmem [thread:$0]  %s13, 1024, %s143, [#allocation15], 256, 256, 16
    $region57: #{tpu_custom_call.1} parent=1 // pred_fallthru
      _
    // Predicated region
    $region58: #{tpu_custom_call.1} parent=1 // pred_check
      _
    $region59: #{tpu_custom_call.1} parent=1 // pred_check_branch
      %150 = sbr.rel (0) target = $region61
    $region60: #{tpu_custom_call.1} parent=1 // pred_region
      _
    $region61: #{tpu_custom_call.1} parent=1 // pred_fallthru
      _
    // Predicated region
    $region62: #{tpu_custom_call.1} parent=1 // pred_check
      _
    $region63: #{tpu_custom_call.1} parent=1 // pred_check_branch
      %152 = sbr.rel (0) target = $region65
    $region64: #{tpu_custom_call.1} parent=1 // pred_region
      %s154 = ssub.s32 512, 512
      %155 = vsyncadd [#allocation18], %s154
      %s156 = sshll.u32 [#allocation17], 4
      %s157 = int_to_ptr.vmem [resolvable:$true] %s156
      %162 = dma.hbm_to_vmem [thread:$0]  %s15, 512, %s157, [#allocation18], 128, 128, 8
    $region65: #{tpu_custom_call.1} parent=1 // pred_fallthru
      _
    // Predicated region
    $region66: #{tpu_custom_call.1} parent=1 // pred_check
      _
    $region67: #{tpu_custom_call.1} parent=1 // pred_check_branch
      %164 = sbr.rel (0) target = $region69
    $region68: #{tpu_custom_call.1} parent=1 // pred_region
      _
    $region69: #{tpu_custom_call.1} parent=1 // pred_fallthru
      _
    // Predicated region
    $region70: #{tpu_custom_call.1} parent=1 // pred_check
      _
    $region71: #{tpu_custom_call.1} parent=1 // pred_check_branch
      %166 = sbr.rel (0) target = $region73
    $region72: #{tpu_custom_call.1} parent=1 // pred_region
      _
    $region73: #{tpu_custom_call.1} parent=1 // pred_fallthru
      _
    // Predicated region
    $region74: #{tpu_custom_call.1} parent=1 // pred_check
      _
    $region75: #{tpu_custom_call.1} parent=1 // pred_check_branch
      %168 = sbr.rel (0) target = $region77
    $region76: #{tpu_custom_call.1} parent=1 // pred_region
      %s170 = ssub.s32 2048, 2048
      %171 = vsyncadd [#allocation18], %s170
      %s172 = sshll.u32 [#allocation19], 4
      %s173 = int_to_ptr.vmem [resolvable:$true] %s172
      %178 = dma.hbm_to_vmem [thread:$0]  %s18, 2048, %s173, [#allocation18], 512, 512, 32
    $region77: #{tpu_custom_call.1} parent=1 // pred_fallthru
      _
    // Predicated region
    $region78: #{tpu_custom_call.1} parent=1 // pred_check
      _
    $region79: #{tpu_custom_call.1} parent=1 // pred_check_branch
      %180 = sbr.rel (0) target = $region81
    $region80: #{tpu_custom_call.1} parent=1 // pred_region
      %s182 = ssub.s32 1024, 1024
      %183 = vsyncadd [#allocation21], %s182
      %s184 = sshll.u32 [#allocation20], 4
      %s185 = int_to_ptr.vmem [resolvable:$true] %s184
      %190 = dma.hbm_to_vmem [thread:$0]  %s19, 1024, %s185, [#allocation21], 256, 256, 16
    $region81: #{tpu_custom_call.1} parent=1 // pred_fallthru
      _
    // Predicated region
    $region82: #{tpu_custom_call.1} parent=1 // pred_check
      _
    $region83: #{tpu_custom_call.1} parent=1 // pred_check_branch
      %192 = sbr.rel (0) target = $region85
    $region84: #{tpu_custom_call.1} parent=1 // pred_region
      _
    $region85: #{tpu_custom_call.1} parent=1 // pred_fallthru
      _
    // Predicated region
    $region86: #{tpu_custom_call.1} parent=1 // pred_check
      _
    $region87: #{tpu_custom_call.1} parent=1 // pred_check_branch
      %194 = sbr.rel (0) target = $region89
    $region88: #{tpu_custom_call.1} parent=1 // pred_region
      %s196 = ssub.s32 1024, 1024
      %197 = vsyncadd [#allocation21], %s196
      %s198 = sshll.u32 [#allocation22], 4
      %s199 = int_to_ptr.vmem [resolvable:$true] %s198
      %204 = dma.hbm_to_vmem [thread:$0]  %s21, 1024, %s199, [#allocation21], 256, 256, 16
    $region89: #{tpu_custom_call.1} parent=1 // pred_fallthru
      _
    // Predicated region
    $region90: #{tpu_custom_call.1} parent=1 // pred_check
      _
    $region91: #{tpu_custom_call.1} parent=1 // pred_check_branch
      %206 = sbr.rel (0) target = $region93
    $region92: #{tpu_custom_call.1} parent=1 // pred_region
      %s208 = ssub.s32 32, 32
      %209 = vsyncadd [#allocation24], %s208
      %s211 = sshll.u32 [#allocation23], 4
      %s212 = int_to_ptr.vmem [resolvable:$true] %s211
      %214 = dma.hbm_to_vmem [thread:$0]  %s22, 32, %s212, [#allocation24]
    $region93: #{tpu_custom_call.1} parent=1 // pred_fallthru
      _
    // Predicated region
    $region94: #{tpu_custom_call.1} parent=1 // pred_check
      _
    $region95: #{tpu_custom_call.1} parent=1 // pred_check_branch
      %216 = sbr.rel (0) target = $region97
    $region96: #{tpu_custom_call.1} parent=1 // pred_region
      %217 = dma.done [#allocation3], 256
    $region97: #{tpu_custom_call.1} parent=1 // pred_fallthru
      _
    // Predicated region
    $region98: #{tpu_custom_call.1} parent=1 // pred_check
      _
    $region99: #{tpu_custom_call.1} parent=1 // pred_check_branch
      %219 = sbr.rel (0) target = $region101
    $region100: #{tpu_custom_call.1} parent=1 // pred_region
      %220 = dma.done [#allocation6], 256
    $region101: #{tpu_custom_call.1} parent=1 // pred_fallthru
      _
    // Predicated region
    $region102: #{tpu_custom_call.1} parent=1 // pred_check
      _
    $region103: #{tpu_custom_call.1} parent=1 // pred_check_branch
      %222 = sbr.rel (0) target = $region105
    $region104: #{tpu_custom_call.1} parent=1 // pred_region
      %223 = dma.done [#allocation6], 256
    $region105: #{tpu_custom_call.1} parent=1 // pred_fallthru
      _
    // Predicated region
    $region106: #{tpu_custom_call.1} parent=1 // pred_check
      _
    $region107: #{tpu_custom_call.1} parent=1 // pred_check_branch
      %225 = sbr.rel (0) target = $region109
    $region108: #{tpu_custom_call.1} parent=1 // pred_region
      %226 = dma.done [#allocation9], 98304
    $region109: #{tpu_custom_call.1} parent=1 // pred_fallthru
      _
    // Predicated region
    $region110: #{tpu_custom_call.1} parent=1 // pred_check
      _
    $region111: #{tpu_custom_call.1} parent=1 // pred_check_branch
      %228 = sbr.rel (0) target = $region113
    $region112: #{tpu_custom_call.1} parent=1 // pred_region
      %229 = dma.done [#allocation9], 320
    $region113: #{tpu_custom_call.1} parent=1 // pred_fallthru
      _
    // Predicated region
    $region114: #{tpu_custom_call.1} parent=1 // pred_check
      _
    $region115: #{tpu_custom_call.1} parent=1 // pred_check_branch
      %231 = sbr.rel (0) target = $region117
    $region116: #{tpu_custom_call.1} parent=1 // pred_region
      %232 = dma.done [#allocation12], 4096
    $region117: #{tpu_custom_call.1} parent=1 // pred_fallthru
      _
    // Predicated region
    $region118: #{tpu_custom_call.1} parent=1 // pred_check
      _
    $region119: #{tpu_custom_call.1} parent=1 // pred_check_branch
      %234 = sbr.rel (0) target = $region121
    $region120: #{tpu_custom_call.1} parent=1 // pred_region
      %235 = dma.done [#allocation12], 3072
    $region121: #{tpu_custom_call.1} parent=1 // pred_fallthru
      _
    // Predicated region
    $region122: #{tpu_custom_call.1} parent=1 // pred_check
      _
    $region123: #{tpu_custom_call.1} parent=1 // pred_check_branch
      %237 = sbr.rel (0) target = $region125
    $region124: #{tpu_custom_call.1} parent=1 // pred_region
      %238 = dma.done [#allocation15], 2048
    $region125: #{tpu_custom_call.1} parent=1 // pred_fallthru
      _
    // Predicated region
    $region126: #{tpu_custom_call.1} parent=1 // pred_check
      _
    $region127: #{tpu_custom_call.1} parent=1 // pred_check_branch
      %240 = sbr.rel (0) target = $region129
    $region128: #{tpu_custom_call.1} parent=1 // pred_region
      %241 = dma.done [#allocation15], 1024
    $region129: #{tpu_custom_call.1} parent=1 // pred_fallthru
      _
    // Predicated region
    $region130: #{tpu_custom_call.1} parent=1 // pred_check
      _
    $region131: #{tpu_custom_call.1} parent=1 // pred_check_branch
      %243 = sbr.rel (0) target = $region133
    $region132: #{tpu_custom_call.1} parent=1 // pred_region
      %244 = dma.done [#allocation18], 512
    $region133: #{tpu_custom_call.1} parent=1 // pred_fallthru
      _
    // Predicated region
    $region134: #{tpu_custom_call.1} parent=1 // pred_check
      _
    $region135: #{tpu_custom_call.1} parent=1 // pred_check_branch
      %246 = sbr.rel (0) target = $region137
    $region136: #{tpu_custom_call.1} parent=1 // pred_region
      %247 = dma.done [#allocation18], 2048
    $region137: #{tpu_custom_call.1} parent=1 // pred_fallthru
      _
    // Predicated region
    $region138: #{tpu_custom_call.1} parent=1 // pred_check
      _
    $region139: #{tpu_custom_call.1} parent=1 // pred_check_branch
      %249 = sbr.rel (0) target = $region141
    $region140: #{tpu_custom_call.1} parent=1 // pred_region
      %250 = dma.done [#allocation21], 1024
    $region141: #{tpu_custom_call.1} parent=1 // pred_fallthru
      _
    // Predicated region
    $region142: #{tpu_custom_call.1} parent=1 // pred_check
      _
    $region143: #{tpu_custom_call.1} parent=1 // pred_check_branch
      %252 = sbr.rel (0) target = $region145
    $region144: #{tpu_custom_call.1} parent=1 // pred_region
      %253 = dma.done [#allocation21], 1024
    $region145: #{tpu_custom_call.1} parent=1 // pred_fallthru
      _
    // Predicated region
    $region146: #{tpu_custom_call.1} parent=1 // pred_check
      _
    $region147: #{tpu_custom_call.1} parent=1 // pred_check_branch
      %255 = sbr.rel (0) target = $region149
    $region148: #{tpu_custom_call.1} parent=1 // pred_region
      %256 = dma.done [#allocation24], 32
    $region149: #{tpu_custom_call.1} parent=1 // pred_fallthru
      _
    %v257 = vld [vmem:[#allocation2] sm:$0xff]
    %v258 = vld [vmem:[#allocation2 + $0x8] sm:$0xff]
    %v259 = vld [vmem:[#allocation5] sm:$0xff]
    %v260 = vld [vmem:[#allocation5 + $0x8] sm:$0xff]
    %v261 = vmul.f32 %v257, %v259
    %v262 = vmul.f32 %v258, %v260
    %v263 = vld [vmem:[#allocation7] sm:$0xff]
    %v264 = vld [vmem:[#allocation7 + $0x8] sm:$0xff]
    %v265 = vadd.f32 %v261, %v263
    %v266 = vadd.f32 %v262, %v264
    %v267 = vld [vmem:[#allocation11] sm:$0xff]
    %v268 = vld [vmem:[#allocation11 + $0x8] sm:$0xff]
    %v269 = vld [vmem:[#allocation11 + $0x10] sm:$0xff]
    %v270 = vld [vmem:[#allocation11 + $0x18] sm:$0xff]
    %v271 = vld [vmem:[#allocation11 + $0x20] sm:$0xff]
    %v272 = vld [vmem:[#allocation11 + $0x28] sm:$0xff]
    %v273 = vld [vmem:[#allocation11 + $0x30] sm:$0xff]
    %v274 = vld [vmem:[#allocation11 + $0x38] sm:$0xff]
    %v275 = vld [vmem:[#allocation11 + $0x40] sm:$0xff]
    %v276 = vld [vmem:[#allocation11 + $0x48] sm:$0xff]
    %v277 = vld [vmem:[#allocation11 + $0x50] sm:$0xff]
    %v278 = vld [vmem:[#allocation11 + $0x58] sm:$0xff]
    %v279 = vld [vmem:[#allocation11 + $0x60] sm:$0xff]
    %v280 = vld [vmem:[#allocation11 + $0x68] sm:$0xff]
    %v281 = vld [vmem:[#allocation11 + $0x70] sm:$0xff]
    %v282 = vld [vmem:[#allocation11 + $0x78] sm:$0xff]
    %v283 = vld [vmem:[#allocation11 + $0x80] sm:$0xff]
    %v284 = vld [vmem:[#allocation11 + $0x88] sm:$0xff]
    %v285 = vld [vmem:[#allocation11 + $0x90] sm:$0xff]
    %v286 = vld [vmem:[#allocation11 + $0x98] sm:$0xff]
    %v287 = vld [vmem:[#allocation11 + $0xa0] sm:$0xff]
    %v288 = vld [vmem:[#allocation11 + $0xa8] sm:$0xff]
    %v289 = vld [vmem:[#allocation11 + $0xb0] sm:$0xff]
    %v290 = vld [vmem:[#allocation11 + $0xb8] sm:$0xff]
    %v291 = vld [vmem:[#allocation11 + $0xc0] sm:$0xff]
    %v292 = vld [vmem:[#allocation11 + $0xc8] sm:$0xff]
    %v293 = vld [vmem:[#allocation11 + $0xd0] sm:$0xff]
    %v294 = vld [vmem:[#allocation11 + $0xd8] sm:$0xff]
    %v295 = vld [vmem:[#allocation11 + $0xe0] sm:$0xff]
    %v296 = vld [vmem:[#allocation11 + $0xe8] sm:$0xff]
    %v297 = vld [vmem:[#allocation11 + $0xf0] sm:$0xff]
    %v298 = vld [vmem:[#allocation11 + $0xf8] sm:$0xff]
    %v299 = vld [vmem:[#allocation8] sm:$0xff]
    %v300 = vld [vmem:[#allocation8 + $0x8] sm:$0xff]
    %v301 = vld [vmem:[#allocation8 + $0x10] sm:$0xff]
    %v302 = vld [vmem:[#allocation8 + $0x18] sm:$0xff]
    %v303 = vld [vmem:[#allocation8 + $0x20] sm:$0xff]
    %v304 = vld [vmem:[#allocation8 + $0x28] sm:$0xff]
    %v305 = vld [vmem:[#allocation8 + $0x30] sm:$0xff]
    %v306 = vld [vmem:[#allocation8 + $0x38] sm:$0xff]
    %v307 = vld [vmem:[#allocation8 + $0x40] sm:$0xff]
    %v308 = vld [vmem:[#allocation8 + $0x48] sm:$0xff]
    %v309 = vld [vmem:[#allocation8 + $0x50] sm:$0xff]
    %v310 = vld [vmem:[#allocation8 + $0x58] sm:$0xff]
    %v311 = vld [vmem:[#allocation8 + $0x60] sm:$0xff]
    %v312 = vld [vmem:[#allocation8 + $0x68] sm:$0xff]
    %v313 = vld [vmem:[#allocation8 + $0x70] sm:$0xff]
    %v314 = vld [vmem:[#allocation8 + $0x78] sm:$0xff]
    %v315 = vld [vmem:[#allocation8 + $0x80] sm:$0xff]
    %v316 = vld [vmem:[#allocation8 + $0x88] sm:$0xff]
    %v317 = vld [vmem:[#allocation8 + $0x90] sm:$0xff]
    %v318 = vld [vmem:[#allocation8 + $0x98] sm:$0xff]
    %v319 = vld [vmem:[#allocation8 + $0xa0] sm:$0xff]
    %v320 = vld [vmem:[#allocation8 + $0xa8] sm:$0xff]
    %v321 = vld [vmem:[#allocation8 + $0xb0] sm:$0xff]
    %v322 = vld [vmem:[#allocation8 + $0xb8] sm:$0xff]
    %v323 = vld [vmem:[#allocation8 + $0xc0] sm:$0xff]
    %v324 = vld [vmem:[#allocation8 + $0xc8] sm:$0xff]
    %v325 = vld [vmem:[#allocation8 + $0xd0] sm:$0xff]
    %v326 = vld [vmem:[#allocation8 + $0xd8] sm:$0xff]
    %v327 = vld [vmem:[#allocation8 + $0xe0] sm:$0xff]
    %v328 = vld [vmem:[#allocation8 + $0xe8] sm:$0xff]
    %v329 = vld [vmem:[#allocation8 + $0xf0] sm:$0xff]
    %v330 = vld [vmem:[#allocation8 + $0xf8] sm:$0xff]
    %v331 = vld [vmem:[#allocation8 + $0x100] sm:$0xff]
    %v332 = vld [vmem:[#allocation8 + $0x108] sm:$0xff]
    %v333 = vld [vmem:[#allocation8 + $0x110] sm:$0xff]
    %v334 = vld [vmem:[#allocation8 + $0x118] sm:$0xff]
    %v335 = vld [vmem:[#allocation8 + $0x120] sm:$0xff]
    %v336 = vld [vmem:[#allocation8 + $0x128] sm:$0xff]
    %v337 = vld [vmem:[#allocation8 + $0x130] sm:$0xff]
    %v338 = vld [vmem:[#allocation8 + $0x138] sm:$0xff]
    %v339 = vld [vmem:[#allocation8 + $0x140] sm:$0xff]
    %v340 = vld [vmem:[#allocation8 + $0x148] sm:$0xff]
    %v341 = vld [vmem:[#allocation8 + $0x150] sm:$0xff]
    %v342 = vld [vmem:[#allocation8 + $0x158] sm:$0xff]
    %v343 = vld [vmem:[#allocation8 + $0x160] sm:$0xff]
    %v344 = vld [vmem:[#allocation8 + $0x168] sm:$0xff]
    %v345 = vld [vmem:[#allocation8 + $0x170] sm:$0xff]
    %v346 = vld [vmem:[#allocation8 + $0x178] sm:$0xff]
    %v347 = vld [vmem:[#allocation8 + $0x180] sm:$0xff]
    %v348 = vld [vmem:[#allocation8 + $0x188] sm:$0xff]
    %v349 = vld [vmem:[#allocation8 + $0x190] sm:$0xff]
    %v350 = vld [vmem:[#allocation8 + $0x198] sm:$0xff]
    %v351 = vld [vmem:[#allocation8 + $0x1a0] sm:$0xff]
    %v352 = vld [vmem:[#allocation8 + $0x1a8] sm:$0xff]
    %v353 = vld [vmem:[#allocation8 + $0x1b0] sm:$0xff]
    %v354 = vld [vmem:[#allocation8 + $0x1b8] sm:$0xff]
    %v355 = vld [vmem:[#allocation8 + $0x1c0] sm:$0xff]
    %v356 = vld [vmem:[#allocation8 + $0x1c8] sm:$0xff]
    %v357 = vld [vmem:[#allocation8 + $0x1d0] sm:$0xff]
    %v358 = vld [vmem:[#allocation8 + $0x1d8] sm:$0xff]
    %v359 = vld [vmem:[#allocation8 + $0x1e0] sm:$0xff]
    %v360 = vld [vmem:[#allocation8 + $0x1e8] sm:$0xff]
    %v361 = vld [vmem:[#allocation8 + $0x1f0] sm:$0xff]
    %v362 = vld [vmem:[#allocation8 + $0x1f8] sm:$0xff]
    %v363 = vld [vmem:[#allocation8 + $0x200] sm:$0xff]
    %v364 = vld [vmem:[#allocation8 + $0x208] sm:$0xff]
    %v365 = vld [vmem:[#allocation8 + $0x210] sm:$0xff]
    %v366 = vld [vmem:[#allocation8 + $0x218] sm:$0xff]
    %v367 = vld [vmem:[#allocation8 + $0x220] sm:$0xff]
    %v368 = vld [vmem:[#allocation8 + $0x228] sm:$0xff]
    %v369 = vld [vmem:[#allocation8 + $0x230] sm:$0xff]
    %v370 = vld [vmem:[#allocation8 + $0x238] sm:$0xff]
    %v371 = vld [vmem:[#allocation8 + $0x240] sm:$0xff]
    %v372 = vld [vmem:[#allocation8 + $0x248] sm:$0xff]
    %v373 = vld [vmem:[#allocation8 + $0x250] sm:$0xff]
    %v374 = vld [vmem:[#allocation8 + $0x258] sm:$0xff]
    %v375 = vld [vmem:[#allocation8 + $0x260] sm:$0xff]
    %v376 = vld [vmem:[#allocation8 + $0x268] sm:$0xff]
    %v377 = vld [vmem:[#allocation8 + $0x270] sm:$0xff]
    %v378 = vld [vmem:[#allocation8 + $0x278] sm:$0xff]
    %v379 = vld [vmem:[#allocation8 + $0x280] sm:$0xff]
    %v380 = vld [vmem:[#allocation8 + $0x288] sm:$0xff]
    %v381 = vld [vmem:[#allocation8 + $0x290] sm:$0xff]
    %v382 = vld [vmem:[#allocation8 + $0x298] sm:$0xff]
    %v383 = vld [vmem:[#allocation8 + $0x2a0] sm:$0xff]
    %v384 = vld [vmem:[#allocation8 + $0x2a8] sm:$0xff]
    %v385 = vld [vmem:[#allocation8 + $0x2b0] sm:$0xff]
    %v386 = vld [vmem:[#allocation8 + $0x2b8] sm:$0xff]
    %v387 = vld [vmem:[#allocation8 + $0x2c0] sm:$0xff]
    %v388 = vld [vmem:[#allocation8 + $0x2c8] sm:$0xff]
    %v389 = vld [vmem:[#allocation8 + $0x2d0] sm:$0xff]
    %v390 = vld [vmem:[#allocation8 + $0x2d8] sm:$0xff]
    %v391 = vld [vmem:[#allocation8 + $0x2e0] sm:$0xff]
    %v392 = vld [vmem:[#allocation8 + $0x2e8] sm:$0xff]
    %v393 = vld [vmem:[#allocation8 + $0x2f0] sm:$0xff]
    %v394 = vld [vmem:[#allocation8 + $0x2f8] sm:$0xff]
    %v395 = vld [vmem:[#allocation8 + $0x300] sm:$0xff]
    %v396 = vld [vmem:[#allocation8 + $0x308] sm:$0xff]
    %v397 = vld [vmem:[#allocation8 + $0x310] sm:$0xff]
    %v398 = vld [vmem:[#allocation8 + $0x318] sm:$0xff]
    %v399 = vld [vmem:[#allocation8 + $0x320] sm:$0xff]
    %v400 = vld [vmem:[#allocation8 + $0x328] sm:$0xff]
    %v401 = vld [vmem:[#allocation8 + $0x330] sm:$0xff]
    %v402 = vld [vmem:[#allocation8 + $0x338] sm:$0xff]
    %v403 = vld [vmem:[#allocation8 + $0x340] sm:$0xff]
    %v404 = vld [vmem:[#allocation8 + $0x348] sm:$0xff]
    %v405 = vld [vmem:[#allocation8 + $0x350] sm:$0xff]
    %v406 = vld [vmem:[#allocation8 + $0x358] sm:$0xff]
    %v407 = vld [vmem:[#allocation8 + $0x360] sm:$0xff]
    %v408 = vld [vmem:[#allocation8 + $0x368] sm:$0xff]
    %v409 = vld [vmem:[#allocation8 + $0x370] sm:$0xff]
    %v410 = vld [vmem:[#allocation8 + $0x378] sm:$0xff]
    %v411 = vld [vmem:[#allocation8 + $0x380] sm:$0xff]
    %v412 = vld [vmem:[#allocation8 + $0x388] sm:$0xff]
    %v413 = vld [vmem:[#allocation8 + $0x390] sm:$0xff]
    %v414 = vld [vmem:[#allocation8 + $0x398] sm:$0xff]
    %v415 = vld [vmem:[#allocation8 + $0x3a0] sm:$0xff]
    %v416 = vld [vmem:[#allocation8 + $0x3a8] sm:$0xff]
    %v417 = vld [vmem:[#allocation8 + $0x3b0] sm:$0xff]
    %v418 = vld [vmem:[#allocation8 + $0x3b8] sm:$0xff]
    %v419 = vld [vmem:[#allocation8 + $0x3c0] sm:$0xff]
    %v420 = vld [vmem:[#allocation8 + $0x3c8] sm:$0xff]
    %v421 = vld [vmem:[#allocation8 + $0x3d0] sm:$0xff]
    %v422 = vld [vmem:[#allocation8 + $0x3d8] sm:$0xff]
    %v423 = vld [vmem:[#allocation8 + $0x3e0] sm:$0xff]
    %v424 = vld [vmem:[#allocation8 + $0x3e8] sm:$0xff]
    %v425 = vld [vmem:[#allocation8 + $0x3f0] sm:$0xff]
    %v426 = vld [vmem:[#allocation8 + $0x3f8] sm:$0xff]
    %v427 = vld [vmem:[#allocation8 + $0x400] sm:$0xff]
    %v428 = vld [vmem:[#allocation8 + $0x408] sm:$0xff]
    %v429 = vld [vmem:[#allocation8 + $0x410] sm:$0xff]
    %v430 = vld [vmem:[#allocation8 + $0x418] sm:$0xff]
    %v431 = vld [vmem:[#allocation8 + $0x420] sm:$0xff]
    %v432 = vld [vmem:[#allocation8 + $0x428] sm:$0xff]
    %v433 = vld [vmem:[#allocation8 + $0x430] sm:$0xff]
    %v434 = vld [vmem:[#allocation8 + $0x438] sm:$0xff]
    %v435 = vld [vmem:[#allocation8 + $0x440] sm:$0xff]
    %v436 = vld [vmem:[#allocation8 + $0x448] sm:$0xff]
    %v437 = vld [vmem:[#allocation8 + $0x450] sm:$0xff]
    %v438 = vld [vmem:[#allocation8 + $0x458] sm:$0xff]
    %v439 = vld [vmem:[#allocation8 + $0x460] sm:$0xff]
    %v440 = vld [vmem:[#allocation8 + $0x468] sm:$0xff]
    %v441 = vld [vmem:[#allocation8 + $0x470] sm:$0xff]
    %v442 = vld [vmem:[#allocation8 + $0x478] sm:$0xff]
    %v443 = vld [vmem:[#allocation8 + $0x480] sm:$0xff]
    %v444 = vld [vmem:[#allocation8 + $0x488] sm:$0xff]
    %v445 = vld [vmem:[#allocation8 + $0x490] sm:$0xff]
    %v446 = vld [vmem:[#allocation8 + $0x498] sm:$0xff]
    %v447 = vld [vmem:[#allocation8 + $0x4a0] sm:$0xff]
    %v448 = vld [vmem:[#allocation8 + $0x4a8] sm:$0xff]
    %v449 = vld [vmem:[#allocation8 + $0x4b0] sm:$0xff]
    %v450 = vld [vmem:[#allocation8 + $0x4b8] sm:$0xff]
    %v451 = vld [vmem:[#allocation8 + $0x4c0] sm:$0xff]
    %v452 = vld [vmem:[#allocation8 + $0x4c8] sm:$0xff]
    %v453 = vld [vmem:[#allocation8 + $0x4d0] sm:$0xff]
    %v454 = vld [vmem:[#allocation8 + $0x4d8] sm:$0xff]
    %v455 = vld [vmem:[#allocation8 + $0x4e0] sm:$0xff]
    %v456 = vld [vmem:[#allocation8 + $0x4e8] sm:$0xff]
    %v457 = vld [vmem:[#allocation8 + $0x4f0] sm:$0xff]
    %v458 = vld [vmem:[#allocation8 + $0x4f8] sm:$0xff]
    %v459 = vld [vmem:[#allocation8 + $0x500] sm:$0xff]
    %v460 = vld [vmem:[#allocation8 + $0x508] sm:$0xff]
    %v461 = vld [vmem:[#allocation8 + $0x510] sm:$0xff]
    %v462 = vld [vmem:[#allocation8 + $0x518] sm:$0xff]
    %v463 = vld [vmem:[#allocation8 + $0x520] sm:$0xff]
    %v464 = vld [vmem:[#allocation8 + $0x528] sm:$0xff]
    %v465 = vld [vmem:[#allocation8 + $0x530] sm:$0xff]
    %v466 = vld [vmem:[#allocation8 + $0x538] sm:$0xff]
    %v467 = vld [vmem:[#allocation8 + $0x540] sm:$0xff]
    %v468 = vld [vmem:[#allocation8 + $0x548] sm:$0xff]
    %v469 = vld [vmem:[#allocation8 + $0x550] sm:$0xff]
    %v470 = vld [vmem:[#allocation8 + $0x558] sm:$0xff]
    %v471 = vld [vmem:[#allocation8 + $0x560] sm:$0xff]
    %v472 = vld [vmem:[#allocation8 + $0x568] sm:$0xff]
    %v473 = vld [vmem:[#allocation8 + $0x570] sm:$0xff]
    %v474 = vld [vmem:[#allocation8 + $0x578] sm:$0xff]
    %v475 = vld [vmem:[#allocation8 + $0x580] sm:$0xff]
    %v476 = vld [vmem:[#allocation8 + $0x588] sm:$0xff]
    %v477 = vld [vmem:[#allocation8 + $0x590] sm:$0xff]
    %v478 = vld [vmem:[#allocation8 + $0x598] sm:$0xff]
    %v479 = vld [vmem:[#allocation8 + $0x5a0] sm:$0xff]
    %v480 = vld [vmem:[#allocation8 + $0x5a8] sm:$0xff]
    %v481 = vld [vmem:[#allocation8 + $0x5b0] sm:$0xff]
    %v482 = vld [vmem:[#allocation8 + $0x5b8] sm:$0xff]
    %v483 = vld [vmem:[#allocation8 + $0x5c0] sm:$0xff]
    %v484 = vld [vmem:[#allocation8 + $0x5c8] sm:$0xff]
    %v485 = vld [vmem:[#allocation8 + $0x5d0] sm:$0xff]
    %v486 = vld [vmem:[#allocation8 + $0x5d8] sm:$0xff]
    %v487 = vld [vmem:[#allocation8 + $0x5e0] sm:$0xff]
    %v488 = vld [vmem:[#allocation8 + $0x5e8] sm:$0xff]
    %v489 = vld [vmem:[#allocation8 + $0x5f0] sm:$0xff]
    %v490 = vld [vmem:[#allocation8 + $0x5f8] sm:$0xff]
    %v491 = vld [vmem:[#allocation8 + $0x600] sm:$0xff]
    %v492 = vld [vmem:[#allocation8 + $0x608] sm:$0xff]
    %v493 = vld [vmem:[#allocation8 + $0x610] sm:$0xff]
    %v494 = vld [vmem:[#allocation8 + $0x618] sm:$0xff]
    %v495 = vld [vmem:[#allocation8 + $0x620] sm:$0xff]
    %v496 = vld [vmem:[#allocation8 + $0x628] sm:$0xff]
    %v497 = vld [vmem:[#allocation8 + $0x630] sm:$0xff]
    %v498 = vld [vmem:[#allocation8 + $0x638] sm:$0xff]
    %v499 = vld [vmem:[#allocation8 + $0x640] sm:$0xff]
    %v500 = vld [vmem:[#allocation8 + $0x648] sm:$0xff]
    %v501 = vld [vmem:[#allocation8 + $0x650] sm:$0xff]
    %v502 = vld [vmem:[#allocation8 + $0x658] sm:$0xff]
    %v503 = vld [vmem:[#allocation8 + $0x660] sm:$0xff]
    %v504 = vld [vmem:[#allocation8 + $0x668] sm:$0xff]
    %v505 = vld [vmem:[#allocation8 + $0x670] sm:$0xff]
    %v506 = vld [vmem:[#allocation8 + $0x678] sm:$0xff]
    %v507 = vld [vmem:[#allocation8 + $0x680] sm:$0xff]
    %v508 = vld [vmem:[#allocation8 + $0x688] sm:$0xff]
    %v509 = vld [vmem:[#allocation8 + $0x690] sm:$0xff]
    %v510 = vld [vmem:[#allocation8 + $0x698] sm:$0xff]
    %v511 = vld [vmem:[#allocation8 + $0x6a0] sm:$0xff]
    %v512 = vld [vmem:[#allocation8 + $0x6a8] sm:$0xff]
    %v513 = vld [vmem:[#allocation8 + $0x6b0] sm:$0xff]
    %v514 = vld [vmem:[#allocation8 + $0x6b8] sm:$0xff]
    %v515 = vld [vmem:[#allocation8 + $0x6c0] sm:$0xff]
    %v516 = vld [vmem:[#allocation8 + $0x6c8] sm:$0xff]
    %v517 = vld [vmem:[#allocation8 + $0x6d0] sm:$0xff]
    %v518 = vld [vmem:[#allocation8 + $0x6d8] sm:$0xff]
    %v519 = vld [vmem:[#allocation8 + $0x6e0] sm:$0xff]
    %v520 = vld [vmem:[#allocation8 + $0x6e8] sm:$0xff]
    %v521 = vld [vmem:[#allocation8 + $0x6f0] sm:$0xff]
    %v522 = vld [vmem:[#allocation8 + $0x6f8] sm:$0xff]
    %v523 = vld [vmem:[#allocation8 + $0x700] sm:$0xff]
    %v524 = vld [vmem:[#allocation8 + $0x708] sm:$0xff]
    %v525 = vld [vmem:[#allocation8 + $0x710] sm:$0xff]
    %v526 = vld [vmem:[#allocation8 + $0x718] sm:$0xff]
    %v527 = vld [vmem:[#allocation8 + $0x720] sm:$0xff]
    %v528 = vld [vmem:[#allocation8 + $0x728] sm:$0xff]
    %v529 = vld [vmem:[#allocation8 + $0x730] sm:$0xff]
    %v530 = vld [vmem:[#allocation8 + $0x738] sm:$0xff]
    %v531 = vld [vmem:[#allocation8 + $0x740] sm:$0xff]
    %v532 = vld [vmem:[#allocation8 + $0x748] sm:$0xff]
    %v533 = vld [vmem:[#allocation8 + $0x750] sm:$0xff]
    %v534 = vld [vmem:[#allocation8 + $0x758] sm:$0xff]
    %v535 = vld [vmem:[#allocation8 + $0x760] sm:$0xff]
    %v536 = vld [vmem:[#allocation8 + $0x768] sm:$0xff]
    %v537 = vld [vmem:[#allocation8 + $0x770] sm:$0xff]
    %v538 = vld [vmem:[#allocation8 + $0x778] sm:$0xff]
    %v539 = vld [vmem:[#allocation8 + $0x780] sm:$0xff]
    %v540 = vld [vmem:[#allocation8 + $0x788] sm:$0xff]
    %v541 = vld [vmem:[#allocation8 + $0x790] sm:$0xff]
    %v542 = vld [vmem:[#allocation8 + $0x798] sm:$0xff]
    %v543 = vld [vmem:[#allocation8 + $0x7a0] sm:$0xff]
    %v544 = vld [vmem:[#allocation8 + $0x7a8] sm:$0xff]
    %v545 = vld [vmem:[#allocation8 + $0x7b0] sm:$0xff]
    %v546 = vld [vmem:[#allocation8 + $0x7b8] sm:$0xff]
    %v547 = vld [vmem:[#allocation8 + $0x7c0] sm:$0xff]
    %v548 = vld [vmem:[#allocation8 + $0x7c8] sm:$0xff]
    %v549 = vld [vmem:[#allocation8 + $0x7d0] sm:$0xff]
    %v550 = vld [vmem:[#allocation8 + $0x7d8] sm:$0xff]
    %v551 = vld [vmem:[#allocation8 + $0x7e0] sm:$0xff]
    %v552 = vld [vmem:[#allocation8 + $0x7e8] sm:$0xff]
    %v553 = vld [vmem:[#allocation8 + $0x7f0] sm:$0xff]
    %v554 = vld [vmem:[#allocation8 + $0x7f8] sm:$0xff]
    %v557 = vcombine.high %v265, %v265
    %v558 = vcombine.high %v266, %v266
    %561 = vmatprep.subr.mxu0 %v300
    %562 = vmatpush1.msra.mxu0 %v299
    %563 = vmatprep.subr.mxu0 %v304
    %564 = vmatpush1.msra.mxu0 %v303
    %565 = vmatprep.subr.mxu0 %v308
    %566 = vmatpush1.msra.mxu0 %v307
    %567 = vmatprep.subr.mxu0 %v312
    %568 = vmatpush1.msra.mxu0 %v311
    %569 = vmatprep.subr.mxu0 %v316
    %570 = vmatpush1.msra.mxu0 %v315
    %571 = vmatprep.subr.mxu0 %v320
    %572 = vmatpush1.msra.mxu0 %v319
    %573 = vmatprep.subr.mxu0 %v324
    %574 = vmatpush1.msra.mxu0 %v323
    %575 = vmatprep.subr.mxu0 %v328
    %576 = vmatpush1.msra.mxu0 %v327
    %577 = vmatprep.subr.mxu0 %v332
    %578 = vmatpush1.msra.mxu0 %v331
    %579 = vmatprep.subr.mxu0 %v336
    %580 = vmatpush1.msra.mxu0 %v335
    %581 = vmatprep.subr.mxu0 %v340
    %582 = vmatpush1.msra.mxu0 %v339
    %583 = vmatprep.subr.mxu0 %v344
    %584 = vmatpush1.msra.mxu0 %v343
    %585 = vmatprep.subr.mxu0 %v348
    %586 = vmatpush1.msra.mxu0 %v347
    %587 = vmatprep.subr.mxu0 %v352
    %588 = vmatpush1.msra.mxu0 %v351
    %589 = vmatprep.subr.mxu0 %v356
    %590 = vmatpush1.msra.mxu0 %v355
    %591 = vmatprep.subr.mxu0 %v360
    %592 = vmatpush1.msra.mxu0 %v359
    %593 = vmatprep.subr.mxu0 %v364
    %594 = vmatpush1.msra.mxu0 %v363
    %595 = vmatprep.subr.mxu0 %v368
    %596 = vmatpush1.msra.mxu0 %v367
    %597 = vmatprep.subr.mxu0 %v372
    %598 = vmatpush1.msra.mxu0 %v371
    %599 = vmatprep.subr.mxu0 %v376
    %600 = vmatpush1.msra.mxu0 %v375
    %601 = vmatprep.subr.mxu0 %v380
    %602 = vmatpush1.msra.mxu0 %v379
    %603 = vmatprep.subr.mxu0 %v384
    %604 = vmatpush1.msra.mxu0 %v383
    %605 = vmatprep.subr.mxu0 %v388
    %606 = vmatpush1.msra.mxu0 %v387
    %607 = vmatprep.subr.mxu0 %v392
    %608 = vmatpush1.msra.mxu0 %v391
    %609 = vmatprep.subr.mxu0 %v396
    %610 = vmatpush1.msra.mxu0 %v395
    %611 = vmatprep.subr.mxu0 %v400
    %612 = vmatpush1.msra.mxu0 %v399
    %613 = vmatprep.subr.mxu0 %v404
    %614 = vmatpush1.msra.mxu0 %v403
    %615 = vmatprep.subr.mxu0 %v408
    %616 = vmatpush1.msra.mxu0 %v407
    %617 = vmatprep.subr.mxu0 %v412
    %618 = vmatpush1.msra.mxu0 %v411
    %619 = vmatprep.subr.mxu0 %v416
    %620 = vmatpush1.msra.mxu0 %v415
    %621 = vmatprep.subr.mxu0 %v420
    %622 = vmatpush1.msra.mxu0 %v419
    %623 = vmatprep.subr.mxu0 %v424
    %624 = vmatpush1.msra.mxu0 %v423
    %625 = vmatprep.mubr.f32.mxu0 %v557
    %626 = vmatmul.mubr.f32.gmra.mrb[0].mxu0 %v265
    %v627 = vpop.f32.mrb[0].mxu0
    %v628 = vadd.f32 0.0, %v627
    %v629 = vpop.f32.mrb[0].mxu0
    %v630 = vadd.f32 0.0, %v629
    %631 = vdwg.mxu0
    %632 = vmatprep.subr.mxu0 %v428
    %633 = vmatpush1.msra.mxu0 %v427
    %634 = vmatprep.subr.mxu0 %v432
    %635 = vmatpush1.msra.mxu0 %v431
    %636 = vmatprep.subr.mxu0 %v436
    %637 = vmatpush1.msra.mxu0 %v435
    %638 = vmatprep.subr.mxu0 %v440
    %639 = vmatpush1.msra.mxu0 %v439
    %640 = vmatprep.subr.mxu0 %v444
    %641 = vmatpush1.msra.mxu0 %v443
    %642 = vmatprep.subr.mxu0 %v448
    %643 = vmatpush1.msra.mxu0 %v447
    %644 = vmatprep.subr.mxu0 %v452
    %645 = vmatpush1.msra.mxu0 %v451
    %646 = vmatprep.subr.mxu0 %v456
    %647 = vmatpush1.msra.mxu0 %v455
    %648 = vmatprep.subr.mxu0 %v460
    %649 = vmatpush1.msra.mxu0 %v459
    %650 = vmatprep.subr.mxu0 %v464
    %651 = vmatpush1.msra.mxu0 %v463
    %652 = vmatprep.subr.mxu0 %v468
    %653 = vmatpush1.msra.mxu0 %v467
    %654 = vmatprep.subr.mxu0 %v472
    %655 = vmatpush1.msra.mxu0 %v471
    %656 = vmatprep.subr.mxu0 %v476
    %657 = vmatpush1.msra.mxu0 %v475
    %658 = vmatprep.subr.mxu0 %v480
    %659 = vmatpush1.msra.mxu0 %v479
    %660 = vmatprep.subr.mxu0 %v484
    %661 = vmatpush1.msra.mxu0 %v483
    %662 = vmatprep.subr.mxu0 %v488
    %663 = vmatpush1.msra.mxu0 %v487
    %664 = vmatprep.subr.mxu0 %v492
    %665 = vmatpush1.msra.mxu0 %v491
    %666 = vmatprep.subr.mxu0 %v496
    %667 = vmatpush1.msra.mxu0 %v495
    %668 = vmatprep.subr.mxu0 %v500
    %669 = vmatpush1.msra.mxu0 %v499
    %670 = vmatprep.subr.mxu0 %v504
    %671 = vmatpush1.msra.mxu0 %v503
    %672 = vmatprep.subr.mxu0 %v508
    %673 = vmatpush1.msra.mxu0 %v507
    %674 = vmatprep.subr.mxu0 %v512
    %675 = vmatpush1.msra.mxu0 %v511
    %676 = vmatprep.subr.mxu0 %v516
    %677 = vmatpush1.msra.mxu0 %v515
    %678 = vmatprep.subr.mxu0 %v520
    %679 = vmatpush1.msra.mxu0 %v519
    %680 = vmatprep.subr.mxu0 %v524
    %681 = vmatpush1.msra.mxu0 %v523
    %682 = vmatprep.subr.mxu0 %v528
    %683 = vmatpush1.msra.mxu0 %v527
    %684 = vmatprep.subr.mxu0 %v532
    %685 = vmatpush1.msra.mxu0 %v531
    %686 = vmatprep.subr.mxu0 %v536
    %687 = vmatpush1.msra.mxu0 %v535
    %688 = vmatprep.subr.mxu0 %v540
    %689 = vmatpush1.msra.mxu0 %v539
    %690 = vmatprep.subr.mxu0 %v544
    %691 = vmatpush1.msra.mxu0 %v543
    %692 = vmatprep.subr.mxu0 %v548
    %693 = vmatpush1.msra.mxu0 %v547
    %694 = vmatprep.subr.mxu0 %v552
    %695 = vmatpush1.msra.mxu0 %v551
    %696 = vmatprep.mubr.f32.mxu0 %v558
    %697 = vmatmul.mubr.f32.gmra.mrb[0].mxu0 %v266
    %v698 = vpop.f32.mrb[0].mxu0
    %v699 = vadd.f32 %v628, %v698
    %v700 = vpop.f32.mrb[0].mxu0
    %v701 = vadd.f32 %v630, %v700
    %702 = vdwg.mxu0
    %703 = vmatprep.subr.mxu0 %v302
    %704 = vmatpush1.msra.mxu0 %v301
    %705 = vmatprep.subr.mxu0 %v306
    %706 = vmatpush1.msra.mxu0 %v305
    %707 = vmatprep.subr.mxu0 %v310
    %708 = vmatpush1.msra.mxu0 %v309
    %709 = vmatprep.subr.mxu0 %v314
    %710 = vmatpush1.msra.mxu0 %v313
    %711 = vmatprep.subr.mxu0 %v318
    %712 = vmatpush1.msra.mxu0 %v317
    %713 = vmatprep.subr.mxu0 %v322
    %714 = vmatpush1.msra.mxu0 %v321
    %715 = vmatprep.subr.mxu0 %v326
    %716 = vmatpush1.msra.mxu0 %v325
    %717 = vmatprep.subr.mxu0 %v330
    %718 = vmatpush1.msra.mxu0 %v329
    %719 = vmatprep.subr.mxu0 %v334
    %720 = vmatpush1.msra.mxu0 %v333
    %721 = vmatprep.subr.mxu0 %v338
    %722 = vmatpush1.msra.mxu0 %v337
    %723 = vmatprep.subr.mxu0 %v342
    %724 = vmatpush1.msra.mxu0 %v341
    %725 = vmatprep.subr.mxu0 %v346
    %726 = vmatpush1.msra.mxu0 %v345
    %727 = vmatprep.subr.mxu0 %v350
    %728 = vmatpush1.msra.mxu0 %v349
    %729 = vmatprep.subr.mxu0 %v354
    %730 = vmatpush1.msra.mxu0 %v353
    %731 = vmatprep.subr.mxu0 %v358
    %732 = vmatpush1.msra.mxu0 %v357
    %733 = vmatprep.subr.mxu0 %v362
    %734 = vmatpush1.msra.mxu0 %v361
    %735 = vmatprep.subr.mxu0 %v366
    %736 = vmatpush1.msra.mxu0 %v365
    %737 = vmatprep.subr.mxu0 %v370
    %738 = vmatpush1.msra.mxu0 %v369
    %739 = vmatprep.subr.mxu0 %v374
    %740 = vmatpush1.msra.mxu0 %v373
    %741 = vmatprep.subr.mxu0 %v378
    %742 = vmatpush1.msra.mxu0 %v377
    %743 = vmatprep.subr.mxu0 %v382
    %744 = vmatpush1.msra.mxu0 %v381
    %745 = vmatprep.subr.mxu0 %v386
    %746 = vmatpush1.msra.mxu0 %v385
    %747 = vmatprep.subr.mxu0 %v390
    %748 = vmatpush1.msra.mxu0 %v389
    %749 = vmatprep.subr.mxu0 %v394
    %750 = vmatpush1.msra.mxu0 %v393
    %751 = vmatprep.subr.mxu0 %v398
    %752 = vmatpush1.msra.mxu0 %v397
    %753 = vmatprep.subr.mxu0 %v402
    %754 = vmatpush1.msra.mxu0 %v401
    %755 = vmatprep.subr.mxu0 %v406
    %756 = vmatpush1.msra.mxu0 %v405
    %757 = vmatprep.subr.mxu0 %v410
    %758 = vmatpush1.msra.mxu0 %v409
    %759 = vmatprep.subr.mxu0 %v414
    %760 = vmatpush1.msra.mxu0 %v413
    %761 = vmatprep.subr.mxu0 %v418
    %762 = vmatpush1.msra.mxu0 %v417
    %763 = vmatprep.subr.mxu0 %v422
    %764 = vmatpush1.msra.mxu0 %v421
    %765 = vmatprep.subr.mxu0 %v426
    %766 = vmatpush1.msra.mxu0 %v425
    %767 = vmatprep.mubr.f32.mxu0 %v557
    %768 = vmatmul.mubr.f32.gmra.mrb[0].mxu0 %v265
    %v769 = vpop.f32.mrb[0].mxu0
    %v770 = vadd.f32 0.0, %v769
    %v771 = vpop.f32.mrb[0].mxu0
    %v772 = vadd.f32 0.0, %v771
    %773 = vdwg.mxu0
    %774 = vmatprep.subr.mxu0 %v430
    %775 = vmatpush1.msra.mxu0 %v429
    %776 = vmatprep.subr.mxu0 %v434
    %777 = vmatpush1.msra.mxu0 %v433
    %778 = vmatprep.subr.mxu0 %v438
    %779 = vmatpush1.msra.mxu0 %v437
    %780 = vmatprep.subr.mxu0 %v442
    %781 = vmatpush1.msra.mxu0 %v441
    %782 = vmatprep.subr.mxu0 %v446
    %783 = vmatpush1.msra.mxu0 %v445
    %784 = vmatprep.subr.mxu0 %v450
    %785 = vmatpush1.msra.mxu0 %v449
    %786 = vmatprep.subr.mxu0 %v454
    %787 = vmatpush1.msra.mxu0 %v453
    %788 = vmatprep.subr.mxu0 %v458
    %789 = vmatpush1.msra.mxu0 %v457
    %790 = vmatprep.subr.mxu0 %v462
    %791 = vmatpush1.msra.mxu0 %v461
    %792 = vmatprep.subr.mxu0 %v466
    %793 = vmatpush1.msra.mxu0 %v465
    %794 = vmatprep.subr.mxu0 %v470
    %795 = vmatpush1.msra.mxu0 %v469
    %796 = vmatprep.subr.mxu0 %v474
    %797 = vmatpush1.msra.mxu0 %v473
    %798 = vmatprep.subr.mxu0 %v478
    %799 = vmatpush1.msra.mxu0 %v477
    %800 = vmatprep.subr.mxu0 %v482
    %801 = vmatpush1.msra.mxu0 %v481
    %802 = vmatprep.subr.mxu0 %v486
    %803 = vmatpush1.msra.mxu0 %v485
    %804 = vmatprep.subr.mxu0 %v490
    %805 = vmatpush1.msra.mxu0 %v489
    %806 = vmatprep.subr.mxu0 %v494
    %807 = vmatpush1.msra.mxu0 %v493
    %808 = vmatprep.subr.mxu0 %v498
    %809 = vmatpush1.msra.mxu0 %v497
    %810 = vmatprep.subr.mxu0 %v502
    %811 = vmatpush1.msra.mxu0 %v501
    %812 = vmatprep.subr.mxu0 %v506
    %813 = vmatpush1.msra.mxu0 %v505
    %814 = vmatprep.subr.mxu0 %v510
    %815 = vmatpush1.msra.mxu0 %v509
    %816 = vmatprep.subr.mxu0 %v514
    %817 = vmatpush1.msra.mxu0 %v513
    %818 = vmatprep.subr.mxu0 %v518
    %819 = vmatpush1.msra.mxu0 %v517
    %820 = vmatprep.subr.mxu0 %v522
    %821 = vmatpush1.msra.mxu0 %v521
    %822 = vmatprep.subr.mxu0 %v526
    %823 = vmatpush1.msra.mxu0 %v525
    %824 = vmatprep.subr.mxu0 %v530
    %825 = vmatpush1.msra.mxu0 %v529
    %826 = vmatprep.subr.mxu0 %v534
    %827 = vmatpush1.msra.mxu0 %v533
    %828 = vmatprep.subr.mxu0 %v538
    %829 = vmatpush1.msra.mxu0 %v537
    %830 = vmatprep.subr.mxu0 %v542
    %831 = vmatpush1.msra.mxu0 %v541
    %832 = vmatprep.subr.mxu0 %v546
    %833 = vmatpush1.msra.mxu0 %v545
    %834 = vmatprep.subr.mxu0 %v550
    %835 = vmatpush1.msra.mxu0 %v549
    %836 = vmatprep.subr.mxu0 %v554
    %837 = vmatpush1.msra.mxu0 %v553
    %838 = vmatprep.mubr.f32.mxu0 %v558
    %839 = vmatmul.mubr.f32.gmra.mrb[0].mxu0 %v266
    %v840 = vpop.f32.mrb[0].mxu0
    %v841 = vadd.f32 %v770, %v840
    %v842 = vpop.f32.mrb[0].mxu0
    %v843 = vadd.f32 %v772, %v842
    %844 = vdwg.mxu0
    %v845 = vld [vmem:[%s5] sm:$0xff]
    %v846 = vld [vmem:[%s5 + $0x8] sm:$0xff]
    %v847 = vld [vmem:[%s5 + $0x10] sm:$0xff]
    %v848 = vld [vmem:[%s5 + $0x18] sm:$0xff]
    %v849 = vld [vmem:[%s5 + $0x20] sm:$0xff]
    %v850 = vld [vmem:[%s5 + $0x28] sm:$0xff]
    %v851 = vld [vmem:[%s5 + $0x30] sm:$0xff]
    %v852 = vld [vmem:[%s5 + $0x38] sm:$0xff]
    %vm853 = vcmask 31744
    %v855 = vsel %vm853, %v845, 0
    %v858 = vsel %vm853, %v846, 0
    %v861 = vsel %vm853, %v847, 0
    %v864 = vsel %vm853, %v848, 0
    %v867 = vsel %vm853, %v849, 0
    %v870 = vsel %vm853, %v850, 0
    %v873 = vsel %vm853, %v851, 0
    %v876 = vsel %vm853, %v852, 0
    %vm878 = vcmask 1043456
    %v880 = vsel %vm878, %v699, 0
    %v883 = vsel %vm878, %v701, 0
    %v886 = vsel %vm878, %v841, 0
    %v889 = vsel %vm878, %v843, 0
    %891 = vmatprep.subr.mxu0 %v883
    %892 = vmatpush1.msra.mxu0 %v880
    %893 = vmatprep.subr.mxu0 0.0
    %894 = vmatpush1.msra.mxu0 0.0
    %895 = vmatprep.subr.mxu0 0.0
    %896 = vmatpush1.msra.mxu0 0.0
    %897 = vmatprep.subr.mxu0 0.0
    %898 = vmatpush1.msra.mxu0 0.0
    %899 = vmatprep.subr.mxu0 0.0
    %900 = vmatpush1.msra.mxu0 0.0
    %901 = vmatprep.subr.mxu0 0.0
    %902 = vmatpush1.msra.mxu0 0.0
    %903 = vmatprep.subr.mxu0 0.0
    %904 = vmatpush1.msra.mxu0 0.0
    %905 = vmatprep.subr.mxu0 0.0
    %906 = vmatpush1.msra.mxu0 0.0
    %907 = vmatprep.subr.mxu0 0.0
    %908 = vmatpush1.msra.mxu0 0.0
    %909 = vmatprep.subr.mxu0 0.0
    %910 = vmatpush1.msra.mxu0 0.0
    %911 = vmatprep.subr.mxu0 0.0
    %912 = vmatpush1.msra.mxu0 0.0
    %913 = vmatprep.subr.mxu0 0.0
    %914 = vmatpush1.msra.mxu0 0.0
    %915 = vmatprep.subr.mxu0 0.0
    %916 = vmatpush1.msra.mxu0 0.0
    %917 = vmatprep.subr.mxu0 0.0
    %918 = vmatpush1.msra.mxu0 0.0
    %919 = vmatprep.subr.mxu0 0.0
    %920 = vmatpush1.msra.mxu0 0.0
    %921 = vmatprep.subr.mxu0 0.0
    %922 = vmatpush1.msra.mxu0 0.0
    %923 = vmatprep.subr.mxu0 0.0
    %924 = vmatpush1.msra.mxu0 0.0
    %925 = vmatprep.subr.mxu0 0.0
    %926 = vmatpush1.msra.mxu0 0.0
    %927 = vmatprep.subr.mxu0 0.0
    %928 = vmatpush1.msra.mxu0 0.0
    %929 = vmatprep.subr.mxu0 0.0
    %930 = vmatpush1.msra.mxu0 0.0
    %931 = vmatprep.subr.mxu0 0.0
    %932 = vmatpush1.msra.mxu0 0.0
    %933 = vmatprep.subr.mxu0 0.0
    %934 = vmatpush1.msra.mxu0 0.0
    %935 = vmatprep.subr.mxu0 0.0
    %936 = vmatpush1.msra.mxu0 0.0
    %937 = vmatprep.subr.mxu0 0.0
    %938 = vmatpush1.msra.mxu0 0.0
    %939 = vmatprep.subr.mxu0 0.0
    %940 = vmatpush1.msra.mxu0 0.0
    %941 = vmatprep.subr.mxu0 0.0
    %942 = vmatpush1.msra.mxu0 0.0
    %943 = vmatprep.subr.mxu0 0.0
    %944 = vmatpush1.msra.mxu0 0.0
    %945 = vmatprep.subr.mxu0 0.0
    %946 = vmatpush1.msra.mxu0 0.0
    %947 = vmatprep.subr.mxu0 0.0
    %948 = vmatpush1.msra.mxu0 0.0
    %949 = vmatprep.subr.mxu0 0.0
    %950 = vmatpush1.msra.mxu0 0.0
    %951 = vmatprep.subr.mxu0 0.0
    %952 = vmatpush1.msra.mxu0 0.0
    %953 = vmatprep.subr.mxu0 0.0
    %954 = vmatpush1.msra.mxu0 0.0
    %955 = vmatprep.mubr.f32.mxu0 0.0
    %956 = vmatmul.mubr.f32.gmra.mrb[0].mxu0 %v855
    %v957 = vpop.f32.mrb[0].mxu0
    %v958 = vadd.f32 0.0, %v957
    %v959 = vpop.f32.mrb[0].mxu0
    %v960 = vadd.f32 0.0, %v959
    %961 = vmatprep.mubr.f32.mxu0 0.0
    %962 = vmatmul.mubr.f32.gmra.mrb[0].mxu0 %v858
    %v963 = vpop.f32.mrb[0].mxu0
    %v964 = vadd.f32 0.0, %v963
    %v965 = vpop.f32.mrb[0].mxu0
    %v966 = vadd.f32 0.0, %v965
    %967 = vmatprep.mubr.f32.mxu0 0.0
    %968 = vmatmul.mubr.f32.gmra.mrb[0].mxu0 %v861
    %v969 = vpop.f32.mrb[0].mxu0
    %v970 = vadd.f32 0.0, %v969
    %v971 = vpop.f32.mrb[0].mxu0
    %v972 = vadd.f32 0.0, %v971
    %973 = vmatprep.mubr.f32.mxu0 0.0
    %974 = vmatmul.mubr.f32.gmra.mrb[0].mxu0 %v864
    %v975 = vpop.f32.mrb[0].mxu0
    %v976 = vadd.f32 0.0, %v975
    %v977 = vpop.f32.mrb[0].mxu0
    %v978 = vadd.f32 0.0, %v977
    %979 = vmatprep.mubr.f32.mxu0 0.0
    %980 = vmatmul.mubr.f32.gmra.mrb[0].mxu0 %v867
    %v981 = vpop.f32.mrb[0].mxu0
    %v982 = vadd.f32 0.0, %v981
    %v983 = vpop.f32.mrb[0].mxu0
    %v984 = vadd.f32 0.0, %v983
    %985 = vmatprep.mubr.f32.mxu0 0.0
    %986 = vmatmul.mubr.f32.gmra.mrb[0].mxu0 %v870
    %v987 = vpop.f32.mrb[0].mxu0
    %v988 = vadd.f32 0.0, %v987
    %v989 = vpop.f32.mrb[0].mxu0
    %v990 = vadd.f32 0.0, %v989
    %991 = vmatprep.mubr.f32.mxu0 0.0
    %992 = vmatmul.mubr.f32.gmra.mrb[0].mxu0 %v873
    %v993 = vpop.f32.mrb[0].mxu0
    %v994 = vadd.f32 0.0, %v993
    %v995 = vpop.f32.mrb[0].mxu0
    %v996 = vadd.f32 0.0, %v995
    %997 = vmatprep.mubr.f32.mxu0 0.0
    %998 = vmatmul.mubr.f32.gmra.mrb[0].mxu0 %v876
    %v999 = vpop.f32.mrb[0].mxu0
    %v1000 = vadd.f32 0.0, %v999
    %v1001 = vpop.f32.mrb[0].mxu0
    %v1002 = vadd.f32 0.0, %v1001
    %1003 = vdwg.mxu0
    %1004 = vmatprep.subr.mxu0 %v889
    %1005 = vmatpush1.msra.mxu0 %v886
    %1006 = vmatprep.subr.mxu0 0.0
    %1007 = vmatpush1.msra.mxu0 0.0
    %1008 = vmatprep.subr.mxu0 0.0
    %1009 = vmatpush1.msra.mxu0 0.0
    %1010 = vmatprep.subr.mxu0 0.0
    %1011 = vmatpush1.msra.mxu0 0.0
    %1012 = vmatprep.subr.mxu0 0.0
    %1013 = vmatpush1.msra.mxu0 0.0
    %1014 = vmatprep.subr.mxu0 0.0
    %1015 = vmatpush1.msra.mxu0 0.0
    %1016 = vmatprep.subr.mxu0 0.0
    %1017 = vmatpush1.msra.mxu0 0.0
    %1018 = vmatprep.subr.mxu0 0.0
    %1019 = vmatpush1.msra.mxu0 0.0
    %1020 = vmatprep.subr.mxu0 0.0
    %1021 = vmatpush1.msra.mxu0 0.0
    %1022 = vmatprep.subr.mxu0 0.0
    %1023 = vmatpush1.msra.mxu0 0.0
    %1024 = vmatprep.subr.mxu0 0.0
    %1025 = vmatpush1.msra.mxu0 0.0
    %1026 = vmatprep.subr.mxu0 0.0
    %1027 = vmatpush1.msra.mxu0 0.0
    %1028 = vmatprep.subr.mxu0 0.0
    %1029 = vmatpush1.msra.mxu0 0.0
    %1030 = vmatprep.subr.mxu0 0.0
    %1031 = vmatpush1.msra.mxu0 0.0
    %1032 = vmatprep.subr.mxu0 0.0
    %1033 = vmatpush1.msra.mxu0 0.0
    %1034 = vmatprep.subr.mxu0 0.0
    %1035 = vmatpush1.msra.mxu0 0.0
    %1036 = vmatprep.subr.mxu0 0.0
    %1037 = vmatpush1.msra.mxu0 0.0
    %1038 = vmatprep.subr.mxu0 0.0
    %1039 = vmatpush1.msra.mxu0 0.0
    %1040 = vmatprep.subr.mxu0 0.0
    %1041 = vmatpush1.msra.mxu0 0.0
    %1042 = vmatprep.subr.mxu0 0.0
    %1043 = vmatpush1.msra.mxu0 0.0
    %1044 = vmatprep.subr.mxu0 0.0
    %1045 = vmatpush1.msra.mxu0 0.0
    %1046 = vmatprep.subr.mxu0 0.0
    %1047 = vmatpush1.msra.mxu0 0.0
    %1048 = vmatprep.subr.mxu0 0.0
    %1049 = vmatpush1.msra.mxu0 0.0
    %1050 = vmatprep.subr.mxu0 0.0
    %1051 = vmatpush1.msra.mxu0 0.0
    %1052 = vmatprep.subr.mxu0 0.0
    %1053 = vmatpush1.msra.mxu0 0.0
    %1054 = vmatprep.subr.mxu0 0.0
    %1055 = vmatpush1.msra.mxu0 0.0
    %1056 = vmatprep.subr.mxu0 0.0
    %1057 = vmatpush1.msra.mxu0 0.0
    %1058 = vmatprep.subr.mxu0 0.0
    %1059 = vmatpush1.msra.mxu0 0.0
    %1060 = vmatprep.subr.mxu0 0.0
    %1061 = vmatpush1.msra.mxu0 0.0
    %1062 = vmatprep.subr.mxu0 0.0
    %1063 = vmatpush1.msra.mxu0 0.0
    %1064 = vmatprep.subr.mxu0 0.0
    %1065 = vmatpush1.msra.mxu0 0.0
    %1066 = vmatprep.subr.mxu0 0.0
    %1067 = vmatpush1.msra.mxu0 0.0
    %1068 = vmatprep.mubr.f32.mxu0 0.0
    %1069 = vmatmul.mubr.f32.gmra.mrb[0].mxu0 %v855
    %v1070 = vpop.f32.mrb[0].mxu0
    %v1071 = vadd.f32 0.0, %v1070
    %v1072 = vpop.f32.mrb[0].mxu0
    %v1073 = vadd.f32 0.0, %v1072
    %1074 = vmatprep.mubr.f32.mxu0 0.0
    %1075 = vmatmul.mubr.f32.gmra.mrb[0].mxu0 %v858
    %v1076 = vpop.f32.mrb[0].mxu0
    %v1077 = vadd.f32 0.0, %v1076
    %v1078 = vpop.f32.mrb[0].mxu0
    %v1079 = vadd.f32 0.0, %v1078
    %1080 = vmatprep.mubr.f32.mxu0 0.0
    %1081 = vmatmul.mubr.f32.gmra.mrb[0].mxu0 %v861
    %v1082 = vpop.f32.mrb[0].mxu0
    %v1083 = vadd.f32 0.0, %v1082
    %v1084 = vpop.f32.mrb[0].mxu0
    %v1085 = vadd.f32 0.0, %v1084
    %1086 = vmatprep.mubr.f32.mxu0 0.0
    %1087 = vmatmul.mubr.f32.gmra.mrb[0].mxu0 %v864
    %v1088 = vpop.f32.mrb[0].mxu0
    %v1089 = vadd.f32 0.0, %v1088
    %v1090 = vpop.f32.mrb[0].mxu0
    %v1091 = vadd.f32 0.0, %v1090
    %1092 = vmatprep.mubr.f32.mxu0 0.0
    %1093 = vmatmul.mubr.f32.gmra.mrb[0].mxu0 %v867
    %v1094 = vpop.f32.mrb[0].mxu0
    %v1095 = vadd.f32 0.0, %v1094
    %v1096 = vpop.f32.mrb[0].mxu0
    %v1097 = vadd.f32 0.0, %v1096
    %1098 = vmatprep.mubr.f32.mxu0 0.0
    %1099 = vmatmul.mubr.f32.gmra.mrb[0].mxu0 %v870
    %v1100 = vpop.f32.mrb[0].mxu0
    %v1101 = vadd.f32 0.0, %v1100
    %v1102 = vpop.f32.mrb[0].mxu0
    %v1103 = vadd.f32 0.0, %v1102
    %1104 = vmatprep.mubr.f32.mxu0 0.0
    %1105 = vmatmul.mubr.f32.gmra.mrb[0].mxu0 %v873
    %v1106 = vpop.f32.mrb[0].mxu0
    %v1107 = vadd.f32 0.0, %v1106
    %v1108 = vpop.f32.mrb[0].mxu0
    %v1109 = vadd.f32 0.0, %v1108
    %1110 = vmatprep.mubr.f32.mxu0 0.0
    %1111 = vmatmul.mubr.f32.gmra.mrb[0].mxu0 %v876
    %v1112 = vpop.f32.mrb[0].mxu0
    %v1113 = vadd.f32 0.0, %v1112
    %v1114 = vpop.f32.mrb[0].mxu0
    %v1115 = vadd.f32 0.0, %v1114
    %1116 = vdwg.mxu0
    %v1117 = vadd.f32 %v267, %v958
    %v1118 = vadd.f32 %v268, %v960
    %v1119 = vadd.f32 %v269, %v1071
    %v1120 = vadd.f32 %v270, %v1073
    %v1121 = vadd.f32 %v271, %v964
    %v1122 = vadd.f32 %v272, %v966
    %v1123 = vadd.f32 %v273, %v1077
    %v1124 = vadd.f32 %v274, %v1079
    %v1125 = vadd.f32 %v275, %v970
    %v1126 = vadd.f32 %v276, %v972
    %v1127 = vadd.f32 %v277, %v1083
    %v1128 = vadd.f32 %v278, %v1085
    %v1129 = vadd.f32 %v279, %v976
    %v1130 = vadd.f32 %v280, %v978
    %v1131 = vadd.f32 %v281, %v1089
    %v1132 = vadd.f32 %v282, %v1091
    %v1133 = vadd.f32 %v283, %v982
    %v1134 = vadd.f32 %v284, %v984
    %v1135 = vadd.f32 %v285, %v1095
    %v1136 = vadd.f32 %v286, %v1097
    %v1137 = vadd.f32 %v287, %v988
    %v1138 = vadd.f32 %v288, %v990
    %v1139 = vadd.f32 %v289, %v1101
    %v1140 = vadd.f32 %v290, %v1103
    %v1141 = vadd.f32 %v291, %v994
    %v1142 = vadd.f32 %v292, %v996
    %v1143 = vadd.f32 %v293, %v1107
    %v1144 = vadd.f32 %v294, %v1109
    %v1145 = vadd.f32 %v295, %v1000
    %v1146 = vadd.f32 %v296, %v1002
    %v1147 = vadd.f32 %v297, %v1113
    %v1148 = vadd.f32 %v298, %v1115
    %s1149 = scalar_lea.vmem [#allocation8], 2048
    %v1150 = vld [vmem:[%s1149] sm:$0xff]
    %v1151 = vld [vmem:[%s1149 + $0x8] sm:$0xff]
    %v1152 = vld [vmem:[%s1149 + $0x10] sm:$0xff]
    %v1153 = vld [vmem:[%s1149 + $0x18] sm:$0xff]
    %v1154 = vld [vmem:[%s1149 + $0x20] sm:$0xff]
    %v1155 = vld [vmem:[%s1149 + $0x28] sm:$0xff]
    %v1156 = vld [vmem:[%s1149 + $0x30] sm:$0xff]
    %v1157 = vld [vmem:[%s1149 + $0x38] sm:$0xff]
    %v1158 = vld [vmem:[%s1149 + $0x40] sm:$0xff]
    %v1159 = vld [vmem:[%s1149 + $0x48] sm:$0xff]
    %v1160 = vld [vmem:[%s1149 + $0x50] sm:$0xff]
    %v1161 = vld [vmem:[%s1149 + $0x58] sm:$0xff]
    %v1162 = vld [vmem:[%s1149 + $0x60] sm:$0xff]
    %v1163 = vld [vmem:[%s1149 + $0x68] sm:$0xff]
    %v1164 = vld [vmem:[%s1149 + $0x70] sm:$0xff]
    %v1165 = vld [vmem:[%s1149 + $0x78] sm:$0xff]
    %v1166 = vld [vmem:[%s1149 + $0x80] sm:$0xff]
    %v1167 = vld [vmem:[%s1149 + $0x88] sm:$0xff]
    %v1168 = vld [vmem:[%s1149 + $0x90] sm:$0xff]
    %v1169 = vld [vmem:[%s1149 + $0x98] sm:$0xff]
    %v1170 = vld [vmem:[%s1149 + $0xa0] sm:$0xff]
    %v1171 = vld [vmem:[%s1149 + $0xa8] sm:$0xff]
    %v1172 = vld [vmem:[%s1149 + $0xb0] sm:$0xff]
    %v1173 = vld [vmem:[%s1149 + $0xb8] sm:$0xff]
    %v1174 = vld [vmem:[%s1149 + $0xc0] sm:$0xff]
    %v1175 = vld [vmem:[%s1149 + $0xc8] sm:$0xff]
    %v1176 = vld [vmem:[%s1149 + $0xd0] sm:$0xff]
    %v1177 = vld [vmem:[%s1149 + $0xd8] sm:$0xff]
    %v1178 = vld [vmem:[%s1149 + $0xe0] sm:$0xff]
    %v1179 = vld [vmem:[%s1149 + $0xe8] sm:$0xff]
    %v1180 = vld [vmem:[%s1149 + $0xf0] sm:$0xff]
    %v1181 = vld [vmem:[%s1149 + $0xf8] sm:$0xff]
    %v1182 = vld [vmem:[%s1149 + $0x100] sm:$0xff]
    %v1183 = vld [vmem:[%s1149 + $0x108] sm:$0xff]
    %v1184 = vld [vmem:[%s1149 + $0x110] sm:$0xff]
    %v1185 = vld [vmem:[%s1149 + $0x118] sm:$0xff]
    %v1186 = vld [vmem:[%s1149 + $0x120] sm:$0xff]
    %v1187 = vld [vmem:[%s1149 + $0x128] sm:$0xff]
    %v1188 = vld [vmem:[%s1149 + $0x130] sm:$0xff]
    %v1189 = vld [vmem:[%s1149 + $0x138] sm:$0xff]
    %v1190 = vld [vmem:[%s1149 + $0x140] sm:$0xff]
    %v1191 = vld [vmem:[%s1149 + $0x148] sm:$0xff]
    %v1192 = vld [vmem:[%s1149 + $0x150] sm:$0xff]
    %v1193 = vld [vmem:[%s1149 + $0x158] sm:$0xff]
    %v1194 = vld [vmem:[%s1149 + $0x160] sm:$0xff]
    %v1195 = vld [vmem:[%s1149 + $0x168] sm:$0xff]
    %v1196 = vld [vmem:[%s1149 + $0x170] sm:$0xff]
    %v1197 = vld [vmem:[%s1149 + $0x178] sm:$0xff]
    %v1198 = vld [vmem:[%s1149 + $0x180] sm:$0xff]
    %v1199 = vld [vmem:[%s1149 + $0x188] sm:$0xff]
    %v1200 = vld [vmem:[%s1149 + $0x190] sm:$0xff]
    %v1201 = vld [vmem:[%s1149 + $0x198] sm:$0xff]
    %v1202 = vld [vmem:[%s1149 + $0x1a0] sm:$0xff]
    %v1203 = vld [vmem:[%s1149 + $0x1a8] sm:$0xff]
    %v1204 = vld [vmem:[%s1149 + $0x1b0] sm:$0xff]
    %v1205 = vld [vmem:[%s1149 + $0x1b8] sm:$0xff]
    %v1206 = vld [vmem:[%s1149 + $0x1c0] sm:$0xff]
    %v1207 = vld [vmem:[%s1149 + $0x1c8] sm:$0xff]
    %v1208 = vld [vmem:[%s1149 + $0x1d0] sm:$0xff]
    %v1209 = vld [vmem:[%s1149 + $0x1d8] sm:$0xff]
    %v1210 = vld [vmem:[%s1149 + $0x1e0] sm:$0xff]
    %v1211 = vld [vmem:[%s1149 + $0x1e8] sm:$0xff]
    %v1212 = vld [vmem:[%s1149 + $0x1f0] sm:$0xff]
    %v1213 = vld [vmem:[%s1149 + $0x1f8] sm:$0xff]
    %v1214 = vld [vmem:[%s1149 + $0x200] sm:$0xff]
    %v1215 = vld [vmem:[%s1149 + $0x208] sm:$0xff]
    %v1216 = vld [vmem:[%s1149 + $0x210] sm:$0xff]
    %v1217 = vld [vmem:[%s1149 + $0x218] sm:$0xff]
    %v1218 = vld [vmem:[%s1149 + $0x220] sm:$0xff]
    %v1219 = vld [vmem:[%s1149 + $0x228] sm:$0xff]
    %v1220 = vld [vmem:[%s1149 + $0x230] sm:$0xff]
    %v1221 = vld [vmem:[%s1149 + $0x238] sm:$0xff]
    %v1222 = vld [vmem:[%s1149 + $0x240] sm:$0xff]
    %v1223 = vld [vmem:[%s1149 + $0x248] sm:$0xff]
    %v1224 = vld [vmem:[%s1149 + $0x250] sm:$0xff]
    %v1225 = vld [vmem:[%s1149 + $0x258] sm:$0xff]
    %v1226 = vld [vmem:[%s1149 + $0x260] sm:$0xff]
    %v1227 = vld [vmem:[%s1149 + $0x268] sm:$0xff]
    %v1228 = vld [vmem:[%s1149 + $0x270] sm:$0xff]
    %v1229 = vld [vmem:[%s1149 + $0x278] sm:$0xff]
    %v1230 = vld [vmem:[%s1149 + $0x280] sm:$0xff]
    %v1231 = vld [vmem:[%s1149 + $0x288] sm:$0xff]
    %v1232 = vld [vmem:[%s1149 + $0x290] sm:$0xff]
    %v1233 = vld [vmem:[%s1149 + $0x298] sm:$0xff]
    %v1234 = vld [vmem:[%s1149 + $0x2a0] sm:$0xff]
    %v1235 = vld [vmem:[%s1149 + $0x2a8] sm:$0xff]
    %v1236 = vld [vmem:[%s1149 + $0x2b0] sm:$0xff]
    %v1237 = vld [vmem:[%s1149 + $0x2b8] sm:$0xff]
    %v1238 = vld [vmem:[%s1149 + $0x2c0] sm:$0xff]
    %v1239 = vld [vmem:[%s1149 + $0x2c8] sm:$0xff]
    %v1240 = vld [vmem:[%s1149 + $0x2d0] sm:$0xff]
    %v1241 = vld [vmem:[%s1149 + $0x2d8] sm:$0xff]
    %v1242 = vld [vmem:[%s1149 + $0x2e0] sm:$0xff]
    %v1243 = vld [vmem:[%s1149 + $0x2e8] sm:$0xff]
    %v1244 = vld [vmem:[%s1149 + $0x2f0] sm:$0xff]
    %v1245 = vld [vmem:[%s1149 + $0x2f8] sm:$0xff]
    %v1246 = vld [vmem:[%s1149 + $0x300] sm:$0xff]
    %v1247 = vld [vmem:[%s1149 + $0x308] sm:$0xff]
    %v1248 = vld [vmem:[%s1149 + $0x310] sm:$0xff]
    %v1249 = vld [vmem:[%s1149 + $0x318] sm:$0xff]
    %v1250 = vld [vmem:[%s1149 + $0x320] sm:$0xff]
    %v1251 = vld [vmem:[%s1149 + $0x328] sm:$0xff]
    %v1252 = vld [vmem:[%s1149 + $0x330] sm:$0xff]
    %v1253 = vld [vmem:[%s1149 + $0x338] sm:$0xff]
    %v1254 = vld [vmem:[%s1149 + $0x340] sm:$0xff]
    %v1255 = vld [vmem:[%s1149 + $0x348] sm:$0xff]
    %v1256 = vld [vmem:[%s1149 + $0x350] sm:$0xff]
    %v1257 = vld [vmem:[%s1149 + $0x358] sm:$0xff]
    %v1258 = vld [vmem:[%s1149 + $0x360] sm:$0xff]
    %v1259 = vld [vmem:[%s1149 + $0x368] sm:$0xff]
    %v1260 = vld [vmem:[%s1149 + $0x370] sm:$0xff]
    %v1261 = vld [vmem:[%s1149 + $0x378] sm:$0xff]
    %v1262 = vld [vmem:[%s1149 + $0x380] sm:$0xff]
    %v1263 = vld [vmem:[%s1149 + $0x388] sm:$0xff]
    %v1264 = vld [vmem:[%s1149 + $0x390] sm:$0xff]
    %v1265 = vld [vmem:[%s1149 + $0x398] sm:$0xff]
    %v1266 = vld [vmem:[%s1149 + $0x3a0] sm:$0xff]
    %v1267 = vld [vmem:[%s1149 + $0x3a8] sm:$0xff]
    %v1268 = vld [vmem:[%s1149 + $0x3b0] sm:$0xff]
    %v1269 = vld [vmem:[%s1149 + $0x3b8] sm:$0xff]
    %v1270 = vld [vmem:[%s1149 + $0x3c0] sm:$0xff]
    %v1271 = vld [vmem:[%s1149 + $0x3c8] sm:$0xff]
    %v1272 = vld [vmem:[%s1149 + $0x3d0] sm:$0xff]
    %v1273 = vld [vmem:[%s1149 + $0x3d8] sm:$0xff]
    %v1274 = vld [vmem:[%s1149 + $0x3e0] sm:$0xff]
    %v1275 = vld [vmem:[%s1149 + $0x3e8] sm:$0xff]
    %v1276 = vld [vmem:[%s1149 + $0x3f0] sm:$0xff]
    %v1277 = vld [vmem:[%s1149 + $0x3f8] sm:$0xff]
    %v1278 = vld [vmem:[%s1149 + $0x400] sm:$0xff]
    %v1279 = vld [vmem:[%s1149 + $0x408] sm:$0xff]
    %v1280 = vld [vmem:[%s1149 + $0x410] sm:$0xff]
    %v1281 = vld [vmem:[%s1149 + $0x418] sm:$0xff]
    %v1282 = vld [vmem:[%s1149 + $0x420] sm:$0xff]
    %v1283 = vld [vmem:[%s1149 + $0x428] sm:$0xff]
    %v1284 = vld [vmem:[%s1149 + $0x430] sm:$0xff]
    %v1285 = vld [vmem:[%s1149 + $0x438] sm:$0xff]
    %v1286 = vld [vmem:[%s1149 + $0x440] sm:$0xff]
    %v1287 = vld [vmem:[%s1149 + $0x448] sm:$0xff]
    %v1288 = vld [vmem:[%s1149 + $0x450] sm:$0xff]
    %v1289 = vld [vmem:[%s1149 + $0x458] sm:$0xff]
    %v1290 = vld [vmem:[%s1149 + $0x460] sm:$0xff]
    %v1291 = vld [vmem:[%s1149 + $0x468] sm:$0xff]
    %v1292 = vld [vmem:[%s1149 + $0x470] sm:$0xff]
    %v1293 = vld [vmem:[%s1149 + $0x478] sm:$0xff]
    %v1294 = vld [vmem:[%s1149 + $0x480] sm:$0xff]
    %v1295 = vld [vmem:[%s1149 + $0x488] sm:$0xff]
    %v1296 = vld [vmem:[%s1149 + $0x490] sm:$0xff]
    %v1297 = vld [vmem:[%s1149 + $0x498] sm:$0xff]
    %v1298 = vld [vmem:[%s1149 + $0x4a0] sm:$0xff]
    %v1299 = vld [vmem:[%s1149 + $0x4a8] sm:$0xff]
    %v1300 = vld [vmem:[%s1149 + $0x4b0] sm:$0xff]
    %v1301 = vld [vmem:[%s1149 + $0x4b8] sm:$0xff]
    %v1302 = vld [vmem:[%s1149 + $0x4c0] sm:$0xff]
    %v1303 = vld [vmem:[%s1149 + $0x4c8] sm:$0xff]
    %v1304 = vld [vmem:[%s1149 + $0x4d0] sm:$0xff]
    %v1305 = vld [vmem:[%s1149 + $0x4d8] sm:$0xff]
    %v1306 = vld [vmem:[%s1149 + $0x4e0] sm:$0xff]
    %v1307 = vld [vmem:[%s1149 + $0x4e8] sm:$0xff]
    %v1308 = vld [vmem:[%s1149 + $0x4f0] sm:$0xff]
    %v1309 = vld [vmem:[%s1149 + $0x4f8] sm:$0xff]
    %v1310 = vld [vmem:[%s1149 + $0x500] sm:$0xff]
    %v1311 = vld [vmem:[%s1149 + $0x508] sm:$0xff]
    %v1312 = vld [vmem:[%s1149 + $0x510] sm:$0xff]
    %v1313 = vld [vmem:[%s1149 + $0x518] sm:$0xff]
    %v1314 = vld [vmem:[%s1149 + $0x520] sm:$0xff]
    %v1315 = vld [vmem:[%s1149 + $0x528] sm:$0xff]
    %v1316 = vld [vmem:[%s1149 + $0x530] sm:$0xff]
    %v1317 = vld [vmem:[%s1149 + $0x538] sm:$0xff]
    %v1318 = vld [vmem:[%s1149 + $0x540] sm:$0xff]
    %v1319 = vld [vmem:[%s1149 + $0x548] sm:$0xff]
    %v1320 = vld [vmem:[%s1149 + $0x550] sm:$0xff]
    %v1321 = vld [vmem:[%s1149 + $0x558] sm:$0xff]
    %v1322 = vld [vmem:[%s1149 + $0x560] sm:$0xff]
    %v1323 = vld [vmem:[%s1149 + $0x568] sm:$0xff]
    %v1324 = vld [vmem:[%s1149 + $0x570] sm:$0xff]
    %v1325 = vld [vmem:[%s1149 + $0x578] sm:$0xff]
    %v1326 = vld [vmem:[%s1149 + $0x580] sm:$0xff]
    %v1327 = vld [vmem:[%s1149 + $0x588] sm:$0xff]
    %v1328 = vld [vmem:[%s1149 + $0x590] sm:$0xff]
    %v1329 = vld [vmem:[%s1149 + $0x598] sm:$0xff]
    %v1330 = vld [vmem:[%s1149 + $0x5a0] sm:$0xff]
    %v1331 = vld [vmem:[%s1149 + $0x5a8] sm:$0xff]
    %v1332 = vld [vmem:[%s1149 + $0x5b0] sm:$0xff]
    %v1333 = vld [vmem:[%s1149 + $0x5b8] sm:$0xff]
    %v1334 = vld [vmem:[%s1149 + $0x5c0] sm:$0xff]
    %v1335 = vld [vmem:[%s1149 + $0x5c8] sm:$0xff]
    %v1336 = vld [vmem:[%s1149 + $0x5d0] sm:$0xff]
    %v1337 = vld [vmem:[%s1149 + $0x5d8] sm:$0xff]
    %v1338 = vld [vmem:[%s1149 + $0x5e0] sm:$0xff]
    %v1339 = vld [vmem:[%s1149 + $0x5e8] sm:$0xff]
    %v1340 = vld [vmem:[%s1149 + $0x5f0] sm:$0xff]
    %v1341 = vld [vmem:[%s1149 + $0x5f8] sm:$0xff]
    %v1342 = vld [vmem:[%s1149 + $0x600] sm:$0xff]
    %v1343 = vld [vmem:[%s1149 + $0x608] sm:$0xff]
    %v1344 = vld [vmem:[%s1149 + $0x610] sm:$0xff]
    %v1345 = vld [vmem:[%s1149 + $0x618] sm:$0xff]
    %v1346 = vld [vmem:[%s1149 + $0x620] sm:$0xff]
    %v1347 = vld [vmem:[%s1149 + $0x628] sm:$0xff]
    %v1348 = vld [vmem:[%s1149 + $0x630] sm:$0xff]
    %v1349 = vld [vmem:[%s1149 + $0x638] sm:$0xff]
    %v1350 = vld [vmem:[%s1149 + $0x640] sm:$0xff]
    %v1351 = vld [vmem:[%s1149 + $0x648] sm:$0xff]
    %v1352 = vld [vmem:[%s1149 + $0x650] sm:$0xff]
    %v1353 = vld [vmem:[%s1149 + $0x658] sm:$0xff]
    %v1354 = vld [vmem:[%s1149 + $0x660] sm:$0xff]
    %v1355 = vld [vmem:[%s1149 + $0x668] sm:$0xff]
    %v1356 = vld [vmem:[%s1149 + $0x670] sm:$0xff]
    %v1357 = vld [vmem:[%s1149 + $0x678] sm:$0xff]
    %v1358 = vld [vmem:[%s1149 + $0x680] sm:$0xff]
    %v1359 = vld [vmem:[%s1149 + $0x688] sm:$0xff]
    %v1360 = vld [vmem:[%s1149 + $0x690] sm:$0xff]
    %v1361 = vld [vmem:[%s1149 + $0x698] sm:$0xff]
    %v1362 = vld [vmem:[%s1149 + $0x6a0] sm:$0xff]
    %v1363 = vld [vmem:[%s1149 + $0x6a8] sm:$0xff]
    %v1364 = vld [vmem:[%s1149 + $0x6b0] sm:$0xff]
    %v1365 = vld [vmem:[%s1149 + $0x6b8] sm:$0xff]
    %v1366 = vld [vmem:[%s1149 + $0x6c0] sm:$0xff]
    %v1367 = vld [vmem:[%s1149 + $0x6c8] sm:$0xff]
    %v1368 = vld [vmem:[%s1149 + $0x6d0] sm:$0xff]
    %v1369 = vld [vmem:[%s1149 + $0x6d8] sm:$0xff]
    %v1370 = vld [vmem:[%s1149 + $0x6e0] sm:$0xff]
    %v1371 = vld [vmem:[%s1149 + $0x6e8] sm:$0xff]
    %v1372 = vld [vmem:[%s1149 + $0x6f0] sm:$0xff]
    %v1373 = vld [vmem:[%s1149 + $0x6f8] sm:$0xff]
    %v1374 = vld [vmem:[%s1149 + $0x700] sm:$0xff]
    %v1375 = vld [vmem:[%s1149 + $0x708] sm:$0xff]
    %v1376 = vld [vmem:[%s1149 + $0x710] sm:$0xff]
    %v1377 = vld [vmem:[%s1149 + $0x718] sm:$0xff]
    %v1378 = vld [vmem:[%s1149 + $0x720] sm:$0xff]
    %v1379 = vld [vmem:[%s1149 + $0x728] sm:$0xff]
    %v1380 = vld [vmem:[%s1149 + $0x730] sm:$0xff]
    %v1381 = vld [vmem:[%s1149 + $0x738] sm:$0xff]
    %v1382 = vld [vmem:[%s1149 + $0x740] sm:$0xff]
    %v1383 = vld [vmem:[%s1149 + $0x748] sm:$0xff]
    %v1384 = vld [vmem:[%s1149 + $0x750] sm:$0xff]
    %v1385 = vld [vmem:[%s1149 + $0x758] sm:$0xff]
    %v1386 = vld [vmem:[%s1149 + $0x760] sm:$0xff]
    %v1387 = vld [vmem:[%s1149 + $0x768] sm:$0xff]
    %v1388 = vld [vmem:[%s1149 + $0x770] sm:$0xff]
    %v1389 = vld [vmem:[%s1149 + $0x778] sm:$0xff]
    %v1390 = vld [vmem:[%s1149 + $0x780] sm:$0xff]
    %v1391 = vld [vmem:[%s1149 + $0x788] sm:$0xff]
    %v1392 = vld [vmem:[%s1149 + $0x790] sm:$0xff]
    %v1393 = vld [vmem:[%s1149 + $0x798] sm:$0xff]
    %v1394 = vld [vmem:[%s1149 + $0x7a0] sm:$0xff]
    %v1395 = vld [vmem:[%s1149 + $0x7a8] sm:$0xff]
    %v1396 = vld [vmem:[%s1149 + $0x7b0] sm:$0xff]
    %v1397 = vld [vmem:[%s1149 + $0x7b8] sm:$0xff]
    %v1398 = vld [vmem:[%s1149 + $0x7c0] sm:$0xff]
    %v1399 = vld [vmem:[%s1149 + $0x7c8] sm:$0xff]
    %v1400 = vld [vmem:[%s1149 + $0x7d0] sm:$0xff]
    %v1401 = vld [vmem:[%s1149 + $0x7d8] sm:$0xff]
    %v1402 = vld [vmem:[%s1149 + $0x7e0] sm:$0xff]
    %v1403 = vld [vmem:[%s1149 + $0x7e8] sm:$0xff]
    %v1404 = vld [vmem:[%s1149 + $0x7f0] sm:$0xff]
    %v1405 = vld [vmem:[%s1149 + $0x7f8] sm:$0xff]
    %1406 = vmatprep.subr.mxu0 %v1151
    %1407 = vmatpush1.msra.mxu0 %v1150
    %1408 = vmatprep.subr.mxu0 %v1155
    %1409 = vmatpush1.msra.mxu0 %v1154
    %1410 = vmatprep.subr.mxu0 %v1159
    %1411 = vmatpush1.msra.mxu0 %v1158
    %1412 = vmatprep.subr.mxu0 %v1163
    %1413 = vmatpush1.msra.mxu0 %v1162
    %1414 = vmatprep.subr.mxu0 %v1167
    %1415 = vmatpush1.msra.mxu0 %v1166
    %1416 = vmatprep.subr.mxu0 %v1171
    %1417 = vmatpush1.msra.mxu0 %v1170
    %1418 = vmatprep.subr.mxu0 %v1175
    %1419 = vmatpush1.msra.mxu0 %v1174
    %1420 = vmatprep.subr.mxu0 %v1179
    %1421 = vmatpush1.msra.mxu0 %v1178
    %1422 = vmatprep.subr.mxu0 %v1183
    %1423 = vmatpush1.msra.mxu0 %v1182
    %1424 = vmatprep.subr.mxu0 %v1187
    %1425 = vmatpush1.msra.mxu0 %v1186
    %1426 = vmatprep.subr.mxu0 %v1191
    %1427 = vmatpush1.msra.mxu0 %v1190
    %1428 = vmatprep.subr.mxu0 %v1195
    %1429 = vmatpush1.msra.mxu0 %v1194
    %1430 = vmatprep.subr.mxu0 %v1199
    %1431 = vmatpush1.msra.mxu0 %v1198
    %1432 = vmatprep.subr.mxu0 %v1203
    %1433 = vmatpush1.msra.mxu0 %v1202
    %1434 = vmatprep.subr.mxu0 %v1207
    %1435 = vmatpush1.msra.mxu0 %v1206
    %1436 = vmatprep.subr.mxu0 %v1211
    %1437 = vmatpush1.msra.mxu0 %v1210
    %1438 = vmatprep.subr.mxu0 %v1215
    %1439 = vmatpush1.msra.mxu0 %v1214
    %1440 = vmatprep.subr.mxu0 %v1219
    %1441 = vmatpush1.msra.mxu0 %v1218
    %1442 = vmatprep.subr.mxu0 %v1223
    %1443 = vmatpush1.msra.mxu0 %v1222
    %1444 = vmatprep.subr.mxu0 %v1227
    %1445 = vmatpush1.msra.mxu0 %v1226
    %1446 = vmatprep.subr.mxu0 %v1231
    %1447 = vmatpush1.msra.mxu0 %v1230
    %1448 = vmatprep.subr.mxu0 %v1235
    %1449 = vmatpush1.msra.mxu0 %v1234
    %1450 = vmatprep.subr.mxu0 %v1239
    %1451 = vmatpush1.msra.mxu0 %v1238
    %1452 = vmatprep.subr.mxu0 %v1243
    %1453 = vmatpush1.msra.mxu0 %v1242
    %1454 = vmatprep.subr.mxu0 %v1247
    %1455 = vmatpush1.msra.mxu0 %v1246
    %1456 = vmatprep.subr.mxu0 %v1251
    %1457 = vmatpush1.msra.mxu0 %v1250
    %1458 = vmatprep.subr.mxu0 %v1255
    %1459 = vmatpush1.msra.mxu0 %v1254
    %1460 = vmatprep.subr.mxu0 %v1259
    %1461 = vmatpush1.msra.mxu0 %v1258
    %1462 = vmatprep.subr.mxu0 %v1263
    %1463 = vmatpush1.msra.mxu0 %v1262
    %1464 = vmatprep.subr.mxu0 %v1267
    %1465 = vmatpush1.msra.mxu0 %v1266
    %1466 = vmatprep.subr.mxu0 %v1271
    %1467 = vmatpush1.msra.mxu0 %v1270
    %1468 = vmatprep.subr.mxu0 %v1275
    %1469 = vmatpush1.msra.mxu0 %v1274
    %1470 = vmatprep.mubr.f32.mxu0 %v557
    %1471 = vmatmul.mubr.f32.gmra.mrb[0].mxu0 %v265
    %v1472 = vpop.f32.mrb[0].mxu0
    %v1473 = vadd.f32 0.0, %v1472
    %v1474 = vpop.f32.mrb[0].mxu0
    %v1475 = vadd.f32 0.0, %v1474
    %1476 = vdwg.mxu0
    %1477 = vmatprep.subr.mxu0 %v1279
    %1478 = vmatpush1.msra.mxu0 %v1278
    %1479 = vmatprep.subr.mxu0 %v1283
    %1480 = vmatpush1.msra.mxu0 %v1282
    %1481 = vmatprep.subr.mxu0 %v1287
    %1482 = vmatpush1.msra.mxu0 %v1286
    %1483 = vmatprep.subr.mxu0 %v1291
    %1484 = vmatpush1.msra.mxu0 %v1290
    %1485 = vmatprep.subr.mxu0 %v1295
    %1486 = vmatpush1.msra.mxu0 %v1294
    %1487 = vmatprep.subr.mxu0 %v1299
    %1488 = vmatpush1.msra.mxu0 %v1298
    %1489 = vmatprep.subr.mxu0 %v1303
    %1490 = vmatpush1.msra.mxu0 %v1302
    %1491 = vmatprep.subr.mxu0 %v1307
    %1492 = vmatpush1.msra.mxu0 %v1306
    %1493 = vmatprep.subr.mxu0 %v1311
    %1494 = vmatpush1.msra.mxu0 %v1310
    %1495 = vmatprep.subr.mxu0 %v1315
    %1496 = vmatpush1.msra.mxu0 %v1314
    %1497 = vmatprep.subr.mxu0 %v1319
    %1498 = vmatpush1.msra.mxu0 %v1318
    %1499 = vmatprep.subr.mxu0 %v1323
    %1500 = vmatpush1.msra.mxu0 %v1322
    %1501 = vmatprep.subr.mxu0 %v1327
    %1502 = vmatpush1.msra.mxu0 %v1326
    %1503 = vmatprep.subr.mxu0 %v1331
    %1504 = vmatpush1.msra.mxu0 %v1330
    %1505 = vmatprep.subr.mxu0 %v1335
    %1506 = vmatpush1.msra.mxu0 %v1334
    %1507 = vmatprep.subr.mxu0 %v1339
    %1508 = vmatpush1.msra.mxu0 %v1338
    %1509 = vmatprep.subr.mxu0 %v1343
    %1510 = vmatpush1.msra.mxu0 %v1342
    %1511 = vmatprep.subr.mxu0 %v1347
    %1512 = vmatpush1.msra.mxu0 %v1346
    %1513 = vmatprep.subr.mxu0 %v1351
    %1514 = vmatpush1.msra.mxu0 %v1350
    %1515 = vmatprep.subr.mxu0 %v1355
    %1516 = vmatpush1.msra.mxu0 %v1354
    %1517 = vmatprep.subr.mxu0 %v1359
    %1518 = vmatpush1.msra.mxu0 %v1358
    %1519 = vmatprep.subr.mxu0 %v1363
    %1520 = vmatpush1.msra.mxu0 %v1362
    %1521 = vmatprep.subr.mxu0 %v1367
    %1522 = vmatpush1.msra.mxu0 %v1366
    %1523 = vmatprep.subr.mxu0 %v1371
    %1524 = vmatpush1.msra.mxu0 %v1370
    %1525 = vmatprep.subr.mxu0 %v1375
    %1526 = vmatpush1.msra.mxu0 %v1374
    %1527 = vmatprep.subr.mxu0 %v1379
    %1528 = vmatpush1.msra.mxu0 %v1378
    %1529 = vmatprep.subr.mxu0 %v1383
    %1530 = vmatpush1.msra.mxu0 %v1382
    %1531 = vmatprep.subr.mxu0 %v1387
    %1532 = vmatpush1.msra.mxu0 %v1386
    %1533 = vmatprep.subr.mxu0 %v1391
    %1534 = vmatpush1.msra.mxu0 %v1390
    %1535 = vmatprep.subr.mxu0 %v1395
    %1536 = vmatpush1.msra.mxu0 %v1394
    %1537 = vmatprep.subr.mxu0 %v1399
    %1538 = vmatpush1.msra.mxu0 %v1398
    %1539 = vmatprep.subr.mxu0 %v1403
    %1540 = vmatpush1.msra.mxu0 %v1402
    %1541 = vmatprep.mubr.f32.mxu0 %v558
    %1542 = vmatmul.mubr.f32.gmra.mrb[0].mxu0 %v266
    %v1543 = vpop.f32.mrb[0].mxu0
    %v1544 = vadd.f32 %v1473, %v1543
    %v1545 = vpop.f32.mrb[0].mxu0
    %v1546 = vadd.f32 %v1475, %v1545
    %1547 = vdwg.mxu0
    %1548 = vmatprep.subr.mxu0 %v1153
    %1549 = vmatpush1.msra.mxu0 %v1152
    %1550 = vmatprep.subr.mxu0 %v1157
    %1551 = vmatpush1.msra.mxu0 %v1156
    %1552 = vmatprep.subr.mxu0 %v1161
    %1553 = vmatpush1.msra.mxu0 %v1160
    %1554 = vmatprep.subr.mxu0 %v1165
    %1555 = vmatpush1.msra.mxu0 %v1164
    %1556 = vmatprep.subr.mxu0 %v1169
    %1557 = vmatpush1.msra.mxu0 %v1168
    %1558 = vmatprep.subr.mxu0 %v1173
    %1559 = vmatpush1.msra.mxu0 %v1172
    %1560 = vmatprep.subr.mxu0 %v1177
    %1561 = vmatpush1.msra.mxu0 %v1176
    %1562 = vmatprep.subr.mxu0 %v1181
    %1563 = vmatpush1.msra.mxu0 %v1180
    %1564 = vmatprep.subr.mxu0 %v1185
    %1565 = vmatpush1.msra.mxu0 %v1184
    %1566 = vmatprep.subr.mxu0 %v1189
    %1567 = vmatpush1.msra.mxu0 %v1188
    %1568 = vmatprep.subr.mxu0 %v1193
    %1569 = vmatpush1.msra.mxu0 %v1192
    %1570 = vmatprep.subr.mxu0 %v1197
    %1571 = vmatpush1.msra.mxu0 %v1196
    %1572 = vmatprep.subr.mxu0 %v1201
    %1573 = vmatpush1.msra.mxu0 %v1200
    %1574 = vmatprep.subr.mxu0 %v1205
    %1575 = vmatpush1.msra.mxu0 %v1204
    %1576 = vmatprep.subr.mxu0 %v1209
    %1577 = vmatpush1.msra.mxu0 %v1208
    %1578 = vmatprep.subr.mxu0 %v1213
    %1579 = vmatpush1.msra.mxu0 %v1212
    %1580 = vmatprep.subr.mxu0 %v1217
    %1581 = vmatpush1.msra.mxu0 %v1216
    %1582 = vmatprep.subr.mxu0 %v1221
    %1583 = vmatpush1.msra.mxu0 %v1220
    %1584 = vmatprep.subr.mxu0 %v1225
    %1585 = vmatpush1.msra.mxu0 %v1224
    %1586 = vmatprep.subr.mxu0 %v1229
    %1587 = vmatpush1.msra.mxu0 %v1228
    %1588 = vmatprep.subr.mxu0 %v1233
    %1589 = vmatpush1.msra.mxu0 %v1232
    %1590 = vmatprep.subr.mxu0 %v1237
    %1591 = vmatpush1.msra.mxu0 %v1236
    %1592 = vmatprep.subr.mxu0 %v1241
    %1593 = vmatpush1.msra.mxu0 %v1240
    %1594 = vmatprep.subr.mxu0 %v1245
    %1595 = vmatpush1.msra.mxu0 %v1244
    %1596 = vmatprep.subr.mxu0 %v1249
    %1597 = vmatpush1.msra.mxu0 %v1248
    %1598 = vmatprep.subr.mxu0 %v1253
    %1599 = vmatpush1.msra.mxu0 %v1252
    %1600 = vmatprep.subr.mxu0 %v1257
    %1601 = vmatpush1.msra.mxu0 %v1256
    %1602 = vmatprep.subr.mxu0 %v1261
    %1603 = vmatpush1.msra.mxu0 %v1260
    %1604 = vmatprep.subr.mxu0 %v1265
    %1605 = vmatpush1.msra.mxu0 %v1264
    %1606 = vmatprep.subr.mxu0 %v1269
    %1607 = vmatpush1.msra.mxu0 %v1268
    %1608 = vmatprep.subr.mxu0 %v1273
    %1609 = vmatpush1.msra.mxu0 %v1272
    %1610 = vmatprep.subr.mxu0 %v1277
    %1611 = vmatpush1.msra.mxu0 %v1276
    %1612 = vmatprep.mubr.f32.mxu0 %v557
    %1613 = vmatmul.mubr.f32.gmra.mrb[0].mxu0 %v265
    %v1614 = vpop.f32.mrb[0].mxu0
    %v1615 = vadd.f32 0.0, %v1614
    %v1616 = vpop.f32.mrb[0].mxu0
    %v1617 = vadd.f32 0.0, %v1616
    %1618 = vdwg.mxu0
    %1619 = vmatprep.subr.mxu0 %v1281
    %1620 = vmatpush1.msra.mxu0 %v1280
    %1621 = vmatprep.subr.mxu0 %v1285
    %1622 = vmatpush1.msra.mxu0 %v1284
    %1623 = vmatprep.subr.mxu0 %v1289
    %1624 = vmatpush1.msra.mxu0 %v1288
    %1625 = vmatprep.subr.mxu0 %v1293
    %1626 = vmatpush1.msra.mxu0 %v1292
    %1627 = vmatprep.subr.mxu0 %v1297
    %1628 = vmatpush1.msra.mxu0 %v1296
    %1629 = vmatprep.subr.mxu0 %v1301
    %1630 = vmatpush1.msra.mxu0 %v1300
    %1631 = vmatprep.subr.mxu0 %v1305
    %1632 = vmatpush1.msra.mxu0 %v1304
    %1633 = vmatprep.subr.mxu0 %v1309
    %1634 = vmatpush1.msra.mxu0 %v1308
    %1635 = vmatprep.subr.mxu0 %v1313
    %1636 = vmatpush1.msra.mxu0 %v1312
    %1637 = vmatprep.subr.mxu0 %v1317
    %1638 = vmatpush1.msra.mxu0 %v1316
    %1639 = vmatprep.subr.mxu0 %v1321
    %1640 = vmatpush1.msra.mxu0 %v1320
    %1641 = vmatprep.subr.mxu0 %v1325
    %1642 = vmatpush1.msra.mxu0 %v1324
    %1643 = vmatprep.subr.mxu0 %v1329
    %1644 = vmatpush1.msra.mxu0 %v1328
    %1645 = vmatprep.subr.mxu0 %v1333
    %1646 = vmatpush1.msra.mxu0 %v1332
    %1647 = vmatprep.subr.mxu0 %v1337
    %1648 = vmatpush1.msra.mxu0 %v1336
    %1649 = vmatprep.subr.mxu0 %v1341
    %1650 = vmatpush1.msra.mxu0 %v1340
    %1651 = vmatprep.subr.mxu0 %v1345
    %1652 = vmatpush1.msra.mxu0 %v1344
    %1653 = vmatprep.subr.mxu0 %v1349
    %1654 = vmatpush1.msra.mxu0 %v1348
    %1655 = vmatprep.subr.mxu0 %v1353
    %1656 = vmatpush1.msra.mxu0 %v1352
    %1657 = vmatprep.subr.mxu0 %v1357
    %1658 = vmatpush1.msra.mxu0 %v1356
    %1659 = vmatprep.subr.mxu0 %v1361
    %1660 = vmatpush1.msra.mxu0 %v1360
    %1661 = vmatprep.subr.mxu0 %v1365
    %1662 = vmatpush1.msra.mxu0 %v1364
    %1663 = vmatprep.subr.mxu0 %v1369
    %1664 = vmatpush1.msra.mxu0 %v1368
    %1665 = vmatprep.subr.mxu0 %v1373
    %1666 = vmatpush1.msra.mxu0 %v1372
    %1667 = vmatprep.subr.mxu0 %v1377
    %1668 = vmatpush1.msra.mxu0 %v1376
    %1669 = vmatprep.subr.mxu0 %v1381
    %1670 = vmatpush1.msra.mxu0 %v1380
    %1671 = vmatprep.subr.mxu0 %v1385
    %1672 = vmatpush1.msra.mxu0 %v1384
    %1673 = vmatprep.subr.mxu0 %v1389
    %1674 = vmatpush1.msra.mxu0 %v1388
    %1675 = vmatprep.subr.mxu0 %v1393
    %1676 = vmatpush1.msra.mxu0 %v1392
    %1677 = vmatprep.subr.mxu0 %v1397
    %1678 = vmatpush1.msra.mxu0 %v1396
    %1679 = vmatprep.subr.mxu0 %v1401
    %1680 = vmatpush1.msra.mxu0 %v1400
    %1681 = vmatprep.subr.mxu0 %v1405
    %1682 = vmatpush1.msra.mxu0 %v1404
    %1683 = vmatprep.mubr.f32.mxu0 %v558
    %1684 = vmatmul.mubr.f32.gmra.mrb[0].mxu0 %v266
    %v1685 = vpop.f32.mrb[0].mxu0
    %v1686 = vadd.f32 %v1615, %v1685
    %v1687 = vpop.f32.mrb[0].mxu0
    %v1688 = vadd.f32 %v1617, %v1687
    %1689 = vdwg.mxu0
    %s1690 = scalar_lea.vmem %s5, 64
    %v1691 = vld [vmem:[%s1690] sm:$0xff]
    %v1692 = vld [vmem:[%s1690 + $0x8] sm:$0xff]
    %v1693 = vld [vmem:[%s1690 + $0x10] sm:$0xff]
    %v1694 = vld [vmem:[%s1690 + $0x18] sm:$0xff]
    %v1695 = vld [vmem:[%s1690 + $0x20] sm:$0xff]
    %v1696 = vld [vmem:[%s1690 + $0x28] sm:$0xff]
    %v1697 = vld [vmem:[%s1690 + $0x30] sm:$0xff]
    %v1698 = vld [vmem:[%s1690 + $0x38] sm:$0xff]
    %v1700 = vsel %vm853, %v1691, 0
    %v1703 = vsel %vm853, %v1692, 0
    %v1706 = vsel %vm853, %v1693, 0
    %v1709 = vsel %vm853, %v1694, 0
    %v1712 = vsel %vm853, %v1695, 0
    %v1715 = vsel %vm853, %v1696, 0
    %v1718 = vsel %vm853, %v1697, 0
    %v1721 = vsel %vm853, %v1698, 0
    %v1724 = vsel %vm878, %v1544, 0
    %v1727 = vsel %vm878, %v1546, 0
    %v1730 = vsel %vm878, %v1686, 0
    %v1733 = vsel %vm878, %v1688, 0
    %1735 = vmatprep.subr.mxu0 %v1727
    %1736 = vmatpush1.msra.mxu0 %v1724
    %1737 = vmatprep.subr.mxu0 0.0
    %1738 = vmatpush1.msra.mxu0 0.0
    %1739 = vmatprep.subr.mxu0 0.0
    %1740 = vmatpush1.msra.mxu0 0.0
    %1741 = vmatprep.subr.mxu0 0.0
    %1742 = vmatpush1.msra.mxu0 0.0
    %1743 = vmatprep.subr.mxu0 0.0
    %1744 = vmatpush1.msra.mxu0 0.0
    %1745 = vmatprep.subr.mxu0 0.0
    %1746 = vmatpush1.msra.mxu0 0.0
    %1747 = vmatprep.subr.mxu0 0.0
    %1748 = vmatpush1.msra.mxu0 0.0
    %1749 = vmatprep.subr.mxu0 0.0
    %1750 = vmatpush1.msra.mxu0 0.0
    %1751 = vmatprep.subr.mxu0 0.0
    %1752 = vmatpush1.msra.mxu0 0.0
    %1753 = vmatprep.subr.mxu0 0.0
    %1754 = vmatpush1.msra.mxu0 0.0
    %1755 = vmatprep.subr.mxu0 0.0
    %1756 = vmatpush1.msra.mxu0 0.0
    %1757 = vmatprep.subr.mxu0 0.0
    %1758 = vmatpush1.msra.mxu0 0.0
    %1759 = vmatprep.subr.mxu0 0.0
    %1760 = vmatpush1.msra.mxu0 0.0
    %1761 = vmatprep.subr.mxu0 0.0
    %1762 = vmatpush1.msra.mxu0 0.0
    %1763 = vmatprep.subr.mxu0 0.0
    %1764 = vmatpush1.msra.mxu0 0.0
    %1765 = vmatprep.subr.mxu0 0.0
    %1766 = vmatpush1.msra.mxu0 0.0
    %1767 = vmatprep.subr.mxu0 0.0
    %1768 = vmatpush1.msra.mxu0 0.0
    %1769 = vmatprep.subr.mxu0 0.0
    %1770 = vmatpush1.msra.mxu0 0.0
    %1771 = vmatprep.subr.mxu0 0.0
    %1772 = vmatpush1.msra.mxu0 0.0
    %1773 = vmatprep.subr.mxu0 0.0
    %1774 = vmatpush1.msra.mxu0 0.0
    %1775 = vmatprep.subr.mxu0 0.0
    %1776 = vmatpush1.msra.mxu0 0.0
    %1777 = vmatprep.subr.mxu0 0.0
    %1778 = vmatpush1.msra.mxu0 0.0
    %1779 = vmatprep.subr.mxu0 0.0
    %1780 = vmatpush1.msra.mxu0 0.0
    %1781 = vmatprep.subr.mxu0 0.0
    %1782 = vmatpush1.msra.mxu0 0.0
    %1783 = vmatprep.subr.mxu0 0.0
    %1784 = vmatpush1.msra.mxu0 0.0
    %1785 = vmatprep.subr.mxu0 0.0
    %1786 = vmatpush1.msra.mxu0 0.0
    %1787 = vmatprep.subr.mxu0 0.0
    %1788 = vmatpush1.msra.mxu0 0.0
    %1789 = vmatprep.subr.mxu0 0.0
    %1790 = vmatpush1.msra.mxu0 0.0
    %1791 = vmatprep.subr.mxu0 0.0
    %1792 = vmatpush1.msra.mxu0 0.0
    %1793 = vmatprep.subr.mxu0 0.0
    %1794 = vmatpush1.msra.mxu0 0.0
    %1795 = vmatprep.subr.mxu0 0.0
    %1796 = vmatpush1.msra.mxu0 0.0
    %1797 = vmatprep.subr.mxu0 0.0
    %1798 = vmatpush1.msra.mxu0 0.0
    %1799 = vmatprep.mubr.f32.mxu0 0.0
    %1800 = vmatmul.mubr.f32.gmra.mrb[0].mxu0 %v1700
    %v1801 = vpop.f32.mrb[0].mxu0
    %v1802 = vadd.f32 0.0, %v1801
    %v1803 = vpop.f32.mrb[0].mxu0
    %v1804 = vadd.f32 0.0, %v1803
    %1805 = vmatprep.mubr.f32.mxu0 0.0
    %1806 = vmatmul.mubr.f32.gmra.mrb[0].mxu0 %v1703
    %v1807 = vpop.f32.mrb[0].mxu0
    %v1808 = vadd.f32 0.0, %v1807
    %v1809 = vpop.f32.mrb[0].mxu0
    %v1810 = vadd.f32 0.0, %v1809
    %1811 = vmatprep.mubr.f32.mxu0 0.0
    %1812 = vmatmul.mubr.f32.gmra.mrb[0].mxu0 %v1706
    %v1813 = vpop.f32.mrb[0].mxu0
    %v1814 = vadd.f32 0.0, %v1813
    %v1815 = vpop.f32.mrb[0].mxu0
    %v1816 = vadd.f32 0.0, %v1815
    %1817 = vmatprep.mubr.f32.mxu0 0.0
    %1818 = vmatmul.mubr.f32.gmra.mrb[0].mxu0 %v1709
    %v1819 = vpop.f32.mrb[0].mxu0
    %v1820 = vadd.f32 0.0, %v1819
    %v1821 = vpop.f32.mrb[0].mxu0
    %v1822 = vadd.f32 0.0, %v1821
    %1823 = vmatprep.mubr.f32.mxu0 0.0
    %1824 = vmatmul.mubr.f32.gmra.mrb[0].mxu0 %v1712
    %v1825 = vpop.f32.mrb[0].mxu0
    %v1826 = vadd.f32 0.0, %v1825
    %v1827 = vpop.f32.mrb[0].mxu0
    %v1828 = vadd.f32 0.0, %v1827
    %1829 = vmatprep.mubr.f32.mxu0 0.0
    %1830 = vmatmul.mubr.f32.gmra.mrb[0].mxu0 %v1715
    %v1831 = vpop.f32.mrb[0].mxu0
    %v1832 = vadd.f32 0.0, %v1831
    %v1833 = vpop.f32.mrb[0].mxu0
    %v1834 = vadd.f32 0.0, %v1833
    %1835 = vmatprep.mubr.f32.mxu0 0.0
    %1836 = vmatmul.mubr.f32.gmra.mrb[0].mxu0 %v1718
    %v1837 = vpop.f32.mrb[0].mxu0
    %v1838 = vadd.f32 0.0, %v1837
    %v1839 = vpop.f32.mrb[0].mxu0
    %v1840 = vadd.f32 0.0, %v1839
    %1841 = vmatprep.mubr.f32.mxu0 0.0
    %1842 = vmatmul.mubr.f32.gmra.mrb[0].mxu0 %v1721
    %v1843 = vpop.f32.mrb[0].mxu0
    %v1844 = vadd.f32 0.0, %v1843
    %v1845 = vpop.f32.mrb[0].mxu0
    %v1846 = vadd.f32 0.0, %v1845
    %1847 = vdwg.mxu0
    %1848 = vmatprep.subr.mxu0 %v1733
    %1849 = vmatpush1.msra.mxu0 %v1730
    %1850 = vmatprep.subr.mxu0 0.0
    %1851 = vmatpush1.msra.mxu0 0.0
    %1852 = vmatprep.subr.mxu0 0.0
    %1853 = vmatpush1.msra.mxu0 0.0
    %1854 = vmatprep.subr.mxu0 0.0
    %1855 = vmatpush1.msra.mxu0 0.0
    %1856 = vmatprep.subr.mxu0 0.0
    %1857 = vmatpush1.msra.mxu0 0.0
    %1858 = vmatprep.subr.mxu0 0.0
    %1859 = vmatpush1.msra.mxu0 0.0
    %1860 = vmatprep.subr.mxu0 0.0
    %1861 = vmatpush1.msra.mxu0 0.0
    %1862 = vmatprep.subr.mxu0 0.0
    %1863 = vmatpush1.msra.mxu0 0.0
    %1864 = vmatprep.subr.mxu0 0.0
    %1865 = vmatpush1.msra.mxu0 0.0
    %1866 = vmatprep.subr.mxu0 0.0
    %1867 = vmatpush1.msra.mxu0 0.0
    %1868 = vmatprep.subr.mxu0 0.0
    %1869 = vmatpush1.msra.mxu0 0.0
    %1870 = vmatprep.subr.mxu0 0.0
    %1871 = vmatpush1.msra.mxu0 0.0
    %1872 = vmatprep.subr.mxu0 0.0
    %1873 = vmatpush1.msra.mxu0 0.0
    %1874 = vmatprep.subr.mxu0 0.0
    %1875 = vmatpush1.msra.mxu0 0.0
    %1876 = vmatprep.subr.mxu0 0.0
    %1877 = vmatpush1.msra.mxu0 0.0
    %1878 = vmatprep.subr.mxu0 0.0
    %1879 = vmatpush1.msra.mxu0 0.0
    %1880 = vmatprep.subr.mxu0 0.0
    %1881 = vmatpush1.msra.mxu0 0.0
    %1882 = vmatprep.subr.mxu0 0.0
    %1883 = vmatpush1.msra.mxu0 0.0
    %1884 = vmatprep.subr.mxu0 0.0
    %1885 = vmatpush1.msra.mxu0 0.0
    %1886 = vmatprep.subr.mxu0 0.0
    %1887 = vmatpush1.msra.mxu0 0.0
    %1888 = vmatprep.subr.mxu0 0.0
    %1889 = vmatpush1.msra.mxu0 0.0
    %1890 = vmatprep.subr.mxu0 0.0
    %1891 = vmatpush1.msra.mxu0 0.0
    %1892 = vmatprep.subr.mxu0 0.0
    %1893 = vmatpush1.msra.mxu0 0.0
    %1894 = vmatprep.subr.mxu0 0.0
    %1895 = vmatpush1.msra.mxu0 0.0
    %1896 = vmatprep.subr.mxu0 0.0
    %1897 = vmatpush1.msra.mxu0 0.0
    %1898 = vmatprep.subr.mxu0 0.0
    %1899 = vmatpush1.msra.mxu0 0.0
    %1900 = vmatprep.subr.mxu0 0.0
    %1901 = vmatpush1.msra.mxu0 0.0
    %1902 = vmatprep.subr.mxu0 0.0
    %1903 = vmatpush1.msra.mxu0 0.0
    %1904 = vmatprep.subr.mxu0 0.0
    %1905 = vmatpush1.msra.mxu0 0.0
    %1906 = vmatprep.subr.mxu0 0.0
    %1907 = vmatpush1.msra.mxu0 0.0
    %1908 = vmatprep.subr.mxu0 0.0
    %1909 = vmatpush1.msra.mxu0 0.0
    %1910 = vmatprep.subr.mxu0 0.0
    %1911 = vmatpush1.msra.mxu0 0.0
    %1912 = vmatprep.mubr.f32.mxu0 0.0
    %1913 = vmatmul.mubr.f32.gmra.mrb[0].mxu0 %v1700
    %v1914 = vpop.f32.mrb[0].mxu0
    %v1915 = vadd.f32 0.0, %v1914
    %v1916 = vpop.f32.mrb[0].mxu0
    %v1917 = vadd.f32 0.0, %v1916
    %1918 = vmatprep.mubr.f32.mxu0 0.0
    %1919 = vmatmul.mubr.f32.gmra.mrb[0].mxu0 %v1703
    %v1920 = vpop.f32.mrb[0].mxu0
    %v1921 = vadd.f32 0.0, %v1920
    %v1922 = vpop.f32.mrb[0].mxu0
    %v1923 = vadd.f32 0.0, %v1922
    %1924 = vmatprep.mubr.f32.mxu0 0.0
    %1925 = vmatmul.mubr.f32.gmra.mrb[0].mxu0 %v1706
    %v1926 = vpop.f32.mrb[0].mxu0
    %v1927 = vadd.f32 0.0, %v1926
    %v1928 = vpop.f32.mrb[0].mxu0
    %v1929 = vadd.f32 0.0, %v1928
    %1930 = vmatprep.mubr.f32.mxu0 0.0
    %1931 = vmatmul.mubr.f32.gmra.mrb[0].mxu0 %v1709
    %v1932 = vpop.f32.mrb[0].mxu0
    %v1933 = vadd.f32 0.0, %v1932
    %v1934 = vpop.f32.mrb[0].mxu0
    %v1935 = vadd.f32 0.0, %v1934
    %1936 = vmatprep.mubr.f32.mxu0 0.0
    %1937 = vmatmul.mubr.f32.gmra.mrb[0].mxu0 %v1712
    %v1938 = vpop.f32.mrb[0].mxu0
    %v1939 = vadd.f32 0.0, %v1938
    %v1940 = vpop.f32.mrb[0].mxu0
    %v1941 = vadd.f32 0.0, %v1940
    %1942 = vmatprep.mubr.f32.mxu0 0.0
    %1943 = vmatmul.mubr.f32.gmra.mrb[0].mxu0 %v1715
    %v1944 = vpop.f32.mrb[0].mxu0
    %v1945 = vadd.f32 0.0, %v1944
    %v1946 = vpop.f32.mrb[0].mxu0
    %v1947 = vadd.f32 0.0, %v1946
    %1948 = vmatprep.mubr.f32.mxu0 0.0
    %1949 = vmatmul.mubr.f32.gmra.mrb[0].mxu0 %v1718
    %v1950 = vpop.f32.mrb[0].mxu0
    %v1951 = vadd.f32 0.0, %v1950
    %v1952 = vpop.f32.mrb[0].mxu0
    %v1953 = vadd.f32 0.0, %v1952
    %1954 = vmatprep.mubr.f32.mxu0 0.0
    %1955 = vmatmul.mubr.f32.gmra.mrb[0].mxu0 %v1721
    %v1956 = vpop.f32.mrb[0].mxu0
    %v1957 = vadd.f32 0.0, %v1956
    %v1958 = vpop.f32.mrb[0].mxu0
    %v1959 = vadd.f32 0.0, %v1958
    %1960 = vdwg.mxu0
    %v1961 = vadd.f32 %v1117, %v1802
    %v1962 = vadd.f32 %v1118, %v1804
    %v1963 = vadd.f32 %v1119, %v1915
    %v1964 = vadd.f32 %v1120, %v1917
    %v1965 = vadd.f32 %v1121, %v1808
    %v1966 = vadd.f32 %v1122, %v1810
    %v1967 = vadd.f32 %v1123, %v1921
    %v1968 = vadd.f32 %v1124, %v1923
    %v1969 = vadd.f32 %v1125, %v1814
    %v1970 = vadd.f32 %v1126, %v1816
    %v1971 = vadd.f32 %v1127, %v1927
    %v1972 = vadd.f32 %v1128, %v1929
    %v1973 = vadd.f32 %v1129, %v1820
    %v1974 = vadd.f32 %v1130, %v1822
    %v1975 = vadd.f32 %v1131, %v1933
    %v1976 = vadd.f32 %v1132, %v1935
    %v1977 = vadd.f32 %v1133, %v1826
    %v1978 = vadd.f32 %v1134, %v1828
    %v1979 = vadd.f32 %v1135, %v1939
    %v1980 = vadd.f32 %v1136, %v1941
    %v1981 = vadd.f32 %v1137, %v1832
    %v1982 = vadd.f32 %v1138, %v1834
    %v1983 = vadd.f32 %v1139, %v1945
    %v1984 = vadd.f32 %v1140, %v1947
    %v1985 = vadd.f32 %v1141, %v1838
    %v1986 = vadd.f32 %v1142, %v1840
    %v1987 = vadd.f32 %v1143, %v1951
    %v1988 = vadd.f32 %v1144, %v1953
    %v1989 = vadd.f32 %v1145, %v1844
    %v1990 = vadd.f32 %v1146, %v1846
    %v1991 = vadd.f32 %v1147, %v1957
    %v1992 = vadd.f32 %v1148, %v1959
    %s1993 = scalar_lea.vmem [#allocation8], 4096
    %v1994 = vld [vmem:[%s1993] sm:$0xff]
    %v1995 = vld [vmem:[%s1993 + $0x8] sm:$0xff]
    %v1996 = vld [vmem:[%s1993 + $0x10] sm:$0xff]
    %v1997 = vld [vmem:[%s1993 + $0x18] sm:$0xff]
    %v1998 = vld [vmem:[%s1993 + $0x20] sm:$0xff]
    %v1999 = vld [vmem:[%s1993 + $0x28] sm:$0xff]
    %v2000 = vld [vmem:[%s1993 + $0x30] sm:$0xff]
    %v2001 = vld [vmem:[%s1993 + $0x38] sm:$0xff]
    %v2002 = vld [vmem:[%s1993 + $0x40] sm:$0xff]
    %v2003 = vld [vmem:[%s1993 + $0x48] sm:$0xff]
    %v2004 = vld [vmem:[%s1993 + $0x50] sm:$0xff]
    %v2005 = vld [vmem:[%s1993 + $0x58] sm:$0xff]
    %v2006 = vld [vmem:[%s1993 + $0x60] sm:$0xff]
    %v2007 = vld [vmem:[%s1993 + $0x68] sm:$0xff]
    %v2008 = vld [vmem:[%s1993 + $0x70] sm:$0xff]
    %v2009 = vld [vmem:[%s1993 + $0x78] sm:$0xff]
    %v2010 = vld [vmem:[%s1993 + $0x80] sm:$0xff]
    %v2011 = vld [vmem:[%s1993 + $0x88] sm:$0xff]
    %v2012 = vld [vmem:[%s1993 + $0x90] sm:$0xff]
    %v2013 = vld [vmem:[%s1993 + $0x98] sm:$0xff]
    %v2014 = vld [vmem:[%s1993 + $0xa0] sm:$0xff]
    %v2015 = vld [vmem:[%s1993 + $0xa8] sm:$0xff]
    %v2016 = vld [vmem:[%s1993 + $0xb0] sm:$0xff]
    %v2017 = vld [vmem:[%s1993 + $0xb8] sm:$0xff]
    %v2018 = vld [vmem:[%s1993 + $0xc0] sm:$0xff]
    %v2019 = vld [vmem:[%s1993 + $0xc8] sm:$0xff]
    %v2020 = vld [vmem:[%s1993 + $0xd0] sm:$0xff]
    %v2021 = vld [vmem:[%s1993 + $0xd8] sm:$0xff]
    %v2022 = vld [vmem:[%s1993 + $0xe0] sm:$0xff]
    %v2023 = vld [vmem:[%s1993 + $0xe8] sm:$0xff]
    %v2024 = vld [vmem:[%s1993 + $0xf0] sm:$0xff]
    %v2025 = vld [vmem:[%s1993 + $0xf8] sm:$0xff]
    %v2026 = vld [vmem:[%s1993 + $0x100] sm:$0xff]
    %v2027 = vld [vmem:[%s1993 + $0x108] sm:$0xff]
    %v2028 = vld [vmem:[%s1993 + $0x110] sm:$0xff]
    %v2029 = vld [vmem:[%s1993 + $0x118] sm:$0xff]
    %v2030 = vld [vmem:[%s1993 + $0x120] sm:$0xff]
    %v2031 = vld [vmem:[%s1993 + $0x128] sm:$0xff]
    %v2032 = vld [vmem:[%s1993 + $0x130] sm:$0xff]
    %v2033 = vld [vmem:[%s1993 + $0x138] sm:$0xff]
    %v2034 = vld [vmem:[%s1993 + $0x140] sm:$0xff]
    %v2035 = vld [vmem:[%s1993 + $0x148] sm:$0xff]
    %v2036 = vld [vmem:[%s1993 + $0x150] sm:$0xff]
    %v2037 = vld [vmem:[%s1993 + $0x158] sm:$0xff]
    %v2038 = vld [vmem:[%s1993 + $0x160] sm:$0xff]
    %v2039 = vld [vmem:[%s1993 + $0x168] sm:$0xff]
    %v2040 = vld [vmem:[%s1993 + $0x170] sm:$0xff]
    %v2041 = vld [vmem:[%s1993 + $0x178] sm:$0xff]
    %v2042 = vld [vmem:[%s1993 + $0x180] sm:$0xff]
    %v2043 = vld [vmem:[%s1993 + $0x188] sm:$0xff]
    %v2044 = vld [vmem:[%s1993 + $0x190] sm:$0xff]
    %v2045 = vld [vmem:[%s1993 + $0x198] sm:$0xff]
    %v2046 = vld [vmem:[%s1993 + $0x1a0] sm:$0xff]
    %v2047 = vld [vmem:[%s1993 + $0x1a8] sm:$0xff]
    %v2048 = vld [vmem:[%s1993 + $0x1b0] sm:$0xff]
    %v2049 = vld [vmem:[%s1993 + $0x1b8] sm:$0xff]
    %v2050 = vld [vmem:[%s1993 + $0x1c0] sm:$0xff]
    %v2051 = vld [vmem:[%s1993 + $0x1c8] sm:$0xff]
    %v2052 = vld [vmem:[%s1993 + $0x1d0] sm:$0xff]
    %v2053 = vld [vmem:[%s1993 + $0x1d8] sm:$0xff]
    %v2054 = vld [vmem:[%s1993 + $0x1e0] sm:$0xff]
    %v2055 = vld [vmem:[%s1993 + $0x1e8] sm:$0xff]
    %v2056 = vld [vmem:[%s1993 + $0x1f0] sm:$0xff]
    %v2057 = vld [vmem:[%s1993 + $0x1f8] sm:$0xff]
    %v2058 = vld [vmem:[%s1993 + $0x200] sm:$0xff]
    %v2059 = vld [vmem:[%s1993 + $0x208] sm:$0xff]
    %v2060 = vld [vmem:[%s1993 + $0x210] sm:$0xff]
    %v2061 = vld [vmem:[%s1993 + $0x218] sm:$0xff]
    %v2062 = vld [vmem:[%s1993 + $0x220] sm:$0xff]
    %v2063 = vld [vmem:[%s1993 + $0x228] sm:$0xff]
    %v2064 = vld [vmem:[%s1993 + $0x230] sm:$0xff]
    %v2065 = vld [vmem:[%s1993 + $0x238] sm:$0xff]
    %v2066 = vld [vmem:[%s1993 + $0x240] sm:$0xff]
    %v2067 = vld [vmem:[%s1993 + $0x248] sm:$0xff]
    %v2068 = vld [vmem:[%s1993 + $0x250] sm:$0xff]
    %v2069 = vld [vmem:[%s1993 + $0x258] sm:$0xff]
    %v2070 = vld [vmem:[%s1993 + $0x260] sm:$0xff]
    %v2071 = vld [vmem:[%s1993 + $0x268] sm:$0xff]
    %v2072 = vld [vmem:[%s1993 + $0x270] sm:$0xff]
    %v2073 = vld [vmem:[%s1993 + $0x278] sm:$0xff]
    %v2074 = vld [vmem:[%s1993 + $0x280] sm:$0xff]
    %v2075 = vld [vmem:[%s1993 + $0x288] sm:$0xff]
    %v2076 = vld [vmem:[%s1993 + $0x290] sm:$0xff]
    %v2077 = vld [vmem:[%s1993 + $0x298] sm:$0xff]
    %v2078 = vld [vmem:[%s1993 + $0x2a0] sm:$0xff]
    %v2079 = vld [vmem:[%s1993 + $0x2a8] sm:$0xff]
    %v2080 = vld [vmem:[%s1993 + $0x2b0] sm:$0xff]
    %v2081 = vld [vmem:[%s1993 + $0x2b8] sm:$0xff]
    %v2082 = vld [vmem:[%s1993 + $0x2c0] sm:$0xff]
    %v2083 = vld [vmem:[%s1993 + $0x2c8] sm:$0xff]
    %v2084 = vld [vmem:[%s1993 + $0x2d0] sm:$0xff]
    %v2085 = vld [vmem:[%s1993 + $0x2d8] sm:$0xff]
    %v2086 = vld [vmem:[%s1993 + $0x2e0] sm:$0xff]
    %v2087 = vld [vmem:[%s1993 + $0x2e8] sm:$0xff]
    %v2088 = vld [vmem:[%s1993 + $0x2f0] sm:$0xff]
    %v2089 = vld [vmem:[%s1993 + $0x2f8] sm:$0xff]
    %v2090 = vld [vmem:[%s1993 + $0x300] sm:$0xff]
    %v2091 = vld [vmem:[%s1993 + $0x308] sm:$0xff]
    %v2092 = vld [vmem:[%s1993 + $0x310] sm:$0xff]
    %v2093 = vld [vmem:[%s1993 + $0x318] sm:$0xff]
    %v2094 = vld [vmem:[%s1993 + $0x320] sm:$0xff]
    %v2095 = vld [vmem:[%s1993 + $0x328] sm:$0xff]
    %v2096 = vld [vmem:[%s1993 + $0x330] sm:$0xff]
    %v2097 = vld [vmem:[%s1993 + $0x338] sm:$0xff]
    %v2098 = vld [vmem:[%s1993 + $0x340] sm:$0xff]
    %v2099 = vld [vmem:[%s1993 + $0x348] sm:$0xff]
    %v2100 = vld [vmem:[%s1993 + $0x350] sm:$0xff]
    %v2101 = vld [vmem:[%s1993 + $0x358] sm:$0xff]
    %v2102 = vld [vmem:[%s1993 + $0x360] sm:$0xff]
    %v2103 = vld [vmem:[%s1993 + $0x368] sm:$0xff]
    %v2104 = vld [vmem:[%s1993 + $0x370] sm:$0xff]
    %v2105 = vld [vmem:[%s1993 + $0x378] sm:$0xff]
    %v2106 = vld [vmem:[%s1993 + $0x380] sm:$0xff]
    %v2107 = vld [vmem:[%s1993 + $0x388] sm:$0xff]
    %v2108 = vld [vmem:[%s1993 + $0x390] sm:$0xff]
    %v2109 = vld [vmem:[%s1993 + $0x398] sm:$0xff]
    %v2110 = vld [vmem:[%s1993 + $0x3a0] sm:$0xff]
    %v2111 = vld [vmem:[%s1993 + $0x3a8] sm:$0xff]
    %v2112 = vld [vmem:[%s1993 + $0x3b0] sm:$0xff]
    %v2113 = vld [vmem:[%s1993 + $0x3b8] sm:$0xff]
    %v2114 = vld [vmem:[%s1993 + $0x3c0] sm:$0xff]
    %v2115 = vld [vmem:[%s1993 + $0x3c8] sm:$0xff]
    %v2116 = vld [vmem:[%s1993 + $0x3d0] sm:$0xff]
    %v2117 = vld [vmem:[%s1993 + $0x3d8] sm:$0xff]
    %v2118 = vld [vmem:[%s1993 + $0x3e0] sm:$0xff]
    %v2119 = vld [vmem:[%s1993 + $0x3e8] sm:$0xff]
    %v2120 = vld [vmem:[%s1993 + $0x3f0] sm:$0xff]
    %v2121 = vld [vmem:[%s1993 + $0x3f8] sm:$0xff]
    %v2122 = vld [vmem:[%s1993 + $0x400] sm:$0xff]
    %v2123 = vld [vmem:[%s1993 + $0x408] sm:$0xff]
    %v2124 = vld [vmem:[%s1993 + $0x410] sm:$0xff]
    %v2125 = vld [vmem:[%s1993 + $0x418] sm:$0xff]
    %v2126 = vld [vmem:[%s1993 + $0x420] sm:$0xff]
    %v2127 = vld [vmem:[%s1993 + $0x428] sm:$0xff]
    %v2128 = vld [vmem:[%s1993 + $0x430] sm:$0xff]
    %v2129 = vld [vmem:[%s1993 + $0x438] sm:$0xff]
    %v2130 = vld [vmem:[%s1993 + $0x440] sm:$0xff]
    %v2131 = vld [vmem:[%s1993 + $0x448] sm:$0xff]
    %v2132 = vld [vmem:[%s1993 + $0x450] sm:$0xff]
    %v2133 = vld [vmem:[%s1993 + $0x458] sm:$0xff]
    %v2134 = vld [vmem:[%s1993 + $0x460] sm:$0xff]
    %v2135 = vld [vmem:[%s1993 + $0x468] sm:$0xff]
    %v2136 = vld [vmem:[%s1993 + $0x470] sm:$0xff]
    %v2137 = vld [vmem:[%s1993 + $0x478] sm:$0xff]
    %v2138 = vld [vmem:[%s1993 + $0x480] sm:$0xff]
    %v2139 = vld [vmem:[%s1993 + $0x488] sm:$0xff]
    %v2140 = vld [vmem:[%s1993 + $0x490] sm:$0xff]
    %v2141 = vld [vmem:[%s1993 + $0x498] sm:$0xff]
    %v2142 = vld [vmem:[%s1993 + $0x4a0] sm:$0xff]
    %v2143 = vld [vmem:[%s1993 + $0x4a8] sm:$0xff]
    %v2144 = vld [vmem:[%s1993 + $0x4b0] sm:$0xff]
    %v2145 = vld [vmem:[%s1993 + $0x4b8] sm:$0xff]
    %v2146 = vld [vmem:[%s1993 + $0x4c0] sm:$0xff]
    %v2147 = vld [vmem:[%s1993 + $0x4c8] sm:$0xff]
    %v2148 = vld [vmem:[%s1993 + $0x4d0] sm:$0xff]
    %v2149 = vld [vmem:[%s1993 + $0x4d8] sm:$0xff]
    %v2150 = vld [vmem:[%s1993 + $0x4e0] sm:$0xff]
    %v2151 = vld [vmem:[%s1993 + $0x4e8] sm:$0xff]
    %v2152 = vld [vmem:[%s1993 + $0x4f0] sm:$0xff]
    %v2153 = vld [vmem:[%s1993 + $0x4f8] sm:$0xff]
    %v2154 = vld [vmem:[%s1993 + $0x500] sm:$0xff]
    %v2155 = vld [vmem:[%s1993 + $0x508] sm:$0xff]
    %v2156 = vld [vmem:[%s1993 + $0x510] sm:$0xff]
    %v2157 = vld [vmem:[%s1993 + $0x518] sm:$0xff]
    %v2158 = vld [vmem:[%s1993 + $0x520] sm:$0xff]
    %v2159 = vld [vmem:[%s1993 + $0x528] sm:$0xff]
    %v2160 = vld [vmem:[%s1993 + $0x530] sm:$0xff]
    %v2161 = vld [vmem:[%s1993 + $0x538] sm:$0xff]
    %v2162 = vld [vmem:[%s1993 + $0x540] sm:$0xff]
    %v2163 = vld [vmem:[%s1993 + $0x548] sm:$0xff]
    %v2164 = vld [vmem:[%s1993 + $0x550] sm:$0xff]
    %v2165 = vld [vmem:[%s1993 + $0x558] sm:$0xff]
    %v2166 = vld [vmem:[%s1993 + $0x560] sm:$0xff]
    %v2167 = vld [vmem:[%s1993 + $0x568] sm:$0xff]
    %v2168 = vld [vmem:[%s1993 + $0x570] sm:$0xff]
    %v2169 = vld [vmem:[%s1993 + $0x578] sm:$0xff]
    %v2170 = vld [vmem:[%s1993 + $0x580] sm:$0xff]
    %v2171 = vld [vmem:[%s1993 + $0x588] sm:$0xff]
    %v2172 = vld [vmem:[%s1993 + $0x590] sm:$0xff]
    %v2173 = vld [vmem:[%s1993 + $0x598] sm:$0xff]
    %v2174 = vld [vmem:[%s1993 + $0x5a0] sm:$0xff]
    %v2175 = vld [vmem:[%s1993 + $0x5a8] sm:$0xff]
    %v2176 = vld [vmem:[%s1993 + $0x5b0] sm:$0xff]
    %v2177 = vld [vmem:[%s1993 + $0x5b8] sm:$0xff]
    %v2178 = vld [vmem:[%s1993 + $0x5c0] sm:$0xff]
    %v2179 = vld [vmem:[%s1993 + $0x5c8] sm:$0xff]
    %v2180 = vld [vmem:[%s1993 + $0x5d0] sm:$0xff]
    %v2181 = vld [vmem:[%s1993 + $0x5d8] sm:$0xff]
    %v2182 = vld [vmem:[%s1993 + $0x5e0] sm:$0xff]
    %v2183 = vld [vmem:[%s1993 + $0x5e8] sm:$0xff]
    %v2184 = vld [vmem:[%s1993 + $0x5f0] sm:$0xff]
    %v2185 = vld [vmem:[%s1993 + $0x5f8] sm:$0xff]
    %v2186 = vld [vmem:[%s1993 + $0x600] sm:$0xff]
    %v2187 = vld [vmem:[%s1993 + $0x608] sm:$0xff]
    %v2188 = vld [vmem:[%s1993 + $0x610] sm:$0xff]
    %v2189 = vld [vmem:[%s1993 + $0x618] sm:$0xff]
    %v2190 = vld [vmem:[%s1993 + $0x620] sm:$0xff]
    %v2191 = vld [vmem:[%s1993 + $0x628] sm:$0xff]
    %v2192 = vld [vmem:[%s1993 + $0x630] sm:$0xff]
    %v2193 = vld [vmem:[%s1993 + $0x638] sm:$0xff]
    %v2194 = vld [vmem:[%s1993 + $0x640] sm:$0xff]
    %v2195 = vld [vmem:[%s1993 + $0x648] sm:$0xff]
    %v2196 = vld [vmem:[%s1993 + $0x650] sm:$0xff]
    %v2197 = vld [vmem:[%s1993 + $0x658] sm:$0xff]
    %v2198 = vld [vmem:[%s1993 + $0x660] sm:$0xff]
    %v2199 = vld [vmem:[%s1993 + $0x668] sm:$0xff]
    %v2200 = vld [vmem:[%s1993 + $0x670] sm:$0xff]
    %v2201 = vld [vmem:[%s1993 + $0x678] sm:$0xff]
    %v2202 = vld [vmem:[%s1993 + $0x680] sm:$0xff]
    %v2203 = vld [vmem:[%s1993 + $0x688] sm:$0xff]
    %v2204 = vld [vmem:[%s1993 + $0x690] sm:$0xff]
    %v2205 = vld [vmem:[%s1993 + $0x698] sm:$0xff]
    %v2206 = vld [vmem:[%s1993 + $0x6a0] sm:$0xff]
    %v2207 = vld [vmem:[%s1993 + $0x6a8] sm:$0xff]
    %v2208 = vld [vmem:[%s1993 + $0x6b0] sm:$0xff]
    %v2209 = vld [vmem:[%s1993 + $0x6b8] sm:$0xff]
    %v2210 = vld [vmem:[%s1993 + $0x6c0] sm:$0xff]
    %v2211 = vld [vmem:[%s1993 + $0x6c8] sm:$0xff]
    %v2212 = vld [vmem:[%s1993 + $0x6d0] sm:$0xff]
    %v2213 = vld [vmem:[%s1993 + $0x6d8] sm:$0xff]
    %v2214 = vld [vmem:[%s1993 + $0x6e0] sm:$0xff]
    %v2215 = vld [vmem:[%s1993 + $0x6e8] sm:$0xff]
    %v2216 = vld [vmem:[%s1993 + $0x6f0] sm:$0xff]
    %v2217 = vld [vmem:[%s1993 + $0x6f8] sm:$0xff]
    %v2218 = vld [vmem:[%s1993 + $0x700] sm:$0xff]
    %v2219 = vld [vmem:[%s1993 + $0x708] sm:$0xff]
    %v2220 = vld [vmem:[%s1993 + $0x710] sm:$0xff]
    %v2221 = vld [vmem:[%s1993 + $0x718] sm:$0xff]
    %v2222 = vld [vmem:[%s1993 + $0x720] sm:$0xff]
    %v2223 = vld [vmem:[%s1993 + $0x728] sm:$0xff]
    %v2224 = vld [vmem:[%s1993 + $0x730] sm:$0xff]
    %v2225 = vld [vmem:[%s1993 + $0x738] sm:$0xff]
    %v2226 = vld [vmem:[%s1993 + $0x740] sm:$0xff]
    %v2227 = vld [vmem:[%s1993 + $0x748] sm:$0xff]
    %v2228 = vld [vmem:[%s1993 + $0x750] sm:$0xff]
    %v2229 = vld [vmem:[%s1993 + $0x758] sm:$0xff]
    %v2230 = vld [vmem:[%s1993 + $0x760] sm:$0xff]
    %v2231 = vld [vmem:[%s1993 + $0x768] sm:$0xff]
    %v2232 = vld [vmem:[%s1993 + $0x770] sm:$0xff]
    %v2233 = vld [vmem:[%s1993 + $0x778] sm:$0xff]
    %v2234 = vld [vmem:[%s1993 + $0x780] sm:$0xff]
    %v2235 = vld [vmem:[%s1993 + $0x788] sm:$0xff]
    %v2236 = vld [vmem:[%s1993 + $0x790] sm:$0xff]
    %v2237 = vld [vmem:[%s1993 + $0x798] sm:$0xff]
    %v2238 = vld [vmem:[%s1993 + $0x7a0] sm:$0xff]
    %v2239 = vld [vmem:[%s1993 + $0x7a8] sm:$0xff]
    %v2240 = vld [vmem:[%s1993 + $0x7b0] sm:$0xff]
    %v2241 = vld [vmem:[%s1993 + $0x7b8] sm:$0xff]
    %v2242 = vld [vmem:[%s1993 + $0x7c0] sm:$0xff]
    %v2243 = vld [vmem:[%s1993 + $0x7c8] sm:$0xff]
    %v2244 = vld [vmem:[%s1993 + $0x7d0] sm:$0xff]
    %v2245 = vld [vmem:[%s1993 + $0x7d8] sm:$0xff]
    %v2246 = vld [vmem:[%s1993 + $0x7e0] sm:$0xff]
    %v2247 = vld [vmem:[%s1993 + $0x7e8] sm:$0xff]
    %v2248 = vld [vmem:[%s1993 + $0x7f0] sm:$0xff]
    %v2249 = vld [vmem:[%s1993 + $0x7f8] sm:$0xff]
    %2250 = vmatprep.subr.mxu0 %v1995
    %2251 = vmatpush1.msra.mxu0 %v1994
    %2252 = vmatprep.subr.mxu0 %v1999
    %2253 = vmatpush1.msra.mxu0 %v1998
    %2254 = vmatprep.subr.mxu0 %v2003
    %2255 = vmatpush1.msra.mxu0 %v2002
    %2256 = vmatprep.subr.mxu0 %v2007
    %2257 = vmatpush1.msra.mxu0 %v2006
    %2258 = vmatprep.subr.mxu0 %v2011
    %2259 = vmatpush1.msra.mxu0 %v2010
    %2260 = vmatprep.subr.mxu0 %v2015
    %2261 = vmatpush1.msra.mxu0 %v2014
    %2262 = vmatprep.subr.mxu0 %v2019
    %2263 = vmatpush1.msra.mxu0 %v2018
    %2264 = vmatprep.subr.mxu0 %v2023
    %2265 = vmatpush1.msra.mxu0 %v2022
    %2266 = vmatprep.subr.mxu0 %v2027
    %2267 = vmatpush1.msra.mxu0 %v2026
    %2268 = vmatprep.subr.mxu0 %v2031
    %2269 = vmatpush1.msra.mxu0 %v2030
    %2270 = vmatprep.subr.mxu0 %v2035
    %2271 = vmatpush1.msra.mxu0 %v2034
    %2272 = vmatprep.subr.mxu0 %v2039
    %2273 = vmatpush1.msra.mxu0 %v2038
    %2274 = vmatprep.subr.mxu0 %v2043
    %2275 = vmatpush1.msra.mxu0 %v2042
    %2276 = vmatprep.subr.mxu0 %v2047
    %2277 = vmatpush1.msra.mxu0 %v2046
    %2278 = vmatprep.subr.mxu0 %v2051
    %2279 = vmatpush1.msra.mxu0 %v2050
    %2280 = vmatprep.subr.mxu0 %v2055
    %2281 = vmatpush1.msra.mxu0 %v2054
    %2282 = vmatprep.subr.mxu0 %v2059
    %2283 = vmatpush1.msra.mxu0 %v2058
    %2284 = vmatprep.subr.mxu0 %v2063
    %2285 = vmatpush1.msra.mxu0 %v2062
    %2286 = vmatprep.subr.mxu0 %v2067
    %2287 = vmatpush1.msra.mxu0 %v2066
    %2288 = vmatprep.subr.mxu0 %v2071
    %2289 = vmatpush1.msra.mxu0 %v2070
    %2290 = vmatprep.subr.mxu0 %v2075
    %2291 = vmatpush1.msra.mxu0 %v2074
    %2292 = vmatprep.subr.mxu0 %v2079
    %2293 = vmatpush1.msra.mxu0 %v2078
    %2294 = vmatprep.subr.mxu0 %v2083
    %2295 = vmatpush1.msra.mxu0 %v2082
    %2296 = vmatprep.subr.mxu0 %v2087
    %2297 = vmatpush1.msra.mxu0 %v2086
    %2298 = vmatprep.subr.mxu0 %v2091
    %2299 = vmatpush1.msra.mxu0 %v2090
    %2300 = vmatprep.subr.mxu0 %v2095
    %2301 = vmatpush1.msra.mxu0 %v2094
    %2302 = vmatprep.subr.mxu0 %v2099
    %2303 = vmatpush1.msra.mxu0 %v2098
    %2304 = vmatprep.subr.mxu0 %v2103
    %2305 = vmatpush1.msra.mxu0 %v2102
    %2306 = vmatprep.subr.mxu0 %v2107
    %2307 = vmatpush1.msra.mxu0 %v2106
    %2308 = vmatprep.subr.mxu0 %v2111
    %2309 = vmatpush1.msra.mxu0 %v2110
    %2310 = vmatprep.subr.mxu0 %v2115
    %2311 = vmatpush1.msra.mxu0 %v2114
    %2312 = vmatprep.subr.mxu0 %v2119
    %2313 = vmatpush1.msra.mxu0 %v2118
    %2314 = vmatprep.mubr.f32.mxu0 %v557
    %2315 = vmatmul.mubr.f32.gmra.mrb[0].mxu0 %v265
    %v2316 = vpop.f32.mrb[0].mxu0
    %v2317 = vadd.f32 0.0, %v2316
    %v2318 = vpop.f32.mrb[0].mxu0
    %v2319 = vadd.f32 0.0, %v2318
    %2320 = vdwg.mxu0
    %2321 = vmatprep.subr.mxu0 %v2123
    %2322 = vmatpush1.msra.mxu0 %v2122
    %2323 = vmatprep.subr.mxu0 %v2127
    %2324 = vmatpush1.msra.mxu0 %v2126
    %2325 = vmatprep.subr.mxu0 %v2131
    %2326 = vmatpush1.msra.mxu0 %v2130
    %2327 = vmatprep.subr.mxu0 %v2135
    %2328 = vmatpush1.msra.mxu0 %v2134
    %2329 = vmatprep.subr.mxu0 %v2139
    %2330 = vmatpush1.msra.mxu0 %v2138
    %2331 = vmatprep.subr.mxu0 %v2143
    %2332 = vmatpush1.msra.mxu0 %v2142
    %2333 = vmatprep.subr.mxu0 %v2147
    %2334 = vmatpush1.msra.mxu0 %v2146
    %2335 = vmatprep.subr.mxu0 %v2151
    %2336 = vmatpush1.msra.mxu0 %v2150
    %2337 = vmatprep.subr.mxu0 %v2155
    %2338 = vmatpush1.msra.mxu0 %v2154
    %2339 = vmatprep.subr.mxu0 %v2159
    %2340 = vmatpush1.msra.mxu0 %v2158
    %2341 = vmatprep.subr.mxu0 %v2163
    %2342 = vmatpush1.msra.mxu0 %v2162
    %2343 = vmatprep.subr.mxu0 %v2167
    %2344 = vmatpush1.msra.mxu0 %v2166
    %2345 = vmatprep.subr.mxu0 %v2171
    %2346 = vmatpush1.msra.mxu0 %v2170
    %2347 = vmatprep.subr.mxu0 %v2175
    %2348 = vmatpush1.msra.mxu0 %v2174
    %2349 = vmatprep.subr.mxu0 %v2179
    %2350 = vmatpush1.msra.mxu0 %v2178
    %2351 = vmatprep.subr.mxu0 %v2183
    %2352 = vmatpush1.msra.mxu0 %v2182
    %2353 = vmatprep.subr.mxu0 %v2187
    %2354 = vmatpush1.msra.mxu0 %v2186
    %2355 = vmatprep.subr.mxu0 %v2191
    %2356 = vmatpush1.msra.mxu0 %v2190
    %2357 = vmatprep.subr.mxu0 %v2195
    %2358 = vmatpush1.msra.mxu0 %v2194
    %2359 = vmatprep.subr.mxu0 %v2199
    %2360 = vmatpush1.msra.mxu0 %v2198
    %2361 = vmatprep.subr.mxu0 %v2203
    %2362 = vmatpush1.msra.mxu0 %v2202
    %2363 = vmatprep.subr.mxu0 %v2207
    %2364 = vmatpush1.msra.mxu0 %v2206
    %2365 = vmatprep.subr.mxu0 %v2211
    %2366 = vmatpush1.msra.mxu0 %v2210
    %2367 = vmatprep.subr.mxu0 %v2215
    %2368 = vmatpush1.msra.mxu0 %v2214
    %2369 = vmatprep.subr.mxu0 %v2219
    %2370 = vmatpush1.msra.mxu0 %v2218
    %2371 = vmatprep.subr.mxu0 %v2223
    %2372 = vmatpush1.msra.mxu0 %v2222
    %2373 = vmatprep.subr.mxu0 %v2227
    %2374 = vmatpush1.msra.mxu0 %v2226
    %2375 = vmatprep.subr.mxu0 %v2231
    %2376 = vmatpush1.msra.mxu0 %v2230
    %2377 = vmatprep.subr.mxu0 %v2235
    %2378 = vmatpush1.msra.mxu0 %v2234
    %2379 = vmatprep.subr.mxu0 %v2239
    %2380 = vmatpush1.msra.mxu0 %v2238
    %2381 = vmatprep.subr.mxu0 %v2243
    %2382 = vmatpush1.msra.mxu0 %v2242
    %2383 = vmatprep.subr.mxu0 %v2247
    %2384 = vmatpush1.msra.mxu0 %v2246
    %2385 = vmatprep.mubr.f32.mxu0 %v558
    %2386 = vmatmul.mubr.f32.gmra.mrb[0].mxu0 %v266
    %v2387 = vpop.f32.mrb[0].mxu0
    %v2388 = vadd.f32 %v2317, %v2387
    %v2389 = vpop.f32.mrb[0].mxu0
    %v2390 = vadd.f32 %v2319, %v2389
    %2391 = vdwg.mxu0
    %2392 = vmatprep.subr.mxu0 %v1997
    %2393 = vmatpush1.msra.mxu0 %v1996
    %2394 = vmatprep.subr.mxu0 %v2001
    %2395 = vmatpush1.msra.mxu0 %v2000
    %2396 = vmatprep.subr.mxu0 %v2005
    %2397 = vmatpush1.msra.mxu0 %v2004
    %2398 = vmatprep.subr.mxu0 %v2009
    %2399 = vmatpush1.msra.mxu0 %v2008
    %2400 = vmatprep.subr.mxu0 %v2013
    %2401 = vmatpush1.msra.mxu0 %v2012
    %2402 = vmatprep.subr.mxu0 %v2017
    %2403 = vmatpush1.msra.mxu0 %v2016
    %2404 = vmatprep.subr.mxu0 %v2021
    %2405 = vmatpush1.msra.mxu0 %v2020
    %2406 = vmatprep.subr.mxu0 %v2025
    %2407 = vmatpush1.msra.mxu0 %v2024
    %2408 = vmatprep.subr.mxu0 %v2029
    %2409 = vmatpush1.msra.mxu0 %v2028
    %2410 = vmatprep.subr.mxu0 %v2033
    %2411 = vmatpush1.msra.mxu0 %v2032
    %2412 = vmatprep.subr.mxu0 %v2037
    %2413 = vmatpush1.msra.mxu0 %v2036
    %2414 = vmatprep.subr.mxu0 %v2041
    %2415 = vmatpush1.msra.mxu0 %v2040
    %2416 = vmatprep.subr.mxu0 %v2045
    %2417 = vmatpush1.msra.mxu0 %v2044
    %2418 = vmatprep.subr.mxu0 %v2049
    %2419 = vmatpush1.msra.mxu0 %v2048
    %2420 = vmatprep.subr.mxu0 %v2053
    %2421 = vmatpush1.msra.mxu0 %v2052
    %2422 = vmatprep.subr.mxu0 %v2057
    %2423 = vmatpush1.msra.mxu0 %v2056
    %2424 = vmatprep.subr.mxu0 %v2061
    %2425 = vmatpush1.msra.mxu0 %v2060
    %2426 = vmatprep.subr.mxu0 %v2065
    %2427 = vmatpush1.msra.mxu0 %v2064
    %2428 = vmatprep.subr.mxu0 %v2069
    %2429 = vmatpush1.msra.mxu0 %v2068
    %2430 = vmatprep.subr.mxu0 %v2073
    %2431 = vmatpush1.msra.mxu0 %v2072
    %2432 = vmatprep.subr.mxu0 %v2077
    %2433 = vmatpush1.msra.mxu0 %v2076
    %2434 = vmatprep.subr.mxu0 %v2081
    %2435 = vmatpush1.msra.mxu0 %v2080
    %2436 = vmatprep.subr.mxu0 %v2085
    %2437 = vmatpush1.msra.mxu0 %v2084
    %2438 = vmatprep.subr.mxu0 %v2089
    %2439 = vmatpush1.msra.mxu0 %v2088
    %2440 = vmatprep.subr.mxu0 %v2093
    %2441 = vmatpush1.msra.mxu0 %v2092
    %2442 = vmatprep.subr.mxu0 %v2097
    %2443 = vmatpush1.msra.mxu0 %v2096
    %2444 = vmatprep.subr.mxu0 %v2101
    %2445 = vmatpush1.msra.mxu0 %v2100
    %2446 = vmatprep.subr.mxu0 %v2105
    %2447 = vmatpush1.msra.mxu0 %v2104
    %2448 = vmatprep.subr.mxu0 %v2109
    %2449 = vmatpush1.msra.mxu0 %v2108
    %2450 = vmatprep.subr.mxu0 %v2113
    %2451 = vmatpush1.msra.mxu0 %v2112
    %2452 = vmatprep.subr.mxu0 %v2117
    %2453 = vmatpush1.msra.mxu0 %v2116
    %2454 = vmatprep.subr.mxu0 %v2121
    %2455 = vmatpush1.msra.mxu0 %v2120
    %2456 = vmatprep.mubr.f32.mxu0 %v557
    %2457 = vmatmul.mubr.f32.gmra.mrb[0].mxu0 %v265
    %v2458 = vpop.f32.mrb[0].mxu0
    %v2459 = vadd.f32 0.0, %v2458
    %v2460 = vpop.f32.mrb[0].mxu0
    %v2461 = vadd.f32 0.0, %v2460
    %2462 = vdwg.mxu0
    %2463 = vmatprep.subr.mxu0 %v2125
    %2464 = vmatpush1.msra.mxu0 %v2124
    %2465 = vmatprep.subr.mxu0 %v2129
    %2466 = vmatpush1.msra.mxu0 %v2128
    %2467 = vmatprep.subr.mxu0 %v2133
    %2468 = vmatpush1.msra.mxu0 %v2132
    %2469 = vmatprep.subr.mxu0 %v2137
    %2470 = vmatpush1.msra.mxu0 %v2136
    %2471 = vmatprep.subr.mxu0 %v2141
    %2472 = vmatpush1.msra.mxu0 %v2140
    %2473 = vmatprep.subr.mxu0 %v2145
    %2474 = vmatpush1.msra.mxu0 %v2144
    %2475 = vmatprep.subr.mxu0 %v2149
    %2476 = vmatpush1.msra.mxu0 %v2148
    %2477 = vmatprep.subr.mxu0 %v2153
    %2478 = vmatpush1.msra.mxu0 %v2152
    %2479 = vmatprep.subr.mxu0 %v2157
    %2480 = vmatpush1.msra.mxu0 %v2156
    %2481 = vmatprep.subr.mxu0 %v2161
    %2482 = vmatpush1.msra.mxu0 %v2160
    %2483 = vmatprep.subr.mxu0 %v2165
    %2484 = vmatpush1.msra.mxu0 %v2164
    %2485 = vmatprep.subr.mxu0 %v2169
    %2486 = vmatpush1.msra.mxu0 %v2168
    %2487 = vmatprep.subr.mxu0 %v2173
    %2488 = vmatpush1.msra.mxu0 %v2172
    %2489 = vmatprep.subr.mxu0 %v2177
    %2490 = vmatpush1.msra.mxu0 %v2176
    %2491 = vmatprep.subr.mxu0 %v2181
    %2492 = vmatpush1.msra.mxu0 %v2180
    %2493 = vmatprep.subr.mxu0 %v2185
    %2494 = vmatpush1.msra.mxu0 %v2184
    %2495 = vmatprep.subr.mxu0 %v2189
    %2496 = vmatpush1.msra.mxu0 %v2188
    %2497 = vmatprep.subr.mxu0 %v2193
    %2498 = vmatpush1.msra.mxu0 %v2192
    %2499 = vmatprep.subr.mxu0 %v2197
    %2500 = vmatpush1.msra.mxu0 %v2196
    %2501 = vmatprep.subr.mxu0 %v2201
    %2502 = vmatpush1.msra.mxu0 %v2200
    %2503 = vmatprep.subr.mxu0 %v2205
    %2504 = vmatpush1.msra.mxu0 %v2204
    %2505 = vmatprep.subr.mxu0 %v2209
    %2506 = vmatpush1.msra.mxu0 %v2208
    %2507 = vmatprep.subr.mxu0 %v2213
    %2508 = vmatpush1.msra.mxu0 %v2212
    %2509 = vmatprep.subr.mxu0 %v2217
    %2510 = vmatpush1.msra.mxu0 %v2216
    %2511 = vmatprep.subr.mxu0 %v2221
    %2512 = vmatpush1.msra.mxu0 %v2220
    %2513 = vmatprep.subr.mxu0 %v2225
    %2514 = vmatpush1.msra.mxu0 %v2224
    %2515 = vmatprep.subr.mxu0 %v2229
    %2516 = vmatpush1.msra.mxu0 %v2228
    %2517 = vmatprep.subr.mxu0 %v2233
    %2518 = vmatpush1.msra.mxu0 %v2232
    %2519 = vmatprep.subr.mxu0 %v2237
    %2520 = vmatpush1.msra.mxu0 %v2236
    %2521 = vmatprep.subr.mxu0 %v2241
    %2522 = vmatpush1.msra.mxu0 %v2240
    %2523 = vmatprep.subr.mxu0 %v2245
    %2524 = vmatpush1.msra.mxu0 %v2244
    %2525 = vmatprep.subr.mxu0 %v2249
    %2526 = vmatpush1.msra.mxu0 %v2248
    %2527 = vmatprep.mubr.f32.mxu0 %v558
    %2528 = vmatmul.mubr.f32.gmra.mrb[0].mxu0 %v266
    %v2529 = vpop.f32.mrb[0].mxu0
    %v2530 = vadd.f32 %v2459, %v2529
    %v2531 = vpop.f32.mrb[0].mxu0
    %v2532 = vadd.f32 %v2461, %v2531
    %2533 = vdwg.mxu0
    %s2534 = scalar_lea.vmem %s5, 128
    %v2535 = vld [vmem:[%s2534] sm:$0xff]
    %v2536 = vld [vmem:[%s2534 + $0x8] sm:$0xff]
    %v2537 = vld [vmem:[%s2534 + $0x10] sm:$0xff]
    %v2538 = vld [vmem:[%s2534 + $0x18] sm:$0xff]
    %v2539 = vld [vmem:[%s2534 + $0x20] sm:$0xff]
    %v2540 = vld [vmem:[%s2534 + $0x28] sm:$0xff]
    %v2541 = vld [vmem:[%s2534 + $0x30] sm:$0xff]
    %v2542 = vld [vmem:[%s2534 + $0x38] sm:$0xff]
    %v2544 = vsel %vm853, %v2535, 0
    %v2547 = vsel %vm853, %v2536, 0
    %v2550 = vsel %vm853, %v2537, 0
    %v2553 = vsel %vm853, %v2538, 0
    %v2556 = vsel %vm853, %v2539, 0
    %v2559 = vsel %vm853, %v2540, 0
    %v2562 = vsel %vm853, %v2541, 0
    %v2565 = vsel %vm853, %v2542, 0
    %v2568 = vsel %vm878, %v2388, 0
    %v2571 = vsel %vm878, %v2390, 0
    %v2574 = vsel %vm878, %v2530, 0
    %v2577 = vsel %vm878, %v2532, 0
    %2579 = vmatprep.subr.mxu0 %v2571
    %2580 = vmatpush1.msra.mxu0 %v2568
    %2581 = vmatprep.subr.mxu0 0.0
    %2582 = vmatpush1.msra.mxu0 0.0
    %2583 = vmatprep.subr.mxu0 0.0
    %2584 = vmatpush1.msra.mxu0 0.0
    %2585 = vmatprep.subr.mxu0 0.0
    %2586 = vmatpush1.msra.mxu0 0.0
    %2587 = vmatprep.subr.mxu0 0.0
    %2588 = vmatpush1.msra.mxu0 0.0
    %2589 = vmatprep.subr.mxu0 0.0
    %2590 = vmatpush1.msra.mxu0 0.0
    %2591 = vmatprep.subr.mxu0 0.0
    %2592 = vmatpush1.msra.mxu0 0.0
    %2593 = vmatprep.subr.mxu0 0.0
    %2594 = vmatpush1.msra.mxu0 0.0
    %2595 = vmatprep.subr.mxu0 0.0
    %2596 = vmatpush1.msra.mxu0 0.0
    %2597 = vmatprep.subr.mxu0 0.0
    %2598 = vmatpush1.msra.mxu0 0.0
    %2599 = vmatprep.subr.mxu0 0.0
    %2600 = vmatpush1.msra.mxu0 0.0
    %2601 = vmatprep.subr.mxu0 0.0
    %2602 = vmatpush1.msra.mxu0 0.0
    %2603 = vmatprep.subr.mxu0 0.0
    %2604 = vmatpush1.msra.mxu0 0.0
    %2605 = vmatprep.subr.mxu0 0.0
    %2606 = vmatpush1.msra.mxu0 0.0
    %2607 = vmatprep.subr.mxu0 0.0
    %2608 = vmatpush1.msra.mxu0 0.0
    %2609 = vmatprep.subr.mxu0 0.0
    %2610 = vmatpush1.msra.mxu0 0.0
    %2611 = vmatprep.subr.mxu0 0.0
    %2612 = vmatpush1.msra.mxu0 0.0
    %2613 = vmatprep.subr.mxu0 0.0
    %2614 = vmatpush1.msra.mxu0 0.0
    %2615 = vmatprep.subr.mxu0 0.0
    %2616 = vmatpush1.msra.mxu0 0.0
    %2617 = vmatprep.subr.mxu0 0.0
    %2618 = vmatpush1.msra.mxu0 0.0
    %2619 = vmatprep.subr.mxu0 0.0
    %2620 = vmatpush1.msra.mxu0 0.0
    %2621 = vmatprep.subr.mxu0 0.0
    %2622 = vmatpush1.msra.mxu0 0.0
    %2623 = vmatprep.subr.mxu0 0.0
    %2624 = vmatpush1.msra.mxu0 0.0
    %2625 = vmatprep.subr.mxu0 0.0
    %2626 = vmatpush1.msra.mxu0 0.0
    %2627 = vmatprep.subr.mxu0 0.0
    %2628 = vmatpush1.msra.mxu0 0.0
    %2629 = vmatprep.subr.mxu0 0.0
    %2630 = vmatpush1.msra.mxu0 0.0
    %2631 = vmatprep.subr.mxu0 0.0
    %2632 = vmatpush1.msra.mxu0 0.0
    %2633 = vmatprep.subr.mxu0 0.0
    %2634 = vmatpush1.msra.mxu0 0.0
    %2635 = vmatprep.subr.mxu0 0.0
    %2636 = vmatpush1.msra.mxu0 0.0
    %2637 = vmatprep.subr.mxu0 0.0
    %2638 = vmatpush1.msra.mxu0 0.0
    %2639 = vmatprep.subr.mxu0 0.0
    %2640 = vmatpush1.msra.mxu0 0.0
    %2641 = vmatprep.subr.mxu0 0.0
    %2642 = vmatpush1.msra.mxu0 0.0
    %2643 = vmatprep.mubr.f32.mxu0 0.0
    %2644 = vmatmul.mubr.f32.gmra.mrb[0].mxu0 %v2544
    %v2645 = vpop.f32.mrb[0].mxu0
    %v2646 = vadd.f32 0.0, %v2645
    %v2647 = vpop.f32.mrb[0].mxu0
    %v2648 = vadd.f32 0.0, %v2647
    %2649 = vmatprep.mubr.f32.mxu0 0.0
    %2650 = vmatmul.mubr.f32.gmra.mrb[0].mxu0 %v2547
    %v2651 = vpop.f32.mrb[0].mxu0
    %v2652 = vadd.f32 0.0, %v2651
    %v2653 = vpop.f32.mrb[0].mxu0
    %v2654 = vadd.f32 0.0, %v2653
    %2655 = vmatprep.mubr.f32.mxu0 0.0
    %2656 = vmatmul.mubr.f32.gmra.mrb[0].mxu0 %v2550
    %v2657 = vpop.f32.mrb[0].mxu0
    %v2658 = vadd.f32 0.0, %v2657
    %v2659 = vpop.f32.mrb[0].mxu0
    %v2660 = vadd.f32 0.0, %v2659
    %2661 = vmatprep.mubr.f32.mxu0 0.0
    %2662 = vmatmul.mubr.f32.gmra.mrb[0].mxu0 %v2553
    %v2663 = vpop.f32.mrb[0].mxu0
    %v2664 = vadd.f32 0.0, %v2663
    %v2665 = vpop.f32.mrb[0].mxu0
    %v2666 = vadd.f32 0.0, %v2665
    %2667 = vmatprep.mubr.f32.mxu0 0.0
    %2668 = vmatmul.mubr.f32.gmra.mrb[0].mxu0 %v2556
    %v2669 = vpop.f32.mrb[0].mxu0
    %v2670 = vadd.f32 0.0, %v2669
    %v2671 = vpop.f32.mrb[0].mxu0
    %v2672 = vadd.f32 0.0, %v2671
    %2673 = vmatprep.mubr.f32.mxu0 0.0
    %2674 = vmatmul.mubr.f32.gmra.mrb[0].mxu0 %v2559
    %v2675 = vpop.f32.mrb[0].mxu0
    %v2676 = vadd.f32 0.0, %v2675
    %v2677 = vpop.f32.mrb[0].mxu0
    %v2678 = vadd.f32 0.0, %v2677
    %2679 = vmatprep.mubr.f32.mxu0 0.0
    %2680 = vmatmul.mubr.f32.gmra.mrb[0].mxu0 %v2562
    %v2681 = vpop.f32.mrb[0].mxu0
    %v2682 = vadd.f32 0.0, %v2681
    %v2683 = vpop.f32.mrb[0].mxu0
    %v2684 = vadd.f32 0.0, %v2683
    %2685 = vmatprep.mubr.f32.mxu0 0.0
    %2686 = vmatmul.mubr.f32.gmra.mrb[0].mxu0 %v2565
    %v2687 = vpop.f32.mrb[0].mxu0
    %v2688 = vadd.f32 0.0, %v2687
    %v2689 = vpop.f32.mrb[0].mxu0
    %v2690 = vadd.f32 0.0, %v2689
    %2691 = vdwg.mxu0
    %2692 = vmatprep.subr.mxu0 %v2577
    %2693 = vmatpush1.msra.mxu0 %v2574
    %2694 = vmatprep.subr.mxu0 0.0
    %2695 = vmatpush1.msra.mxu0 0.0
    %2696 = vmatprep.subr.mxu0 0.0
    %2697 = vmatpush1.msra.mxu0 0.0
    %2698 = vmatprep.subr.mxu0 0.0
    %2699 = vmatpush1.msra.mxu0 0.0
    %2700 = vmatprep.subr.mxu0 0.0
    %2701 = vmatpush1.msra.mxu0 0.0
    %2702 = vmatprep.subr.mxu0 0.0
    %2703 = vmatpush1.msra.mxu0 0.0
    %2704 = vmatprep.subr.mxu0 0.0
    %2705 = vmatpush1.msra.mxu0 0.0
    %2706 = vmatprep.subr.mxu0 0.0
    %2707 = vmatpush1.msra.mxu0 0.0
    %2708 = vmatprep.subr.mxu0 0.0
    %2709 = vmatpush1.msra.mxu0 0.0
    %2710 = vmatprep.subr.mxu0 0.0
    %2711 = vmatpush1.msra.mxu0 0.0
    %2712 = vmatprep.subr.mxu0 0.0
    %2713 = vmatpush1.msra.mxu0 0.0
    %2714 = vmatprep.subr.mxu0 0.0
    %2715 = vmatpush1.msra.mxu0 0.0
    %2716 = vmatprep.subr.mxu0 0.0
    %2717 = vmatpush1.msra.mxu0 0.0
    %2718 = vmatprep.subr.mxu0 0.0
    %2719 = vmatpush1.msra.mxu0 0.0
    %2720 = vmatprep.subr.mxu0 0.0
    %2721 = vmatpush1.msra.mxu0 0.0
    %2722 = vmatprep.subr.mxu0 0.0
    %2723 = vmatpush1.msra.mxu0 0.0
    %2724 = vmatprep.subr.mxu0 0.0
    %2725 = vmatpush1.msra.mxu0 0.0
    %2726 = vmatprep.subr.mxu0 0.0
    %2727 = vmatpush1.msra.mxu0 0.0
    %2728 = vmatprep.subr.mxu0 0.0
    %2729 = vmatpush1.msra.mxu0 0.0
    %2730 = vmatprep.subr.mxu0 0.0
    %2731 = vmatpush1.msra.mxu0 0.0
    %2732 = vmatprep.subr.mxu0 0.0
    %2733 = vmatpush1.msra.mxu0 0.0
    %2734 = vmatprep.subr.mxu0 0.0
    %2735 = vmatpush1.msra.mxu0 0.0
    %2736 = vmatprep.subr.mxu0 0.0
    %2737 = vmatpush1.msra.mxu0 0.0
    %2738 = vmatprep.subr.mxu0 0.0
    %2739 = vmatpush1.msra.mxu0 0.0
    %2740 = vmatprep.subr.mxu0 0.0
    %2741 = vmatpush1.msra.mxu0 0.0
    %2742 = vmatprep.subr.mxu0 0.0
    %2743 = vmatpush1.msra.mxu0 0.0
    %2744 = vmatprep.subr.mxu0 0.0
    %2745 = vmatpush1.msra.mxu0 0.0
    %2746 = vmatprep.subr.mxu0 0.0
    %2747 = vmatpush1.msra.mxu0 0.0
    %2748 = vmatprep.subr.mxu0 0.0
    %2749 = vmatpush1.msra.mxu0 0.0
    %2750 = vmatprep.subr.mxu0 0.0
    %2751 = vmatpush1.msra.mxu0 0.0
    %2752 = vmatprep.subr.mxu0 0.0
    %2753 = vmatpush1.msra.mxu0 0.0
    %2754 = vmatprep.subr.mxu0 0.0
    %2755 = vmatpush1.msra.mxu0 0.0
    %2756 = vmatprep.mubr.f32.mxu0 0.0
    %2757 = vmatmul.mubr.f32.gmra.mrb[0].mxu0 %v2544
    %v2758 = vpop.f32.mrb[0].mxu0
    %v2759 = vadd.f32 0.0, %v2758
    %v2760 = vpop.f32.mrb[0].mxu0
    %v2761 = vadd.f32 0.0, %v2760
    %2762 = vmatprep.mubr.f32.mxu0 0.0
    %2763 = vmatmul.mubr.f32.gmra.mrb[0].mxu0 %v2547
    %v2764 = vpop.f32.mrb[0].mxu0
    %v2765 = vadd.f32 0.0, %v2764
    %v2766 = vpop.f32.mrb[0].mxu0
    %v2767 = vadd.f32 0.0, %v2766
    %2768 = vmatprep.mubr.f32.mxu0 0.0
    %2769 = vmatmul.mubr.f32.gmra.mrb[0].mxu0 %v2550
    %v2770 = vpop.f32.mrb[0].mxu0
    %v2771 = vadd.f32 0.0, %v2770
    %v2772 = vpop.f32.mrb[0].mxu0
    %v2773 = vadd.f32 0.0, %v2772
    %2774 = vmatprep.mubr.f32.mxu0 0.0
    %2775 = vmatmul.mubr.f32.gmra.mrb[0].mxu0 %v2553
    %v2776 = vpop.f32.mrb[0].mxu0
    %v2777 = vadd.f32 0.0, %v2776
    %v2778 = vpop.f32.mrb[0].mxu0
    %v2779 = vadd.f32 0.0, %v2778
    %2780 = vmatprep.mubr.f32.mxu0 0.0
    %2781 = vmatmul.mubr.f32.gmra.mrb[0].mxu0 %v2556
    %v2782 = vpop.f32.mrb[0].mxu0
    %v2783 = vadd.f32 0.0, %v2782
    %v2784 = vpop.f32.mrb[0].mxu0
    %v2785 = vadd.f32 0.0, %v2784
    %2786 = vmatprep.mubr.f32.mxu0 0.0
    %2787 = vmatmul.mubr.f32.gmra.mrb[0].mxu0 %v2559
    %v2788 = vpop.f32.mrb[0].mxu0
    %v2789 = vadd.f32 0.0, %v2788
    %v2790 = vpop.f32.mrb[0].mxu0
    %v2791 = vadd.f32 0.0, %v2790
    %2792 = vmatprep.mubr.f32.mxu0 0.0
    %2793 = vmatmul.mubr.f32.gmra.mrb[0].mxu0 %v2562
    %v2794 = vpop.f32.mrb[0].mxu0
    %v2795 = vadd.f32 0.0, %v2794
    %v2796 = vpop.f32.mrb[0].mxu0
    %v2797 = vadd.f32 0.0, %v2796
    %2798 = vmatprep.mubr.f32.mxu0 0.0
    %2799 = vmatmul.mubr.f32.gmra.mrb[0].mxu0 %v2565
    %v2800 = vpop.f32.mrb[0].mxu0
    %v2801 = vadd.f32 0.0, %v2800
    %v2802 = vpop.f32.mrb[0].mxu0
    %v2803 = vadd.f32 0.0, %v2802
    %2804 = vdwg.mxu0
    %v2805 = vadd.f32 %v1961, %v2646
    %v2806 = vadd.f32 %v1962, %v2648
    %v2807 = vadd.f32 %v1963, %v2759
    %v2808 = vadd.f32 %v1964, %v2761
    %v2809 = vadd.f32 %v1965, %v2652
    %v2810 = vadd.f32 %v1966, %v2654
    %v2811 = vadd.f32 %v1967, %v2765
    %v2812 = vadd.f32 %v1968, %v2767
    %v2813 = vadd.f32 %v1969, %v2658
    %v2814 = vadd.f32 %v1970, %v2660
    %v2815 = vadd.f32 %v1971, %v2771
    %v2816 = vadd.f32 %v1972, %v2773
    %v2817 = vadd.f32 %v1973, %v2664
    %v2818 = vadd.f32 %v1974, %v2666
    %v2819 = vadd.f32 %v1975, %v2777
    %v2820 = vadd.f32 %v1976, %v2779
    %v2821 = vadd.f32 %v1977, %v2670
    %v2822 = vadd.f32 %v1978, %v2672
    %v2823 = vadd.f32 %v1979, %v2783
    %v2824 = vadd.f32 %v1980, %v2785
    %v2825 = vadd.f32 %v1981, %v2676
    %v2826 = vadd.f32 %v1982, %v2678
    %v2827 = vadd.f32 %v1983, %v2789
    %v2828 = vadd.f32 %v1984, %v2791
    %v2829 = vadd.f32 %v1985, %v2682
    %v2830 = vadd.f32 %v1986, %v2684
    %v2831 = vadd.f32 %v1987, %v2795
    %v2832 = vadd.f32 %v1988, %v2797
    %v2833 = vadd.f32 %v1989, %v2688
    %v2834 = vadd.f32 %v1990, %v2690
    %v2835 = vadd.f32 %v1991, %v2801
    %v2836 = vadd.f32 %v1992, %v2803
    %v2837 = vmax.f32 %v2805, 0.0
    %v2838 = vmax.f32 %v2806, 0.0
    %v2839 = vmax.f32 %v2807, 0.0
    %v2840 = vmax.f32 %v2808, 0.0
    %v2841 = vmax.f32 %v2809, 0.0
    %v2842 = vmax.f32 %v2810, 0.0
    %v2843 = vmax.f32 %v2811, 0.0
    %v2844 = vmax.f32 %v2812, 0.0
    %v2845 = vmax.f32 %v2813, 0.0
    %v2846 = vmax.f32 %v2814, 0.0
    %v2847 = vmax.f32 %v2815, 0.0
    %v2848 = vmax.f32 %v2816, 0.0
    %v2849 = vmax.f32 %v2817, 0.0
    %v2850 = vmax.f32 %v2818, 0.0
    %v2851 = vmax.f32 %v2819, 0.0
    %v2852 = vmax.f32 %v2820, 0.0
    %v2853 = vmax.f32 %v2821, 0.0
    %v2854 = vmax.f32 %v2822, 0.0
    %v2855 = vmax.f32 %v2823, 0.0
    %v2856 = vmax.f32 %v2824, 0.0
    %v2857 = vmax.f32 %v2825, 0.0
    %v2858 = vmax.f32 %v2826, 0.0
    %v2859 = vmax.f32 %v2827, 0.0
    %v2860 = vmax.f32 %v2828, 0.0
    %v2861 = vmax.f32 %v2829, 0.0
    %v2862 = vmax.f32 %v2830, 0.0
    %v2863 = vmax.f32 %v2831, 0.0
    %v2864 = vmax.f32 %v2832, 0.0
    %v2865 = vmax.f32 %v2833, 0.0
    %v2866 = vmax.f32 %v2834, 0.0
    %v2867 = vmax.f32 %v2835, 0.0
    %v2868 = vmax.f32 %v2836, 0.0
    %v2869 = vld [vmem:[#allocation13] sm:$0xff]
    %v2870 = vld [vmem:[#allocation13 + $0x8] sm:$0xff]
    %v2871 = vld [vmem:[#allocation13 + $0x10] sm:$0xff]
    %v2872 = vld [vmem:[#allocation13 + $0x18] sm:$0xff]
    %v2873 = vld [vmem:[#allocation13 + $0x20] sm:$0xff]
    %v2874 = vld [vmem:[#allocation13 + $0x28] sm:$0xff]
    %v2875 = vld [vmem:[#allocation13 + $0x30] sm:$0xff]
    %v2876 = vld [vmem:[#allocation13 + $0x38] sm:$0xff]
    %v2877 = vld [vmem:[#allocation13 + $0x40] sm:$0xff]
    %v2878 = vld [vmem:[#allocation13 + $0x48] sm:$0xff]
    %v2879 = vld [vmem:[#allocation13 + $0x50] sm:$0xff]
    %v2880 = vld [vmem:[#allocation13 + $0x58] sm:$0xff]
    %v2881 = vld [vmem:[#allocation13 + $0x60] sm:$0xff]
    %v2882 = vld [vmem:[#allocation13 + $0x68] sm:$0xff]
    %v2883 = vld [vmem:[#allocation13 + $0x70] sm:$0xff]
    %v2884 = vld [vmem:[#allocation13 + $0x78] sm:$0xff]
    %v2885 = vld [vmem:[#allocation13 + $0x80] sm:$0xff]
    %v2886 = vld [vmem:[#allocation13 + $0x88] sm:$0xff]
    %v2887 = vld [vmem:[#allocation13 + $0x90] sm:$0xff]
    %v2888 = vld [vmem:[#allocation13 + $0x98] sm:$0xff]
    %v2889 = vld [vmem:[#allocation13 + $0xa0] sm:$0xff]
    %v2890 = vld [vmem:[#allocation13 + $0xa8] sm:$0xff]
    %v2891 = vld [vmem:[#allocation13 + $0xb0] sm:$0xff]
    %v2892 = vld [vmem:[#allocation13 + $0xb8] sm:$0xff]
    %2893 = vrot.lane.b32.xlu0 %v2837, 32
    %v2894 = vpop.permute.xlu0 %2893
    %2895 = vrot.lane.b32.xlu0 %v2841, 32
    %v2896 = vpop.permute.xlu0 %2895
    %2897 = vrot.lane.b32.xlu0 %v2845, 32
    %v2898 = vpop.permute.xlu0 %2897
    %2899 = vrot.lane.b32.xlu0 %v2849, 32
    %v2900 = vpop.permute.xlu0 %2899
    %2901 = vrot.lane.b32.xlu0 %v2853, 32
    %v2902 = vpop.permute.xlu0 %2901
    %2903 = vrot.lane.b32.xlu0 %v2857, 32
    %v2904 = vpop.permute.xlu0 %2903
    %2905 = vrot.lane.b32.xlu0 %v2861, 32
    %v2906 = vpop.permute.xlu0 %2905
    %2907 = vrot.lane.b32.xlu0 %v2865, 32
    %v2908 = vpop.permute.xlu0 %2907
    %2909 = vrot.lane.b32.xlu0 %v2838, 32
    %v2910 = vpop.permute.xlu0 %2909
    %2911 = vrot.lane.b32.xlu0 %v2842, 32
    %v2912 = vpop.permute.xlu0 %2911
    %2913 = vrot.lane.b32.xlu0 %v2846, 32
    %v2914 = vpop.permute.xlu0 %2913
    %2915 = vrot.lane.b32.xlu0 %v2850, 32
    %v2916 = vpop.permute.xlu0 %2915
    %2917 = vrot.lane.b32.xlu0 %v2854, 32
    %v2918 = vpop.permute.xlu0 %2917
    %2919 = vrot.lane.b32.xlu0 %v2858, 32
    %v2920 = vpop.permute.xlu0 %2919
    %2921 = vrot.lane.b32.xlu0 %v2862, 32
    %v2922 = vpop.permute.xlu0 %2921
    %2923 = vrot.lane.b32.xlu0 %v2866, 32
    %v2924 = vpop.permute.xlu0 %2923
    %2925 = vrot.lane.b32.xlu0 %v2839, 32
    %v2926 = vpop.permute.xlu0 %2925
    %2927 = vrot.lane.b32.xlu0 %v2843, 32
    %v2928 = vpop.permute.xlu0 %2927
    %2929 = vrot.lane.b32.xlu0 %v2847, 32
    %v2930 = vpop.permute.xlu0 %2929
    %2931 = vrot.lane.b32.xlu0 %v2851, 32
    %v2932 = vpop.permute.xlu0 %2931
    %2933 = vrot.lane.b32.xlu0 %v2855, 32
    %v2934 = vpop.permute.xlu0 %2933
    %2935 = vrot.lane.b32.xlu0 %v2859, 32
    %v2936 = vpop.permute.xlu0 %2935
    %2937 = vrot.lane.b32.xlu0 %v2863, 32
    %v2938 = vpop.permute.xlu0 %2937
    %2939 = vrot.lane.b32.xlu0 %v2867, 32
    %v2940 = vpop.permute.xlu0 %2939
    %2941 = vrot.lane.b32.xlu0 %v2840, 32
    %v2942 = vpop.permute.xlu0 %2941
    %2943 = vrot.lane.b32.xlu0 %v2844, 32
    %v2944 = vpop.permute.xlu0 %2943
    %2945 = vrot.lane.b32.xlu0 %v2848, 32
    %v2946 = vpop.permute.xlu0 %2945
    %2947 = vrot.lane.b32.xlu0 %v2852, 32
    %v2948 = vpop.permute.xlu0 %2947
    %2949 = vrot.lane.b32.xlu0 %v2856, 32
    %v2950 = vpop.permute.xlu0 %2949
    %2951 = vrot.lane.b32.xlu0 %v2860, 32
    %v2952 = vpop.permute.xlu0 %2951
    %2953 = vrot.lane.b32.xlu0 %v2864, 32
    %v2954 = vpop.permute.xlu0 %2953
    %2955 = vrot.lane.b32.xlu0 %v2868, 32
    %v2956 = vpop.permute.xlu0 %2955
    %v2957 = vlaneseq
    %v2958 = vand.u32 %v2957, 127
    %vm2959 = vcmp.lt.s32.totalorder %v2958, 32
    %v2960 = vsel %vm2959, %v2926, %v2942
    %v2961 = vsel %vm2959, %v2928, %v2944
    %v2962 = vsel %vm2959, %v2930, %v2946
    %v2963 = vsel %vm2959, %v2932, %v2948
    %v2964 = vsel %vm2959, %v2934, %v2950
    %v2965 = vsel %vm2959, %v2936, %v2952
    %v2966 = vsel %vm2959, %v2938, %v2954
    %v2967 = vsel %vm2959, %v2940, %v2956
    %v2968 = vsel %vm2959, %v2910, %v2926
    %v2969 = vsel %vm2959, %v2912, %v2928
    %v2970 = vsel %vm2959, %v2914, %v2930
    %v2971 = vsel %vm2959, %v2916, %v2932
    %v2972 = vsel %vm2959, %v2918, %v2934
    %v2973 = vsel %vm2959, %v2920, %v2936
    %v2974 = vsel %vm2959, %v2922, %v2938
    %v2975 = vsel %vm2959, %v2924, %v2940
    %v2976 = vsel %vm2959, %v2894, %v2910
    %v2977 = vsel %vm2959, %v2896, %v2912
    %v2978 = vsel %vm2959, %v2898, %v2914
    %v2979 = vsel %vm2959, %v2900, %v2916
    %v2980 = vsel %vm2959, %v2902, %v2918
    %v2981 = vsel %vm2959, %v2904, %v2920
    %v2982 = vsel %vm2959, %v2906, %v2922
    %v2983 = vsel %vm2959, %v2908, %v2924
    %v2984 = vsel %vm2959, %v2942, %v2894
    %v2985 = vsel %vm2959, %v2944, %v2896
    %v2986 = vsel %vm2959, %v2946, %v2898
    %v2987 = vsel %vm2959, %v2948, %v2900
    %v2988 = vsel %vm2959, %v2950, %v2902
    %v2989 = vsel %vm2959, %v2952, %v2904
    %v2990 = vsel %vm2959, %v2954, %v2906
    %v2991 = vsel %vm2959, %v2956, %v2908
    %v2992 = vld [vmem:[#allocation10] sm:$0xf]
    %v2994 = vlaneseq
    %v2995 = vshrl.u32 %v2994, 7
    %v2996 = vsub.s32 0, %v2995
    %v2997 = vrot.slane %v2992, %v2996
    %v2998 = vlaneseq
    %v2999 = vshrl.u32 %v2998, 7
    %v3000 = vsub.s32 1, %v2999
    %v3001 = vrot.slane %v2992, %v3000
    %v3002 = vlaneseq
    %v3003 = vshrl.u32 %v3002, 7
    %v3004 = vsub.s32 2, %v3003
    %v3005 = vrot.slane %v2992, %v3004
    %v3006 = vlaneseq
    %v3007 = vshrl.u32 %v3006, 7
    %v3008 = vsub.s32 3, %v3007
    %v3009 = vrot.slane %v2992, %v3008
    %v3014 = vmul.f32 %v2984, %v2997
    %v3015 = vmul.f32 %v2976, %v3001
    %v3016 = vmul.f32 %v2968, %v3005
    %v3017 = vmul.f32 %v2960, %v3009
    %v3018 = vmul.f32 %v2985, %v2997
    %v3019 = vmul.f32 %v2977, %v3001
    %v3020 = vmul.f32 %v2969, %v3005
    %v3021 = vmul.f32 %v2961, %v3009
    %v3022 = vmul.f32 %v2986, %v2997
    %v3023 = vmul.f32 %v2978, %v3001
    %v3024 = vmul.f32 %v2970, %v3005
    %v3025 = vmul.f32 %v2962, %v3009
    %v3026 = vmul.f32 %v2987, %v2997
    %v3027 = vmul.f32 %v2979, %v3001
    %v3028 = vmul.f32 %v2971, %v3005
    %v3029 = vmul.f32 %v2963, %v3009
    %v3030 = vmul.f32 %v2988, %v2997
    %v3031 = vmul.f32 %v2980, %v3001
    %v3032 = vmul.f32 %v2972, %v3005
    %v3033 = vmul.f32 %v2964, %v3009
    %v3034 = vmul.f32 %v2989, %v2997
    %v3035 = vmul.f32 %v2981, %v3001
    %v3036 = vmul.f32 %v2973, %v3005
    %v3037 = vmul.f32 %v2965, %v3009
    %v3038 = vmul.f32 %v2990, %v2997
    %v3039 = vmul.f32 %v2982, %v3001
    %v3040 = vmul.f32 %v2974, %v3005
    %v3041 = vmul.f32 %v2966, %v3009
    %v3042 = vmul.f32 %v2991, %v2997
    %v3043 = vmul.f32 %v2983, %v3001
    %v3044 = vmul.f32 %v2975, %v3005
    %v3045 = vmul.f32 %v2967, %v3009
    %3046 = vrot.lane.b32.xlu0 %v2837, 16
    %v3047 = vpop.permute.xlu0 %3046
    %3048 = vrot.lane.b32.xlu0 %v2841, 16
    %v3049 = vpop.permute.xlu0 %3048
    %3050 = vrot.lane.b32.xlu0 %v2845, 16
    %v3051 = vpop.permute.xlu0 %3050
    %3052 = vrot.lane.b32.xlu0 %v2849, 16
    %v3053 = vpop.permute.xlu0 %3052
    %3054 = vrot.lane.b32.xlu0 %v2853, 16
    %v3055 = vpop.permute.xlu0 %3054
    %3056 = vrot.lane.b32.xlu0 %v2857, 16
    %v3057 = vpop.permute.xlu0 %3056
    %3058 = vrot.lane.b32.xlu0 %v2861, 16
    %v3059 = vpop.permute.xlu0 %3058
    %3060 = vrot.lane.b32.xlu0 %v2865, 16
    %v3061 = vpop.permute.xlu0 %3060
    %3062 = vrot.lane.b32.xlu0 %v2838, 16
    %v3063 = vpop.permute.xlu0 %3062
    %3064 = vrot.lane.b32.xlu0 %v2842, 16
    %v3065 = vpop.permute.xlu0 %3064
    %3066 = vrot.lane.b32.xlu0 %v2846, 16
    %v3067 = vpop.permute.xlu0 %3066
    %3068 = vrot.lane.b32.xlu0 %v2850, 16
    %v3069 = vpop.permute.xlu0 %3068
    %3070 = vrot.lane.b32.xlu0 %v2854, 16
    %v3071 = vpop.permute.xlu0 %3070
    %3072 = vrot.lane.b32.xlu0 %v2858, 16
    %v3073 = vpop.permute.xlu0 %3072
    %3074 = vrot.lane.b32.xlu0 %v2862, 16
    %v3075 = vpop.permute.xlu0 %3074
    %3076 = vrot.lane.b32.xlu0 %v2866, 16
    %v3077 = vpop.permute.xlu0 %3076
    %3078 = vrot.lane.b32.xlu0 %v2839, 16
    %v3079 = vpop.permute.xlu0 %3078
    %3080 = vrot.lane.b32.xlu0 %v2843, 16
    %v3081 = vpop.permute.xlu0 %3080
    %3082 = vrot.lane.b32.xlu0 %v2847, 16
    %v3083 = vpop.permute.xlu0 %3082
    %3084 = vrot.lane.b32.xlu0 %v2851, 16
    %v3085 = vpop.permute.xlu0 %3084
    %3086 = vrot.lane.b32.xlu0 %v2855, 16
    %v3087 = vpop.permute.xlu0 %3086
    %3088 = vrot.lane.b32.xlu0 %v2859, 16
    %v3089 = vpop.permute.xlu0 %3088
    %3090 = vrot.lane.b32.xlu0 %v2863, 16
    %v3091 = vpop.permute.xlu0 %3090
    %3092 = vrot.lane.b32.xlu0 %v2867, 16
    %v3093 = vpop.permute.xlu0 %3092
    %3094 = vrot.lane.b32.xlu0 %v2840, 16
    %v3095 = vpop.permute.xlu0 %3094
    %3096 = vrot.lane.b32.xlu0 %v2844, 16
    %v3097 = vpop.permute.xlu0 %3096
    %3098 = vrot.lane.b32.xlu0 %v2848, 16
    %v3099 = vpop.permute.xlu0 %3098
    %3100 = vrot.lane.b32.xlu0 %v2852, 16
    %v3101 = vpop.permute.xlu0 %3100
    %3102 = vrot.lane.b32.xlu0 %v2856, 16
    %v3103 = vpop.permute.xlu0 %3102
    %3104 = vrot.lane.b32.xlu0 %v2860, 16
    %v3105 = vpop.permute.xlu0 %3104
    %3106 = vrot.lane.b32.xlu0 %v2864, 16
    %v3107 = vpop.permute.xlu0 %3106
    %3108 = vrot.lane.b32.xlu0 %v2868, 16
    %v3109 = vpop.permute.xlu0 %3108
    %vm3110 = vcmp.lt.s32.totalorder %v2958, 16
    %v3111 = vsel %vm3110, %v3079, %v3095
    %v3112 = vsel %vm3110, %v3081, %v3097
    %v3113 = vsel %vm3110, %v3083, %v3099
    %v3114 = vsel %vm3110, %v3085, %v3101
    %v3115 = vsel %vm3110, %v3087, %v3103
    %v3116 = vsel %vm3110, %v3089, %v3105
    %v3117 = vsel %vm3110, %v3091, %v3107
    %v3118 = vsel %vm3110, %v3093, %v3109
    %v3119 = vsel %vm3110, %v3063, %v3079
    %v3120 = vsel %vm3110, %v3065, %v3081
    %v3121 = vsel %vm3110, %v3067, %v3083
    %v3122 = vsel %vm3110, %v3069, %v3085
    %v3123 = vsel %vm3110, %v3071, %v3087
    %v3124 = vsel %vm3110, %v3073, %v3089
    %v3125 = vsel %vm3110, %v3075, %v3091
    %v3126 = vsel %vm3110, %v3077, %v3093
    %v3127 = vsel %vm3110, %v3047, %v3063
    %v3128 = vsel %vm3110, %v3049, %v3065
    %v3129 = vsel %vm3110, %v3051, %v3067
    %v3130 = vsel %vm3110, %v3053, %v3069
    %v3131 = vsel %vm3110, %v3055, %v3071
    %v3132 = vsel %vm3110, %v3057, %v3073
    %v3133 = vsel %vm3110, %v3059, %v3075
    %v3134 = vsel %vm3110, %v3061, %v3077
    %v3135 = vsel %vm3110, %v3095, %v3047
    %v3136 = vsel %vm3110, %v3097, %v3049
    %v3137 = vsel %vm3110, %v3099, %v3051
    %v3138 = vsel %vm3110, %v3101, %v3053
    %v3139 = vsel %vm3110, %v3103, %v3055
    %v3140 = vsel %vm3110, %v3105, %v3057
    %v3141 = vsel %vm3110, %v3107, %v3059
    %v3142 = vsel %vm3110, %v3109, %v3061
    %s3143 = scalar_lea.vmem [#allocation10], 4
    %v3144 = vld [vmem:[%s3143] sm:$0xf]
    %v3146 = vlaneseq
    %v3147 = vshrl.u32 %v3146, 7
    %v3148 = vsub.s32 0, %v3147
    %v3149 = vrot.slane %v3144, %v3148
    %v3150 = vlaneseq
    %v3151 = vshrl.u32 %v3150, 7
    %v3152 = vsub.s32 1, %v3151
    %v3153 = vrot.slane %v3144, %v3152
    %v3154 = vlaneseq
    %v3155 = vshrl.u32 %v3154, 7
    %v3156 = vsub.s32 2, %v3155
    %v3157 = vrot.slane %v3144, %v3156
    %v3158 = vlaneseq
    %v3159 = vshrl.u32 %v3158, 7
    %v3160 = vsub.s32 3, %v3159
    %v3161 = vrot.slane %v3144, %v3160
    %v3166 = vmul.f32 %v3135, %v3149
    %v3167 = vmul.f32 %v3127, %v3153
    %v3168 = vmul.f32 %v3119, %v3157
    %v3169 = vmul.f32 %v3111, %v3161
    %v3170 = vmul.f32 %v3136, %v3149
    %v3171 = vmul.f32 %v3128, %v3153
    %v3172 = vmul.f32 %v3120, %v3157
    %v3173 = vmul.f32 %v3112, %v3161
    %v3174 = vmul.f32 %v3137, %v3149
    %v3175 = vmul.f32 %v3129, %v3153
    %v3176 = vmul.f32 %v3121, %v3157
    %v3177 = vmul.f32 %v3113, %v3161
    %v3178 = vmul.f32 %v3138, %v3149
    %v3179 = vmul.f32 %v3130, %v3153
    %v3180 = vmul.f32 %v3122, %v3157
    %v3181 = vmul.f32 %v3114, %v3161
    %v3182 = vmul.f32 %v3139, %v3149
    %v3183 = vmul.f32 %v3131, %v3153
    %v3184 = vmul.f32 %v3123, %v3157
    %v3185 = vmul.f32 %v3115, %v3161
    %v3186 = vmul.f32 %v3140, %v3149
    %v3187 = vmul.f32 %v3132, %v3153
    %v3188 = vmul.f32 %v3124, %v3157
    %v3189 = vmul.f32 %v3116, %v3161
    %v3190 = vmul.f32 %v3141, %v3149
    %v3191 = vmul.f32 %v3133, %v3153
    %v3192 = vmul.f32 %v3125, %v3157
    %v3193 = vmul.f32 %v3117, %v3161
    %v3194 = vmul.f32 %v3142, %v3149
    %v3195 = vmul.f32 %v3134, %v3153
    %v3196 = vmul.f32 %v3126, %v3157
    %v3197 = vmul.f32 %v3118, %v3161
    %3198 = vrot.lane.b32.xlu0 %v2837, 112
    %v3199 = vpop.permute.xlu0 %3198
    %3200 = vrot.lane.b32.xlu0 %v2841, 112
    %v3201 = vpop.permute.xlu0 %3200
    %3202 = vrot.lane.b32.xlu0 %v2845, 112
    %v3203 = vpop.permute.xlu0 %3202
    %3204 = vrot.lane.b32.xlu0 %v2849, 112
    %v3205 = vpop.permute.xlu0 %3204
    %3206 = vrot.lane.b32.xlu0 %v2853, 112
    %v3207 = vpop.permute.xlu0 %3206
    %3208 = vrot.lane.b32.xlu0 %v2857, 112
    %v3209 = vpop.permute.xlu0 %3208
    %3210 = vrot.lane.b32.xlu0 %v2861, 112
    %v3211 = vpop.permute.xlu0 %3210
    %3212 = vrot.lane.b32.xlu0 %v2865, 112
    %v3213 = vpop.permute.xlu0 %3212
    %3214 = vrot.lane.b32.xlu0 %v2838, 112
    %v3215 = vpop.permute.xlu0 %3214
    %3216 = vrot.lane.b32.xlu0 %v2842, 112
    %v3217 = vpop.permute.xlu0 %3216
    %3218 = vrot.lane.b32.xlu0 %v2846, 112
    %v3219 = vpop.permute.xlu0 %3218
    %3220 = vrot.lane.b32.xlu0 %v2850, 112
    %v3221 = vpop.permute.xlu0 %3220
    %3222 = vrot.lane.b32.xlu0 %v2854, 112
    %v3223 = vpop.permute.xlu0 %3222
    %3224 = vrot.lane.b32.xlu0 %v2858, 112
    %v3225 = vpop.permute.xlu0 %3224
    %3226 = vrot.lane.b32.xlu0 %v2862, 112
    %v3227 = vpop.permute.xlu0 %3226
    %3228 = vrot.lane.b32.xlu0 %v2866, 112
    %v3229 = vpop.permute.xlu0 %3228
    %3230 = vrot.lane.b32.xlu0 %v2839, 112
    %v3231 = vpop.permute.xlu0 %3230
    %3232 = vrot.lane.b32.xlu0 %v2843, 112
    %v3233 = vpop.permute.xlu0 %3232
    %3234 = vrot.lane.b32.xlu0 %v2847, 112
    %v3235 = vpop.permute.xlu0 %3234
    %3236 = vrot.lane.b32.xlu0 %v2851, 112
    %v3237 = vpop.permute.xlu0 %3236
    %3238 = vrot.lane.b32.xlu0 %v2855, 112
    %v3239 = vpop.permute.xlu0 %3238
    %3240 = vrot.lane.b32.xlu0 %v2859, 112
    %v3241 = vpop.permute.xlu0 %3240
    %3242 = vrot.lane.b32.xlu0 %v2863, 112
    %v3243 = vpop.permute.xlu0 %3242
    %3244 = vrot.lane.b32.xlu0 %v2867, 112
    %v3245 = vpop.permute.xlu0 %3244
    %3246 = vrot.lane.b32.xlu0 %v2840, 112
    %v3247 = vpop.permute.xlu0 %3246
    %3248 = vrot.lane.b32.xlu0 %v2844, 112
    %v3249 = vpop.permute.xlu0 %3248
    %3250 = vrot.lane.b32.xlu0 %v2848, 112
    %v3251 = vpop.permute.xlu0 %3250
    %3252 = vrot.lane.b32.xlu0 %v2852, 112
    %v3253 = vpop.permute.xlu0 %3252
    %3254 = vrot.lane.b32.xlu0 %v2856, 112
    %v3255 = vpop.permute.xlu0 %3254
    %3256 = vrot.lane.b32.xlu0 %v2860, 112
    %v3257 = vpop.permute.xlu0 %3256
    %3258 = vrot.lane.b32.xlu0 %v2864, 112
    %v3259 = vpop.permute.xlu0 %3258
    %3260 = vrot.lane.b32.xlu0 %v2868, 112
    %v3261 = vpop.permute.xlu0 %3260
    %vm3262 = vcmp.lt.s32.totalorder %v2958, 112
    %v3263 = vsel %vm3262, %v3231, %v3247
    %v3264 = vsel %vm3262, %v3233, %v3249
    %v3265 = vsel %vm3262, %v3235, %v3251
    %v3266 = vsel %vm3262, %v3237, %v3253
    %v3267 = vsel %vm3262, %v3239, %v3255
    %v3268 = vsel %vm3262, %v3241, %v3257
    %v3269 = vsel %vm3262, %v3243, %v3259
    %v3270 = vsel %vm3262, %v3245, %v3261
    %v3271 = vsel %vm3262, %v3215, %v3231
    %v3272 = vsel %vm3262, %v3217, %v3233
    %v3273 = vsel %vm3262, %v3219, %v3235
    %v3274 = vsel %vm3262, %v3221, %v3237
    %v3275 = vsel %vm3262, %v3223, %v3239
    %v3276 = vsel %vm3262, %v3225, %v3241
    %v3277 = vsel %vm3262, %v3227, %v3243
    %v3278 = vsel %vm3262, %v3229, %v3245
    %v3279 = vsel %vm3262, %v3199, %v3215
    %v3280 = vsel %vm3262, %v3201, %v3217
    %v3281 = vsel %vm3262, %v3203, %v3219
    %v3282 = vsel %vm3262, %v3205, %v3221
    %v3283 = vsel %vm3262, %v3207, %v3223
    %v3284 = vsel %vm3262, %v3209, %v3225
    %v3285 = vsel %vm3262, %v3211, %v3227
    %v3286 = vsel %vm3262, %v3213, %v3229
    %v3287 = vsel %vm3262, %v3247, %v3199
    %v3288 = vsel %vm3262, %v3249, %v3201
    %v3289 = vsel %vm3262, %v3251, %v3203
    %v3290 = vsel %vm3262, %v3253, %v3205
    %v3291 = vsel %vm3262, %v3255, %v3207
    %v3292 = vsel %vm3262, %v3257, %v3209
    %v3293 = vsel %vm3262, %v3259, %v3211
    %v3294 = vsel %vm3262, %v3261, %v3213
    %s3295 = scalar_lea.vmem [#allocation10], 12
    %v3296 = vld [vmem:[%s3295] sm:$0xf]
    %v3298 = vlaneseq
    %v3299 = vshrl.u32 %v3298, 7
    %v3300 = vsub.s32 0, %v3299
    %v3301 = vrot.slane %v3296, %v3300
    %v3302 = vlaneseq
    %v3303 = vshrl.u32 %v3302, 7
    %v3304 = vsub.s32 1, %v3303
    %v3305 = vrot.slane %v3296, %v3304
    %v3306 = vlaneseq
    %v3307 = vshrl.u32 %v3306, 7
    %v3308 = vsub.s32 2, %v3307
    %v3309 = vrot.slane %v3296, %v3308
    %v3310 = vlaneseq
    %v3311 = vshrl.u32 %v3310, 7
    %v3312 = vsub.s32 3, %v3311
    %v3313 = vrot.slane %v3296, %v3312
    %v3318 = vmul.f32 %v3279, %v3301
    %v3319 = vmul.f32 %v3271, %v3305
    %v3320 = vmul.f32 %v3263, %v3309
    %v3321 = vmul.f32 %v3287, %v3313
    %v3322 = vmul.f32 %v3280, %v3301
    %v3323 = vmul.f32 %v3272, %v3305
    %v3324 = vmul.f32 %v3264, %v3309
    %v3325 = vmul.f32 %v3288, %v3313
    %v3326 = vmul.f32 %v3281, %v3301
    %v3327 = vmul.f32 %v3273, %v3305
    %v3328 = vmul.f32 %v3265, %v3309
    %v3329 = vmul.f32 %v3289, %v3313
    %v3330 = vmul.f32 %v3282, %v3301
    %v3331 = vmul.f32 %v3274, %v3305
    %v3332 = vmul.f32 %v3266, %v3309
    %v3333 = vmul.f32 %v3290, %v3313
    %v3334 = vmul.f32 %v3283, %v3301
    %v3335 = vmul.f32 %v3275, %v3305
    %v3336 = vmul.f32 %v3267, %v3309
    %v3337 = vmul.f32 %v3291, %v3313
    %v3338 = vmul.f32 %v3284, %v3301
    %v3339 = vmul.f32 %v3276, %v3305
    %v3340 = vmul.f32 %v3268, %v3309
    %v3341 = vmul.f32 %v3292, %v3313
    %v3342 = vmul.f32 %v3285, %v3301
    %v3343 = vmul.f32 %v3277, %v3305
    %v3344 = vmul.f32 %v3269, %v3309
    %v3345 = vmul.f32 %v3293, %v3313
    %v3346 = vmul.f32 %v3286, %v3301
    %v3347 = vmul.f32 %v3278, %v3305
    %v3348 = vmul.f32 %v3270, %v3309
    %v3349 = vmul.f32 %v3294, %v3313
    %3350 = vrot.lane.b32.xlu0 %v2837, 96
    %v3351 = vpop.permute.xlu0 %3350
    %3352 = vrot.lane.b32.xlu0 %v2841, 96
    %v3353 = vpop.permute.xlu0 %3352
    %3354 = vrot.lane.b32.xlu0 %v2845, 96
    %v3355 = vpop.permute.xlu0 %3354
    %3356 = vrot.lane.b32.xlu0 %v2849, 96
    %v3357 = vpop.permute.xlu0 %3356
    %3358 = vrot.lane.b32.xlu0 %v2853, 96
    %v3359 = vpop.permute.xlu0 %3358
    %3360 = vrot.lane.b32.xlu0 %v2857, 96
    %v3361 = vpop.permute.xlu0 %3360
    %3362 = vrot.lane.b32.xlu0 %v2861, 96
    %v3363 = vpop.permute.xlu0 %3362
    %3364 = vrot.lane.b32.xlu0 %v2865, 96
    %v3365 = vpop.permute.xlu0 %3364
    %3366 = vrot.lane.b32.xlu0 %v2838, 96
    %v3367 = vpop.permute.xlu0 %3366
    %3368 = vrot.lane.b32.xlu0 %v2842, 96
    %v3369 = vpop.permute.xlu0 %3368
    %3370 = vrot.lane.b32.xlu0 %v2846, 96
    %v3371 = vpop.permute.xlu0 %3370
    %3372 = vrot.lane.b32.xlu0 %v2850, 96
    %v3373 = vpop.permute.xlu0 %3372
    %3374 = vrot.lane.b32.xlu0 %v2854, 96
    %v3375 = vpop.permute.xlu0 %3374
    %3376 = vrot.lane.b32.xlu0 %v2858, 96
    %v3377 = vpop.permute.xlu0 %3376
    %3378 = vrot.lane.b32.xlu0 %v2862, 96
    %v3379 = vpop.permute.xlu0 %3378
    %3380 = vrot.lane.b32.xlu0 %v2866, 96
    %v3381 = vpop.permute.xlu0 %3380
    %3382 = vrot.lane.b32.xlu0 %v2839, 96
    %v3383 = vpop.permute.xlu0 %3382
    %3384 = vrot.lane.b32.xlu0 %v2843, 96
    %v3385 = vpop.permute.xlu0 %3384
    %3386 = vrot.lane.b32.xlu0 %v2847, 96
    %v3387 = vpop.permute.xlu0 %3386
    %3388 = vrot.lane.b32.xlu0 %v2851, 96
    %v3389 = vpop.permute.xlu0 %3388
    %3390 = vrot.lane.b32.xlu0 %v2855, 96
    %v3391 = vpop.permute.xlu0 %3390
    %3392 = vrot.lane.b32.xlu0 %v2859, 96
    %v3393 = vpop.permute.xlu0 %3392
    %3394 = vrot.lane.b32.xlu0 %v2863, 96
    %v3395 = vpop.permute.xlu0 %3394
    %3396 = vrot.lane.b32.xlu0 %v2867, 96
    %v3397 = vpop.permute.xlu0 %3396
    %3398 = vrot.lane.b32.xlu0 %v2840, 96
    %v3399 = vpop.permute.xlu0 %3398
    %3400 = vrot.lane.b32.xlu0 %v2844, 96
    %v3401 = vpop.permute.xlu0 %3400
    %3402 = vrot.lane.b32.xlu0 %v2848, 96
    %v3403 = vpop.permute.xlu0 %3402
    %3404 = vrot.lane.b32.xlu0 %v2852, 96
    %v3405 = vpop.permute.xlu0 %3404
    %3406 = vrot.lane.b32.xlu0 %v2856, 96
    %v3407 = vpop.permute.xlu0 %3406
    %3408 = vrot.lane.b32.xlu0 %v2860, 96
    %v3409 = vpop.permute.xlu0 %3408
    %3410 = vrot.lane.b32.xlu0 %v2864, 96
    %v3411 = vpop.permute.xlu0 %3410
    %3412 = vrot.lane.b32.xlu0 %v2868, 96
    %v3413 = vpop.permute.xlu0 %3412
    %vm3414 = vcmp.lt.s32.totalorder %v2958, 96
    %v3415 = vsel %vm3414, %v3383, %v3399
    %v3416 = vsel %vm3414, %v3385, %v3401
    %v3417 = vsel %vm3414, %v3387, %v3403
    %v3418 = vsel %vm3414, %v3389, %v3405
    %v3419 = vsel %vm3414, %v3391, %v3407
    %v3420 = vsel %vm3414, %v3393, %v3409
    %v3421 = vsel %vm3414, %v3395, %v3411
    %v3422 = vsel %vm3414, %v3397, %v3413
    %v3423 = vsel %vm3414, %v3367, %v3383
    %v3424 = vsel %vm3414, %v3369, %v3385
    %v3425 = vsel %vm3414, %v3371, %v3387
    %v3426 = vsel %vm3414, %v3373, %v3389
    %v3427 = vsel %vm3414, %v3375, %v3391
    %v3428 = vsel %vm3414, %v3377, %v3393
    %v3429 = vsel %vm3414, %v3379, %v3395
    %v3430 = vsel %vm3414, %v3381, %v3397
    %v3431 = vsel %vm3414, %v3351, %v3367
    %v3432 = vsel %vm3414, %v3353, %v3369
    %v3433 = vsel %vm3414, %v3355, %v3371
    %v3434 = vsel %vm3414, %v3357, %v3373
    %v3435 = vsel %vm3414, %v3359, %v3375
    %v3436 = vsel %vm3414, %v3361, %v3377
    %v3437 = vsel %vm3414, %v3363, %v3379
    %v3438 = vsel %vm3414, %v3365, %v3381
    %v3439 = vsel %vm3414, %v3399, %v3351
    %v3440 = vsel %vm3414, %v3401, %v3353
    %v3441 = vsel %vm3414, %v3403, %v3355
    %v3442 = vsel %vm3414, %v3405, %v3357
    %v3443 = vsel %vm3414, %v3407, %v3359
    %v3444 = vsel %vm3414, %v3409, %v3361
    %v3445 = vsel %vm3414, %v3411, %v3363
    %v3446 = vsel %vm3414, %v3413, %v3365
    %s3447 = scalar_lea.vmem [#allocation10], 16
    %v3448 = vld [vmem:[%s3447] sm:$0xf]
    %v3450 = vlaneseq
    %v3451 = vshrl.u32 %v3450, 7
    %v3452 = vsub.s32 0, %v3451
    %v3453 = vrot.slane %v3448, %v3452
    %v3454 = vlaneseq
    %v3455 = vshrl.u32 %v3454, 7
    %v3456 = vsub.s32 1, %v3455
    %v3457 = vrot.slane %v3448, %v3456
    %v3458 = vlaneseq
    %v3459 = vshrl.u32 %v3458, 7
    %v3460 = vsub.s32 2, %v3459
    %v3461 = vrot.slane %v3448, %v3460
    %v3462 = vlaneseq
    %v3463 = vshrl.u32 %v3462, 7
    %v3464 = vsub.s32 3, %v3463
    %v3465 = vrot.slane %v3448, %v3464
    %v3470 = vmul.f32 %v3431, %v3453
    %v3471 = vmul.f32 %v3423, %v3457
    %v3472 = vmul.f32 %v3415, %v3461
    %v3473 = vmul.f32 %v3439, %v3465
    %v3474 = vmul.f32 %v3432, %v3453
    %v3475 = vmul.f32 %v3424, %v3457
    %v3476 = vmul.f32 %v3416, %v3461
    %v3477 = vmul.f32 %v3440, %v3465
    %v3478 = vmul.f32 %v3433, %v3453
    %v3479 = vmul.f32 %v3425, %v3457
    %v3480 = vmul.f32 %v3417, %v3461
    %v3481 = vmul.f32 %v3441, %v3465
    %v3482 = vmul.f32 %v3434, %v3453
    %v3483 = vmul.f32 %v3426, %v3457
    %v3484 = vmul.f32 %v3418, %v3461
    %v3485 = vmul.f32 %v3442, %v3465
    %v3486 = vmul.f32 %v3435, %v3453
    %v3487 = vmul.f32 %v3427, %v3457
    %v3488 = vmul.f32 %v3419, %v3461
    %v3489 = vmul.f32 %v3443, %v3465
    %v3490 = vmul.f32 %v3436, %v3453
    %v3491 = vmul.f32 %v3428, %v3457
    %v3492 = vmul.f32 %v3420, %v3461
    %v3493 = vmul.f32 %v3444, %v3465
    %v3494 = vmul.f32 %v3437, %v3453
    %v3495 = vmul.f32 %v3429, %v3457
    %v3496 = vmul.f32 %v3421, %v3461
    %v3497 = vmul.f32 %v3445, %v3465
    %v3498 = vmul.f32 %v3438, %v3453
    %v3499 = vmul.f32 %v3430, %v3457
    %v3500 = vmul.f32 %v3422, %v3461
    %v3501 = vmul.f32 %v3446, %v3465
    %v3502 = vld [vmem:[%s8] sm:$0xff]
    %v3503 = vld [vmem:[%s8 + $0x8] sm:$0xff]
    %v3504 = vld [vmem:[%s8 + $0x10] sm:$0xff]
    %v3505 = vld [vmem:[%s8 + $0x18] sm:$0xff]
    %v3506 = vld [vmem:[%s8 + $0x20] sm:$0xff]
    %v3507 = vld [vmem:[%s8 + $0x28] sm:$0xff]
    %v3508 = vld [vmem:[%s8 + $0x30] sm:$0xff]
    %v3509 = vld [vmem:[%s8 + $0x38] sm:$0xff]
    %3511 = vset.pattern.permute.xlu0 0
    %3512 = vperm.xlu0 %3511, %v3502
    %v3513 = vpop.permute.xlu0 %3512
    %3516 = vset.pattern.permute.xlu0 0
    %3517 = vperm.xlu0 %3516, %v3503
    %v3518 = vpop.permute.xlu0 %3517
    %3521 = vset.pattern.permute.xlu0 0
    %3522 = vperm.xlu0 %3521, %v3504
    %v3523 = vpop.permute.xlu0 %3522
    %3526 = vset.pattern.permute.xlu0 0
    %3527 = vperm.xlu0 %3526, %v3505
    %v3528 = vpop.permute.xlu0 %3527
    %3531 = vset.pattern.permute.xlu0 0
    %3532 = vperm.xlu0 %3531, %v3506
    %v3533 = vpop.permute.xlu0 %3532
    %3536 = vset.pattern.permute.xlu0 0
    %3537 = vperm.xlu0 %3536, %v3507
    %v3538 = vpop.permute.xlu0 %3537
    %3541 = vset.pattern.permute.xlu0 0
    %3542 = vperm.xlu0 %3541, %v3508
    %v3543 = vpop.permute.xlu0 %3542
    %3546 = vset.pattern.permute.xlu0 0
    %3547 = vperm.xlu0 %3546, %v3509
    %v3548 = vpop.permute.xlu0 %3547
    %vm3550 = vcmask 523264
    %v3552 = vsel %vm3550, %v2871, 0
    %v3555 = vsel %vm3550, %v2874, 0
    %v3558 = vsel %vm3550, %v2877, 0
    %v3561 = vsel %vm3550, %v2880, 0
    %v3564 = vsel %vm3550, %v2883, 0
    %v3567 = vsel %vm3550, %v2886, 0
    %v3570 = vsel %vm3550, %v2889, 0
    %v3573 = vsel %vm3550, %v2892, 0
    %3575 = vmatprep.subr.mxu0 %v3015
    %3576 = vmatpush1.msra.mxu0 %v3014
    %3577 = vmatprep.subr.mxu0 %v3019
    %3578 = vmatpush1.msra.mxu0 %v3018
    %3579 = vmatprep.subr.mxu0 %v3023
    %3580 = vmatpush1.msra.mxu0 %v3022
    %3581 = vmatprep.subr.mxu0 %v3027
    %3582 = vmatpush1.msra.mxu0 %v3026
    %3583 = vmatprep.subr.mxu0 %v3031
    %3584 = vmatpush1.msra.mxu0 %v3030
    %3585 = vmatprep.subr.mxu0 %v3035
    %3586 = vmatpush1.msra.mxu0 %v3034
    %3587 = vmatprep.subr.mxu0 %v3039
    %3588 = vmatpush1.msra.mxu0 %v3038
    %3589 = vmatprep.subr.mxu0 %v3043
    %3590 = vmatpush1.msra.mxu0 %v3042
    %3591 = vmatprep.subr.mxu0 %v3167
    %3592 = vmatpush1.msra.mxu0 %v3166
    %3593 = vmatprep.subr.mxu0 %v3171
    %3594 = vmatpush1.msra.mxu0 %v3170
    %3595 = vmatprep.subr.mxu0 %v3175
    %3596 = vmatpush1.msra.mxu0 %v3174
    %3597 = vmatprep.subr.mxu0 %v3179
    %3598 = vmatpush1.msra.mxu0 %v3178
    %3599 = vmatprep.subr.mxu0 %v3183
    %3600 = vmatpush1.msra.mxu0 %v3182
    %3601 = vmatprep.subr.mxu0 %v3187
    %3602 = vmatpush1.msra.mxu0 %v3186
    %3603 = vmatprep.subr.mxu0 %v3191
    %3604 = vmatpush1.msra.mxu0 %v3190
    %3605 = vmatprep.subr.mxu0 %v3195
    %3606 = vmatpush1.msra.mxu0 %v3194
    %3607 = vmatprep.subr.mxu0 %v2838
    %3608 = vmatpush1.msra.mxu0 %v2837
    %3609 = vmatprep.subr.mxu0 %v2842
    %3610 = vmatpush1.msra.mxu0 %v2841
    %3611 = vmatprep.subr.mxu0 %v2846
    %3612 = vmatpush1.msra.mxu0 %v2845
    %3613 = vmatprep.subr.mxu0 %v2850
    %3614 = vmatpush1.msra.mxu0 %v2849
    %3615 = vmatprep.subr.mxu0 %v2854
    %3616 = vmatpush1.msra.mxu0 %v2853
    %3617 = vmatprep.subr.mxu0 %v2858
    %3618 = vmatpush1.msra.mxu0 %v2857
    %3619 = vmatprep.subr.mxu0 %v2862
    %3620 = vmatpush1.msra.mxu0 %v2861
    %3621 = vmatprep.subr.mxu0 %v2866
    %3622 = vmatpush1.msra.mxu0 %v2865
    %3623 = vmatprep.subr.mxu0 %v3319
    %3624 = vmatpush1.msra.mxu0 %v3318
    %3625 = vmatprep.subr.mxu0 %v3323
    %3626 = vmatpush1.msra.mxu0 %v3322
    %3627 = vmatprep.subr.mxu0 %v3327
    %3628 = vmatpush1.msra.mxu0 %v3326
    %3629 = vmatprep.subr.mxu0 %v3331
    %3630 = vmatpush1.msra.mxu0 %v3330
    %3631 = vmatprep.subr.mxu0 %v3335
    %3632 = vmatpush1.msra.mxu0 %v3334
    %3633 = vmatprep.subr.mxu0 %v3339
    %3634 = vmatpush1.msra.mxu0 %v3338
    %3635 = vmatprep.subr.mxu0 %v3343
    %3636 = vmatpush1.msra.mxu0 %v3342
    %3637 = vmatprep.subr.mxu0 %v3347
    %3638 = vmatpush1.msra.mxu0 %v3346
    %3639 = vmatprep.mubr.f32.mxu0 %v2870
    %3640 = vmatmul.mubr.f32.gmra.mrb[0].mxu0 %v2869
    %v3641 = vpop.f32.mrb[0].mxu0
    %v3642 = vadd.f32 %v3513, %v3641
    %v3643 = vpop.f32.mrb[0].mxu0
    %v3644 = vadd.f32 %v3513, %v3643
    %3645 = vmatprep.mubr.f32.mxu0 %v2873
    %3646 = vmatmul.mubr.f32.gmra.mrb[0].mxu0 %v2872
    %v3647 = vpop.f32.mrb[0].mxu0
    %v3648 = vadd.f32 %v3518, %v3647
    %v3649 = vpop.f32.mrb[0].mxu0
    %v3650 = vadd.f32 %v3518, %v3649
    %3651 = vmatprep.mubr.f32.mxu0 %v2876
    %3652 = vmatmul.mubr.f32.gmra.mrb[0].mxu0 %v2875
    %v3653 = vpop.f32.mrb[0].mxu0
    %v3654 = vadd.f32 %v3523, %v3653
    %v3655 = vpop.f32.mrb[0].mxu0
    %v3656 = vadd.f32 %v3523, %v3655
    %3657 = vmatprep.mubr.f32.mxu0 %v2879
    %3658 = vmatmul.mubr.f32.gmra.mrb[0].mxu0 %v2878
    %v3659 = vpop.f32.mrb[0].mxu0
    %v3660 = vadd.f32 %v3528, %v3659
    %v3661 = vpop.f32.mrb[0].mxu0
    %v3662 = vadd.f32 %v3528, %v3661
    %3663 = vmatprep.mubr.f32.mxu0 %v2882
    %3664 = vmatmul.mubr.f32.gmra.mrb[0].mxu0 %v2881
    %v3665 = vpop.f32.mrb[0].mxu0
    %v3666 = vadd.f32 %v3533, %v3665
    %v3667 = vpop.f32.mrb[0].mxu0
    %v3668 = vadd.f32 %v3533, %v3667
    %3669 = vmatprep.mubr.f32.mxu0 %v2885
    %3670 = vmatmul.mubr.f32.gmra.mrb[0].mxu0 %v2884
    %v3671 = vpop.f32.mrb[0].mxu0
    %v3672 = vadd.f32 %v3538, %v3671
    %v3673 = vpop.f32.mrb[0].mxu0
    %v3674 = vadd.f32 %v3538, %v3673
    %3675 = vmatprep.mubr.f32.mxu0 %v2888
    %3676 = vmatmul.mubr.f32.gmra.mrb[0].mxu0 %v2887
    %v3677 = vpop.f32.mrb[0].mxu0
    %v3678 = vadd.f32 %v3543, %v3677
    %v3679 = vpop.f32.mrb[0].mxu0
    %v3680 = vadd.f32 %v3543, %v3679
    %3681 = vmatprep.mubr.f32.mxu0 %v2891
    %3682 = vmatmul.mubr.f32.gmra.mrb[0].mxu0 %v2890
    %v3683 = vpop.f32.mrb[0].mxu0
    %v3684 = vadd.f32 %v3548, %v3683
    %v3685 = vpop.f32.mrb[0].mxu0
    %v3686 = vadd.f32 %v3548, %v3685
    %3687 = vdwg.mxu0
    %3688 = vmatprep.subr.mxu0 %v3471
    %3689 = vmatpush1.msra.mxu0 %v3470
    %3690 = vmatprep.subr.mxu0 %v3475
    %3691 = vmatpush1.msra.mxu0 %v3474
    %3692 = vmatprep.subr.mxu0 %v3479
    %3693 = vmatpush1.msra.mxu0 %v3478
    %3694 = vmatprep.subr.mxu0 %v3483
    %3695 = vmatpush1.msra.mxu0 %v3482
    %3696 = vmatprep.subr.mxu0 %v3487
    %3697 = vmatpush1.msra.mxu0 %v3486
    %3698 = vmatprep.subr.mxu0 %v3491
    %3699 = vmatpush1.msra.mxu0 %v3490
    %3700 = vmatprep.subr.mxu0 %v3495
    %3701 = vmatpush1.msra.mxu0 %v3494
    %3702 = vmatprep.subr.mxu0 %v3499
    %3703 = vmatpush1.msra.mxu0 %v3498
    %3704 = vmatprep.subr.mxu0 0.0
    %3705 = vmatpush1.msra.mxu0 0.0
    %3706 = vmatprep.subr.mxu0 0.0
    %3707 = vmatpush1.msra.mxu0 0.0
    %3708 = vmatprep.subr.mxu0 0.0
    %3709 = vmatpush1.msra.mxu0 0.0
    %3710 = vmatprep.subr.mxu0 0.0
    %3711 = vmatpush1.msra.mxu0 0.0
    %3712 = vmatprep.subr.mxu0 0.0
    %3713 = vmatpush1.msra.mxu0 0.0
    %3714 = vmatprep.subr.mxu0 0.0
    %3715 = vmatpush1.msra.mxu0 0.0
    %3716 = vmatprep.subr.mxu0 0.0
    %3717 = vmatpush1.msra.mxu0 0.0
    %3718 = vmatprep.subr.mxu0 0.0
    %3719 = vmatpush1.msra.mxu0 0.0
    %3720 = vmatprep.subr.mxu0 0.0
    %3721 = vmatpush1.msra.mxu0 0.0
    %3722 = vmatprep.subr.mxu0 0.0
    %3723 = vmatpush1.msra.mxu0 0.0
    %3724 = vmatprep.subr.mxu0 0.0
    %3725 = vmatpush1.msra.mxu0 0.0
    %3726 = vmatprep.subr.mxu0 0.0
    %3727 = vmatpush1.msra.mxu0 0.0
    %3728 = vmatprep.subr.mxu0 0.0
    %3729 = vmatpush1.msra.mxu0 0.0
    %3730 = vmatprep.subr.mxu0 0.0
    %3731 = vmatpush1.msra.mxu0 0.0
    %3732 = vmatprep.subr.mxu0 0.0
    %3733 = vmatpush1.msra.mxu0 0.0
    %3734 = vmatprep.subr.mxu0 0.0
    %3735 = vmatpush1.msra.mxu0 0.0
    %3736 = vmatprep.subr.mxu0 0.0
    %3737 = vmatpush1.msra.mxu0 0.0
    %3738 = vmatprep.subr.mxu0 0.0
    %3739 = vmatpush1.msra.mxu0 0.0
    %3740 = vmatprep.subr.mxu0 0.0
    %3741 = vmatpush1.msra.mxu0 0.0
    %3742 = vmatprep.subr.mxu0 0.0
    %3743 = vmatpush1.msra.mxu0 0.0
    %3744 = vmatprep.subr.mxu0 0.0
    %3745 = vmatpush1.msra.mxu0 0.0
    %3746 = vmatprep.subr.mxu0 0.0
    %3747 = vmatpush1.msra.mxu0 0.0
    %3748 = vmatprep.subr.mxu0 0.0
    %3749 = vmatpush1.msra.mxu0 0.0
    %3750 = vmatprep.subr.mxu0 0.0
    %3751 = vmatpush1.msra.mxu0 0.0
    %3752 = vmatprep.mubr.f32.mxu0 0.0
    %3753 = vmatmul.mubr.f32.gmra.mrb[0].mxu0 %v3552
    %v3754 = vpop.f32.mrb[0].mxu0
    %v3755 = vadd.f32 %v3642, %v3754
    %v3756 = vpop.f32.mrb[0].mxu0
    %v3757 = vadd.f32 %v3644, %v3756
    %3758 = vmatprep.mubr.f32.mxu0 0.0
    %3759 = vmatmul.mubr.f32.gmra.mrb[0].mxu0 %v3555
    %v3760 = vpop.f32.mrb[0].mxu0
    %v3761 = vadd.f32 %v3648, %v3760
    %v3762 = vpop.f32.mrb[0].mxu0
    %v3763 = vadd.f32 %v3650, %v3762
    %3764 = vmatprep.mubr.f32.mxu0 0.0
    %3765 = vmatmul.mubr.f32.gmra.mrb[0].mxu0 %v3558
    %v3766 = vpop.f32.mrb[0].mxu0
    %v3767 = vadd.f32 %v3654, %v3766
    %v3768 = vpop.f32.mrb[0].mxu0
    %v3769 = vadd.f32 %v3656, %v3768
    %3770 = vmatprep.mubr.f32.mxu0 0.0
    %3771 = vmatmul.mubr.f32.gmra.mrb[0].mxu0 %v3561
    %v3772 = vpop.f32.mrb[0].mxu0
    %v3773 = vadd.f32 %v3660, %v3772
    %v3774 = vpop.f32.mrb[0].mxu0
    %v3775 = vadd.f32 %v3662, %v3774
    %3776 = vmatprep.mubr.f32.mxu0 0.0
    %3777 = vmatmul.mubr.f32.gmra.mrb[0].mxu0 %v3564
    %v3778 = vpop.f32.mrb[0].mxu0
    %v3779 = vadd.f32 %v3666, %v3778
    %v3780 = vpop.f32.mrb[0].mxu0
    %v3781 = vadd.f32 %v3668, %v3780
    %3782 = vmatprep.mubr.f32.mxu0 0.0
    %3783 = vmatmul.mubr.f32.gmra.mrb[0].mxu0 %v3567
    %v3784 = vpop.f32.mrb[0].mxu0
    %v3785 = vadd.f32 %v3672, %v3784
    %v3786 = vpop.f32.mrb[0].mxu0
    %v3787 = vadd.f32 %v3674, %v3786
    %3788 = vmatprep.mubr.f32.mxu0 0.0
    %3789 = vmatmul.mubr.f32.gmra.mrb[0].mxu0 %v3570
    %v3790 = vpop.f32.mrb[0].mxu0
    %v3791 = vadd.f32 %v3678, %v3790
    %v3792 = vpop.f32.mrb[0].mxu0
    %v3793 = vadd.f32 %v3680, %v3792
    %3794 = vmatprep.mubr.f32.mxu0 0.0
    %3795 = vmatmul.mubr.f32.gmra.mrb[0].mxu0 %v3573
    %v3796 = vpop.f32.mrb[0].mxu0
    %v3797 = vadd.f32 %v3684, %v3796
    %v3798 = vpop.f32.mrb[0].mxu0
    %v3799 = vadd.f32 %v3686, %v3798
    %3800 = vdwg.mxu0
    %3801 = vmatprep.subr.mxu0 %v3017
    %3802 = vmatpush1.msra.mxu0 %v3016
    %3803 = vmatprep.subr.mxu0 %v3021
    %3804 = vmatpush1.msra.mxu0 %v3020
    %3805 = vmatprep.subr.mxu0 %v3025
    %3806 = vmatpush1.msra.mxu0 %v3024
    %3807 = vmatprep.subr.mxu0 %v3029
    %3808 = vmatpush1.msra.mxu0 %v3028
    %3809 = vmatprep.subr.mxu0 %v3033
    %3810 = vmatpush1.msra.mxu0 %v3032
    %3811 = vmatprep.subr.mxu0 %v3037
    %3812 = vmatpush1.msra.mxu0 %v3036
    %3813 = vmatprep.subr.mxu0 %v3041
    %3814 = vmatpush1.msra.mxu0 %v3040
    %3815 = vmatprep.subr.mxu0 %v3045
    %3816 = vmatpush1.msra.mxu0 %v3044
    %3817 = vmatprep.subr.mxu0 %v3169
    %3818 = vmatpush1.msra.mxu0 %v3168
    %3819 = vmatprep.subr.mxu0 %v3173
    %3820 = vmatpush1.msra.mxu0 %v3172
    %3821 = vmatprep.subr.mxu0 %v3177
    %3822 = vmatpush1.msra.mxu0 %v3176
    %3823 = vmatprep.subr.mxu0 %v3181
    %3824 = vmatpush1.msra.mxu0 %v3180
    %3825 = vmatprep.subr.mxu0 %v3185
    %3826 = vmatpush1.msra.mxu0 %v3184
    %3827 = vmatprep.subr.mxu0 %v3189
    %3828 = vmatpush1.msra.mxu0 %v3188
    %3829 = vmatprep.subr.mxu0 %v3193
    %3830 = vmatpush1.msra.mxu0 %v3192
    %3831 = vmatprep.subr.mxu0 %v3197
    %3832 = vmatpush1.msra.mxu0 %v3196
    %3833 = vmatprep.subr.mxu0 %v2840
    %3834 = vmatpush1.msra.mxu0 %v2839
    %3835 = vmatprep.subr.mxu0 %v2844
    %3836 = vmatpush1.msra.mxu0 %v2843
    %3837 = vmatprep.subr.mxu0 %v2848
    %3838 = vmatpush1.msra.mxu0 %v2847
    %3839 = vmatprep.subr.mxu0 %v2852
    %3840 = vmatpush1.msra.mxu0 %v2851
    %3841 = vmatprep.subr.mxu0 %v2856
    %3842 = vmatpush1.msra.mxu0 %v2855
    %3843 = vmatprep.subr.mxu0 %v2860
    %3844 = vmatpush1.msra.mxu0 %v2859
    %3845 = vmatprep.subr.mxu0 %v2864
    %3846 = vmatpush1.msra.mxu0 %v2863
    %3847 = vmatprep.subr.mxu0 %v2868
    %3848 = vmatpush1.msra.mxu0 %v2867
    %3849 = vmatprep.subr.mxu0 %v3321
    %3850 = vmatpush1.msra.mxu0 %v3320
    %3851 = vmatprep.subr.mxu0 %v3325
    %3852 = vmatpush1.msra.mxu0 %v3324
    %3853 = vmatprep.subr.mxu0 %v3329
    %3854 = vmatpush1.msra.mxu0 %v3328
    %3855 = vmatprep.subr.mxu0 %v3333
    %3856 = vmatpush1.msra.mxu0 %v3332
    %3857 = vmatprep.subr.mxu0 %v3337
    %3858 = vmatpush1.msra.mxu0 %v3336
    %3859 = vmatprep.subr.mxu0 %v3341
    %3860 = vmatpush1.msra.mxu0 %v3340
    %3861 = vmatprep.subr.mxu0 %v3345
    %3862 = vmatpush1.msra.mxu0 %v3344
    %3863 = vmatprep.subr.mxu0 %v3349
    %3864 = vmatpush1.msra.mxu0 %v3348
    %3865 = vmatprep.mubr.f32.mxu0 %v2870
    %3866 = vmatmul.mubr.f32.gmra.mrb[0].mxu0 %v2869
    %v3867 = vpop.f32.mrb[0].mxu0
    %v3868 = vadd.f32 %v3513, %v3867
    %v3869 = vpop.f32.mrb[0].mxu0
    %v3870 = vadd.f32 %v3513, %v3869
    %3871 = vmatprep.mubr.f32.mxu0 %v2873
    %3872 = vmatmul.mubr.f32.gmra.mrb[0].mxu0 %v2872
    %v3873 = vpop.f32.mrb[0].mxu0
    %v3874 = vadd.f32 %v3518, %v3873
    %v3875 = vpop.f32.mrb[0].mxu0
    %v3876 = vadd.f32 %v3518, %v3875
    %3877 = vmatprep.mubr.f32.mxu0 %v2876
    %3878 = vmatmul.mubr.f32.gmra.mrb[0].mxu0 %v2875
    %v3879 = vpop.f32.mrb[0].mxu0
    %v3880 = vadd.f32 %v3523, %v3879
    %v3881 = vpop.f32.mrb[0].mxu0
    %v3882 = vadd.f32 %v3523, %v3881
    %3883 = vmatprep.mubr.f32.mxu0 %v2879
    %3884 = vmatmul.mubr.f32.gmra.mrb[0].mxu0 %v2878
    %v3885 = vpop.f32.mrb[0].mxu0
    %v3886 = vadd.f32 %v3528, %v3885
    %v3887 = vpop.f32.mrb[0].mxu0
    %v3888 = vadd.f32 %v3528, %v3887
    %3889 = vmatprep.mubr.f32.mxu0 %v2882
    %3890 = vmatmul.mubr.f32.gmra.mrb[0].mxu0 %v2881
    %v3891 = vpop.f32.mrb[0].mxu0
    %v3892 = vadd.f32 %v3533, %v3891
    %v3893 = vpop.f32.mrb[0].mxu0
    %v3894 = vadd.f32 %v3533, %v3893
    %3895 = vmatprep.mubr.f32.mxu0 %v2885
    %3896 = vmatmul.mubr.f32.gmra.mrb[0].mxu0 %v2884
    %v3897 = vpop.f32.mrb[0].mxu0
    %v3898 = vadd.f32 %v3538, %v3897
    %v3899 = vpop.f32.mrb[0].mxu0
    %v3900 = vadd.f32 %v3538, %v3899
    %3901 = vmatprep.mubr.f32.mxu0 %v2888
    %3902 = vmatmul.mubr.f32.gmra.mrb[0].mxu0 %v2887
    %v3903 = vpop.f32.mrb[0].mxu0
    %v3904 = vadd.f32 %v3543, %v3903
    %v3905 = vpop.f32.mrb[0].mxu0
    %v3906 = vadd.f32 %v3543, %v3905
    %3907 = vmatprep.mubr.f32.mxu0 %v2891
    %3908 = vmatmul.mubr.f32.gmra.mrb[0].mxu0 %v2890
    %v3909 = vpop.f32.mrb[0].mxu0
    %v3910 = vadd.f32 %v3548, %v3909
    %v3911 = vpop.f32.mrb[0].mxu0
    %v3912 = vadd.f32 %v3548, %v3911
    %3913 = vdwg.mxu0
    %3914 = vmatprep.subr.mxu0 %v3473
    %3915 = vmatpush1.msra.mxu0 %v3472
    %3916 = vmatprep.subr.mxu0 %v3477
    %3917 = vmatpush1.msra.mxu0 %v3476
    %3918 = vmatprep.subr.mxu0 %v3481
    %3919 = vmatpush1.msra.mxu0 %v3480
    %3920 = vmatprep.subr.mxu0 %v3485
    %3921 = vmatpush1.msra.mxu0 %v3484
    %3922 = vmatprep.subr.mxu0 %v3489
    %3923 = vmatpush1.msra.mxu0 %v3488
    %3924 = vmatprep.subr.mxu0 %v3493
    %3925 = vmatpush1.msra.mxu0 %v3492
    %3926 = vmatprep.subr.mxu0 %v3497
    %3927 = vmatpush1.msra.mxu0 %v3496
    %3928 = vmatprep.subr.mxu0 %v3501
    %3929 = vmatpush1.msra.mxu0 %v3500
    %3930 = vmatprep.subr.mxu0 0.0
    %3931 = vmatpush1.msra.mxu0 0.0
    %3932 = vmatprep.subr.mxu0 0.0
    %3933 = vmatpush1.msra.mxu0 0.0
    %3934 = vmatprep.subr.mxu0 0.0
    %3935 = vmatpush1.msra.mxu0 0.0
    %3936 = vmatprep.subr.mxu0 0.0
    %3937 = vmatpush1.msra.mxu0 0.0
    %3938 = vmatprep.subr.mxu0 0.0
    %3939 = vmatpush1.msra.mxu0 0.0
    %3940 = vmatprep.subr.mxu0 0.0
    %3941 = vmatpush1.msra.mxu0 0.0
    %3942 = vmatprep.subr.mxu0 0.0
    %3943 = vmatpush1.msra.mxu0 0.0
    %3944 = vmatprep.subr.mxu0 0.0
    %3945 = vmatpush1.msra.mxu0 0.0
    %3946 = vmatprep.subr.mxu0 0.0
    %3947 = vmatpush1.msra.mxu0 0.0
    %3948 = vmatprep.subr.mxu0 0.0
    %3949 = vmatpush1.msra.mxu0 0.0
    %3950 = vmatprep.subr.mxu0 0.0
    %3951 = vmatpush1.msra.mxu0 0.0
    %3952 = vmatprep.subr.mxu0 0.0
    %3953 = vmatpush1.msra.mxu0 0.0
    %3954 = vmatprep.subr.mxu0 0.0
    %3955 = vmatpush1.msra.mxu0 0.0
    %3956 = vmatprep.subr.mxu0 0.0
    %3957 = vmatpush1.msra.mxu0 0.0
    %3958 = vmatprep.subr.mxu0 0.0
    %3959 = vmatpush1.msra.mxu0 0.0
    %3960 = vmatprep.subr.mxu0 0.0
    %3961 = vmatpush1.msra.mxu0 0.0
    %3962 = vmatprep.subr.mxu0 0.0
    %3963 = vmatpush1.msra.mxu0 0.0
    %3964 = vmatprep.subr.mxu0 0.0
    %3965 = vmatpush1.msra.mxu0 0.0
    %3966 = vmatprep.subr.mxu0 0.0
    %3967 = vmatpush1.msra.mxu0 0.0
    %3968 = vmatprep.subr.mxu0 0.0
    %3969 = vmatpush1.msra.mxu0 0.0
    %3970 = vmatprep.subr.mxu0 0.0
    %3971 = vmatpush1.msra.mxu0 0.0
    %3972 = vmatprep.subr.mxu0 0.0
    %3973 = vmatpush1.msra.mxu0 0.0
    %3974 = vmatprep.subr.mxu0 0.0
    %3975 = vmatpush1.msra.mxu0 0.0
    %3976 = vmatprep.subr.mxu0 0.0
    %3977 = vmatpush1.msra.mxu0 0.0
    %3978 = vmatprep.mubr.f32.mxu0 0.0
    %3979 = vmatmul.mubr.f32.gmra.mrb[0].mxu0 %v3552
    %v3980 = vpop.f32.mrb[0].mxu0
    %v3981 = vadd.f32 %v3868, %v3980
    %v3982 = vpop.f32.mrb[0].mxu0
    %v3983 = vadd.f32 %v3870, %v3982
    %3984 = vmatprep.mubr.f32.mxu0 0.0
    %3985 = vmatmul.mubr.f32.gmra.mrb[0].mxu0 %v3555
    %v3986 = vpop.f32.mrb[0].mxu0
    %v3987 = vadd.f32 %v3874, %v3986
    %v3988 = vpop.f32.mrb[0].mxu0
    %v3989 = vadd.f32 %v3876, %v3988
    %3990 = vmatprep.mubr.f32.mxu0 0.0
    %3991 = vmatmul.mubr.f32.gmra.mrb[0].mxu0 %v3558
    %v3992 = vpop.f32.mrb[0].mxu0
    %v3993 = vadd.f32 %v3880, %v3992
    %v3994 = vpop.f32.mrb[0].mxu0
    %v3995 = vadd.f32 %v3882, %v3994
    %3996 = vmatprep.mubr.f32.mxu0 0.0
    %3997 = vmatmul.mubr.f32.gmra.mrb[0].mxu0 %v3561
    %v3998 = vpop.f32.mrb[0].mxu0
    %v3999 = vadd.f32 %v3886, %v3998
    %v4000 = vpop.f32.mrb[0].mxu0
    %v4001 = vadd.f32 %v3888, %v4000
    %4002 = vmatprep.mubr.f32.mxu0 0.0
    %4003 = vmatmul.mubr.f32.gmra.mrb[0].mxu0 %v3564
    %v4004 = vpop.f32.mrb[0].mxu0
    %v4005 = vadd.f32 %v3892, %v4004
    %v4006 = vpop.f32.mrb[0].mxu0
    %v4007 = vadd.f32 %v3894, %v4006
    %4008 = vmatprep.mubr.f32.mxu0 0.0
    %4009 = vmatmul.mubr.f32.gmra.mrb[0].mxu0 %v3567
    %v4010 = vpop.f32.mrb[0].mxu0
    %v4011 = vadd.f32 %v3898, %v4010
    %v4012 = vpop.f32.mrb[0].mxu0
    %v4013 = vadd.f32 %v3900, %v4012
    %4014 = vmatprep.mubr.f32.mxu0 0.0
    %4015 = vmatmul.mubr.f32.gmra.mrb[0].mxu0 %v3570
    %v4016 = vpop.f32.mrb[0].mxu0
    %v4017 = vadd.f32 %v3904, %v4016
    %v4018 = vpop.f32.mrb[0].mxu0
    %v4019 = vadd.f32 %v3906, %v4018
    %4020 = vmatprep.mubr.f32.mxu0 0.0
    %4021 = vmatmul.mubr.f32.gmra.mrb[0].mxu0 %v3573
    %v4022 = vpop.f32.mrb[0].mxu0
    %v4023 = vadd.f32 %v3910, %v4022
    %v4024 = vpop.f32.mrb[0].mxu0
    %v4025 = vadd.f32 %v3912, %v4024
    %4026 = vdwg.mxu0
    %v4027 = vld [vmem:[%s9] sm:$0xff]
    %v4028 = vld [vmem:[%s9 + $0x8] sm:$0xff]
    %v4029 = vld [vmem:[%s9 + $0x10] sm:$0xff]
    %v4030 = vld [vmem:[%s9 + $0x18] sm:$0xff]
    %v4031 = vld [vmem:[%s9 + $0x20] sm:$0xff]
    %v4032 = vld [vmem:[%s9 + $0x28] sm:$0xff]
    %v4033 = vld [vmem:[%s9 + $0x30] sm:$0xff]
    %v4034 = vld [vmem:[%s9 + $0x38] sm:$0xff]
    %v4035 = vld [vmem:[%s10] sm:$0xff]
    %v4036 = vld [vmem:[%s10 + $0x8] sm:$0xff]
    %v4037 = vld [vmem:[%s10 + $0x10] sm:$0xff]
    %v4038 = vld [vmem:[%s10 + $0x18] sm:$0xff]
    %v4039 = vld [vmem:[%s10 + $0x20] sm:$0xff]
    %v4040 = vld [vmem:[%s10 + $0x28] sm:$0xff]
    %v4041 = vld [vmem:[%s10 + $0x30] sm:$0xff]
    %v4042 = vld [vmem:[%s10 + $0x38] sm:$0xff]
    %4044 = vset.pattern.permute.xlu0 0
    %4045 = vperm.xlu0 %4044, %v4035
    %v4046 = vpop.permute.xlu0 %4045
    %4049 = vset.pattern.permute.xlu0 0
    %4050 = vperm.xlu0 %4049, %v4036
    %v4051 = vpop.permute.xlu0 %4050
    %4054 = vset.pattern.permute.xlu0 0
    %4055 = vperm.xlu0 %4054, %v4037
    %v4056 = vpop.permute.xlu0 %4055
    %4059 = vset.pattern.permute.xlu0 0
    %4060 = vperm.xlu0 %4059, %v4038
    %v4061 = vpop.permute.xlu0 %4060
    %4064 = vset.pattern.permute.xlu0 0
    %4065 = vperm.xlu0 %4064, %v4039
    %v4066 = vpop.permute.xlu0 %4065
    %4069 = vset.pattern.permute.xlu0 0
    %4070 = vperm.xlu0 %4069, %v4040
    %v4071 = vpop.permute.xlu0 %4070
    %4074 = vset.pattern.permute.xlu0 0
    %4075 = vperm.xlu0 %4074, %v4041
    %v4076 = vpop.permute.xlu0 %4075
    %4079 = vset.pattern.permute.xlu0 0
    %4080 = vperm.xlu0 %4079, %v4042
    %v4081 = vpop.permute.xlu0 %4080
    %v4084 = vsel %vm853, %v4027, 0
    %v4087 = vsel %vm853, %v4028, 0
    %v4090 = vsel %vm853, %v4029, 0
    %v4093 = vsel %vm853, %v4030, 0
    %v4096 = vsel %vm853, %v4031, 0
    %v4099 = vsel %vm853, %v4032, 0
    %v4102 = vsel %vm853, %v4033, 0
    %v4105 = vsel %vm853, %v4034, 0
    %v4107 = vsel %vm878, %v265, 0
    %v4109 = vsel %vm878, %v557, 0
    %v4111 = vsel %vm878, %v266, 0
    %v4113 = vsel %vm878, %v558, 0
    %4115 = vmatprep.subr.mxu0 %v4109
    %4116 = vmatpush1.msra.mxu0 %v4107
    %4117 = vmatprep.subr.mxu0 0.0
    %4118 = vmatpush1.msra.mxu0 0.0
    %4119 = vmatprep.subr.mxu0 0.0
    %4120 = vmatpush1.msra.mxu0 0.0
    %4121 = vmatprep.subr.mxu0 0.0
    %4122 = vmatpush1.msra.mxu0 0.0
    %4123 = vmatprep.subr.mxu0 0.0
    %4124 = vmatpush1.msra.mxu0 0.0
    %4125 = vmatprep.subr.mxu0 0.0
    %4126 = vmatpush1.msra.mxu0 0.0
    %4127 = vmatprep.subr.mxu0 0.0
    %4128 = vmatpush1.msra.mxu0 0.0
    %4129 = vmatprep.subr.mxu0 0.0
    %4130 = vmatpush1.msra.mxu0 0.0
    %4131 = vmatprep.subr.mxu0 0.0
    %4132 = vmatpush1.msra.mxu0 0.0
    %4133 = vmatprep.subr.mxu0 0.0
    %4134 = vmatpush1.msra.mxu0 0.0
    %4135 = vmatprep.subr.mxu0 0.0
    %4136 = vmatpush1.msra.mxu0 0.0
    %4137 = vmatprep.subr.mxu0 0.0
    %4138 = vmatpush1.msra.mxu0 0.0
    %4139 = vmatprep.subr.mxu0 0.0
    %4140 = vmatpush1.msra.mxu0 0.0
    %4141 = vmatprep.subr.mxu0 0.0
    %4142 = vmatpush1.msra.mxu0 0.0
    %4143 = vmatprep.subr.mxu0 0.0
    %4144 = vmatpush1.msra.mxu0 0.0
    %4145 = vmatprep.subr.mxu0 0.0
    %4146 = vmatpush1.msra.mxu0 0.0
    %4147 = vmatprep.subr.mxu0 0.0
    %4148 = vmatpush1.msra.mxu0 0.0
    %4149 = vmatprep.subr.mxu0 0.0
    %4150 = vmatpush1.msra.mxu0 0.0
    %4151 = vmatprep.subr.mxu0 0.0
    %4152 = vmatpush1.msra.mxu0 0.0
    %4153 = vmatprep.subr.mxu0 0.0
    %4154 = vmatpush1.msra.mxu0 0.0
    %4155 = vmatprep.subr.mxu0 0.0
    %4156 = vmatpush1.msra.mxu0 0.0
    %4157 = vmatprep.subr.mxu0 0.0
    %4158 = vmatpush1.msra.mxu0 0.0
    %4159 = vmatprep.subr.mxu0 0.0
    %4160 = vmatpush1.msra.mxu0 0.0
    %4161 = vmatprep.subr.mxu0 0.0
    %4162 = vmatpush1.msra.mxu0 0.0
    %4163 = vmatprep.subr.mxu0 0.0
    %4164 = vmatpush1.msra.mxu0 0.0
    %4165 = vmatprep.subr.mxu0 0.0
    %4166 = vmatpush1.msra.mxu0 0.0
    %4167 = vmatprep.subr.mxu0 0.0
    %4168 = vmatpush1.msra.mxu0 0.0
    %4169 = vmatprep.subr.mxu0 0.0
    %4170 = vmatpush1.msra.mxu0 0.0
    %4171 = vmatprep.subr.mxu0 0.0
    %4172 = vmatpush1.msra.mxu0 0.0
    %4173 = vmatprep.subr.mxu0 0.0
    %4174 = vmatpush1.msra.mxu0 0.0
    %4175 = vmatprep.subr.mxu0 0.0
    %4176 = vmatpush1.msra.mxu0 0.0
    %4177 = vmatprep.subr.mxu0 0.0
    %4178 = vmatpush1.msra.mxu0 0.0
    %4179 = vmatprep.mubr.f32.mxu0 0.0
    %4180 = vmatmul.mubr.f32.gmra.mrb[0].mxu0 %v4084
    %v4181 = vpop.f32.mrb[0].mxu0
    %v4182 = vadd.f32 %v4046, %v4181
    %v4183 = vpop.f32.mrb[0].mxu0
    %v4184 = vadd.f32 %v4046, %v4183
    %4185 = vmatprep.mubr.f32.mxu0 0.0
    %4186 = vmatmul.mubr.f32.gmra.mrb[0].mxu0 %v4087
    %v4187 = vpop.f32.mrb[0].mxu0
    %v4188 = vadd.f32 %v4051, %v4187
    %v4189 = vpop.f32.mrb[0].mxu0
    %v4190 = vadd.f32 %v4051, %v4189
    %4191 = vmatprep.mubr.f32.mxu0 0.0
    %4192 = vmatmul.mubr.f32.gmra.mrb[0].mxu0 %v4090
    %v4193 = vpop.f32.mrb[0].mxu0
    %v4194 = vadd.f32 %v4056, %v4193
    %v4195 = vpop.f32.mrb[0].mxu0
    %v4196 = vadd.f32 %v4056, %v4195
    %4197 = vmatprep.mubr.f32.mxu0 0.0
    %4198 = vmatmul.mubr.f32.gmra.mrb[0].mxu0 %v4093
    %v4199 = vpop.f32.mrb[0].mxu0
    %v4200 = vadd.f32 %v4061, %v4199
    %v4201 = vpop.f32.mrb[0].mxu0
    %v4202 = vadd.f32 %v4061, %v4201
    %4203 = vmatprep.mubr.f32.mxu0 0.0
    %4204 = vmatmul.mubr.f32.gmra.mrb[0].mxu0 %v4096
    %v4205 = vpop.f32.mrb[0].mxu0
    %v4206 = vadd.f32 %v4066, %v4205
    %v4207 = vpop.f32.mrb[0].mxu0
    %v4208 = vadd.f32 %v4066, %v4207
    %4209 = vmatprep.mubr.f32.mxu0 0.0
    %4210 = vmatmul.mubr.f32.gmra.mrb[0].mxu0 %v4099
    %v4211 = vpop.f32.mrb[0].mxu0
    %v4212 = vadd.f32 %v4071, %v4211
    %v4213 = vpop.f32.mrb[0].mxu0
    %v4214 = vadd.f32 %v4071, %v4213
    %4215 = vmatprep.mubr.f32.mxu0 0.0
    %4216 = vmatmul.mubr.f32.gmra.mrb[0].mxu0 %v4102
    %v4217 = vpop.f32.mrb[0].mxu0
    %v4218 = vadd.f32 %v4076, %v4217
    %v4219 = vpop.f32.mrb[0].mxu0
    %v4220 = vadd.f32 %v4076, %v4219
    %4221 = vmatprep.mubr.f32.mxu0 0.0
    %4222 = vmatmul.mubr.f32.gmra.mrb[0].mxu0 %v4105
    %v4223 = vpop.f32.mrb[0].mxu0
    %v4224 = vadd.f32 %v4081, %v4223
    %v4225 = vpop.f32.mrb[0].mxu0
    %v4226 = vadd.f32 %v4081, %v4225
    %4227 = vdwg.mxu0
    %4228 = vmatprep.subr.mxu0 %v4113
    %4229 = vmatpush1.msra.mxu0 %v4111
    %4230 = vmatprep.subr.mxu0 0.0
    %4231 = vmatpush1.msra.mxu0 0.0
    %4232 = vmatprep.subr.mxu0 0.0
    %4233 = vmatpush1.msra.mxu0 0.0
    %4234 = vmatprep.subr.mxu0 0.0
    %4235 = vmatpush1.msra.mxu0 0.0
    %4236 = vmatprep.subr.mxu0 0.0
    %4237 = vmatpush1.msra.mxu0 0.0
    %4238 = vmatprep.subr.mxu0 0.0
    %4239 = vmatpush1.msra.mxu0 0.0
    %4240 = vmatprep.subr.mxu0 0.0
    %4241 = vmatpush1.msra.mxu0 0.0
    %4242 = vmatprep.subr.mxu0 0.0
    %4243 = vmatpush1.msra.mxu0 0.0
    %4244 = vmatprep.subr.mxu0 0.0
    %4245 = vmatpush1.msra.mxu0 0.0
    %4246 = vmatprep.subr.mxu0 0.0
    %4247 = vmatpush1.msra.mxu0 0.0
    %4248 = vmatprep.subr.mxu0 0.0
    %4249 = vmatpush1.msra.mxu0 0.0
    %4250 = vmatprep.subr.mxu0 0.0
    %4251 = vmatpush1.msra.mxu0 0.0
    %4252 = vmatprep.subr.mxu0 0.0
    %4253 = vmatpush1.msra.mxu0 0.0
    %4254 = vmatprep.subr.mxu0 0.0
    %4255 = vmatpush1.msra.mxu0 0.0
    %4256 = vmatprep.subr.mxu0 0.0
    %4257 = vmatpush1.msra.mxu0 0.0
    %4258 = vmatprep.subr.mxu0 0.0
    %4259 = vmatpush1.msra.mxu0 0.0
    %4260 = vmatprep.subr.mxu0 0.0
    %4261 = vmatpush1.msra.mxu0 0.0
    %4262 = vmatprep.subr.mxu0 0.0
    %4263 = vmatpush1.msra.mxu0 0.0
    %4264 = vmatprep.subr.mxu0 0.0
    %4265 = vmatpush1.msra.mxu0 0.0
    %4266 = vmatprep.subr.mxu0 0.0
    %4267 = vmatpush1.msra.mxu0 0.0
    %4268 = vmatprep.subr.mxu0 0.0
    %4269 = vmatpush1.msra.mxu0 0.0
    %4270 = vmatprep.subr.mxu0 0.0
    %4271 = vmatpush1.msra.mxu0 0.0
    %4272 = vmatprep.subr.mxu0 0.0
    %4273 = vmatpush1.msra.mxu0 0.0
    %4274 = vmatprep.subr.mxu0 0.0
    %4275 = vmatpush1.msra.mxu0 0.0
    %4276 = vmatprep.subr.mxu0 0.0
    %4277 = vmatpush1.msra.mxu0 0.0
    %4278 = vmatprep.subr.mxu0 0.0
    %4279 = vmatpush1.msra.mxu0 0.0
    %4280 = vmatprep.subr.mxu0 0.0
    %4281 = vmatpush1.msra.mxu0 0.0
    %4282 = vmatprep.subr.mxu0 0.0
    %4283 = vmatpush1.msra.mxu0 0.0
    %4284 = vmatprep.subr.mxu0 0.0
    %4285 = vmatpush1.msra.mxu0 0.0
    %4286 = vmatprep.subr.mxu0 0.0
    %4287 = vmatpush1.msra.mxu0 0.0
    %4288 = vmatprep.subr.mxu0 0.0
    %4289 = vmatpush1.msra.mxu0 0.0
    %4290 = vmatprep.subr.mxu0 0.0
    %4291 = vmatpush1.msra.mxu0 0.0
    %4292 = vmatprep.mubr.f32.mxu0 0.0
    %4293 = vmatmul.mubr.f32.gmra.mrb[0].mxu0 %v4084
    %v4294 = vpop.f32.mrb[0].mxu0
    %v4295 = vadd.f32 %v4046, %v4294
    %v4296 = vpop.f32.mrb[0].mxu0
    %v4297 = vadd.f32 %v4046, %v4296
    %4298 = vmatprep.mubr.f32.mxu0 0.0
    %4299 = vmatmul.mubr.f32.gmra.mrb[0].mxu0 %v4087
    %v4300 = vpop.f32.mrb[0].mxu0
    %v4301 = vadd.f32 %v4051, %v4300
    %v4302 = vpop.f32.mrb[0].mxu0
    %v4303 = vadd.f32 %v4051, %v4302
    %4304 = vmatprep.mubr.f32.mxu0 0.0
    %4305 = vmatmul.mubr.f32.gmra.mrb[0].mxu0 %v4090
    %v4306 = vpop.f32.mrb[0].mxu0
    %v4307 = vadd.f32 %v4056, %v4306
    %v4308 = vpop.f32.mrb[0].mxu0
    %v4309 = vadd.f32 %v4056, %v4308
    %4310 = vmatprep.mubr.f32.mxu0 0.0
    %4311 = vmatmul.mubr.f32.gmra.mrb[0].mxu0 %v4093
    %v4312 = vpop.f32.mrb[0].mxu0
    %v4313 = vadd.f32 %v4061, %v4312
    %v4314 = vpop.f32.mrb[0].mxu0
    %v4315 = vadd.f32 %v4061, %v4314
    %4316 = vmatprep.mubr.f32.mxu0 0.0
    %4317 = vmatmul.mubr.f32.gmra.mrb[0].mxu0 %v4096
    %v4318 = vpop.f32.mrb[0].mxu0
    %v4319 = vadd.f32 %v4066, %v4318
    %v4320 = vpop.f32.mrb[0].mxu0
    %v4321 = vadd.f32 %v4066, %v4320
    %4322 = vmatprep.mubr.f32.mxu0 0.0
    %4323 = vmatmul.mubr.f32.gmra.mrb[0].mxu0 %v4099
    %v4324 = vpop.f32.mrb[0].mxu0
    %v4325 = vadd.f32 %v4071, %v4324
    %v4326 = vpop.f32.mrb[0].mxu0
    %v4327 = vadd.f32 %v4071, %v4326
    %4328 = vmatprep.mubr.f32.mxu0 0.0
    %4329 = vmatmul.mubr.f32.gmra.mrb[0].mxu0 %v4102
    %v4330 = vpop.f32.mrb[0].mxu0
    %v4331 = vadd.f32 %v4076, %v4330
    %v4332 = vpop.f32.mrb[0].mxu0
    %v4333 = vadd.f32 %v4076, %v4332
    %4334 = vmatprep.mubr.f32.mxu0 0.0
    %4335 = vmatmul.mubr.f32.gmra.mrb[0].mxu0 %v4105
    %v4336 = vpop.f32.mrb[0].mxu0
    %v4337 = vadd.f32 %v4081, %v4336
    %v4338 = vpop.f32.mrb[0].mxu0
    %v4339 = vadd.f32 %v4081, %v4338
    %4340 = vdwg.mxu0
    %v4341 = vadd.f32 %v3755, %v4182
    %v4342 = vadd.f32 %v3757, %v4184
    %v4343 = vadd.f32 %v3981, %v4295
    %v4344 = vadd.f32 %v3983, %v4297
    %v4345 = vadd.f32 %v3761, %v4188
    %v4346 = vadd.f32 %v3763, %v4190
    %v4347 = vadd.f32 %v3987, %v4301
    %v4348 = vadd.f32 %v3989, %v4303
    %v4349 = vadd.f32 %v3767, %v4194
    %v4350 = vadd.f32 %v3769, %v4196
    %v4351 = vadd.f32 %v3993, %v4307
    %v4352 = vadd.f32 %v3995, %v4309
    %v4353 = vadd.f32 %v3773, %v4200
    %v4354 = vadd.f32 %v3775, %v4202
    %v4355 = vadd.f32 %v3999, %v4313
    %v4356 = vadd.f32 %v4001, %v4315
    %v4357 = vadd.f32 %v3779, %v4206
    %v4358 = vadd.f32 %v3781, %v4208
    %v4359 = vadd.f32 %v4005, %v4319
    %v4360 = vadd.f32 %v4007, %v4321
    %v4361 = vadd.f32 %v3785, %v4212
    %v4362 = vadd.f32 %v3787, %v4214
    %v4363 = vadd.f32 %v4011, %v4325
    %v4364 = vadd.f32 %v4013, %v4327
    %v4365 = vadd.f32 %v3791, %v4218
    %v4366 = vadd.f32 %v3793, %v4220
    %v4367 = vadd.f32 %v4017, %v4331
    %v4368 = vadd.f32 %v4019, %v4333
    %v4369 = vadd.f32 %v3797, %v4224
    %v4370 = vadd.f32 %v3799, %v4226
    %v4371 = vadd.f32 %v4023, %v4337
    %v4372 = vadd.f32 %v4025, %v4339
    %v4373 = vmax.f32 %v4341, 0.0
    %v4374 = vmax.f32 %v4342, 0.0
    %v4375 = vmax.f32 %v4343, 0.0
    %v4376 = vmax.f32 %v4344, 0.0
    %v4377 = vmax.f32 %v4345, 0.0
    %v4378 = vmax.f32 %v4346, 0.0
    %v4379 = vmax.f32 %v4347, 0.0
    %v4380 = vmax.f32 %v4348, 0.0
    %v4381 = vmax.f32 %v4349, 0.0
    %v4382 = vmax.f32 %v4350, 0.0
    %v4383 = vmax.f32 %v4351, 0.0
    %v4384 = vmax.f32 %v4352, 0.0
    %v4385 = vmax.f32 %v4353, 0.0
    %v4386 = vmax.f32 %v4354, 0.0
    %v4387 = vmax.f32 %v4355, 0.0
    %v4388 = vmax.f32 %v4356, 0.0
    %v4389 = vmax.f32 %v4357, 0.0
    %v4390 = vmax.f32 %v4358, 0.0
    %v4391 = vmax.f32 %v4359, 0.0
    %v4392 = vmax.f32 %v4360, 0.0
    %v4393 = vmax.f32 %v4361, 0.0
    %v4394 = vmax.f32 %v4362, 0.0
    %v4395 = vmax.f32 %v4363, 0.0
    %v4396 = vmax.f32 %v4364, 0.0
    %v4397 = vmax.f32 %v4365, 0.0
    %v4398 = vmax.f32 %v4366, 0.0
    %v4399 = vmax.f32 %v4367, 0.0
    %v4400 = vmax.f32 %v4368, 0.0
    %v4401 = vmax.f32 %v4369, 0.0
    %v4402 = vmax.f32 %v4370, 0.0
    %v4403 = vmax.f32 %v4371, 0.0
    %v4404 = vmax.f32 %v4372, 0.0
    %v4405 = vld [vmem:[%s11] sm:$0xff]
    %v4406 = vld [vmem:[%s11 + $0x8] sm:$0xff]
    %v4407 = vld [vmem:[%s11 + $0x10] sm:$0xff]
    %v4408 = vld [vmem:[%s11 + $0x18] sm:$0xff]
    %v4409 = vld [vmem:[%s11 + $0x20] sm:$0xff]
    %v4410 = vld [vmem:[%s11 + $0x28] sm:$0xff]
    %v4411 = vld [vmem:[%s11 + $0x30] sm:$0xff]
    %v4412 = vld [vmem:[%s11 + $0x38] sm:$0xff]
    %v4413 = vld [vmem:[%s11 + $0x40] sm:$0xff]
    %v4414 = vld [vmem:[%s11 + $0x48] sm:$0xff]
    %v4415 = vld [vmem:[%s11 + $0x50] sm:$0xff]
    %v4416 = vld [vmem:[%s11 + $0x58] sm:$0xff]
    %v4418 = vsel %vm3550, %v4405, 0
    %v4421 = vsel %vm3550, %v4406, 0
    %v4424 = vsel %vm3550, %v4407, 0
    %v4427 = vsel %vm3550, %v4408, 0
    %v4430 = vsel %vm3550, %v4409, 0
    %v4433 = vsel %vm3550, %v4410, 0
    %v4436 = vsel %vm3550, %v4411, 0
    %v4439 = vsel %vm3550, %v4412, 0
    %v4442 = vsel %vm3550, %v4413, 0
    %v4445 = vsel %vm3550, %v4414, 0
    %v4448 = vsel %vm3550, %v4415, 0
    %v4451 = vsel %vm3550, %v4416, 0
    %4453 = vmatprep.subr.mxu0 %v4374
    %4454 = vmatpush1.msra.mxu0 %v4373
    %4455 = vmatprep.subr.mxu0 %v4378
    %4456 = vmatpush1.msra.mxu0 %v4377
    %4457 = vmatprep.subr.mxu0 %v4382
    %4458 = vmatpush1.msra.mxu0 %v4381
    %4459 = vmatprep.subr.mxu0 %v4386
    %4460 = vmatpush1.msra.mxu0 %v4385
    %4461 = vmatprep.subr.mxu0 %v4390
    %4462 = vmatpush1.msra.mxu0 %v4389
    %4463 = vmatprep.subr.mxu0 %v4394
    %4464 = vmatpush1.msra.mxu0 %v4393
    %4465 = vmatprep.subr.mxu0 %v4398
    %4466 = vmatpush1.msra.mxu0 %v4397
    %4467 = vmatprep.subr.mxu0 %v4402
    %4468 = vmatpush1.msra.mxu0 %v4401
    %4469 = vmatprep.subr.mxu0 0.0
    %4470 = vmatpush1.msra.mxu0 0.0
    %4471 = vmatprep.subr.mxu0 0.0
    %4472 = vmatpush1.msra.mxu0 0.0
    %4473 = vmatprep.subr.mxu0 0.0
    %4474 = vmatpush1.msra.mxu0 0.0
    %4475 = vmatprep.subr.mxu0 0.0
    %4476 = vmatpush1.msra.mxu0 0.0
    %4477 = vmatprep.subr.mxu0 0.0
    %4478 = vmatpush1.msra.mxu0 0.0
    %4479 = vmatprep.subr.mxu0 0.0
    %4480 = vmatpush1.msra.mxu0 0.0
    %4481 = vmatprep.subr.mxu0 0.0
    %4482 = vmatpush1.msra.mxu0 0.0
    %4483 = vmatprep.subr.mxu0 0.0
    %4484 = vmatpush1.msra.mxu0 0.0
    %4485 = vmatprep.subr.mxu0 0.0
    %4486 = vmatpush1.msra.mxu0 0.0
    %4487 = vmatprep.subr.mxu0 0.0
    %4488 = vmatpush1.msra.mxu0 0.0
    %4489 = vmatprep.subr.mxu0 0.0
    %4490 = vmatpush1.msra.mxu0 0.0
    %4491 = vmatprep.subr.mxu0 0.0
    %4492 = vmatpush1.msra.mxu0 0.0
    %4493 = vmatprep.subr.mxu0 0.0
    %4494 = vmatpush1.msra.mxu0 0.0
    %4495 = vmatprep.subr.mxu0 0.0
    %4496 = vmatpush1.msra.mxu0 0.0
    %4497 = vmatprep.subr.mxu0 0.0
    %4498 = vmatpush1.msra.mxu0 0.0
    %4499 = vmatprep.subr.mxu0 0.0
    %4500 = vmatpush1.msra.mxu0 0.0
    %4501 = vmatprep.subr.mxu0 0.0
    %4502 = vmatpush1.msra.mxu0 0.0
    %4503 = vmatprep.subr.mxu0 0.0
    %4504 = vmatpush1.msra.mxu0 0.0
    %4505 = vmatprep.subr.mxu0 0.0
    %4506 = vmatpush1.msra.mxu0 0.0
    %4507 = vmatprep.subr.mxu0 0.0
    %4508 = vmatpush1.msra.mxu0 0.0
    %4509 = vmatprep.subr.mxu0 0.0
    %4510 = vmatpush1.msra.mxu0 0.0
    %4511 = vmatprep.subr.mxu0 0.0
    %4512 = vmatpush1.msra.mxu0 0.0
    %4513 = vmatprep.subr.mxu0 0.0
    %4514 = vmatpush1.msra.mxu0 0.0
    %4515 = vmatprep.subr.mxu0 0.0
    %4516 = vmatpush1.msra.mxu0 0.0
    %4517 = vmatprep.mubr.f32.mxu0 0.0
    %4518 = vmatmul.mubr.f32.gmra.mrb[0].mxu0 %v4418
    %v4519 = vpop.f32.mrb[0].mxu0
    %v4520 = vadd.f32 0.0, %v4519
    %v4521 = vpop.f32.mrb[0].mxu0
    %v4522 = vadd.f32 0.0, %v4521
    %4523 = vmatprep.mubr.f32.mxu0 0.0
    %4524 = vmatmul.mubr.f32.gmra.mrb[0].mxu0 %v4421
    %v4525 = vpop.f32.mrb[0].mxu0
    %v4526 = vadd.f32 0.0, %v4525
    %v4527 = vpop.f32.mrb[0].mxu0
    %v4528 = vadd.f32 0.0, %v4527
    %4529 = vmatprep.mubr.f32.mxu0 0.0
    %4530 = vmatmul.mubr.f32.gmra.mrb[0].mxu0 %v4424
    %v4531 = vpop.f32.mrb[0].mxu0
    %v4532 = vadd.f32 0.0, %v4531
    %v4533 = vpop.f32.mrb[0].mxu0
    %v4534 = vadd.f32 0.0, %v4533
    %4535 = vmatprep.mubr.f32.mxu0 0.0
    %4536 = vmatmul.mubr.f32.gmra.mrb[0].mxu0 %v4427
    %v4537 = vpop.f32.mrb[0].mxu0
    %v4538 = vadd.f32 0.0, %v4537
    %v4539 = vpop.f32.mrb[0].mxu0
    %v4540 = vadd.f32 0.0, %v4539
    %4541 = vmatprep.mubr.f32.mxu0 0.0
    %4542 = vmatmul.mubr.f32.gmra.mrb[0].mxu0 %v4430
    %v4543 = vpop.f32.mrb[0].mxu0
    %v4544 = vadd.f32 0.0, %v4543
    %v4545 = vpop.f32.mrb[0].mxu0
    %v4546 = vadd.f32 0.0, %v4545
    %4547 = vmatprep.mubr.f32.mxu0 0.0
    %4548 = vmatmul.mubr.f32.gmra.mrb[0].mxu0 %v4433
    %v4549 = vpop.f32.mrb[0].mxu0
    %v4550 = vadd.f32 0.0, %v4549
    %v4551 = vpop.f32.mrb[0].mxu0
    %v4552 = vadd.f32 0.0, %v4551
    %4553 = vmatprep.mubr.f32.mxu0 0.0
    %4554 = vmatmul.mubr.f32.gmra.mrb[0].mxu0 %v4436
    %v4555 = vpop.f32.mrb[0].mxu0
    %v4556 = vadd.f32 0.0, %v4555
    %v4557 = vpop.f32.mrb[0].mxu0
    %v4558 = vadd.f32 0.0, %v4557
    %4559 = vmatprep.mubr.f32.mxu0 0.0
    %4560 = vmatmul.mubr.f32.gmra.mrb[0].mxu0 %v4439
    %v4561 = vpop.f32.mrb[0].mxu0
    %v4562 = vadd.f32 0.0, %v4561
    %v4563 = vpop.f32.mrb[0].mxu0
    %v4564 = vadd.f32 0.0, %v4563
    %4565 = vmatprep.mubr.f32.mxu0 0.0
    %4566 = vmatmul.mubr.f32.gmra.mrb[0].mxu0 %v4442
    %v4567 = vpop.f32.mrb[0].mxu0
    %v4568 = vadd.f32 0.0, %v4567
    %v4569 = vpop.f32.mrb[0].mxu0
    %v4570 = vadd.f32 0.0, %v4569
    %4571 = vmatprep.mubr.f32.mxu0 0.0
    %4572 = vmatmul.mubr.f32.gmra.mrb[0].mxu0 %v4445
    %v4573 = vpop.f32.mrb[0].mxu0
    %v4574 = vadd.f32 0.0, %v4573
    %v4575 = vpop.f32.mrb[0].mxu0
    %v4576 = vadd.f32 0.0, %v4575
    %4577 = vmatprep.mubr.f32.mxu0 0.0
    %4578 = vmatmul.mubr.f32.gmra.mrb[0].mxu0 %v4448
    %v4579 = vpop.f32.mrb[0].mxu0
    %v4580 = vadd.f32 0.0, %v4579
    %v4581 = vpop.f32.mrb[0].mxu0
    %v4582 = vadd.f32 0.0, %v4581
    %4583 = vmatprep.mubr.f32.mxu0 0.0
    %4584 = vmatmul.mubr.f32.gmra.mrb[0].mxu0 %v4451
    %v4585 = vpop.f32.mrb[0].mxu0
    %v4586 = vadd.f32 0.0, %v4585
    %v4587 = vpop.f32.mrb[0].mxu0
    %v4588 = vadd.f32 0.0, %v4587
    %4589 = vdwg.mxu0
    %4590 = vmatprep.subr.mxu0 %v4376
    %4591 = vmatpush1.msra.mxu0 %v4375
    %4592 = vmatprep.subr.mxu0 %v4380
    %4593 = vmatpush1.msra.mxu0 %v4379
    %4594 = vmatprep.subr.mxu0 %v4384
    %4595 = vmatpush1.msra.mxu0 %v4383
    %4596 = vmatprep.subr.mxu0 %v4388
    %4597 = vmatpush1.msra.mxu0 %v4387
    %4598 = vmatprep.subr.mxu0 %v4392
    %4599 = vmatpush1.msra.mxu0 %v4391
    %4600 = vmatprep.subr.mxu0 %v4396
    %4601 = vmatpush1.msra.mxu0 %v4395
    %4602 = vmatprep.subr.mxu0 %v4400
    %4603 = vmatpush1.msra.mxu0 %v4399
    %4604 = vmatprep.subr.mxu0 %v4404
    %4605 = vmatpush1.msra.mxu0 %v4403
    %4606 = vmatprep.subr.mxu0 0.0
    %4607 = vmatpush1.msra.mxu0 0.0
    %4608 = vmatprep.subr.mxu0 0.0
    %4609 = vmatpush1.msra.mxu0 0.0
    %4610 = vmatprep.subr.mxu0 0.0
    %4611 = vmatpush1.msra.mxu0 0.0
    %4612 = vmatprep.subr.mxu0 0.0
    %4613 = vmatpush1.msra.mxu0 0.0
    %4614 = vmatprep.subr.mxu0 0.0
    %4615 = vmatpush1.msra.mxu0 0.0
    %4616 = vmatprep.subr.mxu0 0.0
    %4617 = vmatpush1.msra.mxu0 0.0
    %4618 = vmatprep.subr.mxu0 0.0
    %4619 = vmatpush1.msra.mxu0 0.0
    %4620 = vmatprep.subr.mxu0 0.0
    %4621 = vmatpush1.msra.mxu0 0.0
    %4622 = vmatprep.subr.mxu0 0.0
    %4623 = vmatpush1.msra.mxu0 0.0
    %4624 = vmatprep.subr.mxu0 0.0
    %4625 = vmatpush1.msra.mxu0 0.0
    %4626 = vmatprep.subr.mxu0 0.0
    %4627 = vmatpush1.msra.mxu0 0.0
    %4628 = vmatprep.subr.mxu0 0.0
    %4629 = vmatpush1.msra.mxu0 0.0
    %4630 = vmatprep.subr.mxu0 0.0
    %4631 = vmatpush1.msra.mxu0 0.0
    %4632 = vmatprep.subr.mxu0 0.0
    %4633 = vmatpush1.msra.mxu0 0.0
    %4634 = vmatprep.subr.mxu0 0.0
    %4635 = vmatpush1.msra.mxu0 0.0
    %4636 = vmatprep.subr.mxu0 0.0
    %4637 = vmatpush1.msra.mxu0 0.0
    %4638 = vmatprep.subr.mxu0 0.0
    %4639 = vmatpush1.msra.mxu0 0.0
    %4640 = vmatprep.subr.mxu0 0.0
    %4641 = vmatpush1.msra.mxu0 0.0
    %4642 = vmatprep.subr.mxu0 0.0
    %4643 = vmatpush1.msra.mxu0 0.0
    %4644 = vmatprep.subr.mxu0 0.0
    %4645 = vmatpush1.msra.mxu0 0.0
    %4646 = vmatprep.subr.mxu0 0.0
    %4647 = vmatpush1.msra.mxu0 0.0
    %4648 = vmatprep.subr.mxu0 0.0
    %4649 = vmatpush1.msra.mxu0 0.0
    %4650 = vmatprep.subr.mxu0 0.0
    %4651 = vmatpush1.msra.mxu0 0.0
    %4652 = vmatprep.subr.mxu0 0.0
    %4653 = vmatpush1.msra.mxu0 0.0
    %4654 = vmatprep.mubr.f32.mxu0 0.0
    %4655 = vmatmul.mubr.f32.gmra.mrb[0].mxu0 %v4418
    %v4656 = vpop.f32.mrb[0].mxu0
    %v4657 = vadd.f32 0.0, %v4656
    %v4658 = vpop.f32.mrb[0].mxu0
    %v4659 = vadd.f32 0.0, %v4658
    %4660 = vmatprep.mubr.f32.mxu0 0.0
    %4661 = vmatmul.mubr.f32.gmra.mrb[0].mxu0 %v4421
    %v4662 = vpop.f32.mrb[0].mxu0
    %v4663 = vadd.f32 0.0, %v4662
    %v4664 = vpop.f32.mrb[0].mxu0
    %v4665 = vadd.f32 0.0, %v4664
    %4666 = vmatprep.mubr.f32.mxu0 0.0
    %4667 = vmatmul.mubr.f32.gmra.mrb[0].mxu0 %v4424
    %v4668 = vpop.f32.mrb[0].mxu0
    %v4669 = vadd.f32 0.0, %v4668
    %v4670 = vpop.f32.mrb[0].mxu0
    %v4671 = vadd.f32 0.0, %v4670
    %4672 = vmatprep.mubr.f32.mxu0 0.0
    %4673 = vmatmul.mubr.f32.gmra.mrb[0].mxu0 %v4427
    %v4674 = vpop.f32.mrb[0].mxu0
    %v4675 = vadd.f32 0.0, %v4674
    %v4676 = vpop.f32.mrb[0].mxu0
    %v4677 = vadd.f32 0.0, %v4676
    %4678 = vmatprep.mubr.f32.mxu0 0.0
    %4679 = vmatmul.mubr.f32.gmra.mrb[0].mxu0 %v4430
    %v4680 = vpop.f32.mrb[0].mxu0
    %v4681 = vadd.f32 0.0, %v4680
    %v4682 = vpop.f32.mrb[0].mxu0
    %v4683 = vadd.f32 0.0, %v4682
    %4684 = vmatprep.mubr.f32.mxu0 0.0
    %4685 = vmatmul.mubr.f32.gmra.mrb[0].mxu0 %v4433
    %v4686 = vpop.f32.mrb[0].mxu0
    %v4687 = vadd.f32 0.0, %v4686
    %v4688 = vpop.f32.mrb[0].mxu0
    %v4689 = vadd.f32 0.0, %v4688
    %4690 = vmatprep.mubr.f32.mxu0 0.0
    %4691 = vmatmul.mubr.f32.gmra.mrb[0].mxu0 %v4436
    %v4692 = vpop.f32.mrb[0].mxu0
    %v4693 = vadd.f32 0.0, %v4692
    %v4694 = vpop.f32.mrb[0].mxu0
    %v4695 = vadd.f32 0.0, %v4694
    %4696 = vmatprep.mubr.f32.mxu0 0.0
    %4697 = vmatmul.mubr.f32.gmra.mrb[0].mxu0 %v4439
    %v4698 = vpop.f32.mrb[0].mxu0
    %v4699 = vadd.f32 0.0, %v4698
    %v4700 = vpop.f32.mrb[0].mxu0
    %v4701 = vadd.f32 0.0, %v4700
    %4702 = vmatprep.mubr.f32.mxu0 0.0
    %4703 = vmatmul.mubr.f32.gmra.mrb[0].mxu0 %v4442
    %v4704 = vpop.f32.mrb[0].mxu0
    %v4705 = vadd.f32 0.0, %v4704
    %v4706 = vpop.f32.mrb[0].mxu0
    %v4707 = vadd.f32 0.0, %v4706
    %4708 = vmatprep.mubr.f32.mxu0 0.0
    %4709 = vmatmul.mubr.f32.gmra.mrb[0].mxu0 %v4445
    %v4710 = vpop.f32.mrb[0].mxu0
    %v4711 = vadd.f32 0.0, %v4710
    %v4712 = vpop.f32.mrb[0].mxu0
    %v4713 = vadd.f32 0.0, %v4712
    %4714 = vmatprep.mubr.f32.mxu0 0.0
    %4715 = vmatmul.mubr.f32.gmra.mrb[0].mxu0 %v4448
    %v4716 = vpop.f32.mrb[0].mxu0
    %v4717 = vadd.f32 0.0, %v4716
    %v4718 = vpop.f32.mrb[0].mxu0
    %v4719 = vadd.f32 0.0, %v4718
    %4720 = vmatprep.mubr.f32.mxu0 0.0
    %4721 = vmatmul.mubr.f32.gmra.mrb[0].mxu0 %v4451
    %v4722 = vpop.f32.mrb[0].mxu0
    %v4723 = vadd.f32 0.0, %v4722
    %v4724 = vpop.f32.mrb[0].mxu0
    %v4725 = vadd.f32 0.0, %v4724
    %4726 = vdwg.mxu0
    %v4727 = vld [vmem:[#allocation14] sm:$0xff]
    %v4728 = vld [vmem:[#allocation14 + $0x8] sm:$0xff]
    %v4729 = vld [vmem:[#allocation14 + $0x10] sm:$0xff]
    %v4730 = vld [vmem:[#allocation14 + $0x18] sm:$0xff]
    %v4731 = vld [vmem:[#allocation14 + $0x20] sm:$0xff]
    %v4732 = vld [vmem:[#allocation14 + $0x28] sm:$0xff]
    %v4733 = vld [vmem:[#allocation14 + $0x30] sm:$0xff]
    %v4734 = vld [vmem:[#allocation14 + $0x38] sm:$0xff]
    %v4735 = vld [vmem:[#allocation14 + $0x40] sm:$0xff]
    %v4736 = vld [vmem:[#allocation14 + $0x48] sm:$0xff]
    %v4737 = vld [vmem:[#allocation14 + $0x50] sm:$0xff]
    %v4738 = vld [vmem:[#allocation14 + $0x58] sm:$0xff]
    %v4739 = vld [vmem:[#allocation14 + $0x60] sm:$0xff]
    %v4740 = vld [vmem:[#allocation14 + $0x68] sm:$0xff]
    %v4741 = vld [vmem:[#allocation14 + $0x70] sm:$0xff]
    %v4742 = vld [vmem:[#allocation14 + $0x78] sm:$0xff]
    %4743 = vmatprep.subr.mxu0 %v300
    %4744 = vmatpush1.msra.mxu0 %v299
    %4745 = vmatprep.subr.mxu0 %v304
    %4746 = vmatpush1.msra.mxu0 %v303
    %4747 = vmatprep.subr.mxu0 %v308
    %4748 = vmatpush1.msra.mxu0 %v307
    %4749 = vmatprep.subr.mxu0 %v312
    %4750 = vmatpush1.msra.mxu0 %v311
    %4751 = vmatprep.subr.mxu0 %v316
    %4752 = vmatpush1.msra.mxu0 %v315
    %4753 = vmatprep.subr.mxu0 %v320
    %4754 = vmatpush1.msra.mxu0 %v319
    %4755 = vmatprep.subr.mxu0 %v324
    %4756 = vmatpush1.msra.mxu0 %v323
    %4757 = vmatprep.subr.mxu0 %v328
    %4758 = vmatpush1.msra.mxu0 %v327
    %4759 = vmatprep.subr.mxu0 %v332
    %4760 = vmatpush1.msra.mxu0 %v331
    %4761 = vmatprep.subr.mxu0 %v336
    %4762 = vmatpush1.msra.mxu0 %v335
    %4763 = vmatprep.subr.mxu0 %v340
    %4764 = vmatpush1.msra.mxu0 %v339
    %4765 = vmatprep.subr.mxu0 %v344
    %4766 = vmatpush1.msra.mxu0 %v343
    %4767 = vmatprep.subr.mxu0 %v348
    %4768 = vmatpush1.msra.mxu0 %v347
    %4769 = vmatprep.subr.mxu0 %v352
    %4770 = vmatpush1.msra.mxu0 %v351
    %4771 = vmatprep.subr.mxu0 %v356
    %4772 = vmatpush1.msra.mxu0 %v355
    %4773 = vmatprep.subr.mxu0 %v360
    %4774 = vmatpush1.msra.mxu0 %v359
    %4775 = vmatprep.subr.mxu0 %v364
    %4776 = vmatpush1.msra.mxu0 %v363
    %4777 = vmatprep.subr.mxu0 %v368
    %4778 = vmatpush1.msra.mxu0 %v367
    %4779 = vmatprep.subr.mxu0 %v372
    %4780 = vmatpush1.msra.mxu0 %v371
    %4781 = vmatprep.subr.mxu0 %v376
    %4782 = vmatpush1.msra.mxu0 %v375
    %4783 = vmatprep.subr.mxu0 %v380
    %4784 = vmatpush1.msra.mxu0 %v379
    %4785 = vmatprep.subr.mxu0 %v384
    %4786 = vmatpush1.msra.mxu0 %v383
    %4787 = vmatprep.subr.mxu0 %v388
    %4788 = vmatpush1.msra.mxu0 %v387
    %4789 = vmatprep.subr.mxu0 %v392
    %4790 = vmatpush1.msra.mxu0 %v391
    %4791 = vmatprep.subr.mxu0 %v396
    %4792 = vmatpush1.msra.mxu0 %v395
    %4793 = vmatprep.subr.mxu0 %v400
    %4794 = vmatpush1.msra.mxu0 %v399
    %4795 = vmatprep.subr.mxu0 %v404
    %4796 = vmatpush1.msra.mxu0 %v403
    %4797 = vmatprep.subr.mxu0 %v408
    %4798 = vmatpush1.msra.mxu0 %v407
    %4799 = vmatprep.subr.mxu0 %v412
    %4800 = vmatpush1.msra.mxu0 %v411
    %4801 = vmatprep.subr.mxu0 %v416
    %4802 = vmatpush1.msra.mxu0 %v415
    %4803 = vmatprep.subr.mxu0 %v420
    %4804 = vmatpush1.msra.mxu0 %v419
    %4805 = vmatprep.subr.mxu0 %v424
    %4806 = vmatpush1.msra.mxu0 %v423
    %4807 = vmatprep.mubr.f32.mxu0 %v4522
    %4808 = vmatmul.mubr.f32.gmra.mrb[0].mxu0 %v4520
    %v4809 = vpop.f32.mrb[0].mxu0
    %v4810 = vadd.f32 0.0, %v4809
    %v4811 = vpop.f32.mrb[0].mxu0
    %v4812 = vadd.f32 0.0, %v4811
    %4813 = vmatprep.mubr.f32.mxu0 %v4528
    %4814 = vmatmul.mubr.f32.gmra.mrb[0].mxu0 %v4526
    %v4815 = vpop.f32.mrb[0].mxu0
    %v4816 = vadd.f32 0.0, %v4815
    %v4817 = vpop.f32.mrb[0].mxu0
    %v4818 = vadd.f32 0.0, %v4817
    %4819 = vmatprep.mubr.f32.mxu0 %v4534
    %4820 = vmatmul.mubr.f32.gmra.mrb[0].mxu0 %v4532
    %v4821 = vpop.f32.mrb[0].mxu0
    %v4822 = vadd.f32 0.0, %v4821
    %v4823 = vpop.f32.mrb[0].mxu0
    %v4824 = vadd.f32 0.0, %v4823
    %4825 = vmatprep.mubr.f32.mxu0 %v4540
    %4826 = vmatmul.mubr.f32.gmra.mrb[0].mxu0 %v4538
    %v4827 = vpop.f32.mrb[0].mxu0
    %v4828 = vadd.f32 0.0, %v4827
    %v4829 = vpop.f32.mrb[0].mxu0
    %v4830 = vadd.f32 0.0, %v4829
    %4831 = vdwg.mxu0
    %4832 = vmatprep.subr.mxu0 %v428
    %4833 = vmatpush1.msra.mxu0 %v427
    %4834 = vmatprep.subr.mxu0 %v432
    %4835 = vmatpush1.msra.mxu0 %v431
    %4836 = vmatprep.subr.mxu0 %v436
    %4837 = vmatpush1.msra.mxu0 %v435
    %4838 = vmatprep.subr.mxu0 %v440
    %4839 = vmatpush1.msra.mxu0 %v439
    %4840 = vmatprep.subr.mxu0 %v444
    %4841 = vmatpush1.msra.mxu0 %v443
    %4842 = vmatprep.subr.mxu0 %v448
    %4843 = vmatpush1.msra.mxu0 %v447
    %4844 = vmatprep.subr.mxu0 %v452
    %4845 = vmatpush1.msra.mxu0 %v451
    %4846 = vmatprep.subr.mxu0 %v456
    %4847 = vmatpush1.msra.mxu0 %v455
    %4848 = vmatprep.subr.mxu0 %v460
    %4849 = vmatpush1.msra.mxu0 %v459
    %4850 = vmatprep.subr.mxu0 %v464
    %4851 = vmatpush1.msra.mxu0 %v463
    %4852 = vmatprep.subr.mxu0 %v468
    %4853 = vmatpush1.msra.mxu0 %v467
    %4854 = vmatprep.subr.mxu0 %v472
    %4855 = vmatpush1.msra.mxu0 %v471
    %4856 = vmatprep.subr.mxu0 %v476
    %4857 = vmatpush1.msra.mxu0 %v475
    %4858 = vmatprep.subr.mxu0 %v480
    %4859 = vmatpush1.msra.mxu0 %v479
    %4860 = vmatprep.subr.mxu0 %v484
    %4861 = vmatpush1.msra.mxu0 %v483
    %4862 = vmatprep.subr.mxu0 %v488
    %4863 = vmatpush1.msra.mxu0 %v487
    %4864 = vmatprep.subr.mxu0 %v492
    %4865 = vmatpush1.msra.mxu0 %v491
    %4866 = vmatprep.subr.mxu0 %v496
    %4867 = vmatpush1.msra.mxu0 %v495
    %4868 = vmatprep.subr.mxu0 %v500
    %4869 = vmatpush1.msra.mxu0 %v499
    %4870 = vmatprep.subr.mxu0 %v504
    %4871 = vmatpush1.msra.mxu0 %v503
    %4872 = vmatprep.subr.mxu0 %v508
    %4873 = vmatpush1.msra.mxu0 %v507
    %4874 = vmatprep.subr.mxu0 %v512
    %4875 = vmatpush1.msra.mxu0 %v511
    %4876 = vmatprep.subr.mxu0 %v516
    %4877 = vmatpush1.msra.mxu0 %v515
    %4878 = vmatprep.subr.mxu0 %v520
    %4879 = vmatpush1.msra.mxu0 %v519
    %4880 = vmatprep.subr.mxu0 %v524
    %4881 = vmatpush1.msra.mxu0 %v523
    %4882 = vmatprep.subr.mxu0 %v528
    %4883 = vmatpush1.msra.mxu0 %v527
    %4884 = vmatprep.subr.mxu0 %v532
    %4885 = vmatpush1.msra.mxu0 %v531
    %4886 = vmatprep.subr.mxu0 %v536
    %4887 = vmatpush1.msra.mxu0 %v535
    %4888 = vmatprep.subr.mxu0 %v540
    %4889 = vmatpush1.msra.mxu0 %v539
    %4890 = vmatprep.subr.mxu0 %v544
    %4891 = vmatpush1.msra.mxu0 %v543
    %4892 = vmatprep.subr.mxu0 %v548
    %4893 = vmatpush1.msra.mxu0 %v547
    %4894 = vmatprep.subr.mxu0 %v552
    %4895 = vmatpush1.msra.mxu0 %v551
    %4896 = vmatprep.mubr.f32.mxu0 %v4659
    %4897 = vmatmul.mubr.f32.gmra.mrb[0].mxu0 %v4657
    %v4898 = vpop.f32.mrb[0].mxu0
    %v4899 = vadd.f32 %v4810, %v4898
    %v4900 = vpop.f32.mrb[0].mxu0
    %v4901 = vadd.f32 %v4812, %v4900
    %4902 = vmatprep.mubr.f32.mxu0 %v4665
    %4903 = vmatmul.mubr.f32.gmra.mrb[0].mxu0 %v4663
    %v4904 = vpop.f32.mrb[0].mxu0
    %v4905 = vadd.f32 %v4816, %v4904
    %v4906 = vpop.f32.mrb[0].mxu0
    %v4907 = vadd.f32 %v4818, %v4906
    %4908 = vmatprep.mubr.f32.mxu0 %v4671
    %4909 = vmatmul.mubr.f32.gmra.mrb[0].mxu0 %v4669
    %v4910 = vpop.f32.mrb[0].mxu0
    %v4911 = vadd.f32 %v4822, %v4910
    %v4912 = vpop.f32.mrb[0].mxu0
    %v4913 = vadd.f32 %v4824, %v4912
    %4914 = vmatprep.mubr.f32.mxu0 %v4677
    %4915 = vmatmul.mubr.f32.gmra.mrb[0].mxu0 %v4675
    %v4916 = vpop.f32.mrb[0].mxu0
    %v4917 = vadd.f32 %v4828, %v4916
    %v4918 = vpop.f32.mrb[0].mxu0
    %v4919 = vadd.f32 %v4830, %v4918
    %4920 = vdwg.mxu0
    %4921 = vmatprep.subr.mxu0 %v302
    %4922 = vmatpush1.msra.mxu0 %v301
    %4923 = vmatprep.subr.mxu0 %v306
    %4924 = vmatpush1.msra.mxu0 %v305
    %4925 = vmatprep.subr.mxu0 %v310
    %4926 = vmatpush1.msra.mxu0 %v309
    %4927 = vmatprep.subr.mxu0 %v314
    %4928 = vmatpush1.msra.mxu0 %v313
    %4929 = vmatprep.subr.mxu0 %v318
    %4930 = vmatpush1.msra.mxu0 %v317
    %4931 = vmatprep.subr.mxu0 %v322
    %4932 = vmatpush1.msra.mxu0 %v321
    %4933 = vmatprep.subr.mxu0 %v326
    %4934 = vmatpush1.msra.mxu0 %v325
    %4935 = vmatprep.subr.mxu0 %v330
    %4936 = vmatpush1.msra.mxu0 %v329
    %4937 = vmatprep.subr.mxu0 %v334
    %4938 = vmatpush1.msra.mxu0 %v333
    %4939 = vmatprep.subr.mxu0 %v338
    %4940 = vmatpush1.msra.mxu0 %v337
    %4941 = vmatprep.subr.mxu0 %v342
    %4942 = vmatpush1.msra.mxu0 %v341
    %4943 = vmatprep.subr.mxu0 %v346
    %4944 = vmatpush1.msra.mxu0 %v345
    %4945 = vmatprep.subr.mxu0 %v350
    %4946 = vmatpush1.msra.mxu0 %v349
    %4947 = vmatprep.subr.mxu0 %v354
    %4948 = vmatpush1.msra.mxu0 %v353
    %4949 = vmatprep.subr.mxu0 %v358
    %4950 = vmatpush1.msra.mxu0 %v357
    %4951 = vmatprep.subr.mxu0 %v362
    %4952 = vmatpush1.msra.mxu0 %v361
    %4953 = vmatprep.subr.mxu0 %v366
    %4954 = vmatpush1.msra.mxu0 %v365
    %4955 = vmatprep.subr.mxu0 %v370
    %4956 = vmatpush1.msra.mxu0 %v369
    %4957 = vmatprep.subr.mxu0 %v374
    %4958 = vmatpush1.msra.mxu0 %v373
    %4959 = vmatprep.subr.mxu0 %v378
    %4960 = vmatpush1.msra.mxu0 %v377
    %4961 = vmatprep.subr.mxu0 %v382
    %4962 = vmatpush1.msra.mxu0 %v381
    %4963 = vmatprep.subr.mxu0 %v386
    %4964 = vmatpush1.msra.mxu0 %v385
    %4965 = vmatprep.subr.mxu0 %v390
    %4966 = vmatpush1.msra.mxu0 %v389
    %4967 = vmatprep.subr.mxu0 %v394
    %4968 = vmatpush1.msra.mxu0 %v393
    %4969 = vmatprep.subr.mxu0 %v398
    %4970 = vmatpush1.msra.mxu0 %v397
    %4971 = vmatprep.subr.mxu0 %v402
    %4972 = vmatpush1.msra.mxu0 %v401
    %4973 = vmatprep.subr.mxu0 %v406
    %4974 = vmatpush1.msra.mxu0 %v405
    %4975 = vmatprep.subr.mxu0 %v410
    %4976 = vmatpush1.msra.mxu0 %v409
    %4977 = vmatprep.subr.mxu0 %v414
    %4978 = vmatpush1.msra.mxu0 %v413
    %4979 = vmatprep.subr.mxu0 %v418
    %4980 = vmatpush1.msra.mxu0 %v417
    %4981 = vmatprep.subr.mxu0 %v422
    %4982 = vmatpush1.msra.mxu0 %v421
    %4983 = vmatprep.subr.mxu0 %v426
    %4984 = vmatpush1.msra.mxu0 %v425
    %4985 = vmatprep.mubr.f32.mxu0 %v4522
    %4986 = vmatmul.mubr.f32.gmra.mrb[0].mxu0 %v4520
    %v4987 = vpop.f32.mrb[0].mxu0
    %v4988 = vadd.f32 0.0, %v4987
    %v4989 = vpop.f32.mrb[0].mxu0
    %v4990 = vadd.f32 0.0, %v4989
    %4991 = vmatprep.mubr.f32.mxu0 %v4528
    %4992 = vmatmul.mubr.f32.gmra.mrb[0].mxu0 %v4526
    %v4993 = vpop.f32.mrb[0].mxu0
    %v4994 = vadd.f32 0.0, %v4993
    %v4995 = vpop.f32.mrb[0].mxu0
    %v4996 = vadd.f32 0.0, %v4995
    %4997 = vmatprep.mubr.f32.mxu0 %v4534
    %4998 = vmatmul.mubr.f32.gmra.mrb[0].mxu0 %v4532
    %v4999 = vpop.f32.mrb[0].mxu0
    %v5000 = vadd.f32 0.0, %v4999
    %v5001 = vpop.f32.mrb[0].mxu0
    %v5002 = vadd.f32 0.0, %v5001
    %5003 = vmatprep.mubr.f32.mxu0 %v4540
    %5004 = vmatmul.mubr.f32.gmra.mrb[0].mxu0 %v4538
    %v5005 = vpop.f32.mrb[0].mxu0
    %v5006 = vadd.f32 0.0, %v5005
    %v5007 = vpop.f32.mrb[0].mxu0
    %v5008 = vadd.f32 0.0, %v5007
    %5009 = vdwg.mxu0
    %5010 = vmatprep.subr.mxu0 %v430
    %5011 = vmatpush1.msra.mxu0 %v429
    %5012 = vmatprep.subr.mxu0 %v434
    %5013 = vmatpush1.msra.mxu0 %v433
    %5014 = vmatprep.subr.mxu0 %v438
    %5015 = vmatpush1.msra.mxu0 %v437
    %5016 = vmatprep.subr.mxu0 %v442
    %5017 = vmatpush1.msra.mxu0 %v441
    %5018 = vmatprep.subr.mxu0 %v446
    %5019 = vmatpush1.msra.mxu0 %v445
    %5020 = vmatprep.subr.mxu0 %v450
    %5021 = vmatpush1.msra.mxu0 %v449
    %5022 = vmatprep.subr.mxu0 %v454
    %5023 = vmatpush1.msra.mxu0 %v453
    %5024 = vmatprep.subr.mxu0 %v458
    %5025 = vmatpush1.msra.mxu0 %v457
    %5026 = vmatprep.subr.mxu0 %v462
    %5027 = vmatpush1.msra.mxu0 %v461
    %5028 = vmatprep.subr.mxu0 %v466
    %5029 = vmatpush1.msra.mxu0 %v465
    %5030 = vmatprep.subr.mxu0 %v470
    %5031 = vmatpush1.msra.mxu0 %v469
    %5032 = vmatprep.subr.mxu0 %v474
    %5033 = vmatpush1.msra.mxu0 %v473
    %5034 = vmatprep.subr.mxu0 %v478
    %5035 = vmatpush1.msra.mxu0 %v477
    %5036 = vmatprep.subr.mxu0 %v482
    %5037 = vmatpush1.msra.mxu0 %v481
    %5038 = vmatprep.subr.mxu0 %v486
    %5039 = vmatpush1.msra.mxu0 %v485
    %5040 = vmatprep.subr.mxu0 %v490
    %5041 = vmatpush1.msra.mxu0 %v489
    %5042 = vmatprep.subr.mxu0 %v494
    %5043 = vmatpush1.msra.mxu0 %v493
    %5044 = vmatprep.subr.mxu0 %v498
    %5045 = vmatpush1.msra.mxu0 %v497
    %5046 = vmatprep.subr.mxu0 %v502
    %5047 = vmatpush1.msra.mxu0 %v501
    %5048 = vmatprep.subr.mxu0 %v506
    %5049 = vmatpush1.msra.mxu0 %v505
    %5050 = vmatprep.subr.mxu0 %v510
    %5051 = vmatpush1.msra.mxu0 %v509
    %5052 = vmatprep.subr.mxu0 %v514
    %5053 = vmatpush1.msra.mxu0 %v513
    %5054 = vmatprep.subr.mxu0 %v518
    %5055 = vmatpush1.msra.mxu0 %v517
    %5056 = vmatprep.subr.mxu0 %v522
    %5057 = vmatpush1.msra.mxu0 %v521
    %5058 = vmatprep.subr.mxu0 %v526
    %5059 = vmatpush1.msra.mxu0 %v525
    %5060 = vmatprep.subr.mxu0 %v530
    %5061 = vmatpush1.msra.mxu0 %v529
    %5062 = vmatprep.subr.mxu0 %v534
    %5063 = vmatpush1.msra.mxu0 %v533
    %5064 = vmatprep.subr.mxu0 %v538
    %5065 = vmatpush1.msra.mxu0 %v537
    %5066 = vmatprep.subr.mxu0 %v542
    %5067 = vmatpush1.msra.mxu0 %v541
    %5068 = vmatprep.subr.mxu0 %v546
    %5069 = vmatpush1.msra.mxu0 %v545
    %5070 = vmatprep.subr.mxu0 %v550
    %5071 = vmatpush1.msra.mxu0 %v549
    %5072 = vmatprep.subr.mxu0 %v554
    %5073 = vmatpush1.msra.mxu0 %v553
    %5074 = vmatprep.mubr.f32.mxu0 %v4659
    %5075 = vmatmul.mubr.f32.gmra.mrb[0].mxu0 %v4657
    %v5076 = vpop.f32.mrb[0].mxu0
    %v5077 = vadd.f32 %v4988, %v5076
    %v5078 = vpop.f32.mrb[0].mxu0
    %v5079 = vadd.f32 %v4990, %v5078
    %5080 = vmatprep.mubr.f32.mxu0 %v4665
    %5081 = vmatmul.mubr.f32.gmra.mrb[0].mxu0 %v4663
    %v5082 = vpop.f32.mrb[0].mxu0
    %v5083 = vadd.f32 %v4994, %v5082
    %v5084 = vpop.f32.mrb[0].mxu0
    %v5085 = vadd.f32 %v4996, %v5084
    %5086 = vmatprep.mubr.f32.mxu0 %v4671
    %5087 = vmatmul.mubr.f32.gmra.mrb[0].mxu0 %v4669
    %v5088 = vpop.f32.mrb[0].mxu0
    %v5089 = vadd.f32 %v5000, %v5088
    %v5090 = vpop.f32.mrb[0].mxu0
    %v5091 = vadd.f32 %v5002, %v5090
    %5092 = vmatprep.mubr.f32.mxu0 %v4677
    %5093 = vmatmul.mubr.f32.gmra.mrb[0].mxu0 %v4675
    %v5094 = vpop.f32.mrb[0].mxu0
    %v5095 = vadd.f32 %v5006, %v5094
    %v5096 = vpop.f32.mrb[0].mxu0
    %v5097 = vadd.f32 %v5008, %v5096
    %5098 = vdwg.mxu0
    %v5099 = vadd.f32 %v4727, %v4899
    %v5100 = vadd.f32 %v4728, %v4901
    %v5101 = vadd.f32 %v4729, %v5077
    %v5102 = vadd.f32 %v4730, %v5079
    %v5103 = vadd.f32 %v4731, %v4905
    %v5104 = vadd.f32 %v4732, %v4907
    %v5105 = vadd.f32 %v4733, %v5083
    %v5106 = vadd.f32 %v4734, %v5085
    %v5107 = vadd.f32 %v4735, %v4911
    %v5108 = vadd.f32 %v4736, %v4913
    %v5109 = vadd.f32 %v4737, %v5089
    %v5110 = vadd.f32 %v4738, %v5091
    %v5111 = vadd.f32 %v4739, %v4917
    %v5112 = vadd.f32 %v4740, %v4919
    %v5113 = vadd.f32 %v4741, %v5095
    %v5114 = vadd.f32 %v4742, %v5097
    %5115 = vmatprep.subr.mxu0 %v1151
    %5116 = vmatpush1.msra.mxu0 %v1150
    %5117 = vmatprep.subr.mxu0 %v1155
    %5118 = vmatpush1.msra.mxu0 %v1154
    %5119 = vmatprep.subr.mxu0 %v1159
    %5120 = vmatpush1.msra.mxu0 %v1158
    %5121 = vmatprep.subr.mxu0 %v1163
    %5122 = vmatpush1.msra.mxu0 %v1162
    %5123 = vmatprep.subr.mxu0 %v1167
    %5124 = vmatpush1.msra.mxu0 %v1166
    %5125 = vmatprep.subr.mxu0 %v1171
    %5126 = vmatpush1.msra.mxu0 %v1170
    %5127 = vmatprep.subr.mxu0 %v1175
    %5128 = vmatpush1.msra.mxu0 %v1174
    %5129 = vmatprep.subr.mxu0 %v1179
    %5130 = vmatpush1.msra.mxu0 %v1178
    %5131 = vmatprep.subr.mxu0 %v1183
    %5132 = vmatpush1.msra.mxu0 %v1182
    %5133 = vmatprep.subr.mxu0 %v1187
    %5134 = vmatpush1.msra.mxu0 %v1186
    %5135 = vmatprep.subr.mxu0 %v1191
    %5136 = vmatpush1.msra.mxu0 %v1190
    %5137 = vmatprep.subr.mxu0 %v1195
    %5138 = vmatpush1.msra.mxu0 %v1194
    %5139 = vmatprep.subr.mxu0 %v1199
    %5140 = vmatpush1.msra.mxu0 %v1198
    %5141 = vmatprep.subr.mxu0 %v1203
    %5142 = vmatpush1.msra.mxu0 %v1202
    %5143 = vmatprep.subr.mxu0 %v1207
    %5144 = vmatpush1.msra.mxu0 %v1206
    %5145 = vmatprep.subr.mxu0 %v1211
    %5146 = vmatpush1.msra.mxu0 %v1210
    %5147 = vmatprep.subr.mxu0 %v1215
    %5148 = vmatpush1.msra.mxu0 %v1214
    %5149 = vmatprep.subr.mxu0 %v1219
    %5150 = vmatpush1.msra.mxu0 %v1218
    %5151 = vmatprep.subr.mxu0 %v1223
    %5152 = vmatpush1.msra.mxu0 %v1222
    %5153 = vmatprep.subr.mxu0 %v1227
    %5154 = vmatpush1.msra.mxu0 %v1226
    %5155 = vmatprep.subr.mxu0 %v1231
    %5156 = vmatpush1.msra.mxu0 %v1230
    %5157 = vmatprep.subr.mxu0 %v1235
    %5158 = vmatpush1.msra.mxu0 %v1234
    %5159 = vmatprep.subr.mxu0 %v1239
    %5160 = vmatpush1.msra.mxu0 %v1238
    %5161 = vmatprep.subr.mxu0 %v1243
    %5162 = vmatpush1.msra.mxu0 %v1242
    %5163 = vmatprep.subr.mxu0 %v1247
    %5164 = vmatpush1.msra.mxu0 %v1246
    %5165 = vmatprep.subr.mxu0 %v1251
    %5166 = vmatpush1.msra.mxu0 %v1250
    %5167 = vmatprep.subr.mxu0 %v1255
    %5168 = vmatpush1.msra.mxu0 %v1254
    %5169 = vmatprep.subr.mxu0 %v1259
    %5170 = vmatpush1.msra.mxu0 %v1258
    %5171 = vmatprep.subr.mxu0 %v1263
    %5172 = vmatpush1.msra.mxu0 %v1262
    %5173 = vmatprep.subr.mxu0 %v1267
    %5174 = vmatpush1.msra.mxu0 %v1266
    %5175 = vmatprep.subr.mxu0 %v1271
    %5176 = vmatpush1.msra.mxu0 %v1270
    %5177 = vmatprep.subr.mxu0 %v1275
    %5178 = vmatpush1.msra.mxu0 %v1274
    %5179 = vmatprep.mubr.f32.mxu0 %v4546
    %5180 = vmatmul.mubr.f32.gmra.mrb[0].mxu0 %v4544
    %v5181 = vpop.f32.mrb[0].mxu0
    %v5182 = vadd.f32 0.0, %v5181
    %v5183 = vpop.f32.mrb[0].mxu0
    %v5184 = vadd.f32 0.0, %v5183
    %5185 = vmatprep.mubr.f32.mxu0 %v4552
    %5186 = vmatmul.mubr.f32.gmra.mrb[0].mxu0 %v4550
    %v5187 = vpop.f32.mrb[0].mxu0
    %v5188 = vadd.f32 0.0, %v5187
    %v5189 = vpop.f32.mrb[0].mxu0
    %v5190 = vadd.f32 0.0, %v5189
    %5191 = vmatprep.mubr.f32.mxu0 %v4558
    %5192 = vmatmul.mubr.f32.gmra.mrb[0].mxu0 %v4556
    %v5193 = vpop.f32.mrb[0].mxu0
    %v5194 = vadd.f32 0.0, %v5193
    %v5195 = vpop.f32.mrb[0].mxu0
    %v5196 = vadd.f32 0.0, %v5195
    %5197 = vmatprep.mubr.f32.mxu0 %v4564
    %5198 = vmatmul.mubr.f32.gmra.mrb[0].mxu0 %v4562
    %v5199 = vpop.f32.mrb[0].mxu0
    %v5200 = vadd.f32 0.0, %v5199
    %v5201 = vpop.f32.mrb[0].mxu0
    %v5202 = vadd.f32 0.0, %v5201
    %5203 = vdwg.mxu0
    %5204 = vmatprep.subr.mxu0 %v1279
    %5205 = vmatpush1.msra.mxu0 %v1278
    %5206 = vmatprep.subr.mxu0 %v1283
    %5207 = vmatpush1.msra.mxu0 %v1282
    %5208 = vmatprep.subr.mxu0 %v1287
    %5209 = vmatpush1.msra.mxu0 %v1286
    %5210 = vmatprep.subr.mxu0 %v1291
    %5211 = vmatpush1.msra.mxu0 %v1290
    %5212 = vmatprep.subr.mxu0 %v1295
    %5213 = vmatpush1.msra.mxu0 %v1294
    %5214 = vmatprep.subr.mxu0 %v1299
    %5215 = vmatpush1.msra.mxu0 %v1298
    %5216 = vmatprep.subr.mxu0 %v1303
    %5217 = vmatpush1.msra.mxu0 %v1302
    %5218 = vmatprep.subr.mxu0 %v1307
    %5219 = vmatpush1.msra.mxu0 %v1306
    %5220 = vmatprep.subr.mxu0 %v1311
    %5221 = vmatpush1.msra.mxu0 %v1310
    %5222 = vmatprep.subr.mxu0 %v1315
    %5223 = vmatpush1.msra.mxu0 %v1314
    %5224 = vmatprep.subr.mxu0 %v1319
    %5225 = vmatpush1.msra.mxu0 %v1318
    %5226 = vmatprep.subr.mxu0 %v1323
    %5227 = vmatpush1.msra.mxu0 %v1322
    %5228 = vmatprep.subr.mxu0 %v1327
    %5229 = vmatpush1.msra.mxu0 %v1326
    %5230 = vmatprep.subr.mxu0 %v1331
    %5231 = vmatpush1.msra.mxu0 %v1330
    %5232 = vmatprep.subr.mxu0 %v1335
    %5233 = vmatpush1.msra.mxu0 %v1334
    %5234 = vmatprep.subr.mxu0 %v1339
    %5235 = vmatpush1.msra.mxu0 %v1338
    %5236 = vmatprep.subr.mxu0 %v1343
    %5237 = vmatpush1.msra.mxu0 %v1342
    %5238 = vmatprep.subr.mxu0 %v1347
    %5239 = vmatpush1.msra.mxu0 %v1346
    %5240 = vmatprep.subr.mxu0 %v1351
    %5241 = vmatpush1.msra.mxu0 %v1350
    %5242 = vmatprep.subr.mxu0 %v1355
    %5243 = vmatpush1.msra.mxu0 %v1354
    %5244 = vmatprep.subr.mxu0 %v1359
    %5245 = vmatpush1.msra.mxu0 %v1358
    %5246 = vmatprep.subr.mxu0 %v1363
    %5247 = vmatpush1.msra.mxu0 %v1362
    %5248 = vmatprep.subr.mxu0 %v1367
    %5249 = vmatpush1.msra.mxu0 %v1366
    %5250 = vmatprep.subr.mxu0 %v1371
    %5251 = vmatpush1.msra.mxu0 %v1370
    %5252 = vmatprep.subr.mxu0 %v1375
    %5253 = vmatpush1.msra.mxu0 %v1374
    %5254 = vmatprep.subr.mxu0 %v1379
    %5255 = vmatpush1.msra.mxu0 %v1378
    %5256 = vmatprep.subr.mxu0 %v1383
    %5257 = vmatpush1.msra.mxu0 %v1382
    %5258 = vmatprep.subr.mxu0 %v1387
    %5259 = vmatpush1.msra.mxu0 %v1386
    %5260 = vmatprep.subr.mxu0 %v1391
    %5261 = vmatpush1.msra.mxu0 %v1390
    %5262 = vmatprep.subr.mxu0 %v1395
    %5263 = vmatpush1.msra.mxu0 %v1394
    %5264 = vmatprep.subr.mxu0 %v1399
    %5265 = vmatpush1.msra.mxu0 %v1398
    %5266 = vmatprep.subr.mxu0 %v1403
    %5267 = vmatpush1.msra.mxu0 %v1402
    %5268 = vmatprep.mubr.f32.mxu0 %v4683
    %5269 = vmatmul.mubr.f32.gmra.mrb[0].mxu0 %v4681
    %v5270 = vpop.f32.mrb[0].mxu0
    %v5271 = vadd.f32 %v5182, %v5270
    %v5272 = vpop.f32.mrb[0].mxu0
    %v5273 = vadd.f32 %v5184, %v5272
    %5274 = vmatprep.mubr.f32.mxu0 %v4689
    %5275 = vmatmul.mubr.f32.gmra.mrb[0].mxu0 %v4687
    %v5276 = vpop.f32.mrb[0].mxu0
    %v5277 = vadd.f32 %v5188, %v5276
    %v5278 = vpop.f32.mrb[0].mxu0
    %v5279 = vadd.f32 %v5190, %v5278
    %5280 = vmatprep.mubr.f32.mxu0 %v4695
    %5281 = vmatmul.mubr.f32.gmra.mrb[0].mxu0 %v4693
    %v5282 = vpop.f32.mrb[0].mxu0
    %v5283 = vadd.f32 %v5194, %v5282
    %v5284 = vpop.f32.mrb[0].mxu0
    %v5285 = vadd.f32 %v5196, %v5284
    %5286 = vmatprep.mubr.f32.mxu0 %v4701
    %5287 = vmatmul.mubr.f32.gmra.mrb[0].mxu0 %v4699
    %v5288 = vpop.f32.mrb[0].mxu0
    %v5289 = vadd.f32 %v5200, %v5288
    %v5290 = vpop.f32.mrb[0].mxu0
    %v5291 = vadd.f32 %v5202, %v5290
    %5292 = vdwg.mxu0
    %5293 = vmatprep.subr.mxu0 %v1153
    %5294 = vmatpush1.msra.mxu0 %v1152
    %5295 = vmatprep.subr.mxu0 %v1157
    %5296 = vmatpush1.msra.mxu0 %v1156
    %5297 = vmatprep.subr.mxu0 %v1161
    %5298 = vmatpush1.msra.mxu0 %v1160
    %5299 = vmatprep.subr.mxu0 %v1165
    %5300 = vmatpush1.msra.mxu0 %v1164
    %5301 = vmatprep.subr.mxu0 %v1169
    %5302 = vmatpush1.msra.mxu0 %v1168
    %5303 = vmatprep.subr.mxu0 %v1173
    %5304 = vmatpush1.msra.mxu0 %v1172
    %5305 = vmatprep.subr.mxu0 %v1177
    %5306 = vmatpush1.msra.mxu0 %v1176
    %5307 = vmatprep.subr.mxu0 %v1181
    %5308 = vmatpush1.msra.mxu0 %v1180
    %5309 = vmatprep.subr.mxu0 %v1185
    %5310 = vmatpush1.msra.mxu0 %v1184
    %5311 = vmatprep.subr.mxu0 %v1189
    %5312 = vmatpush1.msra.mxu0 %v1188
    %5313 = vmatprep.subr.mxu0 %v1193
    %5314 = vmatpush1.msra.mxu0 %v1192
    %5315 = vmatprep.subr.mxu0 %v1197
    %5316 = vmatpush1.msra.mxu0 %v1196
    %5317 = vmatprep.subr.mxu0 %v1201
    %5318 = vmatpush1.msra.mxu0 %v1200
    %5319 = vmatprep.subr.mxu0 %v1205
    %5320 = vmatpush1.msra.mxu0 %v1204
    %5321 = vmatprep.subr.mxu0 %v1209
    %5322 = vmatpush1.msra.mxu0 %v1208
    %5323 = vmatprep.subr.mxu0 %v1213
    %5324 = vmatpush1.msra.mxu0 %v1212
    %5325 = vmatprep.subr.mxu0 %v1217
    %5326 = vmatpush1.msra.mxu0 %v1216
    %5327 = vmatprep.subr.mxu0 %v1221
    %5328 = vmatpush1.msra.mxu0 %v1220
    %5329 = vmatprep.subr.mxu0 %v1225
    %5330 = vmatpush1.msra.mxu0 %v1224
    %5331 = vmatprep.subr.mxu0 %v1229
    %5332 = vmatpush1.msra.mxu0 %v1228
    %5333 = vmatprep.subr.mxu0 %v1233
    %5334 = vmatpush1.msra.mxu0 %v1232
    %5335 = vmatprep.subr.mxu0 %v1237
    %5336 = vmatpush1.msra.mxu0 %v1236
    %5337 = vmatprep.subr.mxu0 %v1241
    %5338 = vmatpush1.msra.mxu0 %v1240
    %5339 = vmatprep.subr.mxu0 %v1245
    %5340 = vmatpush1.msra.mxu0 %v1244
    %5341 = vmatprep.subr.mxu0 %v1249
    %5342 = vmatpush1.msra.mxu0 %v1248
    %5343 = vmatprep.subr.mxu0 %v1253
    %5344 = vmatpush1.msra.mxu0 %v1252
    %5345 = vmatprep.subr.mxu0 %v1257
    %5346 = vmatpush1.msra.mxu0 %v1256
    %5347 = vmatprep.subr.mxu0 %v1261
    %5348 = vmatpush1.msra.mxu0 %v1260
    %5349 = vmatprep.subr.mxu0 %v1265
    %5350 = vmatpush1.msra.mxu0 %v1264
    %5351 = vmatprep.subr.mxu0 %v1269
    %5352 = vmatpush1.msra.mxu0 %v1268
    %5353 = vmatprep.subr.mxu0 %v1273
    %5354 = vmatpush1.msra.mxu0 %v1272
    %5355 = vmatprep.subr.mxu0 %v1277
    %5356 = vmatpush1.msra.mxu0 %v1276
    %5357 = vmatprep.mubr.f32.mxu0 %v4546
    %5358 = vmatmul.mubr.f32.gmra.mrb[0].mxu0 %v4544
    %v5359 = vpop.f32.mrb[0].mxu0
    %v5360 = vadd.f32 0.0, %v5359
    %v5361 = vpop.f32.mrb[0].mxu0
    %v5362 = vadd.f32 0.0, %v5361
    %5363 = vmatprep.mubr.f32.mxu0 %v4552
    %5364 = vmatmul.mubr.f32.gmra.mrb[0].mxu0 %v4550
    %v5365 = vpop.f32.mrb[0].mxu0
    %v5366 = vadd.f32 0.0, %v5365
    %v5367 = vpop.f32.mrb[0].mxu0
    %v5368 = vadd.f32 0.0, %v5367
    %5369 = vmatprep.mubr.f32.mxu0 %v4558
    %5370 = vmatmul.mubr.f32.gmra.mrb[0].mxu0 %v4556
    %v5371 = vpop.f32.mrb[0].mxu0
    %v5372 = vadd.f32 0.0, %v5371
    %v5373 = vpop.f32.mrb[0].mxu0
    %v5374 = vadd.f32 0.0, %v5373
    %5375 = vmatprep.mubr.f32.mxu0 %v4564
    %5376 = vmatmul.mubr.f32.gmra.mrb[0].mxu0 %v4562
    %v5377 = vpop.f32.mrb[0].mxu0
    %v5378 = vadd.f32 0.0, %v5377
    %v5379 = vpop.f32.mrb[0].mxu0
    %v5380 = vadd.f32 0.0, %v5379
    %5381 = vdwg.mxu0
    %5382 = vmatprep.subr.mxu0 %v1281
    %5383 = vmatpush1.msra.mxu0 %v1280
    %5384 = vmatprep.subr.mxu0 %v1285
    %5385 = vmatpush1.msra.mxu0 %v1284
    %5386 = vmatprep.subr.mxu0 %v1289
    %5387 = vmatpush1.msra.mxu0 %v1288
    %5388 = vmatprep.subr.mxu0 %v1293
    %5389 = vmatpush1.msra.mxu0 %v1292
    %5390 = vmatprep.subr.mxu0 %v1297
    %5391 = vmatpush1.msra.mxu0 %v1296
    %5392 = vmatprep.subr.mxu0 %v1301
    %5393 = vmatpush1.msra.mxu0 %v1300
    %5394 = vmatprep.subr.mxu0 %v1305
    %5395 = vmatpush1.msra.mxu0 %v1304
    %5396 = vmatprep.subr.mxu0 %v1309
    %5397 = vmatpush1.msra.mxu0 %v1308
    %5398 = vmatprep.subr.mxu0 %v1313
    %5399 = vmatpush1.msra.mxu0 %v1312
    %5400 = vmatprep.subr.mxu0 %v1317
    %5401 = vmatpush1.msra.mxu0 %v1316
    %5402 = vmatprep.subr.mxu0 %v1321
    %5403 = vmatpush1.msra.mxu0 %v1320
    %5404 = vmatprep.subr.mxu0 %v1325
    %5405 = vmatpush1.msra.mxu0 %v1324
    %5406 = vmatprep.subr.mxu0 %v1329
    %5407 = vmatpush1.msra.mxu0 %v1328
    %5408 = vmatprep.subr.mxu0 %v1333
    %5409 = vmatpush1.msra.mxu0 %v1332
    %5410 = vmatprep.subr.mxu0 %v1337
    %5411 = vmatpush1.msra.mxu0 %v1336
    %5412 = vmatprep.subr.mxu0 %v1341
    %5413 = vmatpush1.msra.mxu0 %v1340
    %5414 = vmatprep.subr.mxu0 %v1345
    %5415 = vmatpush1.msra.mxu0 %v1344
    %5416 = vmatprep.subr.mxu0 %v1349
    %5417 = vmatpush1.msra.mxu0 %v1348
    %5418 = vmatprep.subr.mxu0 %v1353
    %5419 = vmatpush1.msra.mxu0 %v1352
    %5420 = vmatprep.subr.mxu0 %v1357
    %5421 = vmatpush1.msra.mxu0 %v1356
    %5422 = vmatprep.subr.mxu0 %v1361
    %5423 = vmatpush1.msra.mxu0 %v1360
    %5424 = vmatprep.subr.mxu0 %v1365
    %5425 = vmatpush1.msra.mxu0 %v1364
    %5426 = vmatprep.subr.mxu0 %v1369
    %5427 = vmatpush1.msra.mxu0 %v1368
    %5428 = vmatprep.subr.mxu0 %v1373
    %5429 = vmatpush1.msra.mxu0 %v1372
    %5430 = vmatprep.subr.mxu0 %v1377
    %5431 = vmatpush1.msra.mxu0 %v1376
    %5432 = vmatprep.subr.mxu0 %v1381
    %5433 = vmatpush1.msra.mxu0 %v1380
    %5434 = vmatprep.subr.mxu0 %v1385
    %5435 = vmatpush1.msra.mxu0 %v1384
    %5436 = vmatprep.subr.mxu0 %v1389
    %5437 = vmatpush1.msra.mxu0 %v1388
    %5438 = vmatprep.subr.mxu0 %v1393
    %5439 = vmatpush1.msra.mxu0 %v1392
    %5440 = vmatprep.subr.mxu0 %v1397
    %5441 = vmatpush1.msra.mxu0 %v1396
    %5442 = vmatprep.subr.mxu0 %v1401
    %5443 = vmatpush1.msra.mxu0 %v1400
    %5444 = vmatprep.subr.mxu0 %v1405
    %5445 = vmatpush1.msra.mxu0 %v1404
    %5446 = vmatprep.mubr.f32.mxu0 %v4683
    %5447 = vmatmul.mubr.f32.gmra.mrb[0].mxu0 %v4681
    %v5448 = vpop.f32.mrb[0].mxu0
    %v5449 = vadd.f32 %v5360, %v5448
    %v5450 = vpop.f32.mrb[0].mxu0
    %v5451 = vadd.f32 %v5362, %v5450
    %5452 = vmatprep.mubr.f32.mxu0 %v4689
    %5453 = vmatmul.mubr.f32.gmra.mrb[0].mxu0 %v4687
    %v5454 = vpop.f32.mrb[0].mxu0
    %v5455 = vadd.f32 %v5366, %v5454
    %v5456 = vpop.f32.mrb[0].mxu0
    %v5457 = vadd.f32 %v5368, %v5456
    %5458 = vmatprep.mubr.f32.mxu0 %v4695
    %5459 = vmatmul.mubr.f32.gmra.mrb[0].mxu0 %v4693
    %v5460 = vpop.f32.mrb[0].mxu0
    %v5461 = vadd.f32 %v5372, %v5460
    %v5462 = vpop.f32.mrb[0].mxu0
    %v5463 = vadd.f32 %v5374, %v5462
    %5464 = vmatprep.mubr.f32.mxu0 %v4701
    %5465 = vmatmul.mubr.f32.gmra.mrb[0].mxu0 %v4699
    %v5466 = vpop.f32.mrb[0].mxu0
    %v5467 = vadd.f32 %v5378, %v5466
    %v5468 = vpop.f32.mrb[0].mxu0
    %v5469 = vadd.f32 %v5380, %v5468
    %5470 = vdwg.mxu0
    %v5471 = vadd.f32 %v5099, %v5271
    %v5472 = vadd.f32 %v5100, %v5273
    %v5473 = vadd.f32 %v5101, %v5449
    %v5474 = vadd.f32 %v5102, %v5451
    %v5475 = vadd.f32 %v5103, %v5277
    %v5476 = vadd.f32 %v5104, %v5279
    %v5477 = vadd.f32 %v5105, %v5455
    %v5478 = vadd.f32 %v5106, %v5457
    %v5479 = vadd.f32 %v5107, %v5283
    %v5480 = vadd.f32 %v5108, %v5285
    %v5481 = vadd.f32 %v5109, %v5461
    %v5482 = vadd.f32 %v5110, %v5463
    %v5483 = vadd.f32 %v5111, %v5289
    %v5484 = vadd.f32 %v5112, %v5291
    %v5485 = vadd.f32 %v5113, %v5467
    %v5486 = vadd.f32 %v5114, %v5469
    %5487 = vmatprep.subr.mxu0 %v1995
    %5488 = vmatpush1.msra.mxu0 %v1994
    %5489 = vmatprep.subr.mxu0 %v1999
    %5490 = vmatpush1.msra.mxu0 %v1998
    %5491 = vmatprep.subr.mxu0 %v2003
    %5492 = vmatpush1.msra.mxu0 %v2002
    %5493 = vmatprep.subr.mxu0 %v2007
    %5494 = vmatpush1.msra.mxu0 %v2006
    %5495 = vmatprep.subr.mxu0 %v2011
    %5496 = vmatpush1.msra.mxu0 %v2010
    %5497 = vmatprep.subr.mxu0 %v2015
    %5498 = vmatpush1.msra.mxu0 %v2014
    %5499 = vmatprep.subr.mxu0 %v2019
    %5500 = vmatpush1.msra.mxu0 %v2018
    %5501 = vmatprep.subr.mxu0 %v2023
    %5502 = vmatpush1.msra.mxu0 %v2022
    %5503 = vmatprep.subr.mxu0 %v2027
    %5504 = vmatpush1.msra.mxu0 %v2026
    %5505 = vmatprep.subr.mxu0 %v2031
    %5506 = vmatpush1.msra.mxu0 %v2030
    %5507 = vmatprep.subr.mxu0 %v2035
    %5508 = vmatpush1.msra.mxu0 %v2034
    %5509 = vmatprep.subr.mxu0 %v2039
    %5510 = vmatpush1.msra.mxu0 %v2038
    %5511 = vmatprep.subr.mxu0 %v2043
    %5512 = vmatpush1.msra.mxu0 %v2042
    %5513 = vmatprep.subr.mxu0 %v2047
    %5514 = vmatpush1.msra.mxu0 %v2046
    %5515 = vmatprep.subr.mxu0 %v2051
    %5516 = vmatpush1.msra.mxu0 %v2050
    %5517 = vmatprep.subr.mxu0 %v2055
    %5518 = vmatpush1.msra.mxu0 %v2054
    %5519 = vmatprep.subr.mxu0 %v2059
    %5520 = vmatpush1.msra.mxu0 %v2058
    %5521 = vmatprep.subr.mxu0 %v2063
    %5522 = vmatpush1.msra.mxu0 %v2062
    %5523 = vmatprep.subr.mxu0 %v2067
    %5524 = vmatpush1.msra.mxu0 %v2066
    %5525 = vmatprep.subr.mxu0 %v2071
    %5526 = vmatpush1.msra.mxu0 %v2070
    %5527 = vmatprep.subr.mxu0 %v2075
    %5528 = vmatpush1.msra.mxu0 %v2074
    %5529 = vmatprep.subr.mxu0 %v2079
    %5530 = vmatpush1.msra.mxu0 %v2078
    %5531 = vmatprep.subr.mxu0 %v2083
    %5532 = vmatpush1.msra.mxu0 %v2082
    %5533 = vmatprep.subr.mxu0 %v2087
    %5534 = vmatpush1.msra.mxu0 %v2086
    %5535 = vmatprep.subr.mxu0 %v2091
    %5536 = vmatpush1.msra.mxu0 %v2090
    %5537 = vmatprep.subr.mxu0 %v2095
    %5538 = vmatpush1.msra.mxu0 %v2094
    %5539 = vmatprep.subr.mxu0 %v2099
    %5540 = vmatpush1.msra.mxu0 %v2098
    %5541 = vmatprep.subr.mxu0 %v2103
    %5542 = vmatpush1.msra.mxu0 %v2102
    %5543 = vmatprep.subr.mxu0 %v2107
    %5544 = vmatpush1.msra.mxu0 %v2106
    %5545 = vmatprep.subr.mxu0 %v2111
    %5546 = vmatpush1.msra.mxu0 %v2110
    %5547 = vmatprep.subr.mxu0 %v2115
    %5548 = vmatpush1.msra.mxu0 %v2114
    %5549 = vmatprep.subr.mxu0 %v2119
    %5550 = vmatpush1.msra.mxu0 %v2118
    %5551 = vmatprep.mubr.f32.mxu0 %v4570
    %5552 = vmatmul.mubr.f32.gmra.mrb[0].mxu0 %v4568
    %v5553 = vpop.f32.mrb[0].mxu0
    %v5554 = vadd.f32 0.0, %v5553
    %v5555 = vpop.f32.mrb[0].mxu0
    %v5556 = vadd.f32 0.0, %v5555
    %5557 = vmatprep.mubr.f32.mxu0 %v4576
    %5558 = vmatmul.mubr.f32.gmra.mrb[0].mxu0 %v4574
    %v5559 = vpop.f32.mrb[0].mxu0
    %v5560 = vadd.f32 0.0, %v5559
    %v5561 = vpop.f32.mrb[0].mxu0
    %v5562 = vadd.f32 0.0, %v5561
    %5563 = vmatprep.mubr.f32.mxu0 %v4582
    %5564 = vmatmul.mubr.f32.gmra.mrb[0].mxu0 %v4580
    %v5565 = vpop.f32.mrb[0].mxu0
    %v5566 = vadd.f32 0.0, %v5565
    %v5567 = vpop.f32.mrb[0].mxu0
    %v5568 = vadd.f32 0.0, %v5567
    %5569 = vmatprep.mubr.f32.mxu0 %v4588
    %5570 = vmatmul.mubr.f32.gmra.mrb[0].mxu0 %v4586
    %v5571 = vpop.f32.mrb[0].mxu0
    %v5572 = vadd.f32 0.0, %v5571
    %v5573 = vpop.f32.mrb[0].mxu0
    %v5574 = vadd.f32 0.0, %v5573
    %5575 = vdwg.mxu0
    %5576 = vmatprep.subr.mxu0 %v2123
    %5577 = vmatpush1.msra.mxu0 %v2122
    %5578 = vmatprep.subr.mxu0 %v2127
    %5579 = vmatpush1.msra.mxu0 %v2126
    %5580 = vmatprep.subr.mxu0 %v2131
    %5581 = vmatpush1.msra.mxu0 %v2130
    %5582 = vmatprep.subr.mxu0 %v2135
    %5583 = vmatpush1.msra.mxu0 %v2134
    %5584 = vmatprep.subr.mxu0 %v2139
    %5585 = vmatpush1.msra.mxu0 %v2138
    %5586 = vmatprep.subr.mxu0 %v2143
    %5587 = vmatpush1.msra.mxu0 %v2142
    %5588 = vmatprep.subr.mxu0 %v2147
    %5589 = vmatpush1.msra.mxu0 %v2146
    %5590 = vmatprep.subr.mxu0 %v2151
    %5591 = vmatpush1.msra.mxu0 %v2150
    %5592 = vmatprep.subr.mxu0 %v2155
    %5593 = vmatpush1.msra.mxu0 %v2154
    %5594 = vmatprep.subr.mxu0 %v2159
    %5595 = vmatpush1.msra.mxu0 %v2158
    %5596 = vmatprep.subr.mxu0 %v2163
    %5597 = vmatpush1.msra.mxu0 %v2162
    %5598 = vmatprep.subr.mxu0 %v2167
    %5599 = vmatpush1.msra.mxu0 %v2166
    %5600 = vmatprep.subr.mxu0 %v2171
    %5601 = vmatpush1.msra.mxu0 %v2170
    %5602 = vmatprep.subr.mxu0 %v2175
    %5603 = vmatpush1.msra.mxu0 %v2174
    %5604 = vmatprep.subr.mxu0 %v2179
    %5605 = vmatpush1.msra.mxu0 %v2178
    %5606 = vmatprep.subr.mxu0 %v2183
    %5607 = vmatpush1.msra.mxu0 %v2182
    %5608 = vmatprep.subr.mxu0 %v2187
    %5609 = vmatpush1.msra.mxu0 %v2186
    %5610 = vmatprep.subr.mxu0 %v2191
    %5611 = vmatpush1.msra.mxu0 %v2190
    %5612 = vmatprep.subr.mxu0 %v2195
    %5613 = vmatpush1.msra.mxu0 %v2194
    %5614 = vmatprep.subr.mxu0 %v2199
    %5615 = vmatpush1.msra.mxu0 %v2198
    %5616 = vmatprep.subr.mxu0 %v2203
    %5617 = vmatpush1.msra.mxu0 %v2202
    %5618 = vmatprep.subr.mxu0 %v2207
    %5619 = vmatpush1.msra.mxu0 %v2206
    %5620 = vmatprep.subr.mxu0 %v2211
    %5621 = vmatpush1.msra.mxu0 %v2210
    %5622 = vmatprep.subr.mxu0 %v2215
    %5623 = vmatpush1.msra.mxu0 %v2214
    %5624 = vmatprep.subr.mxu0 %v2219
    %5625 = vmatpush1.msra.mxu0 %v2218
    %5626 = vmatprep.subr.mxu0 %v2223
    %5627 = vmatpush1.msra.mxu0 %v2222
    %5628 = vmatprep.subr.mxu0 %v2227
    %5629 = vmatpush1.msra.mxu0 %v2226
    %5630 = vmatprep.subr.mxu0 %v2231
    %5631 = vmatpush1.msra.mxu0 %v2230
    %5632 = vmatprep.subr.mxu0 %v2235
    %5633 = vmatpush1.msra.mxu0 %v2234
    %5634 = vmatprep.subr.mxu0 %v2239
    %5635 = vmatpush1.msra.mxu0 %v2238
    %5636 = vmatprep.subr.mxu0 %v2243
    %5637 = vmatpush1.msra.mxu0 %v2242
    %5638 = vmatprep.subr.mxu0 %v2247
    %5639 = vmatpush1.msra.mxu0 %v2246
    %5640 = vmatprep.mubr.f32.mxu0 %v4707
    %5641 = vmatmul.mubr.f32.gmra.mrb[0].mxu0 %v4705
    %v5642 = vpop.f32.mrb[0].mxu0
    %v5643 = vadd.f32 %v5554, %v5642
    %v5644 = vpop.f32.mrb[0].mxu0
    %v5645 = vadd.f32 %v5556, %v5644
    %5646 = vmatprep.mubr.f32.mxu0 %v4713
    %5647 = vmatmul.mubr.f32.gmra.mrb[0].mxu0 %v4711
    %v5648 = vpop.f32.mrb[0].mxu0
    %v5649 = vadd.f32 %v5560, %v5648
    %v5650 = vpop.f32.mrb[0].mxu0
    %v5651 = vadd.f32 %v5562, %v5650
    %5652 = vmatprep.mubr.f32.mxu0 %v4719
    %5653 = vmatmul.mubr.f32.gmra.mrb[0].mxu0 %v4717
    %v5654 = vpop.f32.mrb[0].mxu0
    %v5655 = vadd.f32 %v5566, %v5654
    %v5656 = vpop.f32.mrb[0].mxu0
    %v5657 = vadd.f32 %v5568, %v5656
    %5658 = vmatprep.mubr.f32.mxu0 %v4725
    %5659 = vmatmul.mubr.f32.gmra.mrb[0].mxu0 %v4723
    %v5660 = vpop.f32.mrb[0].mxu0
    %v5661 = vadd.f32 %v5572, %v5660
    %v5662 = vpop.f32.mrb[0].mxu0
    %v5663 = vadd.f32 %v5574, %v5662
    %5664 = vdwg.mxu0
    %5665 = vmatprep.subr.mxu0 %v1997
    %5666 = vmatpush1.msra.mxu0 %v1996
    %5667 = vmatprep.subr.mxu0 %v2001
    %5668 = vmatpush1.msra.mxu0 %v2000
    %5669 = vmatprep.subr.mxu0 %v2005
    %5670 = vmatpush1.msra.mxu0 %v2004
    %5671 = vmatprep.subr.mxu0 %v2009
    %5672 = vmatpush1.msra.mxu0 %v2008
    %5673 = vmatprep.subr.mxu0 %v2013
    %5674 = vmatpush1.msra.mxu0 %v2012
    %5675 = vmatprep.subr.mxu0 %v2017
    %5676 = vmatpush1.msra.mxu0 %v2016
    %5677 = vmatprep.subr.mxu0 %v2021
    %5678 = vmatpush1.msra.mxu0 %v2020
    %5679 = vmatprep.subr.mxu0 %v2025
    %5680 = vmatpush1.msra.mxu0 %v2024
    %5681 = vmatprep.subr.mxu0 %v2029
    %5682 = vmatpush1.msra.mxu0 %v2028
    %5683 = vmatprep.subr.mxu0 %v2033
    %5684 = vmatpush1.msra.mxu0 %v2032
    %5685 = vmatprep.subr.mxu0 %v2037
    %5686 = vmatpush1.msra.mxu0 %v2036
    %5687 = vmatprep.subr.mxu0 %v2041
    %5688 = vmatpush1.msra.mxu0 %v2040
    %5689 = vmatprep.subr.mxu0 %v2045
    %5690 = vmatpush1.msra.mxu0 %v2044
    %5691 = vmatprep.subr.mxu0 %v2049
    %5692 = vmatpush1.msra.mxu0 %v2048
    %5693 = vmatprep.subr.mxu0 %v2053
    %5694 = vmatpush1.msra.mxu0 %v2052
    %5695 = vmatprep.subr.mxu0 %v2057
    %5696 = vmatpush1.msra.mxu0 %v2056
    %5697 = vmatprep.subr.mxu0 %v2061
    %5698 = vmatpush1.msra.mxu0 %v2060
    %5699 = vmatprep.subr.mxu0 %v2065
    %5700 = vmatpush1.msra.mxu0 %v2064
    %5701 = vmatprep.subr.mxu0 %v2069
    %5702 = vmatpush1.msra.mxu0 %v2068
    %5703 = vmatprep.subr.mxu0 %v2073
    %5704 = vmatpush1.msra.mxu0 %v2072
    %5705 = vmatprep.subr.mxu0 %v2077
    %5706 = vmatpush1.msra.mxu0 %v2076
    %5707 = vmatprep.subr.mxu0 %v2081
    %5708 = vmatpush1.msra.mxu0 %v2080
    %5709 = vmatprep.subr.mxu0 %v2085
    %5710 = vmatpush1.msra.mxu0 %v2084
    %5711 = vmatprep.subr.mxu0 %v2089
    %5712 = vmatpush1.msra.mxu0 %v2088
    %5713 = vmatprep.subr.mxu0 %v2093
    %5714 = vmatpush1.msra.mxu0 %v2092
    %5715 = vmatprep.subr.mxu0 %v2097
    %5716 = vmatpush1.msra.mxu0 %v2096
    %5717 = vmatprep.subr.mxu0 %v2101
    %5718 = vmatpush1.msra.mxu0 %v2100
    %5719 = vmatprep.subr.mxu0 %v2105
    %5720 = vmatpush1.msra.mxu0 %v2104
    %5721 = vmatprep.subr.mxu0 %v2109
    %5722 = vmatpush1.msra.mxu0 %v2108
    %5723 = vmatprep.subr.mxu0 %v2113
    %5724 = vmatpush1.msra.mxu0 %v2112
    %5725 = vmatprep.subr.mxu0 %v2117
    %5726 = vmatpush1.msra.mxu0 %v2116
    %5727 = vmatprep.subr.mxu0 %v2121
    %5728 = vmatpush1.msra.mxu0 %v2120
    %5729 = vmatprep.mubr.f32.mxu0 %v4570
    %5730 = vmatmul.mubr.f32.gmra.mrb[0].mxu0 %v4568
    %v5731 = vpop.f32.mrb[0].mxu0
    %v5732 = vadd.f32 0.0, %v5731
    %v5733 = vpop.f32.mrb[0].mxu0
    %v5734 = vadd.f32 0.0, %v5733
    %5735 = vmatprep.mubr.f32.mxu0 %v4576
    %5736 = vmatmul.mubr.f32.gmra.mrb[0].mxu0 %v4574
    %v5737 = vpop.f32.mrb[0].mxu0
    %v5738 = vadd.f32 0.0, %v5737
    %v5739 = vpop.f32.mrb[0].mxu0
    %v5740 = vadd.f32 0.0, %v5739
    %5741 = vmatprep.mubr.f32.mxu0 %v4582
    %5742 = vmatmul.mubr.f32.gmra.mrb[0].mxu0 %v4580
    %v5743 = vpop.f32.mrb[0].mxu0
    %v5744 = vadd.f32 0.0, %v5743
    %v5745 = vpop.f32.mrb[0].mxu0
    %v5746 = vadd.f32 0.0, %v5745
    %5747 = vmatprep.mubr.f32.mxu0 %v4588
    %5748 = vmatmul.mubr.f32.gmra.mrb[0].mxu0 %v4586
    %v5749 = vpop.f32.mrb[0].mxu0
    %v5750 = vadd.f32 0.0, %v5749
    %v5751 = vpop.f32.mrb[0].mxu0
    %v5752 = vadd.f32 0.0, %v5751
    %5753 = vdwg.mxu0
    %5754 = vmatprep.subr.mxu0 %v2125
    %5755 = vmatpush1.msra.mxu0 %v2124
    %5756 = vmatprep.subr.mxu0 %v2129
    %5757 = vmatpush1.msra.mxu0 %v2128
    %5758 = vmatprep.subr.mxu0 %v2133
    %5759 = vmatpush1.msra.mxu0 %v2132
    %5760 = vmatprep.subr.mxu0 %v2137
    %5761 = vmatpush1.msra.mxu0 %v2136
    %5762 = vmatprep.subr.mxu0 %v2141
    %5763 = vmatpush1.msra.mxu0 %v2140
    %5764 = vmatprep.subr.mxu0 %v2145
    %5765 = vmatpush1.msra.mxu0 %v2144
    %5766 = vmatprep.subr.mxu0 %v2149
    %5767 = vmatpush1.msra.mxu0 %v2148
    %5768 = vmatprep.subr.mxu0 %v2153
    %5769 = vmatpush1.msra.mxu0 %v2152
    %5770 = vmatprep.subr.mxu0 %v2157
    %5771 = vmatpush1.msra.mxu0 %v2156
    %5772 = vmatprep.subr.mxu0 %v2161
    %5773 = vmatpush1.msra.mxu0 %v2160
    %5774 = vmatprep.subr.mxu0 %v2165
    %5775 = vmatpush1.msra.mxu0 %v2164
    %5776 = vmatprep.subr.mxu0 %v2169
    %5777 = vmatpush1.msra.mxu0 %v2168
    %5778 = vmatprep.subr.mxu0 %v2173
    %5779 = vmatpush1.msra.mxu0 %v2172
    %5780 = vmatprep.subr.mxu0 %v2177
    %5781 = vmatpush1.msra.mxu0 %v2176
    %5782 = vmatprep.subr.mxu0 %v2181
    %5783 = vmatpush1.msra.mxu0 %v2180
    %5784 = vmatprep.subr.mxu0 %v2185
    %5785 = vmatpush1.msra.mxu0 %v2184
    %5786 = vmatprep.subr.mxu0 %v2189
    %5787 = vmatpush1.msra.mxu0 %v2188
    %5788 = vmatprep.subr.mxu0 %v2193
    %5789 = vmatpush1.msra.mxu0 %v2192
    %5790 = vmatprep.subr.mxu0 %v2197
    %5791 = vmatpush1.msra.mxu0 %v2196
    %5792 = vmatprep.subr.mxu0 %v2201
    %5793 = vmatpush1.msra.mxu0 %v2200
    %5794 = vmatprep.subr.mxu0 %v2205
    %5795 = vmatpush1.msra.mxu0 %v2204
    %5796 = vmatprep.subr.mxu0 %v2209
    %5797 = vmatpush1.msra.mxu0 %v2208
    %5798 = vmatprep.subr.mxu0 %v2213
    %5799 = vmatpush1.msra.mxu0 %v2212
    %5800 = vmatprep.subr.mxu0 %v2217
    %5801 = vmatpush1.msra.mxu0 %v2216
    %5802 = vmatprep.subr.mxu0 %v2221
    %5803 = vmatpush1.msra.mxu0 %v2220
    %5804 = vmatprep.subr.mxu0 %v2225
    %5805 = vmatpush1.msra.mxu0 %v2224
    %5806 = vmatprep.subr.mxu0 %v2229
    %5807 = vmatpush1.msra.mxu0 %v2228
    %5808 = vmatprep.subr.mxu0 %v2233
    %5809 = vmatpush1.msra.mxu0 %v2232
    %5810 = vmatprep.subr.mxu0 %v2237
    %5811 = vmatpush1.msra.mxu0 %v2236
    %5812 = vmatprep.subr.mxu0 %v2241
    %5813 = vmatpush1.msra.mxu0 %v2240
    %5814 = vmatprep.subr.mxu0 %v2245
    %5815 = vmatpush1.msra.mxu0 %v2244
    %5816 = vmatprep.subr.mxu0 %v2249
    %5817 = vmatpush1.msra.mxu0 %v2248
    %5818 = vmatprep.mubr.f32.mxu0 %v4707
    %5819 = vmatmul.mubr.f32.gmra.mrb[0].mxu0 %v4705
    %v5820 = vpop.f32.mrb[0].mxu0
    %v5821 = vadd.f32 %v5732, %v5820
    %v5822 = vpop.f32.mrb[0].mxu0
    %v5823 = vadd.f32 %v5734, %v5822
    %5824 = vmatprep.mubr.f32.mxu0 %v4713
    %5825 = vmatmul.mubr.f32.gmra.mrb[0].mxu0 %v4711
    %v5826 = vpop.f32.mrb[0].mxu0
    %v5827 = vadd.f32 %v5738, %v5826
    %v5828 = vpop.f32.mrb[0].mxu0
    %v5829 = vadd.f32 %v5740, %v5828
    %5830 = vmatprep.mubr.f32.mxu0 %v4719
    %5831 = vmatmul.mubr.f32.gmra.mrb[0].mxu0 %v4717
    %v5832 = vpop.f32.mrb[0].mxu0
    %v5833 = vadd.f32 %v5744, %v5832
    %v5834 = vpop.f32.mrb[0].mxu0
    %v5835 = vadd.f32 %v5746, %v5834
    %5836 = vmatprep.mubr.f32.mxu0 %v4725
    %5837 = vmatmul.mubr.f32.gmra.mrb[0].mxu0 %v4723
    %v5838 = vpop.f32.mrb[0].mxu0
    %v5839 = vadd.f32 %v5750, %v5838
    %v5840 = vpop.f32.mrb[0].mxu0
    %v5841 = vadd.f32 %v5752, %v5840
    %5842 = vdwg.mxu0
    %v5843 = vadd.f32 %v5471, %v5643
    %v5844 = vadd.f32 %v5472, %v5645
    %v5845 = vadd.f32 %v5473, %v5821
    %v5846 = vadd.f32 %v5474, %v5823
    %v5847 = vadd.f32 %v5475, %v5649
    %v5848 = vadd.f32 %v5476, %v5651
    %v5849 = vadd.f32 %v5477, %v5827
    %v5850 = vadd.f32 %v5478, %v5829
    %v5851 = vadd.f32 %v5479, %v5655
    %v5852 = vadd.f32 %v5480, %v5657
    %v5853 = vadd.f32 %v5481, %v5833
    %v5854 = vadd.f32 %v5482, %v5835
    %v5855 = vadd.f32 %v5483, %v5661
    %v5856 = vadd.f32 %v5484, %v5663
    %v5857 = vadd.f32 %v5485, %v5839
    %v5858 = vadd.f32 %v5486, %v5841
    %v5859 = vmax.f32 %v5843, 0.0
    %v5860 = vmax.f32 %v5844, 0.0
    %v5861 = vmax.f32 %v5845, 0.0
    %v5862 = vmax.f32 %v5846, 0.0
    %v5863 = vmax.f32 %v5847, 0.0
    %v5864 = vmax.f32 %v5848, 0.0
    %v5865 = vmax.f32 %v5849, 0.0
    %v5866 = vmax.f32 %v5850, 0.0
    %v5867 = vmax.f32 %v5851, 0.0
    %v5868 = vmax.f32 %v5852, 0.0
    %v5869 = vmax.f32 %v5853, 0.0
    %v5870 = vmax.f32 %v5854, 0.0
    %v5871 = vmax.f32 %v5855, 0.0
    %v5872 = vmax.f32 %v5856, 0.0
    %v5873 = vmax.f32 %v5857, 0.0
    %v5874 = vmax.f32 %v5858, 0.0
    %v5875 = vld [vmem:[#allocation16] sm:$0xff]
    %v5876 = vld [vmem:[#allocation16 + $0x8] sm:$0xff]
    %v5877 = vld [vmem:[#allocation16 + $0x10] sm:$0xff]
    %v5878 = vld [vmem:[#allocation16 + $0x18] sm:$0xff]
    %v5879 = vld [vmem:[#allocation16 + $0x20] sm:$0xff]
    %v5880 = vld [vmem:[#allocation16 + $0x28] sm:$0xff]
    %v5881 = vld [vmem:[#allocation16 + $0x30] sm:$0xff]
    %v5882 = vld [vmem:[#allocation16 + $0x38] sm:$0xff]
    %5883 = vrot.lane.b32.xlu0 %v5859, 32
    %v5884 = vpop.permute.xlu0 %5883
    %5885 = vrot.lane.b32.xlu0 %v5863, 32
    %v5886 = vpop.permute.xlu0 %5885
    %5887 = vrot.lane.b32.xlu0 %v5867, 32
    %v5888 = vpop.permute.xlu0 %5887
    %5889 = vrot.lane.b32.xlu0 %v5871, 32
    %v5890 = vpop.permute.xlu0 %5889
    %5891 = vrot.lane.b32.xlu0 %v5860, 32
    %v5892 = vpop.permute.xlu0 %5891
    %5893 = vrot.lane.b32.xlu0 %v5864, 32
    %v5894 = vpop.permute.xlu0 %5893
    %5895 = vrot.lane.b32.xlu0 %v5868, 32
    %v5896 = vpop.permute.xlu0 %5895
    %5897 = vrot.lane.b32.xlu0 %v5872, 32
    %v5898 = vpop.permute.xlu0 %5897
    %5899 = vrot.lane.b32.xlu0 %v5861, 32
    %v5900 = vpop.permute.xlu0 %5899
    %5901 = vrot.lane.b32.xlu0 %v5865, 32
    %v5902 = vpop.permute.xlu0 %5901
    %5903 = vrot.lane.b32.xlu0 %v5869, 32
    %v5904 = vpop.permute.xlu0 %5903
    %5905 = vrot.lane.b32.xlu0 %v5873, 32
    %v5906 = vpop.permute.xlu0 %5905
    %5907 = vrot.lane.b32.xlu0 %v5862, 32
    %v5908 = vpop.permute.xlu0 %5907
    %5909 = vrot.lane.b32.xlu0 %v5866, 32
    %v5910 = vpop.permute.xlu0 %5909
    %5911 = vrot.lane.b32.xlu0 %v5870, 32
    %v5912 = vpop.permute.xlu0 %5911
    %5913 = vrot.lane.b32.xlu0 %v5874, 32
    %v5914 = vpop.permute.xlu0 %5913
    %v5915 = vsel %vm2959, %v5900, %v5908
    %v5916 = vsel %vm2959, %v5902, %v5910
    %v5917 = vsel %vm2959, %v5904, %v5912
    %v5918 = vsel %vm2959, %v5906, %v5914
    %v5919 = vsel %vm2959, %v5892, %v5900
    %v5920 = vsel %vm2959, %v5894, %v5902
    %v5921 = vsel %vm2959, %v5896, %v5904
    %v5922 = vsel %vm2959, %v5898, %v5906
    %v5923 = vsel %vm2959, %v5884, %v5892
    %v5924 = vsel %vm2959, %v5886, %v5894
    %v5925 = vsel %vm2959, %v5888, %v5896
    %v5926 = vsel %vm2959, %v5890, %v5898
    %v5927 = vsel %vm2959, %v5908, %v5884
    %v5928 = vsel %vm2959, %v5910, %v5886
    %v5929 = vsel %vm2959, %v5912, %v5888
    %v5930 = vsel %vm2959, %v5914, %v5890
    %v5931 = vmul.f32 %v5927, %v2997
    %v5932 = vmul.f32 %v5923, %v3001
    %v5933 = vmul.f32 %v5919, %v3005
    %v5934 = vmul.f32 %v5915, %v3009
    %v5935 = vmul.f32 %v5928, %v2997
    %v5936 = vmul.f32 %v5924, %v3001
    %v5937 = vmul.f32 %v5920, %v3005
    %v5938 = vmul.f32 %v5916, %v3009
    %v5939 = vmul.f32 %v5929, %v2997
    %v5940 = vmul.f32 %v5925, %v3001
    %v5941 = vmul.f32 %v5921, %v3005
    %v5942 = vmul.f32 %v5917, %v3009
    %v5943 = vmul.f32 %v5930, %v2997
    %v5944 = vmul.f32 %v5926, %v3001
    %v5945 = vmul.f32 %v5922, %v3005
    %v5946 = vmul.f32 %v5918, %v3009
    %5947 = vrot.lane.b32.xlu0 %v5859, 16
    %v5948 = vpop.permute.xlu0 %5947
    %5949 = vrot.lane.b32.xlu0 %v5863, 16
    %v5950 = vpop.permute.xlu0 %5949
    %5951 = vrot.lane.b32.xlu0 %v5867, 16
    %v5952 = vpop.permute.xlu0 %5951
    %5953 = vrot.lane.b32.xlu0 %v5871, 16
    %v5954 = vpop.permute.xlu0 %5953
    %5955 = vrot.lane.b32.xlu0 %v5860, 16
    %v5956 = vpop.permute.xlu0 %5955
    %5957 = vrot.lane.b32.xlu0 %v5864, 16
    %v5958 = vpop.permute.xlu0 %5957
    %5959 = vrot.lane.b32.xlu0 %v5868, 16
    %v5960 = vpop.permute.xlu0 %5959
    %5961 = vrot.lane.b32.xlu0 %v5872, 16
    %v5962 = vpop.permute.xlu0 %5961
    %5963 = vrot.lane.b32.xlu0 %v5861, 16
    %v5964 = vpop.permute.xlu0 %5963
    %5965 = vrot.lane.b32.xlu0 %v5865, 16
    %v5966 = vpop.permute.xlu0 %5965
    %5967 = vrot.lane.b32.xlu0 %v5869, 16
    %v5968 = vpop.permute.xlu0 %5967
    %5969 = vrot.lane.b32.xlu0 %v5873, 16
    %v5970 = vpop.permute.xlu0 %5969
    %5971 = vrot.lane.b32.xlu0 %v5862, 16
    %v5972 = vpop.permute.xlu0 %5971
    %5973 = vrot.lane.b32.xlu0 %v5866, 16
    %v5974 = vpop.permute.xlu0 %5973
    %5975 = vrot.lane.b32.xlu0 %v5870, 16
    %v5976 = vpop.permute.xlu0 %5975
    %5977 = vrot.lane.b32.xlu0 %v5874, 16
    %v5978 = vpop.permute.xlu0 %5977
    %v5979 = vsel %vm3110, %v5964, %v5972
    %v5980 = vsel %vm3110, %v5966, %v5974
    %v5981 = vsel %vm3110, %v5968, %v5976
    %v5982 = vsel %vm3110, %v5970, %v5978
    %v5983 = vsel %vm3110, %v5956, %v5964
    %v5984 = vsel %vm3110, %v5958, %v5966
    %v5985 = vsel %vm3110, %v5960, %v5968
    %v5986 = vsel %vm3110, %v5962, %v5970
    %v5987 = vsel %vm3110, %v5948, %v5956
    %v5988 = vsel %vm3110, %v5950, %v5958
    %v5989 = vsel %vm3110, %v5952, %v5960
    %v5990 = vsel %vm3110, %v5954, %v5962
    %v5991 = vsel %vm3110, %v5972, %v5948
    %v5992 = vsel %vm3110, %v5974, %v5950
    %v5993 = vsel %vm3110, %v5976, %v5952
    %v5994 = vsel %vm3110, %v5978, %v5954
    %v5995 = vmul.f32 %v5991, %v3149
    %v5996 = vmul.f32 %v5987, %v3153
    %v5997 = vmul.f32 %v5983, %v3157
    %v5998 = vmul.f32 %v5979, %v3161
    %v5999 = vmul.f32 %v5992, %v3149
    %v6000 = vmul.f32 %v5988, %v3153
    %v6001 = vmul.f32 %v5984, %v3157
    %v6002 = vmul.f32 %v5980, %v3161
    %v6003 = vmul.f32 %v5993, %v3149
    %v6004 = vmul.f32 %v5989, %v3153
    %v6005 = vmul.f32 %v5985, %v3157
    %v6006 = vmul.f32 %v5981, %v3161
    %v6007 = vmul.f32 %v5994, %v3149
    %v6008 = vmul.f32 %v5990, %v3153
    %v6009 = vmul.f32 %v5986, %v3157
    %v6010 = vmul.f32 %v5982, %v3161
    %6011 = vrot.lane.b32.xlu0 %v5859, 112
    %v6012 = vpop.permute.xlu0 %6011
    %6013 = vrot.lane.b32.xlu0 %v5863, 112
    %v6014 = vpop.permute.xlu0 %6013
    %6015 = vrot.lane.b32.xlu0 %v5867, 112
    %v6016 = vpop.permute.xlu0 %6015
    %6017 = vrot.lane.b32.xlu0 %v5871, 112
    %v6018 = vpop.permute.xlu0 %6017
    %6019 = vrot.lane.b32.xlu0 %v5860, 112
    %v6020 = vpop.permute.xlu0 %6019
    %6021 = vrot.lane.b32.xlu0 %v5864, 112
    %v6022 = vpop.permute.xlu0 %6021
    %6023 = vrot.lane.b32.xlu0 %v5868, 112
    %v6024 = vpop.permute.xlu0 %6023
    %6025 = vrot.lane.b32.xlu0 %v5872, 112
    %v6026 = vpop.permute.xlu0 %6025
    %6027 = vrot.lane.b32.xlu0 %v5861, 112
    %v6028 = vpop.permute.xlu0 %6027
    %6029 = vrot.lane.b32.xlu0 %v5865, 112
    %v6030 = vpop.permute.xlu0 %6029
    %6031 = vrot.lane.b32.xlu0 %v5869, 112
    %v6032 = vpop.permute.xlu0 %6031
    %6033 = vrot.lane.b32.xlu0 %v5873, 112
    %v6034 = vpop.permute.xlu0 %6033
    %6035 = vrot.lane.b32.xlu0 %v5862, 112
    %v6036 = vpop.permute.xlu0 %6035
    %6037 = vrot.lane.b32.xlu0 %v5866, 112
    %v6038 = vpop.permute.xlu0 %6037
    %6039 = vrot.lane.b32.xlu0 %v5870, 112
    %v6040 = vpop.permute.xlu0 %6039
    %6041 = vrot.lane.b32.xlu0 %v5874, 112
    %v6042 = vpop.permute.xlu0 %6041
    %v6043 = vsel %vm3262, %v6028, %v6036
    %v6044 = vsel %vm3262, %v6030, %v6038
    %v6045 = vsel %vm3262, %v6032, %v6040
    %v6046 = vsel %vm3262, %v6034, %v6042
    %v6047 = vsel %vm3262, %v6020, %v6028
    %v6048 = vsel %vm3262, %v6022, %v6030
    %v6049 = vsel %vm3262, %v6024, %v6032
    %v6050 = vsel %vm3262, %v6026, %v6034
    %v6051 = vsel %vm3262, %v6012, %v6020
    %v6052 = vsel %vm3262, %v6014, %v6022
    %v6053 = vsel %vm3262, %v6016, %v6024
    %v6054 = vsel %vm3262, %v6018, %v6026
    %v6055 = vsel %vm3262, %v6036, %v6012
    %v6056 = vsel %vm3262, %v6038, %v6014
    %v6057 = vsel %vm3262, %v6040, %v6016
    %v6058 = vsel %vm3262, %v6042, %v6018
    %v6059 = vmul.f32 %v6051, %v3301
    %v6060 = vmul.f32 %v6047, %v3305
    %v6061 = vmul.f32 %v6043, %v3309
    %v6062 = vmul.f32 %v6055, %v3313
    %v6063 = vmul.f32 %v6052, %v3301
    %v6064 = vmul.f32 %v6048, %v3305
    %v6065 = vmul.f32 %v6044, %v3309
    %v6066 = vmul.f32 %v6056, %v3313
    %v6067 = vmul.f32 %v6053, %v3301
    %v6068 = vmul.f32 %v6049, %v3305
    %v6069 = vmul.f32 %v6045, %v3309
    %v6070 = vmul.f32 %v6057, %v3313
    %v6071 = vmul.f32 %v6054, %v3301
    %v6072 = vmul.f32 %v6050, %v3305
    %v6073 = vmul.f32 %v6046, %v3309
    %v6074 = vmul.f32 %v6058, %v3313
    %6075 = vrot.lane.b32.xlu0 %v5859, 96
    %v6076 = vpop.permute.xlu0 %6075
    %6077 = vrot.lane.b32.xlu0 %v5863, 96
    %v6078 = vpop.permute.xlu0 %6077
    %6079 = vrot.lane.b32.xlu0 %v5867, 96
    %v6080 = vpop.permute.xlu0 %6079
    %6081 = vrot.lane.b32.xlu0 %v5871, 96
    %v6082 = vpop.permute.xlu0 %6081
    %6083 = vrot.lane.b32.xlu0 %v5860, 96
    %v6084 = vpop.permute.xlu0 %6083
    %6085 = vrot.lane.b32.xlu0 %v5864, 96
    %v6086 = vpop.permute.xlu0 %6085
    %6087 = vrot.lane.b32.xlu0 %v5868, 96
    %v6088 = vpop.permute.xlu0 %6087
    %6089 = vrot.lane.b32.xlu0 %v5872, 96
    %v6090 = vpop.permute.xlu0 %6089
    %6091 = vrot.lane.b32.xlu0 %v5861, 96
    %v6092 = vpop.permute.xlu0 %6091
    %6093 = vrot.lane.b32.xlu0 %v5865, 96
    %v6094 = vpop.permute.xlu0 %6093
    %6095 = vrot.lane.b32.xlu0 %v5869, 96
    %v6096 = vpop.permute.xlu0 %6095
    %6097 = vrot.lane.b32.xlu0 %v5873, 96
    %v6098 = vpop.permute.xlu0 %6097
    %6099 = vrot.lane.b32.xlu0 %v5862, 96
    %v6100 = vpop.permute.xlu0 %6099
    %6101 = vrot.lane.b32.xlu0 %v5866, 96
    %v6102 = vpop.permute.xlu0 %6101
    %6103 = vrot.lane.b32.xlu0 %v5870, 96
    %v6104 = vpop.permute.xlu0 %6103
    %6105 = vrot.lane.b32.xlu0 %v5874, 96
    %v6106 = vpop.permute.xlu0 %6105
    %v6107 = vsel %vm3414, %v6092, %v6100
    %v6108 = vsel %vm3414, %v6094, %v6102
    %v6109 = vsel %vm3414, %v6096, %v6104
    %v6110 = vsel %vm3414, %v6098, %v6106
    %v6111 = vsel %vm3414, %v6084, %v6092
    %v6112 = vsel %vm3414, %v6086, %v6094
    %v6113 = vsel %vm3414, %v6088, %v6096
    %v6114 = vsel %vm3414, %v6090, %v6098
    %v6115 = vsel %vm3414, %v6076, %v6084
    %v6116 = vsel %vm3414, %v6078, %v6086
    %v6117 = vsel %vm3414, %v6080, %v6088
    %v6118 = vsel %vm3414, %v6082, %v6090
    %v6119 = vsel %vm3414, %v6100, %v6076
    %v6120 = vsel %vm3414, %v6102, %v6078
    %v6121 = vsel %vm3414, %v6104, %v6080
    %v6122 = vsel %vm3414, %v6106, %v6082
    %v6123 = vmul.f32 %v6115, %v3453
    %v6124 = vmul.f32 %v6111, %v3457
    %v6125 = vmul.f32 %v6107, %v3461
    %v6126 = vmul.f32 %v6119, %v3465
    %v6127 = vmul.f32 %v6116, %v3453
    %v6128 = vmul.f32 %v6112, %v3457
    %v6129 = vmul.f32 %v6108, %v3461
    %v6130 = vmul.f32 %v6120, %v3465
    %v6131 = vmul.f32 %v6117, %v3453
    %v6132 = vmul.f32 %v6113, %v3457
    %v6133 = vmul.f32 %v6109, %v3461
    %v6134 = vmul.f32 %v6121, %v3465
    %v6135 = vmul.f32 %v6118, %v3453
    %v6136 = vmul.f32 %v6114, %v3457
    %v6137 = vmul.f32 %v6110, %v3461
    %v6138 = vmul.f32 %v6122, %v3465
    %v6139 = vld [vmem:[%s14] sm:$0xff]
    %v6140 = vld [vmem:[%s14 + $0x8] sm:$0xff]
    %v6141 = vld [vmem:[%s14 + $0x10] sm:$0xff]
    %v6142 = vld [vmem:[%s14 + $0x18] sm:$0xff]
    %6144 = vset.pattern.permute.xlu0 0
    %6145 = vperm.xlu0 %6144, %v6139
    %v6146 = vpop.permute.xlu0 %6145
    %6149 = vset.pattern.permute.xlu0 0
    %6150 = vperm.xlu0 %6149, %v6140
    %v6151 = vpop.permute.xlu0 %6150
    %6154 = vset.pattern.permute.xlu0 0
    %6155 = vperm.xlu0 %6154, %v6141
    %v6156 = vpop.permute.xlu0 %6155
    %6159 = vset.pattern.permute.xlu0 0
    %6160 = vperm.xlu0 %6159, %v6142
    %v6161 = vpop.permute.xlu0 %6160
    %vm6163 = vcmask 261120
    %v6165 = vsel %vm6163, %v5876, 0
    %v6168 = vsel %vm6163, %v5878, 0
    %v6171 = vsel %vm6163, %v5880, 0
    %v6174 = vsel %vm6163, %v5882, 0
    %6176 = vmatprep.subr.mxu0 %v5932
    %6177 = vmatpush1.msra.mxu0 %v5931
    %6178 = vmatprep.subr.mxu0 %v5936
    %6179 = vmatpush1.msra.mxu0 %v5935
    %6180 = vmatprep.subr.mxu0 %v5940
    %6181 = vmatpush1.msra.mxu0 %v5939
    %6182 = vmatprep.subr.mxu0 %v5944
    %6183 = vmatpush1.msra.mxu0 %v5943
    %6184 = vmatprep.subr.mxu0 %v5996
    %6185 = vmatpush1.msra.mxu0 %v5995
    %6186 = vmatprep.subr.mxu0 %v6000
    %6187 = vmatpush1.msra.mxu0 %v5999
    %6188 = vmatprep.subr.mxu0 %v6004
    %6189 = vmatpush1.msra.mxu0 %v6003
    %6190 = vmatprep.subr.mxu0 %v6008
    %6191 = vmatpush1.msra.mxu0 %v6007
    %6192 = vmatprep.subr.mxu0 %v5860
    %6193 = vmatpush1.msra.mxu0 %v5859
    %6194 = vmatprep.subr.mxu0 %v5864
    %6195 = vmatpush1.msra.mxu0 %v5863
    %6196 = vmatprep.subr.mxu0 %v5868
    %6197 = vmatpush1.msra.mxu0 %v5867
    %6198 = vmatprep.subr.mxu0 %v5872
    %6199 = vmatpush1.msra.mxu0 %v5871
    %6200 = vmatprep.subr.mxu0 %v6060
    %6201 = vmatpush1.msra.mxu0 %v6059
    %6202 = vmatprep.subr.mxu0 %v6064
    %6203 = vmatpush1.msra.mxu0 %v6063
    %6204 = vmatprep.subr.mxu0 %v6068
    %6205 = vmatpush1.msra.mxu0 %v6067
    %6206 = vmatprep.subr.mxu0 %v6072
    %6207 = vmatpush1.msra.mxu0 %v6071
    %6208 = vmatprep.subr.mxu0 %v6124
    %6209 = vmatpush1.msra.mxu0 %v6123
    %6210 = vmatprep.subr.mxu0 %v6128
    %6211 = vmatpush1.msra.mxu0 %v6127
    %6212 = vmatprep.subr.mxu0 %v6132
    %6213 = vmatpush1.msra.mxu0 %v6131
    %6214 = vmatprep.subr.mxu0 %v6136
    %6215 = vmatpush1.msra.mxu0 %v6135
    %6216 = vmatprep.subr.mxu0 0.0
    %6217 = vmatpush1.msra.mxu0 0.0
    %6218 = vmatprep.subr.mxu0 0.0
    %6219 = vmatpush1.msra.mxu0 0.0
    %6220 = vmatprep.subr.mxu0 0.0
    %6221 = vmatpush1.msra.mxu0 0.0
    %6222 = vmatprep.subr.mxu0 0.0
    %6223 = vmatpush1.msra.mxu0 0.0
    %6224 = vmatprep.subr.mxu0 0.0
    %6225 = vmatpush1.msra.mxu0 0.0
    %6226 = vmatprep.subr.mxu0 0.0
    %6227 = vmatpush1.msra.mxu0 0.0
    %6228 = vmatprep.subr.mxu0 0.0
    %6229 = vmatpush1.msra.mxu0 0.0
    %6230 = vmatprep.subr.mxu0 0.0
    %6231 = vmatpush1.msra.mxu0 0.0
    %6232 = vmatprep.subr.mxu0 0.0
    %6233 = vmatpush1.msra.mxu0 0.0
    %6234 = vmatprep.subr.mxu0 0.0
    %6235 = vmatpush1.msra.mxu0 0.0
    %6236 = vmatprep.subr.mxu0 0.0
    %6237 = vmatpush1.msra.mxu0 0.0
    %6238 = vmatprep.subr.mxu0 0.0
    %6239 = vmatpush1.msra.mxu0 0.0
    %6240 = vmatprep.mubr.f32.mxu0 %v6165
    %6241 = vmatmul.mubr.f32.gmra.mrb[0].mxu0 %v5875
    %v6242 = vpop.f32.mrb[0].mxu0
    %v6243 = vadd.f32 %v6146, %v6242
    %v6244 = vpop.f32.mrb[0].mxu0
    %v6245 = vadd.f32 %v6146, %v6244
    %6246 = vmatprep.mubr.f32.mxu0 %v6168
    %6247 = vmatmul.mubr.f32.gmra.mrb[0].mxu0 %v5877
    %v6248 = vpop.f32.mrb[0].mxu0
    %v6249 = vadd.f32 %v6151, %v6248
    %v6250 = vpop.f32.mrb[0].mxu0
    %v6251 = vadd.f32 %v6151, %v6250
    %6252 = vmatprep.mubr.f32.mxu0 %v6171
    %6253 = vmatmul.mubr.f32.gmra.mrb[0].mxu0 %v5879
    %v6254 = vpop.f32.mrb[0].mxu0
    %v6255 = vadd.f32 %v6156, %v6254
    %v6256 = vpop.f32.mrb[0].mxu0
    %v6257 = vadd.f32 %v6156, %v6256
    %6258 = vmatprep.mubr.f32.mxu0 %v6174
    %6259 = vmatmul.mubr.f32.gmra.mrb[0].mxu0 %v5881
    %v6260 = vpop.f32.mrb[0].mxu0
    %v6261 = vadd.f32 %v6161, %v6260
    %v6262 = vpop.f32.mrb[0].mxu0
    %v6263 = vadd.f32 %v6161, %v6262
    %6264 = vdwg.mxu0
    %6265 = vmatprep.subr.mxu0 %v5934
    %6266 = vmatpush1.msra.mxu0 %v5933
    %6267 = vmatprep.subr.mxu0 %v5938
    %6268 = vmatpush1.msra.mxu0 %v5937
    %6269 = vmatprep.subr.mxu0 %v5942
    %6270 = vmatpush1.msra.mxu0 %v5941
    %6271 = vmatprep.subr.mxu0 %v5946
    %6272 = vmatpush1.msra.mxu0 %v5945
    %6273 = vmatprep.subr.mxu0 %v5998
    %6274 = vmatpush1.msra.mxu0 %v5997
    %6275 = vmatprep.subr.mxu0 %v6002
    %6276 = vmatpush1.msra.mxu0 %v6001
    %6277 = vmatprep.subr.mxu0 %v6006
    %6278 = vmatpush1.msra.mxu0 %v6005
    %6279 = vmatprep.subr.mxu0 %v6010
    %6280 = vmatpush1.msra.mxu0 %v6009
    %6281 = vmatprep.subr.mxu0 %v5862
    %6282 = vmatpush1.msra.mxu0 %v5861
    %6283 = vmatprep.subr.mxu0 %v5866
    %6284 = vmatpush1.msra.mxu0 %v5865
    %6285 = vmatprep.subr.mxu0 %v5870
    %6286 = vmatpush1.msra.mxu0 %v5869
    %6287 = vmatprep.subr.mxu0 %v5874
    %6288 = vmatpush1.msra.mxu0 %v5873
    %6289 = vmatprep.subr.mxu0 %v6062
    %6290 = vmatpush1.msra.mxu0 %v6061
    %6291 = vmatprep.subr.mxu0 %v6066
    %6292 = vmatpush1.msra.mxu0 %v6065
    %6293 = vmatprep.subr.mxu0 %v6070
    %6294 = vmatpush1.msra.mxu0 %v6069
    %6295 = vmatprep.subr.mxu0 %v6074
    %6296 = vmatpush1.msra.mxu0 %v6073
    %6297 = vmatprep.subr.mxu0 %v6126
    %6298 = vmatpush1.msra.mxu0 %v6125
    %6299 = vmatprep.subr.mxu0 %v6130
    %6300 = vmatpush1.msra.mxu0 %v6129
    %6301 = vmatprep.subr.mxu0 %v6134
    %6302 = vmatpush1.msra.mxu0 %v6133
    %6303 = vmatprep.subr.mxu0 %v6138
    %6304 = vmatpush1.msra.mxu0 %v6137
    %6305 = vmatprep.subr.mxu0 0.0
    %6306 = vmatpush1.msra.mxu0 0.0
    %6307 = vmatprep.subr.mxu0 0.0
    %6308 = vmatpush1.msra.mxu0 0.0
    %6309 = vmatprep.subr.mxu0 0.0
    %6310 = vmatpush1.msra.mxu0 0.0
    %6311 = vmatprep.subr.mxu0 0.0
    %6312 = vmatpush1.msra.mxu0 0.0
    %6313 = vmatprep.subr.mxu0 0.0
    %6314 = vmatpush1.msra.mxu0 0.0
    %6315 = vmatprep.subr.mxu0 0.0
    %6316 = vmatpush1.msra.mxu0 0.0
    %6317 = vmatprep.subr.mxu0 0.0
    %6318 = vmatpush1.msra.mxu0 0.0
    %6319 = vmatprep.subr.mxu0 0.0
    %6320 = vmatpush1.msra.mxu0 0.0
    %6321 = vmatprep.subr.mxu0 0.0
    %6322 = vmatpush1.msra.mxu0 0.0
    %6323 = vmatprep.subr.mxu0 0.0
    %6324 = vmatpush1.msra.mxu0 0.0
    %6325 = vmatprep.subr.mxu0 0.0
    %6326 = vmatpush1.msra.mxu0 0.0
    %6327 = vmatprep.subr.mxu0 0.0
    %6328 = vmatpush1.msra.mxu0 0.0
    %6329 = vmatprep.mubr.f32.mxu0 %v6165
    %6330 = vmatmul.mubr.f32.gmra.mrb[0].mxu0 %v5875
    %v6331 = vpop.f32.mrb[0].mxu0
    %v6332 = vadd.f32 %v6146, %v6331
    %v6333 = vpop.f32.mrb[0].mxu0
    %v6334 = vadd.f32 %v6146, %v6333
    %6335 = vmatprep.mubr.f32.mxu0 %v6168
    %6336 = vmatmul.mubr.f32.gmra.mrb[0].mxu0 %v5877
    %v6337 = vpop.f32.mrb[0].mxu0
    %v6338 = vadd.f32 %v6151, %v6337
    %v6339 = vpop.f32.mrb[0].mxu0
    %v6340 = vadd.f32 %v6151, %v6339
    %6341 = vmatprep.mubr.f32.mxu0 %v6171
    %6342 = vmatmul.mubr.f32.gmra.mrb[0].mxu0 %v5879
    %v6343 = vpop.f32.mrb[0].mxu0
    %v6344 = vadd.f32 %v6156, %v6343
    %v6345 = vpop.f32.mrb[0].mxu0
    %v6346 = vadd.f32 %v6156, %v6345
    %6347 = vmatprep.mubr.f32.mxu0 %v6174
    %6348 = vmatmul.mubr.f32.gmra.mrb[0].mxu0 %v5881
    %v6349 = vpop.f32.mrb[0].mxu0
    %v6350 = vadd.f32 %v6161, %v6349
    %v6351 = vpop.f32.mrb[0].mxu0
    %v6352 = vadd.f32 %v6161, %v6351
    %6353 = vdwg.mxu0
    %v6354 = vld [vmem:[#allocation17] sm:$0xff]
    %v6355 = vld [vmem:[#allocation17 + $0x8] sm:$0xff]
    %v6356 = vld [vmem:[#allocation17 + $0x10] sm:$0xff]
    %v6357 = vld [vmem:[#allocation17 + $0x18] sm:$0xff]
    %v6358 = vld [vmem:[%s16] sm:$0xff]
    %v6359 = vld [vmem:[%s16 + $0x8] sm:$0xff]
    %v6360 = vld [vmem:[%s16 + $0x10] sm:$0xff]
    %v6361 = vld [vmem:[%s16 + $0x18] sm:$0xff]
    %6363 = vset.pattern.permute.xlu0 0
    %6364 = vperm.xlu0 %6363, %v6358
    %v6365 = vpop.permute.xlu0 %6364
    %6368 = vset.pattern.permute.xlu0 0
    %6369 = vperm.xlu0 %6368, %v6359
    %v6370 = vpop.permute.xlu0 %6369
    %6373 = vset.pattern.permute.xlu0 0
    %6374 = vperm.xlu0 %6373, %v6360
    %v6375 = vpop.permute.xlu0 %6374
    %6378 = vset.pattern.permute.xlu0 0
    %6379 = vperm.xlu0 %6378, %v6361
    %v6380 = vpop.permute.xlu0 %6379
    %v6383 = vsel %vm3550, %v6354, 0
    %v6386 = vsel %vm3550, %v6355, 0
    %v6389 = vsel %vm3550, %v6356, 0
    %v6392 = vsel %vm3550, %v6357, 0
    %6394 = vmatprep.subr.mxu0 %v4374
    %6395 = vmatpush1.msra.mxu0 %v4373
    %6396 = vmatprep.subr.mxu0 %v4378
    %6397 = vmatpush1.msra.mxu0 %v4377
    %6398 = vmatprep.subr.mxu0 %v4382
    %6399 = vmatpush1.msra.mxu0 %v4381
    %6400 = vmatprep.subr.mxu0 %v4386
    %6401 = vmatpush1.msra.mxu0 %v4385
    %6402 = vmatprep.subr.mxu0 %v4390
    %6403 = vmatpush1.msra.mxu0 %v4389
    %6404 = vmatprep.subr.mxu0 %v4394
    %6405 = vmatpush1.msra.mxu0 %v4393
    %6406 = vmatprep.subr.mxu0 %v4398
    %6407 = vmatpush1.msra.mxu0 %v4397
    %6408 = vmatprep.subr.mxu0 %v4402
    %6409 = vmatpush1.msra.mxu0 %v4401
    %6410 = vmatprep.subr.mxu0 0.0
    %6411 = vmatpush1.msra.mxu0 0.0
    %6412 = vmatprep.subr.mxu0 0.0
    %6413 = vmatpush1.msra.mxu0 0.0
    %6414 = vmatprep.subr.mxu0 0.0
    %6415 = vmatpush1.msra.mxu0 0.0
    %6416 = vmatprep.subr.mxu0 0.0
    %6417 = vmatpush1.msra.mxu0 0.0
    %6418 = vmatprep.subr.mxu0 0.0
    %6419 = vmatpush1.msra.mxu0 0.0
    %6420 = vmatprep.subr.mxu0 0.0
    %6421 = vmatpush1.msra.mxu0 0.0
    %6422 = vmatprep.subr.mxu0 0.0
    %6423 = vmatpush1.msra.mxu0 0.0
    %6424 = vmatprep.subr.mxu0 0.0
    %6425 = vmatpush1.msra.mxu0 0.0
    %6426 = vmatprep.subr.mxu0 0.0
    %6427 = vmatpush1.msra.mxu0 0.0
    %6428 = vmatprep.subr.mxu0 0.0
    %6429 = vmatpush1.msra.mxu0 0.0
    %6430 = vmatprep.subr.mxu0 0.0
    %6431 = vmatpush1.msra.mxu0 0.0
    %6432 = vmatprep.subr.mxu0 0.0
    %6433 = vmatpush1.msra.mxu0 0.0
    %6434 = vmatprep.subr.mxu0 0.0
    %6435 = vmatpush1.msra.mxu0 0.0
    %6436 = vmatprep.subr.mxu0 0.0
    %6437 = vmatpush1.msra.mxu0 0.0
    %6438 = vmatprep.subr.mxu0 0.0
    %6439 = vmatpush1.msra.mxu0 0.0
    %6440 = vmatprep.subr.mxu0 0.0
    %6441 = vmatpush1.msra.mxu0 0.0
    %6442 = vmatprep.subr.mxu0 0.0
    %6443 = vmatpush1.msra.mxu0 0.0
    %6444 = vmatprep.subr.mxu0 0.0
    %6445 = vmatpush1.msra.mxu0 0.0
    %6446 = vmatprep.subr.mxu0 0.0
    %6447 = vmatpush1.msra.mxu0 0.0
    %6448 = vmatprep.subr.mxu0 0.0
    %6449 = vmatpush1.msra.mxu0 0.0
    %6450 = vmatprep.subr.mxu0 0.0
    %6451 = vmatpush1.msra.mxu0 0.0
    %6452 = vmatprep.subr.mxu0 0.0
    %6453 = vmatpush1.msra.mxu0 0.0
    %6454 = vmatprep.subr.mxu0 0.0
    %6455 = vmatpush1.msra.mxu0 0.0
    %6456 = vmatprep.subr.mxu0 0.0
    %6457 = vmatpush1.msra.mxu0 0.0
    %6458 = vmatprep.mubr.f32.mxu0 0.0
    %6459 = vmatmul.mubr.f32.gmra.mrb[0].mxu0 %v6383
    %v6460 = vpop.f32.mrb[0].mxu0
    %v6461 = vadd.f32 %v6365, %v6460
    %v6462 = vpop.f32.mrb[0].mxu0
    %v6463 = vadd.f32 %v6365, %v6462
    %6464 = vmatprep.mubr.f32.mxu0 0.0
    %6465 = vmatmul.mubr.f32.gmra.mrb[0].mxu0 %v6386
    %v6466 = vpop.f32.mrb[0].mxu0
    %v6467 = vadd.f32 %v6370, %v6466
    %v6468 = vpop.f32.mrb[0].mxu0
    %v6469 = vadd.f32 %v6370, %v6468
    %6470 = vmatprep.mubr.f32.mxu0 0.0
    %6471 = vmatmul.mubr.f32.gmra.mrb[0].mxu0 %v6389
    %v6472 = vpop.f32.mrb[0].mxu0
    %v6473 = vadd.f32 %v6375, %v6472
    %v6474 = vpop.f32.mrb[0].mxu0
    %v6475 = vadd.f32 %v6375, %v6474
    %6476 = vmatprep.mubr.f32.mxu0 0.0
    %6477 = vmatmul.mubr.f32.gmra.mrb[0].mxu0 %v6392
    %v6478 = vpop.f32.mrb[0].mxu0
    %v6479 = vadd.f32 %v6380, %v6478
    %v6480 = vpop.f32.mrb[0].mxu0
    %v6481 = vadd.f32 %v6380, %v6480
    %6482 = vdwg.mxu0
    %6483 = vmatprep.subr.mxu0 %v4376
    %6484 = vmatpush1.msra.mxu0 %v4375
    %6485 = vmatprep.subr.mxu0 %v4380
    %6486 = vmatpush1.msra.mxu0 %v4379
    %6487 = vmatprep.subr.mxu0 %v4384
    %6488 = vmatpush1.msra.mxu0 %v4383
    %6489 = vmatprep.subr.mxu0 %v4388
    %6490 = vmatpush1.msra.mxu0 %v4387
    %6491 = vmatprep.subr.mxu0 %v4392
    %6492 = vmatpush1.msra.mxu0 %v4391
    %6493 = vmatprep.subr.mxu0 %v4396
    %6494 = vmatpush1.msra.mxu0 %v4395
    %6495 = vmatprep.subr.mxu0 %v4400
    %6496 = vmatpush1.msra.mxu0 %v4399
    %6497 = vmatprep.subr.mxu0 %v4404
    %6498 = vmatpush1.msra.mxu0 %v4403
    %6499 = vmatprep.subr.mxu0 0.0
    %6500 = vmatpush1.msra.mxu0 0.0
    %6501 = vmatprep.subr.mxu0 0.0
    %6502 = vmatpush1.msra.mxu0 0.0
    %6503 = vmatprep.subr.mxu0 0.0
    %6504 = vmatpush1.msra.mxu0 0.0
    %6505 = vmatprep.subr.mxu0 0.0
    %6506 = vmatpush1.msra.mxu0 0.0
    %6507 = vmatprep.subr.mxu0 0.0
    %6508 = vmatpush1.msra.mxu0 0.0
    %6509 = vmatprep.subr.mxu0 0.0
    %6510 = vmatpush1.msra.mxu0 0.0
    %6511 = vmatprep.subr.mxu0 0.0
    %6512 = vmatpush1.msra.mxu0 0.0
    %6513 = vmatprep.subr.mxu0 0.0
    %6514 = vmatpush1.msra.mxu0 0.0
    %6515 = vmatprep.subr.mxu0 0.0
    %6516 = vmatpush1.msra.mxu0 0.0
    %6517 = vmatprep.subr.mxu0 0.0
    %6518 = vmatpush1.msra.mxu0 0.0
    %6519 = vmatprep.subr.mxu0 0.0
    %6520 = vmatpush1.msra.mxu0 0.0
    %6521 = vmatprep.subr.mxu0 0.0
    %6522 = vmatpush1.msra.mxu0 0.0
    %6523 = vmatprep.subr.mxu0 0.0
    %6524 = vmatpush1.msra.mxu0 0.0
    %6525 = vmatprep.subr.mxu0 0.0
    %6526 = vmatpush1.msra.mxu0 0.0
    %6527 = vmatprep.subr.mxu0 0.0
    %6528 = vmatpush1.msra.mxu0 0.0
    %6529 = vmatprep.subr.mxu0 0.0
    %6530 = vmatpush1.msra.mxu0 0.0
    %6531 = vmatprep.subr.mxu0 0.0
    %6532 = vmatpush1.msra.mxu0 0.0
    %6533 = vmatprep.subr.mxu0 0.0
    %6534 = vmatpush1.msra.mxu0 0.0
    %6535 = vmatprep.subr.mxu0 0.0
    %6536 = vmatpush1.msra.mxu0 0.0
    %6537 = vmatprep.subr.mxu0 0.0
    %6538 = vmatpush1.msra.mxu0 0.0
    %6539 = vmatprep.subr.mxu0 0.0
    %6540 = vmatpush1.msra.mxu0 0.0
    %6541 = vmatprep.subr.mxu0 0.0
    %6542 = vmatpush1.msra.mxu0 0.0
    %6543 = vmatprep.subr.mxu0 0.0
    %6544 = vmatpush1.msra.mxu0 0.0
    %6545 = vmatprep.subr.mxu0 0.0
    %6546 = vmatpush1.msra.mxu0 0.0
    %6547 = vmatprep.mubr.f32.mxu0 0.0
    %6548 = vmatmul.mubr.f32.gmra.mrb[0].mxu0 %v6383
    %v6549 = vpop.f32.mrb[0].mxu0
    %v6550 = vadd.f32 %v6365, %v6549
    %v6551 = vpop.f32.mrb[0].mxu0
    %v6552 = vadd.f32 %v6365, %v6551
    %6553 = vmatprep.mubr.f32.mxu0 0.0
    %6554 = vmatmul.mubr.f32.gmra.mrb[0].mxu0 %v6386
    %v6555 = vpop.f32.mrb[0].mxu0
    %v6556 = vadd.f32 %v6370, %v6555
    %v6557 = vpop.f32.mrb[0].mxu0
    %v6558 = vadd.f32 %v6370, %v6557
    %6559 = vmatprep.mubr.f32.mxu0 0.0
    %6560 = vmatmul.mubr.f32.gmra.mrb[0].mxu0 %v6389
    %v6561 = vpop.f32.mrb[0].mxu0
    %v6562 = vadd.f32 %v6375, %v6561
    %v6563 = vpop.f32.mrb[0].mxu0
    %v6564 = vadd.f32 %v6375, %v6563
    %6565 = vmatprep.mubr.f32.mxu0 0.0
    %6566 = vmatmul.mubr.f32.gmra.mrb[0].mxu0 %v6392
    %v6567 = vpop.f32.mrb[0].mxu0
    %v6568 = vadd.f32 %v6380, %v6567
    %v6569 = vpop.f32.mrb[0].mxu0
    %v6570 = vadd.f32 %v6380, %v6569
    %6571 = vdwg.mxu0
    %v6572 = vadd.f32 %v6243, %v6461
    %v6573 = vadd.f32 %v6245, %v6463
    %v6574 = vadd.f32 %v6332, %v6550
    %v6575 = vadd.f32 %v6334, %v6552
    %v6576 = vadd.f32 %v6249, %v6467
    %v6577 = vadd.f32 %v6251, %v6469
    %v6578 = vadd.f32 %v6338, %v6556
    %v6579 = vadd.f32 %v6340, %v6558
    %v6580 = vadd.f32 %v6255, %v6473
    %v6581 = vadd.f32 %v6257, %v6475
    %v6582 = vadd.f32 %v6344, %v6562
    %v6583 = vadd.f32 %v6346, %v6564
    %v6584 = vadd.f32 %v6261, %v6479
    %v6585 = vadd.f32 %v6263, %v6481
    %v6586 = vadd.f32 %v6350, %v6568
    %v6587 = vadd.f32 %v6352, %v6570
    %v6588 = vmax.f32 %v6572, 0.0
    %v6589 = vmax.f32 %v6573, 0.0
    %v6590 = vmax.f32 %v6574, 0.0
    %v6591 = vmax.f32 %v6575, 0.0
    %v6592 = vmax.f32 %v6576, 0.0
    %v6593 = vmax.f32 %v6577, 0.0
    %v6594 = vmax.f32 %v6578, 0.0
    %v6595 = vmax.f32 %v6579, 0.0
    %v6596 = vmax.f32 %v6580, 0.0
    %v6597 = vmax.f32 %v6581, 0.0
    %v6598 = vmax.f32 %v6582, 0.0
    %v6599 = vmax.f32 %v6583, 0.0
    %v6600 = vmax.f32 %v6584, 0.0
    %v6601 = vmax.f32 %v6585, 0.0
    %v6602 = vmax.f32 %v6586, 0.0
    %v6603 = vmax.f32 %v6587, 0.0
    %v6604 = vld [vmem:[%s17] sm:$0xff]
    %v6605 = vld [vmem:[%s17 + $0x8] sm:$0xff]
    %v6606 = vld [vmem:[%s17 + $0x10] sm:$0xff]
    %v6607 = vld [vmem:[%s17 + $0x18] sm:$0xff]
    %v6608 = vld [vmem:[%s17 + $0x20] sm:$0xff]
    %v6609 = vld [vmem:[%s17 + $0x28] sm:$0xff]
    %v6610 = vld [vmem:[%s17 + $0x30] sm:$0xff]
    %v6611 = vld [vmem:[%s17 + $0x38] sm:$0xff]
    %v6612 = vld [vmem:[%s17 + $0x40] sm:$0xff]
    %v6613 = vld [vmem:[%s17 + $0x48] sm:$0xff]
    %v6614 = vld [vmem:[%s17 + $0x50] sm:$0xff]
    %v6615 = vld [vmem:[%s17 + $0x58] sm:$0xff]
    %v6617 = vsel %vm6163, %v6604, 0
    %v6620 = vsel %vm6163, %v6605, 0
    %v6623 = vsel %vm6163, %v6606, 0
    %v6626 = vsel %vm6163, %v6607, 0
    %v6629 = vsel %vm6163, %v6608, 0
    %v6632 = vsel %vm6163, %v6609, 0
    %v6635 = vsel %vm6163, %v6610, 0
    %v6638 = vsel %vm6163, %v6611, 0
    %v6641 = vsel %vm6163, %v6612, 0
    %v6644 = vsel %vm6163, %v6613, 0
    %v6647 = vsel %vm6163, %v6614, 0
    %v6650 = vsel %vm6163, %v6615, 0
    %6652 = vmatprep.subr.mxu0 %v6589
    %6653 = vmatpush1.msra.mxu0 %v6588
    %6654 = vmatprep.subr.mxu0 %v6593
    %6655 = vmatpush1.msra.mxu0 %v6592
    %6656 = vmatprep.subr.mxu0 %v6597
    %6657 = vmatpush1.msra.mxu0 %v6596
    %6658 = vmatprep.subr.mxu0 %v6601
    %6659 = vmatpush1.msra.mxu0 %v6600
    %6660 = vmatprep.subr.mxu0 0.0
    %6661 = vmatpush1.msra.mxu0 0.0
    %6662 = vmatprep.subr.mxu0 0.0
    %6663 = vmatpush1.msra.mxu0 0.0
    %6664 = vmatprep.subr.mxu0 0.0
    %6665 = vmatpush1.msra.mxu0 0.0
    %6666 = vmatprep.subr.mxu0 0.0
    %6667 = vmatpush1.msra.mxu0 0.0
    %6668 = vmatprep.subr.mxu0 0.0
    %6669 = vmatpush1.msra.mxu0 0.0
    %6670 = vmatprep.subr.mxu0 0.0
    %6671 = vmatpush1.msra.mxu0 0.0
    %6672 = vmatprep.subr.mxu0 0.0
    %6673 = vmatpush1.msra.mxu0 0.0
    %6674 = vmatprep.subr.mxu0 0.0
    %6675 = vmatpush1.msra.mxu0 0.0
    %6676 = vmatprep.subr.mxu0 0.0
    %6677 = vmatpush1.msra.mxu0 0.0
    %6678 = vmatprep.subr.mxu0 0.0
    %6679 = vmatpush1.msra.mxu0 0.0
    %6680 = vmatprep.subr.mxu0 0.0
    %6681 = vmatpush1.msra.mxu0 0.0
    %6682 = vmatprep.subr.mxu0 0.0
    %6683 = vmatpush1.msra.mxu0 0.0
    %6684 = vmatprep.subr.mxu0 0.0
    %6685 = vmatpush1.msra.mxu0 0.0
    %6686 = vmatprep.subr.mxu0 0.0
    %6687 = vmatpush1.msra.mxu0 0.0
    %6688 = vmatprep.subr.mxu0 0.0
    %6689 = vmatpush1.msra.mxu0 0.0
    %6690 = vmatprep.subr.mxu0 0.0
    %6691 = vmatpush1.msra.mxu0 0.0
    %6692 = vmatprep.subr.mxu0 0.0
    %6693 = vmatpush1.msra.mxu0 0.0
    %6694 = vmatprep.subr.mxu0 0.0
    %6695 = vmatpush1.msra.mxu0 0.0
    %6696 = vmatprep.subr.mxu0 0.0
    %6697 = vmatpush1.msra.mxu0 0.0
    %6698 = vmatprep.subr.mxu0 0.0
    %6699 = vmatpush1.msra.mxu0 0.0
    %6700 = vmatprep.subr.mxu0 0.0
    %6701 = vmatpush1.msra.mxu0 0.0
    %6702 = vmatprep.subr.mxu0 0.0
    %6703 = vmatpush1.msra.mxu0 0.0
    %6704 = vmatprep.subr.mxu0 0.0
    %6705 = vmatpush1.msra.mxu0 0.0
    %6706 = vmatprep.subr.mxu0 0.0
    %6707 = vmatpush1.msra.mxu0 0.0
    %6708 = vmatprep.subr.mxu0 0.0
    %6709 = vmatpush1.msra.mxu0 0.0
    %6710 = vmatprep.subr.mxu0 0.0
    %6711 = vmatpush1.msra.mxu0 0.0
    %6712 = vmatprep.subr.mxu0 0.0
    %6713 = vmatpush1.msra.mxu0 0.0
    %6714 = vmatprep.subr.mxu0 0.0
    %6715 = vmatpush1.msra.mxu0 0.0
    %6716 = vmatprep.mubr.f32.mxu0 0.0
    %6717 = vmatmul.mubr.f32.gmra.mrb[0].mxu0 %v6617
    %v6718 = vpop.f32.mrb[0].mxu0
    %v6719 = vadd.f32 0.0, %v6718
    %v6720 = vpop.f32.mrb[0].mxu0
    %v6721 = vadd.f32 0.0, %v6720
    %6722 = vmatprep.mubr.f32.mxu0 0.0
    %6723 = vmatmul.mubr.f32.gmra.mrb[0].mxu0 %v6620
    %v6724 = vpop.f32.mrb[0].mxu0
    %v6725 = vadd.f32 0.0, %v6724
    %v6726 = vpop.f32.mrb[0].mxu0
    %v6727 = vadd.f32 0.0, %v6726
    %6728 = vmatprep.mubr.f32.mxu0 0.0
    %6729 = vmatmul.mubr.f32.gmra.mrb[0].mxu0 %v6623
    %v6730 = vpop.f32.mrb[0].mxu0
    %v6731 = vadd.f32 0.0, %v6730
    %v6732 = vpop.f32.mrb[0].mxu0
    %v6733 = vadd.f32 0.0, %v6732
    %6734 = vmatprep.mubr.f32.mxu0 0.0
    %6735 = vmatmul.mubr.f32.gmra.mrb[0].mxu0 %v6626
    %v6736 = vpop.f32.mrb[0].mxu0
    %v6737 = vadd.f32 0.0, %v6736
    %v6738 = vpop.f32.mrb[0].mxu0
    %v6739 = vadd.f32 0.0, %v6738
    %6740 = vmatprep.mubr.f32.mxu0 0.0
    %6741 = vmatmul.mubr.f32.gmra.mrb[0].mxu0 %v6629
    %v6742 = vpop.f32.mrb[0].mxu0
    %v6743 = vadd.f32 0.0, %v6742
    %v6744 = vpop.f32.mrb[0].mxu0
    %v6745 = vadd.f32 0.0, %v6744
    %6746 = vmatprep.mubr.f32.mxu0 0.0
    %6747 = vmatmul.mubr.f32.gmra.mrb[0].mxu0 %v6632
    %v6748 = vpop.f32.mrb[0].mxu0
    %v6749 = vadd.f32 0.0, %v6748
    %v6750 = vpop.f32.mrb[0].mxu0
    %v6751 = vadd.f32 0.0, %v6750
    %6752 = vmatprep.mubr.f32.mxu0 0.0
    %6753 = vmatmul.mubr.f32.gmra.mrb[0].mxu0 %v6635
    %v6754 = vpop.f32.mrb[0].mxu0
    %v6755 = vadd.f32 0.0, %v6754
    %v6756 = vpop.f32.mrb[0].mxu0
    %v6757 = vadd.f32 0.0, %v6756
    %6758 = vmatprep.mubr.f32.mxu0 0.0
    %6759 = vmatmul.mubr.f32.gmra.mrb[0].mxu0 %v6638
    %v6760 = vpop.f32.mrb[0].mxu0
    %v6761 = vadd.f32 0.0, %v6760
    %v6762 = vpop.f32.mrb[0].mxu0
    %v6763 = vadd.f32 0.0, %v6762
    %6764 = vmatprep.mubr.f32.mxu0 0.0
    %6765 = vmatmul.mubr.f32.gmra.mrb[0].mxu0 %v6641
    %v6766 = vpop.f32.mrb[0].mxu0
    %v6767 = vadd.f32 0.0, %v6766
    %v6768 = vpop.f32.mrb[0].mxu0
    %v6769 = vadd.f32 0.0, %v6768
    %6770 = vmatprep.mubr.f32.mxu0 0.0
    %6771 = vmatmul.mubr.f32.gmra.mrb[0].mxu0 %v6644
    %v6772 = vpop.f32.mrb[0].mxu0
    %v6773 = vadd.f32 0.0, %v6772
    %v6774 = vpop.f32.mrb[0].mxu0
    %v6775 = vadd.f32 0.0, %v6774
    %6776 = vmatprep.mubr.f32.mxu0 0.0
    %6777 = vmatmul.mubr.f32.gmra.mrb[0].mxu0 %v6647
    %v6778 = vpop.f32.mrb[0].mxu0
    %v6779 = vadd.f32 0.0, %v6778
    %v6780 = vpop.f32.mrb[0].mxu0
    %v6781 = vadd.f32 0.0, %v6780
    %6782 = vmatprep.mubr.f32.mxu0 0.0
    %6783 = vmatmul.mubr.f32.gmra.mrb[0].mxu0 %v6650
    %v6784 = vpop.f32.mrb[0].mxu0
    %v6785 = vadd.f32 0.0, %v6784
    %v6786 = vpop.f32.mrb[0].mxu0
    %v6787 = vadd.f32 0.0, %v6786
    %6788 = vdwg.mxu0
    %6789 = vmatprep.subr.mxu0 %v6591
    %6790 = vmatpush1.msra.mxu0 %v6590
    %6791 = vmatprep.subr.mxu0 %v6595
    %6792 = vmatpush1.msra.mxu0 %v6594
    %6793 = vmatprep.subr.mxu0 %v6599
    %6794 = vmatpush1.msra.mxu0 %v6598
    %6795 = vmatprep.subr.mxu0 %v6603
    %6796 = vmatpush1.msra.mxu0 %v6602
    %6797 = vmatprep.subr.mxu0 0.0
    %6798 = vmatpush1.msra.mxu0 0.0
    %6799 = vmatprep.subr.mxu0 0.0
    %6800 = vmatpush1.msra.mxu0 0.0
    %6801 = vmatprep.subr.mxu0 0.0
    %6802 = vmatpush1.msra.mxu0 0.0
    %6803 = vmatprep.subr.mxu0 0.0
    %6804 = vmatpush1.msra.mxu0 0.0
    %6805 = vmatprep.subr.mxu0 0.0
    %6806 = vmatpush1.msra.mxu0 0.0
    %6807 = vmatprep.subr.mxu0 0.0
    %6808 = vmatpush1.msra.mxu0 0.0
    %6809 = vmatprep.subr.mxu0 0.0
    %6810 = vmatpush1.msra.mxu0 0.0
    %6811 = vmatprep.subr.mxu0 0.0
    %6812 = vmatpush1.msra.mxu0 0.0
    %6813 = vmatprep.subr.mxu0 0.0
    %6814 = vmatpush1.msra.mxu0 0.0
    %6815 = vmatprep.subr.mxu0 0.0
    %6816 = vmatpush1.msra.mxu0 0.0
    %6817 = vmatprep.subr.mxu0 0.0
    %6818 = vmatpush1.msra.mxu0 0.0
    %6819 = vmatprep.subr.mxu0 0.0
    %6820 = vmatpush1.msra.mxu0 0.0
    %6821 = vmatprep.subr.mxu0 0.0
    %6822 = vmatpush1.msra.mxu0 0.0
    %6823 = vmatprep.subr.mxu0 0.0
    %6824 = vmatpush1.msra.mxu0 0.0
    %6825 = vmatprep.subr.mxu0 0.0
    %6826 = vmatpush1.msra.mxu0 0.0
    %6827 = vmatprep.subr.mxu0 0.0
    %6828 = vmatpush1.msra.mxu0 0.0
    %6829 = vmatprep.subr.mxu0 0.0
    %6830 = vmatpush1.msra.mxu0 0.0
    %6831 = vmatprep.subr.mxu0 0.0
    %6832 = vmatpush1.msra.mxu0 0.0
    %6833 = vmatprep.subr.mxu0 0.0
    %6834 = vmatpush1.msra.mxu0 0.0
    %6835 = vmatprep.subr.mxu0 0.0
    %6836 = vmatpush1.msra.mxu0 0.0
    %6837 = vmatprep.subr.mxu0 0.0
    %6838 = vmatpush1.msra.mxu0 0.0
    %6839 = vmatprep.subr.mxu0 0.0
    %6840 = vmatpush1.msra.mxu0 0.0
    %6841 = vmatprep.subr.mxu0 0.0
    %6842 = vmatpush1.msra.mxu0 0.0
    %6843 = vmatprep.subr.mxu0 0.0
    %6844 = vmatpush1.msra.mxu0 0.0
    %6845 = vmatprep.subr.mxu0 0.0
    %6846 = vmatpush1.msra.mxu0 0.0
    %6847 = vmatprep.subr.mxu0 0.0
    %6848 = vmatpush1.msra.mxu0 0.0
    %6849 = vmatprep.subr.mxu0 0.0
    %6850 = vmatpush1.msra.mxu0 0.0
    %6851 = vmatprep.subr.mxu0 0.0
    %6852 = vmatpush1.msra.mxu0 0.0
    %6853 = vmatprep.mubr.f32.mxu0 0.0
    %6854 = vmatmul.mubr.f32.gmra.mrb[0].mxu0 %v6617
    %v6855 = vpop.f32.mrb[0].mxu0
    %v6856 = vadd.f32 0.0, %v6855
    %v6857 = vpop.f32.mrb[0].mxu0
    %v6858 = vadd.f32 0.0, %v6857
    %6859 = vmatprep.mubr.f32.mxu0 0.0
    %6860 = vmatmul.mubr.f32.gmra.mrb[0].mxu0 %v6620
    %v6861 = vpop.f32.mrb[0].mxu0
    %v6862 = vadd.f32 0.0, %v6861
    %v6863 = vpop.f32.mrb[0].mxu0
    %v6864 = vadd.f32 0.0, %v6863
    %6865 = vmatprep.mubr.f32.mxu0 0.0
    %6866 = vmatmul.mubr.f32.gmra.mrb[0].mxu0 %v6623
    %v6867 = vpop.f32.mrb[0].mxu0
    %v6868 = vadd.f32 0.0, %v6867
    %v6869 = vpop.f32.mrb[0].mxu0
    %v6870 = vadd.f32 0.0, %v6869
    %6871 = vmatprep.mubr.f32.mxu0 0.0
    %6872 = vmatmul.mubr.f32.gmra.mrb[0].mxu0 %v6626
    %v6873 = vpop.f32.mrb[0].mxu0
    %v6874 = vadd.f32 0.0, %v6873
    %v6875 = vpop.f32.mrb[0].mxu0
    %v6876 = vadd.f32 0.0, %v6875
    %6877 = vmatprep.mubr.f32.mxu0 0.0
    %6878 = vmatmul.mubr.f32.gmra.mrb[0].mxu0 %v6629
    %v6879 = vpop.f32.mrb[0].mxu0
    %v6880 = vadd.f32 0.0, %v6879
    %v6881 = vpop.f32.mrb[0].mxu0
    %v6882 = vadd.f32 0.0, %v6881
    %6883 = vmatprep.mubr.f32.mxu0 0.0
    %6884 = vmatmul.mubr.f32.gmra.mrb[0].mxu0 %v6632
    %v6885 = vpop.f32.mrb[0].mxu0
    %v6886 = vadd.f32 0.0, %v6885
    %v6887 = vpop.f32.mrb[0].mxu0
    %v6888 = vadd.f32 0.0, %v6887
    %6889 = vmatprep.mubr.f32.mxu0 0.0
    %6890 = vmatmul.mubr.f32.gmra.mrb[0].mxu0 %v6635
    %v6891 = vpop.f32.mrb[0].mxu0
    %v6892 = vadd.f32 0.0, %v6891
    %v6893 = vpop.f32.mrb[0].mxu0
    %v6894 = vadd.f32 0.0, %v6893
    %6895 = vmatprep.mubr.f32.mxu0 0.0
    %6896 = vmatmul.mubr.f32.gmra.mrb[0].mxu0 %v6638
    %v6897 = vpop.f32.mrb[0].mxu0
    %v6898 = vadd.f32 0.0, %v6897
    %v6899 = vpop.f32.mrb[0].mxu0
    %v6900 = vadd.f32 0.0, %v6899
    %6901 = vmatprep.mubr.f32.mxu0 0.0
    %6902 = vmatmul.mubr.f32.gmra.mrb[0].mxu0 %v6641
    %v6903 = vpop.f32.mrb[0].mxu0
    %v6904 = vadd.f32 0.0, %v6903
    %v6905 = vpop.f32.mrb[0].mxu0
    %v6906 = vadd.f32 0.0, %v6905
    %6907 = vmatprep.mubr.f32.mxu0 0.0
    %6908 = vmatmul.mubr.f32.gmra.mrb[0].mxu0 %v6644
    %v6909 = vpop.f32.mrb[0].mxu0
    %v6910 = vadd.f32 0.0, %v6909
    %v6911 = vpop.f32.mrb[0].mxu0
    %v6912 = vadd.f32 0.0, %v6911
    %6913 = vmatprep.mubr.f32.mxu0 0.0
    %6914 = vmatmul.mubr.f32.gmra.mrb[0].mxu0 %v6647
    %v6915 = vpop.f32.mrb[0].mxu0
    %v6916 = vadd.f32 0.0, %v6915
    %v6917 = vpop.f32.mrb[0].mxu0
    %v6918 = vadd.f32 0.0, %v6917
    %6919 = vmatprep.mubr.f32.mxu0 0.0
    %6920 = vmatmul.mubr.f32.gmra.mrb[0].mxu0 %v6650
    %v6921 = vpop.f32.mrb[0].mxu0
    %v6922 = vadd.f32 0.0, %v6921
    %v6923 = vpop.f32.mrb[0].mxu0
    %v6924 = vadd.f32 0.0, %v6923
    %6925 = vdwg.mxu0
    %v6926 = vld [vmem:[#allocation19] sm:$0xff]
    %v6927 = vld [vmem:[#allocation19 + $0x8] sm:$0xff]
    %v6928 = vld [vmem:[#allocation19 + $0x10] sm:$0xff]
    %v6929 = vld [vmem:[#allocation19 + $0x18] sm:$0xff]
    %v6930 = vld [vmem:[#allocation19 + $0x20] sm:$0xff]
    %v6931 = vld [vmem:[#allocation19 + $0x28] sm:$0xff]
    %v6932 = vld [vmem:[#allocation19 + $0x30] sm:$0xff]
    %v6933 = vld [vmem:[#allocation19 + $0x38] sm:$0xff]
    %v6934 = vld [vmem:[#allocation19 + $0x40] sm:$0xff]
    %v6935 = vld [vmem:[#allocation19 + $0x48] sm:$0xff]
    %v6936 = vld [vmem:[#allocation19 + $0x50] sm:$0xff]
    %v6937 = vld [vmem:[#allocation19 + $0x58] sm:$0xff]
    %v6938 = vld [vmem:[#allocation19 + $0x60] sm:$0xff]
    %v6939 = vld [vmem:[#allocation19 + $0x68] sm:$0xff]
    %v6940 = vld [vmem:[#allocation19 + $0x70] sm:$0xff]
    %v6941 = vld [vmem:[#allocation19 + $0x78] sm:$0xff]
    %6942 = vmatprep.subr.mxu0 %v300
    %6943 = vmatpush1.msra.mxu0 %v299
    %6944 = vmatprep.subr.mxu0 %v304
    %6945 = vmatpush1.msra.mxu0 %v303
    %6946 = vmatprep.subr.mxu0 %v308
    %6947 = vmatpush1.msra.mxu0 %v307
    %6948 = vmatprep.subr.mxu0 %v312
    %6949 = vmatpush1.msra.mxu0 %v311
    %6950 = vmatprep.subr.mxu0 %v316
    %6951 = vmatpush1.msra.mxu0 %v315
    %6952 = vmatprep.subr.mxu0 %v320
    %6953 = vmatpush1.msra.mxu0 %v319
    %6954 = vmatprep.subr.mxu0 %v324
    %6955 = vmatpush1.msra.mxu0 %v323
    %6956 = vmatprep.subr.mxu0 %v328
    %6957 = vmatpush1.msra.mxu0 %v327
    %6958 = vmatprep.subr.mxu0 %v332
    %6959 = vmatpush1.msra.mxu0 %v331
    %6960 = vmatprep.subr.mxu0 %v336
    %6961 = vmatpush1.msra.mxu0 %v335
    %6962 = vmatprep.subr.mxu0 %v340
    %6963 = vmatpush1.msra.mxu0 %v339
    %6964 = vmatprep.subr.mxu0 %v344
    %6965 = vmatpush1.msra.mxu0 %v343
    %6966 = vmatprep.subr.mxu0 %v348
    %6967 = vmatpush1.msra.mxu0 %v347
    %6968 = vmatprep.subr.mxu0 %v352
    %6969 = vmatpush1.msra.mxu0 %v351
    %6970 = vmatprep.subr.mxu0 %v356
    %6971 = vmatpush1.msra.mxu0 %v355
    %6972 = vmatprep.subr.mxu0 %v360
    %6973 = vmatpush1.msra.mxu0 %v359
    %6974 = vmatprep.subr.mxu0 %v364
    %6975 = vmatpush1.msra.mxu0 %v363
    %6976 = vmatprep.subr.mxu0 %v368
    %6977 = vmatpush1.msra.mxu0 %v367
    %6978 = vmatprep.subr.mxu0 %v372
    %6979 = vmatpush1.msra.mxu0 %v371
    %6980 = vmatprep.subr.mxu0 %v376
    %6981 = vmatpush1.msra.mxu0 %v375
    %6982 = vmatprep.subr.mxu0 %v380
    %6983 = vmatpush1.msra.mxu0 %v379
    %6984 = vmatprep.subr.mxu0 %v384
    %6985 = vmatpush1.msra.mxu0 %v383
    %6986 = vmatprep.subr.mxu0 %v388
    %6987 = vmatpush1.msra.mxu0 %v387
    %6988 = vmatprep.subr.mxu0 %v392
    %6989 = vmatpush1.msra.mxu0 %v391
    %6990 = vmatprep.subr.mxu0 %v396
    %6991 = vmatpush1.msra.mxu0 %v395
    %6992 = vmatprep.subr.mxu0 %v400
    %6993 = vmatpush1.msra.mxu0 %v399
    %6994 = vmatprep.subr.mxu0 %v404
    %6995 = vmatpush1.msra.mxu0 %v403
    %6996 = vmatprep.subr.mxu0 %v408
    %6997 = vmatpush1.msra.mxu0 %v407
    %6998 = vmatprep.subr.mxu0 %v412
    %6999 = vmatpush1.msra.mxu0 %v411
    %7000 = vmatprep.subr.mxu0 %v416
    %7001 = vmatpush1.msra.mxu0 %v415
    %7002 = vmatprep.subr.mxu0 %v420
    %7003 = vmatpush1.msra.mxu0 %v419
    %7004 = vmatprep.subr.mxu0 %v424
    %7005 = vmatpush1.msra.mxu0 %v423
    %7006 = vmatprep.mubr.f32.mxu0 %v6721
    %7007 = vmatmul.mubr.f32.gmra.mrb[0].mxu0 %v6719
    %v7008 = vpop.f32.mrb[0].mxu0
    %v7009 = vadd.f32 0.0, %v7008
    %v7010 = vpop.f32.mrb[0].mxu0
    %v7011 = vadd.f32 0.0, %v7010
    %7012 = vmatprep.mubr.f32.mxu0 %v6727
    %7013 = vmatmul.mubr.f32.gmra.mrb[0].mxu0 %v6725
    %v7014 = vpop.f32.mrb[0].mxu0
    %v7015 = vadd.f32 0.0, %v7014
    %v7016 = vpop.f32.mrb[0].mxu0
    %v7017 = vadd.f32 0.0, %v7016
    %7018 = vmatprep.mubr.f32.mxu0 %v6733
    %7019 = vmatmul.mubr.f32.gmra.mrb[0].mxu0 %v6731
    %v7020 = vpop.f32.mrb[0].mxu0
    %v7021 = vadd.f32 0.0, %v7020
    %v7022 = vpop.f32.mrb[0].mxu0
    %v7023 = vadd.f32 0.0, %v7022
    %7024 = vmatprep.mubr.f32.mxu0 %v6739
    %7025 = vmatmul.mubr.f32.gmra.mrb[0].mxu0 %v6737
    %v7026 = vpop.f32.mrb[0].mxu0
    %v7027 = vadd.f32 0.0, %v7026
    %v7028 = vpop.f32.mrb[0].mxu0
    %v7029 = vadd.f32 0.0, %v7028
    %7030 = vdwg.mxu0
    %7031 = vmatprep.subr.mxu0 %v428
    %7032 = vmatpush1.msra.mxu0 %v427
    %7033 = vmatprep.subr.mxu0 %v432
    %7034 = vmatpush1.msra.mxu0 %v431
    %7035 = vmatprep.subr.mxu0 %v436
    %7036 = vmatpush1.msra.mxu0 %v435
    %7037 = vmatprep.subr.mxu0 %v440
    %7038 = vmatpush1.msra.mxu0 %v439
    %7039 = vmatprep.subr.mxu0 %v444
    %7040 = vmatpush1.msra.mxu0 %v443
    %7041 = vmatprep.subr.mxu0 %v448
    %7042 = vmatpush1.msra.mxu0 %v447
    %7043 = vmatprep.subr.mxu0 %v452
    %7044 = vmatpush1.msra.mxu0 %v451
    %7045 = vmatprep.subr.mxu0 %v456
    %7046 = vmatpush1.msra.mxu0 %v455
    %7047 = vmatprep.subr.mxu0 %v460
    %7048 = vmatpush1.msra.mxu0 %v459
    %7049 = vmatprep.subr.mxu0 %v464
    %7050 = vmatpush1.msra.mxu0 %v463
    %7051 = vmatprep.subr.mxu0 %v468
    %7052 = vmatpush1.msra.mxu0 %v467
    %7053 = vmatprep.subr.mxu0 %v472
    %7054 = vmatpush1.msra.mxu0 %v471
    %7055 = vmatprep.subr.mxu0 %v476
    %7056 = vmatpush1.msra.mxu0 %v475
    %7057 = vmatprep.subr.mxu0 %v480
    %7058 = vmatpush1.msra.mxu0 %v479
    %7059 = vmatprep.subr.mxu0 %v484
    %7060 = vmatpush1.msra.mxu0 %v483
    %7061 = vmatprep.subr.mxu0 %v488
    %7062 = vmatpush1.msra.mxu0 %v487
    %7063 = vmatprep.subr.mxu0 %v492
    %7064 = vmatpush1.msra.mxu0 %v491
    %7065 = vmatprep.subr.mxu0 %v496
    %7066 = vmatpush1.msra.mxu0 %v495
    %7067 = vmatprep.subr.mxu0 %v500
    %7068 = vmatpush1.msra.mxu0 %v499
    %7069 = vmatprep.subr.mxu0 %v504
    %7070 = vmatpush1.msra.mxu0 %v503
    %7071 = vmatprep.subr.mxu0 %v508
    %7072 = vmatpush1.msra.mxu0 %v507
    %7073 = vmatprep.subr.mxu0 %v512
    %7074 = vmatpush1.msra.mxu0 %v511
    %7075 = vmatprep.subr.mxu0 %v516
    %7076 = vmatpush1.msra.mxu0 %v515
    %7077 = vmatprep.subr.mxu0 %v520
    %7078 = vmatpush1.msra.mxu0 %v519
    %7079 = vmatprep.subr.mxu0 %v524
    %7080 = vmatpush1.msra.mxu0 %v523
    %7081 = vmatprep.subr.mxu0 %v528
    %7082 = vmatpush1.msra.mxu0 %v527
    %7083 = vmatprep.subr.mxu0 %v532
    %7084 = vmatpush1.msra.mxu0 %v531
    %7085 = vmatprep.subr.mxu0 %v536
    %7086 = vmatpush1.msra.mxu0 %v535
    %7087 = vmatprep.subr.mxu0 %v540
    %7088 = vmatpush1.msra.mxu0 %v539
    %7089 = vmatprep.subr.mxu0 %v544
    %7090 = vmatpush1.msra.mxu0 %v543
    %7091 = vmatprep.subr.mxu0 %v548
    %7092 = vmatpush1.msra.mxu0 %v547
    %7093 = vmatprep.subr.mxu0 %v552
    %7094 = vmatpush1.msra.mxu0 %v551
    %7095 = vmatprep.mubr.f32.mxu0 %v6858
    %7096 = vmatmul.mubr.f32.gmra.mrb[0].mxu0 %v6856
    %v7097 = vpop.f32.mrb[0].mxu0
    %v7098 = vadd.f32 %v7009, %v7097
    %v7099 = vpop.f32.mrb[0].mxu0
    %v7100 = vadd.f32 %v7011, %v7099
    %7101 = vmatprep.mubr.f32.mxu0 %v6864
    %7102 = vmatmul.mubr.f32.gmra.mrb[0].mxu0 %v6862
    %v7103 = vpop.f32.mrb[0].mxu0
    %v7104 = vadd.f32 %v7015, %v7103
    %v7105 = vpop.f32.mrb[0].mxu0
    %v7106 = vadd.f32 %v7017, %v7105
    %7107 = vmatprep.mubr.f32.mxu0 %v6870
    %7108 = vmatmul.mubr.f32.gmra.mrb[0].mxu0 %v6868
    %v7109 = vpop.f32.mrb[0].mxu0
    %v7110 = vadd.f32 %v7021, %v7109
    %v7111 = vpop.f32.mrb[0].mxu0
    %v7112 = vadd.f32 %v7023, %v7111
    %7113 = vmatprep.mubr.f32.mxu0 %v6876
    %7114 = vmatmul.mubr.f32.gmra.mrb[0].mxu0 %v6874
    %v7115 = vpop.f32.mrb[0].mxu0
    %v7116 = vadd.f32 %v7027, %v7115
    %v7117 = vpop.f32.mrb[0].mxu0
    %v7118 = vadd.f32 %v7029, %v7117
    %7119 = vdwg.mxu0
    %7120 = vmatprep.subr.mxu0 %v302
    %7121 = vmatpush1.msra.mxu0 %v301
    %7122 = vmatprep.subr.mxu0 %v306
    %7123 = vmatpush1.msra.mxu0 %v305
    %7124 = vmatprep.subr.mxu0 %v310
    %7125 = vmatpush1.msra.mxu0 %v309
    %7126 = vmatprep.subr.mxu0 %v314
    %7127 = vmatpush1.msra.mxu0 %v313
    %7128 = vmatprep.subr.mxu0 %v318
    %7129 = vmatpush1.msra.mxu0 %v317
    %7130 = vmatprep.subr.mxu0 %v322
    %7131 = vmatpush1.msra.mxu0 %v321
    %7132 = vmatprep.subr.mxu0 %v326
    %7133 = vmatpush1.msra.mxu0 %v325
    %7134 = vmatprep.subr.mxu0 %v330
    %7135 = vmatpush1.msra.mxu0 %v329
    %7136 = vmatprep.subr.mxu0 %v334
    %7137 = vmatpush1.msra.mxu0 %v333
    %7138 = vmatprep.subr.mxu0 %v338
    %7139 = vmatpush1.msra.mxu0 %v337
    %7140 = vmatprep.subr.mxu0 %v342
    %7141 = vmatpush1.msra.mxu0 %v341
    %7142 = vmatprep.subr.mxu0 %v346
    %7143 = vmatpush1.msra.mxu0 %v345
    %7144 = vmatprep.subr.mxu0 %v350
    %7145 = vmatpush1.msra.mxu0 %v349
    %7146 = vmatprep.subr.mxu0 %v354
    %7147 = vmatpush1.msra.mxu0 %v353
    %7148 = vmatprep.subr.mxu0 %v358
    %7149 = vmatpush1.msra.mxu0 %v357
    %7150 = vmatprep.subr.mxu0 %v362
    %7151 = vmatpush1.msra.mxu0 %v361
    %7152 = vmatprep.subr.mxu0 %v366
    %7153 = vmatpush1.msra.mxu0 %v365
    %7154 = vmatprep.subr.mxu0 %v370
    %7155 = vmatpush1.msra.mxu0 %v369
    %7156 = vmatprep.subr.mxu0 %v374
    %7157 = vmatpush1.msra.mxu0 %v373
    %7158 = vmatprep.subr.mxu0 %v378
    %7159 = vmatpush1.msra.mxu0 %v377
    %7160 = vmatprep.subr.mxu0 %v382
    %7161 = vmatpush1.msra.mxu0 %v381
    %7162 = vmatprep.subr.mxu0 %v386
    %7163 = vmatpush1.msra.mxu0 %v385
    %7164 = vmatprep.subr.mxu0 %v390
    %7165 = vmatpush1.msra.mxu0 %v389
    %7166 = vmatprep.subr.mxu0 %v394
    %7167 = vmatpush1.msra.mxu0 %v393
    %7168 = vmatprep.subr.mxu0 %v398
    %7169 = vmatpush1.msra.mxu0 %v397
    %7170 = vmatprep.subr.mxu0 %v402
    %7171 = vmatpush1.msra.mxu0 %v401
    %7172 = vmatprep.subr.mxu0 %v406
    %7173 = vmatpush1.msra.mxu0 %v405
    %7174 = vmatprep.subr.mxu0 %v410
    %7175 = vmatpush1.msra.mxu0 %v409
    %7176 = vmatprep.subr.mxu0 %v414
    %7177 = vmatpush1.msra.mxu0 %v413
    %7178 = vmatprep.subr.mxu0 %v418
    %7179 = vmatpush1.msra.mxu0 %v417
    %7180 = vmatprep.subr.mxu0 %v422
    %7181 = vmatpush1.msra.mxu0 %v421
    %7182 = vmatprep.subr.mxu0 %v426
    %7183 = vmatpush1.msra.mxu0 %v425
    %7184 = vmatprep.mubr.f32.mxu0 %v6721
    %7185 = vmatmul.mubr.f32.gmra.mrb[0].mxu0 %v6719
    %v7186 = vpop.f32.mrb[0].mxu0
    %v7187 = vadd.f32 0.0, %v7186
    %v7188 = vpop.f32.mrb[0].mxu0
    %v7189 = vadd.f32 0.0, %v7188
    %7190 = vmatprep.mubr.f32.mxu0 %v6727
    %7191 = vmatmul.mubr.f32.gmra.mrb[0].mxu0 %v6725
    %v7192 = vpop.f32.mrb[0].mxu0
    %v7193 = vadd.f32 0.0, %v7192
    %v7194 = vpop.f32.mrb[0].mxu0
    %v7195 = vadd.f32 0.0, %v7194
    %7196 = vmatprep.mubr.f32.mxu0 %v6733
    %7197 = vmatmul.mubr.f32.gmra.mrb[0].mxu0 %v6731
    %v7198 = vpop.f32.mrb[0].mxu0
    %v7199 = vadd.f32 0.0, %v7198
    %v7200 = vpop.f32.mrb[0].mxu0
    %v7201 = vadd.f32 0.0, %v7200
    %7202 = vmatprep.mubr.f32.mxu0 %v6739
    %7203 = vmatmul.mubr.f32.gmra.mrb[0].mxu0 %v6737
    %v7204 = vpop.f32.mrb[0].mxu0
    %v7205 = vadd.f32 0.0, %v7204
    %v7206 = vpop.f32.mrb[0].mxu0
    %v7207 = vadd.f32 0.0, %v7206
    %7208 = vdwg.mxu0
    %7209 = vmatprep.subr.mxu0 %v430
    %7210 = vmatpush1.msra.mxu0 %v429
    %7211 = vmatprep.subr.mxu0 %v434
    %7212 = vmatpush1.msra.mxu0 %v433
    %7213 = vmatprep.subr.mxu0 %v438
    %7214 = vmatpush1.msra.mxu0 %v437
    %7215 = vmatprep.subr.mxu0 %v442
    %7216 = vmatpush1.msra.mxu0 %v441
    %7217 = vmatprep.subr.mxu0 %v446
    %7218 = vmatpush1.msra.mxu0 %v445
    %7219 = vmatprep.subr.mxu0 %v450
    %7220 = vmatpush1.msra.mxu0 %v449
    %7221 = vmatprep.subr.mxu0 %v454
    %7222 = vmatpush1.msra.mxu0 %v453
    %7223 = vmatprep.subr.mxu0 %v458
    %7224 = vmatpush1.msra.mxu0 %v457
    %7225 = vmatprep.subr.mxu0 %v462
    %7226 = vmatpush1.msra.mxu0 %v461
    %7227 = vmatprep.subr.mxu0 %v466
    %7228 = vmatpush1.msra.mxu0 %v465
    %7229 = vmatprep.subr.mxu0 %v470
    %7230 = vmatpush1.msra.mxu0 %v469
    %7231 = vmatprep.subr.mxu0 %v474
    %7232 = vmatpush1.msra.mxu0 %v473
    %7233 = vmatprep.subr.mxu0 %v478
    %7234 = vmatpush1.msra.mxu0 %v477
    %7235 = vmatprep.subr.mxu0 %v482
    %7236 = vmatpush1.msra.mxu0 %v481
    %7237 = vmatprep.subr.mxu0 %v486
    %7238 = vmatpush1.msra.mxu0 %v485
    %7239 = vmatprep.subr.mxu0 %v490
    %7240 = vmatpush1.msra.mxu0 %v489
    %7241 = vmatprep.subr.mxu0 %v494
    %7242 = vmatpush1.msra.mxu0 %v493
    %7243 = vmatprep.subr.mxu0 %v498
    %7244 = vmatpush1.msra.mxu0 %v497
    %7245 = vmatprep.subr.mxu0 %v502
    %7246 = vmatpush1.msra.mxu0 %v501
    %7247 = vmatprep.subr.mxu0 %v506
    %7248 = vmatpush1.msra.mxu0 %v505
    %7249 = vmatprep.subr.mxu0 %v510
    %7250 = vmatpush1.msra.mxu0 %v509
    %7251 = vmatprep.subr.mxu0 %v514
    %7252 = vmatpush1.msra.mxu0 %v513
    %7253 = vmatprep.subr.mxu0 %v518
    %7254 = vmatpush1.msra.mxu0 %v517
    %7255 = vmatprep.subr.mxu0 %v522
    %7256 = vmatpush1.msra.mxu0 %v521
    %7257 = vmatprep.subr.mxu0 %v526
    %7258 = vmatpush1.msra.mxu0 %v525
    %7259 = vmatprep.subr.mxu0 %v530
    %7260 = vmatpush1.msra.mxu0 %v529
    %7261 = vmatprep.subr.mxu0 %v534
    %7262 = vmatpush1.msra.mxu0 %v533
    %7263 = vmatprep.subr.mxu0 %v538
    %7264 = vmatpush1.msra.mxu0 %v537
    %7265 = vmatprep.subr.mxu0 %v542
    %7266 = vmatpush1.msra.mxu0 %v541
    %7267 = vmatprep.subr.mxu0 %v546
    %7268 = vmatpush1.msra.mxu0 %v545
    %7269 = vmatprep.subr.mxu0 %v550
    %7270 = vmatpush1.msra.mxu0 %v549
    %7271 = vmatprep.subr.mxu0 %v554
    %7272 = vmatpush1.msra.mxu0 %v553
    %7273 = vmatprep.mubr.f32.mxu0 %v6858
    %7274 = vmatmul.mubr.f32.gmra.mrb[0].mxu0 %v6856
    %v7275 = vpop.f32.mrb[0].mxu0
    %v7276 = vadd.f32 %v7187, %v7275
    %v7277 = vpop.f32.mrb[0].mxu0
    %v7278 = vadd.f32 %v7189, %v7277
    %7279 = vmatprep.mubr.f32.mxu0 %v6864
    %7280 = vmatmul.mubr.f32.gmra.mrb[0].mxu0 %v6862
    %v7281 = vpop.f32.mrb[0].mxu0
    %v7282 = vadd.f32 %v7193, %v7281
    %v7283 = vpop.f32.mrb[0].mxu0
    %v7284 = vadd.f32 %v7195, %v7283
    %7285 = vmatprep.mubr.f32.mxu0 %v6870
    %7286 = vmatmul.mubr.f32.gmra.mrb[0].mxu0 %v6868
    %v7287 = vpop.f32.mrb[0].mxu0
    %v7288 = vadd.f32 %v7199, %v7287
    %v7289 = vpop.f32.mrb[0].mxu0
    %v7290 = vadd.f32 %v7201, %v7289
    %7291 = vmatprep.mubr.f32.mxu0 %v6876
    %7292 = vmatmul.mubr.f32.gmra.mrb[0].mxu0 %v6874
    %v7293 = vpop.f32.mrb[0].mxu0
    %v7294 = vadd.f32 %v7205, %v7293
    %v7295 = vpop.f32.mrb[0].mxu0
    %v7296 = vadd.f32 %v7207, %v7295
    %7297 = vdwg.mxu0
    %v7298 = vadd.f32 %v6926, %v7098
    %v7299 = vadd.f32 %v6927, %v7100
    %v7300 = vadd.f32 %v6928, %v7276
    %v7301 = vadd.f32 %v6929, %v7278
    %v7302 = vadd.f32 %v6930, %v7104
    %v7303 = vadd.f32 %v6931, %v7106
    %v7304 = vadd.f32 %v6932, %v7282
    %v7305 = vadd.f32 %v6933, %v7284
    %v7306 = vadd.f32 %v6934, %v7110
    %v7307 = vadd.f32 %v6935, %v7112
    %v7308 = vadd.f32 %v6936, %v7288
    %v7309 = vadd.f32 %v6937, %v7290
    %v7310 = vadd.f32 %v6938, %v7116
    %v7311 = vadd.f32 %v6939, %v7118
    %v7312 = vadd.f32 %v6940, %v7294
    %v7313 = vadd.f32 %v6941, %v7296
    %7314 = vmatprep.subr.mxu0 %v1151
    %7315 = vmatpush1.msra.mxu0 %v1150
    %7316 = vmatprep.subr.mxu0 %v1155
    %7317 = vmatpush1.msra.mxu0 %v1154
    %7318 = vmatprep.subr.mxu0 %v1159
    %7319 = vmatpush1.msra.mxu0 %v1158
    %7320 = vmatprep.subr.mxu0 %v1163
    %7321 = vmatpush1.msra.mxu0 %v1162
    %7322 = vmatprep.subr.mxu0 %v1167
    %7323 = vmatpush1.msra.mxu0 %v1166
    %7324 = vmatprep.subr.mxu0 %v1171
    %7325 = vmatpush1.msra.mxu0 %v1170
    %7326 = vmatprep.subr.mxu0 %v1175
    %7327 = vmatpush1.msra.mxu0 %v1174
    %7328 = vmatprep.subr.mxu0 %v1179
    %7329 = vmatpush1.msra.mxu0 %v1178
    %7330 = vmatprep.subr.mxu0 %v1183
    %7331 = vmatpush1.msra.mxu0 %v1182
    %7332 = vmatprep.subr.mxu0 %v1187
    %7333 = vmatpush1.msra.mxu0 %v1186
    %7334 = vmatprep.subr.mxu0 %v1191
    %7335 = vmatpush1.msra.mxu0 %v1190
    %7336 = vmatprep.subr.mxu0 %v1195
    %7337 = vmatpush1.msra.mxu0 %v1194
    %7338 = vmatprep.subr.mxu0 %v1199
    %7339 = vmatpush1.msra.mxu0 %v1198
    %7340 = vmatprep.subr.mxu0 %v1203
    %7341 = vmatpush1.msra.mxu0 %v1202
    %7342 = vmatprep.subr.mxu0 %v1207
    %7343 = vmatpush1.msra.mxu0 %v1206
    %7344 = vmatprep.subr.mxu0 %v1211
    %7345 = vmatpush1.msra.mxu0 %v1210
    %7346 = vmatprep.subr.mxu0 %v1215
    %7347 = vmatpush1.msra.mxu0 %v1214
    %7348 = vmatprep.subr.mxu0 %v1219
    %7349 = vmatpush1.msra.mxu0 %v1218
    %7350 = vmatprep.subr.mxu0 %v1223
    %7351 = vmatpush1.msra.mxu0 %v1222
    %7352 = vmatprep.subr.mxu0 %v1227
    %7353 = vmatpush1.msra.mxu0 %v1226
    %7354 = vmatprep.subr.mxu0 %v1231
    %7355 = vmatpush1.msra.mxu0 %v1230
    %7356 = vmatprep.subr.mxu0 %v1235
    %7357 = vmatpush1.msra.mxu0 %v1234
    %7358 = vmatprep.subr.mxu0 %v1239
    %7359 = vmatpush1.msra.mxu0 %v1238
    %7360 = vmatprep.subr.mxu0 %v1243
    %7361 = vmatpush1.msra.mxu0 %v1242
    %7362 = vmatprep.subr.mxu0 %v1247
    %7363 = vmatpush1.msra.mxu0 %v1246
    %7364 = vmatprep.subr.mxu0 %v1251
    %7365 = vmatpush1.msra.mxu0 %v1250
    %7366 = vmatprep.subr.mxu0 %v1255
    %7367 = vmatpush1.msra.mxu0 %v1254
    %7368 = vmatprep.subr.mxu0 %v1259
    %7369 = vmatpush1.msra.mxu0 %v1258
    %7370 = vmatprep.subr.mxu0 %v1263
    %7371 = vmatpush1.msra.mxu0 %v1262
    %7372 = vmatprep.subr.mxu0 %v1267
    %7373 = vmatpush1.msra.mxu0 %v1266
    %7374 = vmatprep.subr.mxu0 %v1271
    %7375 = vmatpush1.msra.mxu0 %v1270
    %7376 = vmatprep.subr.mxu0 %v1275
    %7377 = vmatpush1.msra.mxu0 %v1274
    %7378 = vmatprep.mubr.f32.mxu0 %v6745
    %7379 = vmatmul.mubr.f32.gmra.mrb[0].mxu0 %v6743
    %v7380 = vpop.f32.mrb[0].mxu0
    %v7381 = vadd.f32 0.0, %v7380
    %v7382 = vpop.f32.mrb[0].mxu0
    %v7383 = vadd.f32 0.0, %v7382
    %7384 = vmatprep.mubr.f32.mxu0 %v6751
    %7385 = vmatmul.mubr.f32.gmra.mrb[0].mxu0 %v6749
    %v7386 = vpop.f32.mrb[0].mxu0
    %v7387 = vadd.f32 0.0, %v7386
    %v7388 = vpop.f32.mrb[0].mxu0
    %v7389 = vadd.f32 0.0, %v7388
    %7390 = vmatprep.mubr.f32.mxu0 %v6757
    %7391 = vmatmul.mubr.f32.gmra.mrb[0].mxu0 %v6755
    %v7392 = vpop.f32.mrb[0].mxu0
    %v7393 = vadd.f32 0.0, %v7392
    %v7394 = vpop.f32.mrb[0].mxu0
    %v7395 = vadd.f32 0.0, %v7394
    %7396 = vmatprep.mubr.f32.mxu0 %v6763
    %7397 = vmatmul.mubr.f32.gmra.mrb[0].mxu0 %v6761
    %v7398 = vpop.f32.mrb[0].mxu0
    %v7399 = vadd.f32 0.0, %v7398
    %v7400 = vpop.f32.mrb[0].mxu0
    %v7401 = vadd.f32 0.0, %v7400
    %7402 = vdwg.mxu0
    %7403 = vmatprep.subr.mxu0 %v1279
    %7404 = vmatpush1.msra.mxu0 %v1278
    %7405 = vmatprep.subr.mxu0 %v1283
    %7406 = vmatpush1.msra.mxu0 %v1282
    %7407 = vmatprep.subr.mxu0 %v1287
    %7408 = vmatpush1.msra.mxu0 %v1286
    %7409 = vmatprep.subr.mxu0 %v1291
    %7410 = vmatpush1.msra.mxu0 %v1290
    %7411 = vmatprep.subr.mxu0 %v1295
    %7412 = vmatpush1.msra.mxu0 %v1294
    %7413 = vmatprep.subr.mxu0 %v1299
    %7414 = vmatpush1.msra.mxu0 %v1298
    %7415 = vmatprep.subr.mxu0 %v1303
    %7416 = vmatpush1.msra.mxu0 %v1302
    %7417 = vmatprep.subr.mxu0 %v1307
    %7418 = vmatpush1.msra.mxu0 %v1306
    %7419 = vmatprep.subr.mxu0 %v1311
    %7420 = vmatpush1.msra.mxu0 %v1310
    %7421 = vmatprep.subr.mxu0 %v1315
    %7422 = vmatpush1.msra.mxu0 %v1314
    %7423 = vmatprep.subr.mxu0 %v1319
    %7424 = vmatpush1.msra.mxu0 %v1318
    %7425 = vmatprep.subr.mxu0 %v1323
    %7426 = vmatpush1.msra.mxu0 %v1322
    %7427 = vmatprep.subr.mxu0 %v1327
    %7428 = vmatpush1.msra.mxu0 %v1326
    %7429 = vmatprep.subr.mxu0 %v1331
    %7430 = vmatpush1.msra.mxu0 %v1330
    %7431 = vmatprep.subr.mxu0 %v1335
    %7432 = vmatpush1.msra.mxu0 %v1334
    %7433 = vmatprep.subr.mxu0 %v1339
    %7434 = vmatpush1.msra.mxu0 %v1338
    %7435 = vmatprep.subr.mxu0 %v1343
    %7436 = vmatpush1.msra.mxu0 %v1342
    %7437 = vmatprep.subr.mxu0 %v1347
    %7438 = vmatpush1.msra.mxu0 %v1346
    %7439 = vmatprep.subr.mxu0 %v1351
    %7440 = vmatpush1.msra.mxu0 %v1350
    %7441 = vmatprep.subr.mxu0 %v1355
    %7442 = vmatpush1.msra.mxu0 %v1354
    %7443 = vmatprep.subr.mxu0 %v1359
    %7444 = vmatpush1.msra.mxu0 %v1358
    %7445 = vmatprep.subr.mxu0 %v1363
    %7446 = vmatpush1.msra.mxu0 %v1362
    %7447 = vmatprep.subr.mxu0 %v1367
    %7448 = vmatpush1.msra.mxu0 %v1366
    %7449 = vmatprep.subr.mxu0 %v1371
    %7450 = vmatpush1.msra.mxu0 %v1370
    %7451 = vmatprep.subr.mxu0 %v1375
    %7452 = vmatpush1.msra.mxu0 %v1374
    %7453 = vmatprep.subr.mxu0 %v1379
    %7454 = vmatpush1.msra.mxu0 %v1378
    %7455 = vmatprep.subr.mxu0 %v1383
    %7456 = vmatpush1.msra.mxu0 %v1382
    %7457 = vmatprep.subr.mxu0 %v1387
    %7458 = vmatpush1.msra.mxu0 %v1386
    %7459 = vmatprep.subr.mxu0 %v1391
    %7460 = vmatpush1.msra.mxu0 %v1390
    %7461 = vmatprep.subr.mxu0 %v1395
    %7462 = vmatpush1.msra.mxu0 %v1394
    %7463 = vmatprep.subr.mxu0 %v1399
    %7464 = vmatpush1.msra.mxu0 %v1398
    %7465 = vmatprep.subr.mxu0 %v1403
    %7466 = vmatpush1.msra.mxu0 %v1402
    %7467 = vmatprep.mubr.f32.mxu0 %v6882
    %7468 = vmatmul.mubr.f32.gmra.mrb[0].mxu0 %v6880
    %v7469 = vpop.f32.mrb[0].mxu0
    %v7470 = vadd.f32 %v7381, %v7469
    %v7471 = vpop.f32.mrb[0].mxu0
    %v7472 = vadd.f32 %v7383, %v7471
    %7473 = vmatprep.mubr.f32.mxu0 %v6888
    %7474 = vmatmul.mubr.f32.gmra.mrb[0].mxu0 %v6886
    %v7475 = vpop.f32.mrb[0].mxu0
    %v7476 = vadd.f32 %v7387, %v7475
    %v7477 = vpop.f32.mrb[0].mxu0
    %v7478 = vadd.f32 %v7389, %v7477
    %7479 = vmatprep.mubr.f32.mxu0 %v6894
    %7480 = vmatmul.mubr.f32.gmra.mrb[0].mxu0 %v6892
    %v7481 = vpop.f32.mrb[0].mxu0
    %v7482 = vadd.f32 %v7393, %v7481
    %v7483 = vpop.f32.mrb[0].mxu0
    %v7484 = vadd.f32 %v7395, %v7483
    %7485 = vmatprep.mubr.f32.mxu0 %v6900
    %7486 = vmatmul.mubr.f32.gmra.mrb[0].mxu0 %v6898
    %v7487 = vpop.f32.mrb[0].mxu0
    %v7488 = vadd.f32 %v7399, %v7487
    %v7489 = vpop.f32.mrb[0].mxu0
    %v7490 = vadd.f32 %v7401, %v7489
    %7491 = vdwg.mxu0
    %7492 = vmatprep.subr.mxu0 %v1153
    %7493 = vmatpush1.msra.mxu0 %v1152
    %7494 = vmatprep.subr.mxu0 %v1157
    %7495 = vmatpush1.msra.mxu0 %v1156
    %7496 = vmatprep.subr.mxu0 %v1161
    %7497 = vmatpush1.msra.mxu0 %v1160
    %7498 = vmatprep.subr.mxu0 %v1165
    %7499 = vmatpush1.msra.mxu0 %v1164
    %7500 = vmatprep.subr.mxu0 %v1169
    %7501 = vmatpush1.msra.mxu0 %v1168
    %7502 = vmatprep.subr.mxu0 %v1173
    %7503 = vmatpush1.msra.mxu0 %v1172
    %7504 = vmatprep.subr.mxu0 %v1177
    %7505 = vmatpush1.msra.mxu0 %v1176
    %7506 = vmatprep.subr.mxu0 %v1181
    %7507 = vmatpush1.msra.mxu0 %v1180
    %7508 = vmatprep.subr.mxu0 %v1185
    %7509 = vmatpush1.msra.mxu0 %v1184
    %7510 = vmatprep.subr.mxu0 %v1189
    %7511 = vmatpush1.msra.mxu0 %v1188
    %7512 = vmatprep.subr.mxu0 %v1193
    %7513 = vmatpush1.msra.mxu0 %v1192
    %7514 = vmatprep.subr.mxu0 %v1197
    %7515 = vmatpush1.msra.mxu0 %v1196
    %7516 = vmatprep.subr.mxu0 %v1201
    %7517 = vmatpush1.msra.mxu0 %v1200
    %7518 = vmatprep.subr.mxu0 %v1205
    %7519 = vmatpush1.msra.mxu0 %v1204
    %7520 = vmatprep.subr.mxu0 %v1209
    %7521 = vmatpush1.msra.mxu0 %v1208
    %7522 = vmatprep.subr.mxu0 %v1213
    %7523 = vmatpush1.msra.mxu0 %v1212
    %7524 = vmatprep.subr.mxu0 %v1217
    %7525 = vmatpush1.msra.mxu0 %v1216
    %7526 = vmatprep.subr.mxu0 %v1221
    %7527 = vmatpush1.msra.mxu0 %v1220
    %7528 = vmatprep.subr.mxu0 %v1225
    %7529 = vmatpush1.msra.mxu0 %v1224
    %7530 = vmatprep.subr.mxu0 %v1229
    %7531 = vmatpush1.msra.mxu0 %v1228
    %7532 = vmatprep.subr.mxu0 %v1233
    %7533 = vmatpush1.msra.mxu0 %v1232
    %7534 = vmatprep.subr.mxu0 %v1237
    %7535 = vmatpush1.msra.mxu0 %v1236
    %7536 = vmatprep.subr.mxu0 %v1241
    %7537 = vmatpush1.msra.mxu0 %v1240
    %7538 = vmatprep.subr.mxu0 %v1245
    %7539 = vmatpush1.msra.mxu0 %v1244
    %7540 = vmatprep.subr.mxu0 %v1249
    %7541 = vmatpush1.msra.mxu0 %v1248
    %7542 = vmatprep.subr.mxu0 %v1253
    %7543 = vmatpush1.msra.mxu0 %v1252
    %7544 = vmatprep.subr.mxu0 %v1257
    %7545 = vmatpush1.msra.mxu0 %v1256
    %7546 = vmatprep.subr.mxu0 %v1261
    %7547 = vmatpush1.msra.mxu0 %v1260
    %7548 = vmatprep.subr.mxu0 %v1265
    %7549 = vmatpush1.msra.mxu0 %v1264
    %7550 = vmatprep.subr.mxu0 %v1269
    %7551 = vmatpush1.msra.mxu0 %v1268
    %7552 = vmatprep.subr.mxu0 %v1273
    %7553 = vmatpush1.msra.mxu0 %v1272
    %7554 = vmatprep.subr.mxu0 %v1277
    %7555 = vmatpush1.msra.mxu0 %v1276
    %7556 = vmatprep.mubr.f32.mxu0 %v6745
    %7557 = vmatmul.mubr.f32.gmra.mrb[0].mxu0 %v6743
    %v7558 = vpop.f32.mrb[0].mxu0
    %v7559 = vadd.f32 0.0, %v7558
    %v7560 = vpop.f32.mrb[0].mxu0
    %v7561 = vadd.f32 0.0, %v7560
    %7562 = vmatprep.mubr.f32.mxu0 %v6751
    %7563 = vmatmul.mubr.f32.gmra.mrb[0].mxu0 %v6749
    %v7564 = vpop.f32.mrb[0].mxu0
    %v7565 = vadd.f32 0.0, %v7564
    %v7566 = vpop.f32.mrb[0].mxu0
    %v7567 = vadd.f32 0.0, %v7566
    %7568 = vmatprep.mubr.f32.mxu0 %v6757
    %7569 = vmatmul.mubr.f32.gmra.mrb[0].mxu0 %v6755
    %v7570 = vpop.f32.mrb[0].mxu0
    %v7571 = vadd.f32 0.0, %v7570
    %v7572 = vpop.f32.mrb[0].mxu0
    %v7573 = vadd.f32 0.0, %v7572
    %7574 = vmatprep.mubr.f32.mxu0 %v6763
    %7575 = vmatmul.mubr.f32.gmra.mrb[0].mxu0 %v6761
    %v7576 = vpop.f32.mrb[0].mxu0
    %v7577 = vadd.f32 0.0, %v7576
    %v7578 = vpop.f32.mrb[0].mxu0
    %v7579 = vadd.f32 0.0, %v7578
    %7580 = vdwg.mxu0
    %7581 = vmatprep.subr.mxu0 %v1281
    %7582 = vmatpush1.msra.mxu0 %v1280
    %7583 = vmatprep.subr.mxu0 %v1285
    %7584 = vmatpush1.msra.mxu0 %v1284
    %7585 = vmatprep.subr.mxu0 %v1289
    %7586 = vmatpush1.msra.mxu0 %v1288
    %7587 = vmatprep.subr.mxu0 %v1293
    %7588 = vmatpush1.msra.mxu0 %v1292
    %7589 = vmatprep.subr.mxu0 %v1297
    %7590 = vmatpush1.msra.mxu0 %v1296
    %7591 = vmatprep.subr.mxu0 %v1301
    %7592 = vmatpush1.msra.mxu0 %v1300
    %7593 = vmatprep.subr.mxu0 %v1305
    %7594 = vmatpush1.msra.mxu0 %v1304
    %7595 = vmatprep.subr.mxu0 %v1309
    %7596 = vmatpush1.msra.mxu0 %v1308
    %7597 = vmatprep.subr.mxu0 %v1313
    %7598 = vmatpush1.msra.mxu0 %v1312
    %7599 = vmatprep.subr.mxu0 %v1317
    %7600 = vmatpush1.msra.mxu0 %v1316
    %7601 = vmatprep.subr.mxu0 %v1321
    %7602 = vmatpush1.msra.mxu0 %v1320
    %7603 = vmatprep.subr.mxu0 %v1325
    %7604 = vmatpush1.msra.mxu0 %v1324
    %7605 = vmatprep.subr.mxu0 %v1329
    %7606 = vmatpush1.msra.mxu0 %v1328
    %7607 = vmatprep.subr.mxu0 %v1333
    %7608 = vmatpush1.msra.mxu0 %v1332
    %7609 = vmatprep.subr.mxu0 %v1337
    %7610 = vmatpush1.msra.mxu0 %v1336
    %7611 = vmatprep.subr.mxu0 %v1341
    %7612 = vmatpush1.msra.mxu0 %v1340
    %7613 = vmatprep.subr.mxu0 %v1345
    %7614 = vmatpush1.msra.mxu0 %v1344
    %7615 = vmatprep.subr.mxu0 %v1349
    %7616 = vmatpush1.msra.mxu0 %v1348
    %7617 = vmatprep.subr.mxu0 %v1353
    %7618 = vmatpush1.msra.mxu0 %v1352
    %7619 = vmatprep.subr.mxu0 %v1357
    %7620 = vmatpush1.msra.mxu0 %v1356
    %7621 = vmatprep.subr.mxu0 %v1361
    %7622 = vmatpush1.msra.mxu0 %v1360
    %7623 = vmatprep.subr.mxu0 %v1365
    %7624 = vmatpush1.msra.mxu0 %v1364
    %7625 = vmatprep.subr.mxu0 %v1369
    %7626 = vmatpush1.msra.mxu0 %v1368
    %7627 = vmatprep.subr.mxu0 %v1373
    %7628 = vmatpush1.msra.mxu0 %v1372
    %7629 = vmatprep.subr.mxu0 %v1377
    %7630 = vmatpush1.msra.mxu0 %v1376
    %7631 = vmatprep.subr.mxu0 %v1381
    %7632 = vmatpush1.msra.mxu0 %v1380
    %7633 = vmatprep.subr.mxu0 %v1385
    %7634 = vmatpush1.msra.mxu0 %v1384
    %7635 = vmatprep.subr.mxu0 %v1389
    %7636 = vmatpush1.msra.mxu0 %v1388
    %7637 = vmatprep.subr.mxu0 %v1393
    %7638 = vmatpush1.msra.mxu0 %v1392
    %7639 = vmatprep.subr.mxu0 %v1397
    %7640 = vmatpush1.msra.mxu0 %v1396
    %7641 = vmatprep.subr.mxu0 %v1401
    %7642 = vmatpush1.msra.mxu0 %v1400
    %7643 = vmatprep.subr.mxu0 %v1405
    %7644 = vmatpush1.msra.mxu0 %v1404
    %7645 = vmatprep.mubr.f32.mxu0 %v6882
    %7646 = vmatmul.mubr.f32.gmra.mrb[0].mxu0 %v6880
    %v7647 = vpop.f32.mrb[0].mxu0
    %v7648 = vadd.f32 %v7559, %v7647
    %v7649 = vpop.f32.mrb[0].mxu0
    %v7650 = vadd.f32 %v7561, %v7649
    %7651 = vmatprep.mubr.f32.mxu0 %v6888
    %7652 = vmatmul.mubr.f32.gmra.mrb[0].mxu0 %v6886
    %v7653 = vpop.f32.mrb[0].mxu0
    %v7654 = vadd.f32 %v7565, %v7653
    %v7655 = vpop.f32.mrb[0].mxu0
    %v7656 = vadd.f32 %v7567, %v7655
    %7657 = vmatprep.mubr.f32.mxu0 %v6894
    %7658 = vmatmul.mubr.f32.gmra.mrb[0].mxu0 %v6892
    %v7659 = vpop.f32.mrb[0].mxu0
    %v7660 = vadd.f32 %v7571, %v7659
    %v7661 = vpop.f32.mrb[0].mxu0
    %v7662 = vadd.f32 %v7573, %v7661
    %7663 = vmatprep.mubr.f32.mxu0 %v6900
    %7664 = vmatmul.mubr.f32.gmra.mrb[0].mxu0 %v6898
    %v7665 = vpop.f32.mrb[0].mxu0
    %v7666 = vadd.f32 %v7577, %v7665
    %v7667 = vpop.f32.mrb[0].mxu0
    %v7668 = vadd.f32 %v7579, %v7667
    %7669 = vdwg.mxu0
    %v7670 = vadd.f32 %v7298, %v7470
    %v7671 = vadd.f32 %v7299, %v7472
    %v7672 = vadd.f32 %v7300, %v7648
    %v7673 = vadd.f32 %v7301, %v7650
    %v7674 = vadd.f32 %v7302, %v7476
    %v7675 = vadd.f32 %v7303, %v7478
    %v7676 = vadd.f32 %v7304, %v7654
    %v7677 = vadd.f32 %v7305, %v7656
    %v7678 = vadd.f32 %v7306, %v7482
    %v7679 = vadd.f32 %v7307, %v7484
    %v7680 = vadd.f32 %v7308, %v7660
    %v7681 = vadd.f32 %v7309, %v7662
    %v7682 = vadd.f32 %v7310, %v7488
    %v7683 = vadd.f32 %v7311, %v7490
    %v7684 = vadd.f32 %v7312, %v7666
    %v7685 = vadd.f32 %v7313, %v7668
    %7686 = vmatprep.subr.mxu0 %v1995
    %7687 = vmatpush1.msra.mxu0 %v1994
    %7688 = vmatprep.subr.mxu0 %v1999
    %7689 = vmatpush1.msra.mxu0 %v1998
    %7690 = vmatprep.subr.mxu0 %v2003
    %7691 = vmatpush1.msra.mxu0 %v2002
    %7692 = vmatprep.subr.mxu0 %v2007
    %7693 = vmatpush1.msra.mxu0 %v2006
    %7694 = vmatprep.subr.mxu0 %v2011
    %7695 = vmatpush1.msra.mxu0 %v2010
    %7696 = vmatprep.subr.mxu0 %v2015
    %7697 = vmatpush1.msra.mxu0 %v2014
    %7698 = vmatprep.subr.mxu0 %v2019
    %7699 = vmatpush1.msra.mxu0 %v2018
    %7700 = vmatprep.subr.mxu0 %v2023
    %7701 = vmatpush1.msra.mxu0 %v2022
    %7702 = vmatprep.subr.mxu0 %v2027
    %7703 = vmatpush1.msra.mxu0 %v2026
    %7704 = vmatprep.subr.mxu0 %v2031
    %7705 = vmatpush1.msra.mxu0 %v2030
    %7706 = vmatprep.subr.mxu0 %v2035
    %7707 = vmatpush1.msra.mxu0 %v2034
    %7708 = vmatprep.subr.mxu0 %v2039
    %7709 = vmatpush1.msra.mxu0 %v2038
    %7710 = vmatprep.subr.mxu0 %v2043
    %7711 = vmatpush1.msra.mxu0 %v2042
    %7712 = vmatprep.subr.mxu0 %v2047
    %7713 = vmatpush1.msra.mxu0 %v2046
    %7714 = vmatprep.subr.mxu0 %v2051
    %7715 = vmatpush1.msra.mxu0 %v2050
    %7716 = vmatprep.subr.mxu0 %v2055
    %7717 = vmatpush1.msra.mxu0 %v2054
    %7718 = vmatprep.subr.mxu0 %v2059
    %7719 = vmatpush1.msra.mxu0 %v2058
    %7720 = vmatprep.subr.mxu0 %v2063
    %7721 = vmatpush1.msra.mxu0 %v2062
    %7722 = vmatprep.subr.mxu0 %v2067
    %7723 = vmatpush1.msra.mxu0 %v2066
    %7724 = vmatprep.subr.mxu0 %v2071
    %7725 = vmatpush1.msra.mxu0 %v2070
    %7726 = vmatprep.subr.mxu0 %v2075
    %7727 = vmatpush1.msra.mxu0 %v2074
    %7728 = vmatprep.subr.mxu0 %v2079
    %7729 = vmatpush1.msra.mxu0 %v2078
    %7730 = vmatprep.subr.mxu0 %v2083
    %7731 = vmatpush1.msra.mxu0 %v2082
    %7732 = vmatprep.subr.mxu0 %v2087
    %7733 = vmatpush1.msra.mxu0 %v2086
    %7734 = vmatprep.subr.mxu0 %v2091
    %7735 = vmatpush1.msra.mxu0 %v2090
    %7736 = vmatprep.subr.mxu0 %v2095
    %7737 = vmatpush1.msra.mxu0 %v2094
    %7738 = vmatprep.subr.mxu0 %v2099
    %7739 = vmatpush1.msra.mxu0 %v2098
    %7740 = vmatprep.subr.mxu0 %v2103
    %7741 = vmatpush1.msra.mxu0 %v2102
    %7742 = vmatprep.subr.mxu0 %v2107
    %7743 = vmatpush1.msra.mxu0 %v2106
    %7744 = vmatprep.subr.mxu0 %v2111
    %7745 = vmatpush1.msra.mxu0 %v2110
    %7746 = vmatprep.subr.mxu0 %v2115
    %7747 = vmatpush1.msra.mxu0 %v2114
    %7748 = vmatprep.subr.mxu0 %v2119
    %7749 = vmatpush1.msra.mxu0 %v2118
    %7750 = vmatprep.mubr.f32.mxu0 %v6769
    %7751 = vmatmul.mubr.f32.gmra.mrb[0].mxu0 %v6767
    %v7752 = vpop.f32.mrb[0].mxu0
    %v7753 = vadd.f32 0.0, %v7752
    %v7754 = vpop.f32.mrb[0].mxu0
    %v7755 = vadd.f32 0.0, %v7754
    %7756 = vmatprep.mubr.f32.mxu0 %v6775
    %7757 = vmatmul.mubr.f32.gmra.mrb[0].mxu0 %v6773
    %v7758 = vpop.f32.mrb[0].mxu0
    %v7759 = vadd.f32 0.0, %v7758
    %v7760 = vpop.f32.mrb[0].mxu0
    %v7761 = vadd.f32 0.0, %v7760
    %7762 = vmatprep.mubr.f32.mxu0 %v6781
    %7763 = vmatmul.mubr.f32.gmra.mrb[0].mxu0 %v6779
    %v7764 = vpop.f32.mrb[0].mxu0
    %v7765 = vadd.f32 0.0, %v7764
    %v7766 = vpop.f32.mrb[0].mxu0
    %v7767 = vadd.f32 0.0, %v7766
    %7768 = vmatprep.mubr.f32.mxu0 %v6787
    %7769 = vmatmul.mubr.f32.gmra.mrb[0].mxu0 %v6785
    %v7770 = vpop.f32.mrb[0].mxu0
    %v7771 = vadd.f32 0.0, %v7770
    %v7772 = vpop.f32.mrb[0].mxu0
    %v7773 = vadd.f32 0.0, %v7772
    %7774 = vdwg.mxu0
    %7775 = vmatprep.subr.mxu0 %v2123
    %7776 = vmatpush1.msra.mxu0 %v2122
    %7777 = vmatprep.subr.mxu0 %v2127
    %7778 = vmatpush1.msra.mxu0 %v2126
    %7779 = vmatprep.subr.mxu0 %v2131
    %7780 = vmatpush1.msra.mxu0 %v2130
    %7781 = vmatprep.subr.mxu0 %v2135
    %7782 = vmatpush1.msra.mxu0 %v2134
    %7783 = vmatprep.subr.mxu0 %v2139
    %7784 = vmatpush1.msra.mxu0 %v2138
    %7785 = vmatprep.subr.mxu0 %v2143
    %7786 = vmatpush1.msra.mxu0 %v2142
    %7787 = vmatprep.subr.mxu0 %v2147
    %7788 = vmatpush1.msra.mxu0 %v2146
    %7789 = vmatprep.subr.mxu0 %v2151
    %7790 = vmatpush1.msra.mxu0 %v2150
    %7791 = vmatprep.subr.mxu0 %v2155
    %7792 = vmatpush1.msra.mxu0 %v2154
    %7793 = vmatprep.subr.mxu0 %v2159
    %7794 = vmatpush1.msra.mxu0 %v2158
    %7795 = vmatprep.subr.mxu0 %v2163
    %7796 = vmatpush1.msra.mxu0 %v2162
    %7797 = vmatprep.subr.mxu0 %v2167
    %7798 = vmatpush1.msra.mxu0 %v2166
    %7799 = vmatprep.subr.mxu0 %v2171
    %7800 = vmatpush1.msra.mxu0 %v2170
    %7801 = vmatprep.subr.mxu0 %v2175
    %7802 = vmatpush1.msra.mxu0 %v2174
    %7803 = vmatprep.subr.mxu0 %v2179
    %7804 = vmatpush1.msra.mxu0 %v2178
    %7805 = vmatprep.subr.mxu0 %v2183
    %7806 = vmatpush1.msra.mxu0 %v2182
    %7807 = vmatprep.subr.mxu0 %v2187
    %7808 = vmatpush1.msra.mxu0 %v2186
    %7809 = vmatprep.subr.mxu0 %v2191
    %7810 = vmatpush1.msra.mxu0 %v2190
    %7811 = vmatprep.subr.mxu0 %v2195
    %7812 = vmatpush1.msra.mxu0 %v2194
    %7813 = vmatprep.subr.mxu0 %v2199
    %7814 = vmatpush1.msra.mxu0 %v2198
    %7815 = vmatprep.subr.mxu0 %v2203
    %7816 = vmatpush1.msra.mxu0 %v2202
    %7817 = vmatprep.subr.mxu0 %v2207
    %7818 = vmatpush1.msra.mxu0 %v2206
    %7819 = vmatprep.subr.mxu0 %v2211
    %7820 = vmatpush1.msra.mxu0 %v2210
    %7821 = vmatprep.subr.mxu0 %v2215
    %7822 = vmatpush1.msra.mxu0 %v2214
    %7823 = vmatprep.subr.mxu0 %v2219
    %7824 = vmatpush1.msra.mxu0 %v2218
    %7825 = vmatprep.subr.mxu0 %v2223
    %7826 = vmatpush1.msra.mxu0 %v2222
    %7827 = vmatprep.subr.mxu0 %v2227
    %7828 = vmatpush1.msra.mxu0 %v2226
    %7829 = vmatprep.subr.mxu0 %v2231
    %7830 = vmatpush1.msra.mxu0 %v2230
    %7831 = vmatprep.subr.mxu0 %v2235
    %7832 = vmatpush1.msra.mxu0 %v2234
    %7833 = vmatprep.subr.mxu0 %v2239
    %7834 = vmatpush1.msra.mxu0 %v2238
    %7835 = vmatprep.subr.mxu0 %v2243
    %7836 = vmatpush1.msra.mxu0 %v2242
    %7837 = vmatprep.subr.mxu0 %v2247
    %7838 = vmatpush1.msra.mxu0 %v2246
    %7839 = vmatprep.mubr.f32.mxu0 %v6906
    %7840 = vmatmul.mubr.f32.gmra.mrb[0].mxu0 %v6904
    %v7841 = vpop.f32.mrb[0].mxu0
    %v7842 = vadd.f32 %v7753, %v7841
    %v7843 = vpop.f32.mrb[0].mxu0
    %v7844 = vadd.f32 %v7755, %v7843
    %7845 = vmatprep.mubr.f32.mxu0 %v6912
    %7846 = vmatmul.mubr.f32.gmra.mrb[0].mxu0 %v6910
    %v7847 = vpop.f32.mrb[0].mxu0
    %v7848 = vadd.f32 %v7759, %v7847
    %v7849 = vpop.f32.mrb[0].mxu0
    %v7850 = vadd.f32 %v7761, %v7849
    %7851 = vmatprep.mubr.f32.mxu0 %v6918
    %7852 = vmatmul.mubr.f32.gmra.mrb[0].mxu0 %v6916
    %v7853 = vpop.f32.mrb[0].mxu0
    %v7854 = vadd.f32 %v7765, %v7853
    %v7855 = vpop.f32.mrb[0].mxu0
    %v7856 = vadd.f32 %v7767, %v7855
    %7857 = vmatprep.mubr.f32.mxu0 %v6924
    %7858 = vmatmul.mubr.f32.gmra.mrb[0].mxu0 %v6922
    %v7859 = vpop.f32.mrb[0].mxu0
    %v7860 = vadd.f32 %v7771, %v7859
    %v7861 = vpop.f32.mrb[0].mxu0
    %v7862 = vadd.f32 %v7773, %v7861
    %7863 = vdwg.mxu0
    %7864 = vmatprep.subr.mxu0 %v1997
    %7865 = vmatpush1.msra.mxu0 %v1996
    %7866 = vmatprep.subr.mxu0 %v2001
    %7867 = vmatpush1.msra.mxu0 %v2000
    %7868 = vmatprep.subr.mxu0 %v2005
    %7869 = vmatpush1.msra.mxu0 %v2004
    %7870 = vmatprep.subr.mxu0 %v2009
    %7871 = vmatpush1.msra.mxu0 %v2008
    %7872 = vmatprep.subr.mxu0 %v2013
    %7873 = vmatpush1.msra.mxu0 %v2012
    %7874 = vmatprep.subr.mxu0 %v2017
    %7875 = vmatpush1.msra.mxu0 %v2016
    %7876 = vmatprep.subr.mxu0 %v2021
    %7877 = vmatpush1.msra.mxu0 %v2020
    %7878 = vmatprep.subr.mxu0 %v2025
    %7879 = vmatpush1.msra.mxu0 %v2024
    %7880 = vmatprep.subr.mxu0 %v2029
    %7881 = vmatpush1.msra.mxu0 %v2028
    %7882 = vmatprep.subr.mxu0 %v2033
    %7883 = vmatpush1.msra.mxu0 %v2032
    %7884 = vmatprep.subr.mxu0 %v2037
    %7885 = vmatpush1.msra.mxu0 %v2036
    %7886 = vmatprep.subr.mxu0 %v2041
    %7887 = vmatpush1.msra.mxu0 %v2040
    %7888 = vmatprep.subr.mxu0 %v2045
    %7889 = vmatpush1.msra.mxu0 %v2044
    %7890 = vmatprep.subr.mxu0 %v2049
    %7891 = vmatpush1.msra.mxu0 %v2048
    %7892 = vmatprep.subr.mxu0 %v2053
    %7893 = vmatpush1.msra.mxu0 %v2052
    %7894 = vmatprep.subr.mxu0 %v2057
    %7895 = vmatpush1.msra.mxu0 %v2056
    %7896 = vmatprep.subr.mxu0 %v2061
    %7897 = vmatpush1.msra.mxu0 %v2060
    %7898 = vmatprep.subr.mxu0 %v2065
    %7899 = vmatpush1.msra.mxu0 %v2064
    %7900 = vmatprep.subr.mxu0 %v2069
    %7901 = vmatpush1.msra.mxu0 %v2068
    %7902 = vmatprep.subr.mxu0 %v2073
    %7903 = vmatpush1.msra.mxu0 %v2072
    %7904 = vmatprep.subr.mxu0 %v2077
    %7905 = vmatpush1.msra.mxu0 %v2076
    %7906 = vmatprep.subr.mxu0 %v2081
    %7907 = vmatpush1.msra.mxu0 %v2080
    %7908 = vmatprep.subr.mxu0 %v2085
    %7909 = vmatpush1.msra.mxu0 %v2084
    %7910 = vmatprep.subr.mxu0 %v2089
    %7911 = vmatpush1.msra.mxu0 %v2088
    %7912 = vmatprep.subr.mxu0 %v2093
    %7913 = vmatpush1.msra.mxu0 %v2092
    %7914 = vmatprep.subr.mxu0 %v2097
    %7915 = vmatpush1.msra.mxu0 %v2096
    %7916 = vmatprep.subr.mxu0 %v2101
    %7917 = vmatpush1.msra.mxu0 %v2100
    %7918 = vmatprep.subr.mxu0 %v2105
    %7919 = vmatpush1.msra.mxu0 %v2104
    %7920 = vmatprep.subr.mxu0 %v2109
    %7921 = vmatpush1.msra.mxu0 %v2108
    %7922 = vmatprep.subr.mxu0 %v2113
    %7923 = vmatpush1.msra.mxu0 %v2112
    %7924 = vmatprep.subr.mxu0 %v2117
    %7925 = vmatpush1.msra.mxu0 %v2116
    %7926 = vmatprep.subr.mxu0 %v2121
    %7927 = vmatpush1.msra.mxu0 %v2120
    %7928 = vmatprep.mubr.f32.mxu0 %v6769
    %7929 = vmatmul.mubr.f32.gmra.mrb[0].mxu0 %v6767
    %v7930 = vpop.f32.mrb[0].mxu0
    %v7931 = vadd.f32 0.0, %v7930
    %v7932 = vpop.f32.mrb[0].mxu0
    %v7933 = vadd.f32 0.0, %v7932
    %7934 = vmatprep.mubr.f32.mxu0 %v6775
    %7935 = vmatmul.mubr.f32.gmra.mrb[0].mxu0 %v6773
    %v7936 = vpop.f32.mrb[0].mxu0
    %v7937 = vadd.f32 0.0, %v7936
    %v7938 = vpop.f32.mrb[0].mxu0
    %v7939 = vadd.f32 0.0, %v7938
    %7940 = vmatprep.mubr.f32.mxu0 %v6781
    %7941 = vmatmul.mubr.f32.gmra.mrb[0].mxu0 %v6779
    %v7942 = vpop.f32.mrb[0].mxu0
    %v7943 = vadd.f32 0.0, %v7942
    %v7944 = vpop.f32.mrb[0].mxu0
    %v7945 = vadd.f32 0.0, %v7944
    %7946 = vmatprep.mubr.f32.mxu0 %v6787
    %7947 = vmatmul.mubr.f32.gmra.mrb[0].mxu0 %v6785
    %v7948 = vpop.f32.mrb[0].mxu0
    %v7949 = vadd.f32 0.0, %v7948
    %v7950 = vpop.f32.mrb[0].mxu0
    %v7951 = vadd.f32 0.0, %v7950
    %7952 = vdwg.mxu0
    %7953 = vmatprep.subr.mxu0 %v2125
    %7954 = vmatpush1.msra.mxu0 %v2124
    %7955 = vmatprep.subr.mxu0 %v2129
    %7956 = vmatpush1.msra.mxu0 %v2128
    %7957 = vmatprep.subr.mxu0 %v2133
    %7958 = vmatpush1.msra.mxu0 %v2132
    %7959 = vmatprep.subr.mxu0 %v2137
    %7960 = vmatpush1.msra.mxu0 %v2136
    %7961 = vmatprep.subr.mxu0 %v2141
    %7962 = vmatpush1.msra.mxu0 %v2140
    %7963 = vmatprep.subr.mxu0 %v2145
    %7964 = vmatpush1.msra.mxu0 %v2144
    %7965 = vmatprep.subr.mxu0 %v2149
    %7966 = vmatpush1.msra.mxu0 %v2148
    %7967 = vmatprep.subr.mxu0 %v2153
    %7968 = vmatpush1.msra.mxu0 %v2152
    %7969 = vmatprep.subr.mxu0 %v2157
    %7970 = vmatpush1.msra.mxu0 %v2156
    %7971 = vmatprep.subr.mxu0 %v2161
    %7972 = vmatpush1.msra.mxu0 %v2160
    %7973 = vmatprep.subr.mxu0 %v2165
    %7974 = vmatpush1.msra.mxu0 %v2164
    %7975 = vmatprep.subr.mxu0 %v2169
    %7976 = vmatpush1.msra.mxu0 %v2168
    %7977 = vmatprep.subr.mxu0 %v2173
    %7978 = vmatpush1.msra.mxu0 %v2172
    %7979 = vmatprep.subr.mxu0 %v2177
    %7980 = vmatpush1.msra.mxu0 %v2176
    %7981 = vmatprep.subr.mxu0 %v2181
    %7982 = vmatpush1.msra.mxu0 %v2180
    %7983 = vmatprep.subr.mxu0 %v2185
    %7984 = vmatpush1.msra.mxu0 %v2184
    %7985 = vmatprep.subr.mxu0 %v2189
    %7986 = vmatpush1.msra.mxu0 %v2188
    %7987 = vmatprep.subr.mxu0 %v2193
    %7988 = vmatpush1.msra.mxu0 %v2192
    %7989 = vmatprep.subr.mxu0 %v2197
    %7990 = vmatpush1.msra.mxu0 %v2196
    %7991 = vmatprep.subr.mxu0 %v2201
    %7992 = vmatpush1.msra.mxu0 %v2200
    %7993 = vmatprep.subr.mxu0 %v2205
    %7994 = vmatpush1.msra.mxu0 %v2204
    %7995 = vmatprep.subr.mxu0 %v2209
    %7996 = vmatpush1.msra.mxu0 %v2208
    %7997 = vmatprep.subr.mxu0 %v2213
    %7998 = vmatpush1.msra.mxu0 %v2212
    %7999 = vmatprep.subr.mxu0 %v2217
    %8000 = vmatpush1.msra.mxu0 %v2216
    %8001 = vmatprep.subr.mxu0 %v2221
    %8002 = vmatpush1.msra.mxu0 %v2220
    %8003 = vmatprep.subr.mxu0 %v2225
    %8004 = vmatpush1.msra.mxu0 %v2224
    %8005 = vmatprep.subr.mxu0 %v2229
    %8006 = vmatpush1.msra.mxu0 %v2228
    %8007 = vmatprep.subr.mxu0 %v2233
    %8008 = vmatpush1.msra.mxu0 %v2232
    %8009 = vmatprep.subr.mxu0 %v2237
    %8010 = vmatpush1.msra.mxu0 %v2236
    %8011 = vmatprep.subr.mxu0 %v2241
    %8012 = vmatpush1.msra.mxu0 %v2240
    %8013 = vmatprep.subr.mxu0 %v2245
    %8014 = vmatpush1.msra.mxu0 %v2244
    %8015 = vmatprep.subr.mxu0 %v2249
    %8016 = vmatpush1.msra.mxu0 %v2248
    %8017 = vmatprep.mubr.f32.mxu0 %v6906
    %8018 = vmatmul.mubr.f32.gmra.mrb[0].mxu0 %v6904
    %v8019 = vpop.f32.mrb[0].mxu0
    %v8020 = vadd.f32 %v7931, %v8019
    %v8021 = vpop.f32.mrb[0].mxu0
    %v8022 = vadd.f32 %v7933, %v8021
    %8023 = vmatprep.mubr.f32.mxu0 %v6912
    %8024 = vmatmul.mubr.f32.gmra.mrb[0].mxu0 %v6910
    %v8025 = vpop.f32.mrb[0].mxu0
    %v8026 = vadd.f32 %v7937, %v8025
    %v8027 = vpop.f32.mrb[0].mxu0
    %v8028 = vadd.f32 %v7939, %v8027
    %8029 = vmatprep.mubr.f32.mxu0 %v6918
    %8030 = vmatmul.mubr.f32.gmra.mrb[0].mxu0 %v6916
    %v8031 = vpop.f32.mrb[0].mxu0
    %v8032 = vadd.f32 %v7943, %v8031
    %v8033 = vpop.f32.mrb[0].mxu0
    %v8034 = vadd.f32 %v7945, %v8033
    %8035 = vmatprep.mubr.f32.mxu0 %v6924
    %8036 = vmatmul.mubr.f32.gmra.mrb[0].mxu0 %v6922
    %v8037 = vpop.f32.mrb[0].mxu0
    %v8038 = vadd.f32 %v7949, %v8037
    %v8039 = vpop.f32.mrb[0].mxu0
    %v8040 = vadd.f32 %v7951, %v8039
    %8041 = vdwg.mxu0
    %v8042 = vadd.f32 %v7670, %v7842
    %v8043 = vadd.f32 %v7671, %v7844
    %v8044 = vadd.f32 %v7672, %v8020
    %v8045 = vadd.f32 %v7673, %v8022
    %v8046 = vadd.f32 %v7674, %v7848
    %v8047 = vadd.f32 %v7675, %v7850
    %v8048 = vadd.f32 %v7676, %v8026
    %v8049 = vadd.f32 %v7677, %v8028
    %v8050 = vadd.f32 %v7678, %v7854
    %v8051 = vadd.f32 %v7679, %v7856
    %v8052 = vadd.f32 %v7680, %v8032
    %v8053 = vadd.f32 %v7681, %v8034
    %v8054 = vadd.f32 %v7682, %v7860
    %v8055 = vadd.f32 %v7683, %v7862
    %v8056 = vadd.f32 %v7684, %v8038
    %v8057 = vadd.f32 %v7685, %v8040
    %v8058 = vmax.f32 %v8042, 0.0
    %v8059 = vmax.f32 %v8043, 0.0
    %v8060 = vmax.f32 %v8044, 0.0
    %v8061 = vmax.f32 %v8045, 0.0
    %v8062 = vmax.f32 %v8046, 0.0
    %v8063 = vmax.f32 %v8047, 0.0
    %v8064 = vmax.f32 %v8048, 0.0
    %v8065 = vmax.f32 %v8049, 0.0
    %v8066 = vmax.f32 %v8050, 0.0
    %v8067 = vmax.f32 %v8051, 0.0
    %v8068 = vmax.f32 %v8052, 0.0
    %v8069 = vmax.f32 %v8053, 0.0
    %v8070 = vmax.f32 %v8054, 0.0
    %v8071 = vmax.f32 %v8055, 0.0
    %v8072 = vmax.f32 %v8056, 0.0
    %v8073 = vmax.f32 %v8057, 0.0
    %v8074 = vld [vmem:[#allocation20] sm:$0xff]
    %v8075 = vld [vmem:[#allocation20 + $0x8] sm:$0xff]
    %v8076 = vld [vmem:[#allocation20 + $0x10] sm:$0xff]
    %v8077 = vld [vmem:[#allocation20 + $0x18] sm:$0xff]
    %v8078 = vld [vmem:[#allocation20 + $0x20] sm:$0xff]
    %v8079 = vld [vmem:[#allocation20 + $0x28] sm:$0xff]
    %v8080 = vld [vmem:[#allocation20 + $0x30] sm:$0xff]
    %v8081 = vld [vmem:[#allocation20 + $0x38] sm:$0xff]
    %8082 = vrot.lane.b32.xlu0 %v8058, 32
    %v8083 = vpop.permute.xlu0 %8082
    %8084 = vrot.lane.b32.xlu0 %v8062, 32
    %v8085 = vpop.permute.xlu0 %8084
    %8086 = vrot.lane.b32.xlu0 %v8066, 32
    %v8087 = vpop.permute.xlu0 %8086
    %8088 = vrot.lane.b32.xlu0 %v8070, 32
    %v8089 = vpop.permute.xlu0 %8088
    %8090 = vrot.lane.b32.xlu0 %v8059, 32
    %v8091 = vpop.permute.xlu0 %8090
    %8092 = vrot.lane.b32.xlu0 %v8063, 32
    %v8093 = vpop.permute.xlu0 %8092
    %8094 = vrot.lane.b32.xlu0 %v8067, 32
    %v8095 = vpop.permute.xlu0 %8094
    %8096 = vrot.lane.b32.xlu0 %v8071, 32
    %v8097 = vpop.permute.xlu0 %8096
    %8098 = vrot.lane.b32.xlu0 %v8060, 32
    %v8099 = vpop.permute.xlu0 %8098
    %8100 = vrot.lane.b32.xlu0 %v8064, 32
    %v8101 = vpop.permute.xlu0 %8100
    %8102 = vrot.lane.b32.xlu0 %v8068, 32
    %v8103 = vpop.permute.xlu0 %8102
    %8104 = vrot.lane.b32.xlu0 %v8072, 32
    %v8105 = vpop.permute.xlu0 %8104
    %8106 = vrot.lane.b32.xlu0 %v8061, 32
    %v8107 = vpop.permute.xlu0 %8106
    %8108 = vrot.lane.b32.xlu0 %v8065, 32
    %v8109 = vpop.permute.xlu0 %8108
    %8110 = vrot.lane.b32.xlu0 %v8069, 32
    %v8111 = vpop.permute.xlu0 %8110
    %8112 = vrot.lane.b32.xlu0 %v8073, 32
    %v8113 = vpop.permute.xlu0 %8112
    %v8114 = vsel %vm2959, %v8099, %v8107
    %v8115 = vsel %vm2959, %v8101, %v8109
    %v8116 = vsel %vm2959, %v8103, %v8111
    %v8117 = vsel %vm2959, %v8105, %v8113
    %v8118 = vsel %vm2959, %v8091, %v8099
    %v8119 = vsel %vm2959, %v8093, %v8101
    %v8120 = vsel %vm2959, %v8095, %v8103
    %v8121 = vsel %vm2959, %v8097, %v8105
    %v8122 = vsel %vm2959, %v8083, %v8091
    %v8123 = vsel %vm2959, %v8085, %v8093
    %v8124 = vsel %vm2959, %v8087, %v8095
    %v8125 = vsel %vm2959, %v8089, %v8097
    %v8126 = vsel %vm2959, %v8107, %v8083
    %v8127 = vsel %vm2959, %v8109, %v8085
    %v8128 = vsel %vm2959, %v8111, %v8087
    %v8129 = vsel %vm2959, %v8113, %v8089
    %v8130 = vmul.f32 %v8126, %v2997
    %v8131 = vmul.f32 %v8122, %v3001
    %v8132 = vmul.f32 %v8118, %v3005
    %v8133 = vmul.f32 %v8114, %v3009
    %v8134 = vmul.f32 %v8127, %v2997
    %v8135 = vmul.f32 %v8123, %v3001
    %v8136 = vmul.f32 %v8119, %v3005
    %v8137 = vmul.f32 %v8115, %v3009
    %v8138 = vmul.f32 %v8128, %v2997
    %v8139 = vmul.f32 %v8124, %v3001
    %v8140 = vmul.f32 %v8120, %v3005
    %v8141 = vmul.f32 %v8116, %v3009
    %v8142 = vmul.f32 %v8129, %v2997
    %v8143 = vmul.f32 %v8125, %v3001
    %v8144 = vmul.f32 %v8121, %v3005
    %v8145 = vmul.f32 %v8117, %v3009
    %8146 = vrot.lane.b32.xlu0 %v8058, 16
    %v8147 = vpop.permute.xlu0 %8146
    %8148 = vrot.lane.b32.xlu0 %v8062, 16
    %v8149 = vpop.permute.xlu0 %8148
    %8150 = vrot.lane.b32.xlu0 %v8066, 16
    %v8151 = vpop.permute.xlu0 %8150
    %8152 = vrot.lane.b32.xlu0 %v8070, 16
    %v8153 = vpop.permute.xlu0 %8152
    %8154 = vrot.lane.b32.xlu0 %v8059, 16
    %v8155 = vpop.permute.xlu0 %8154
    %8156 = vrot.lane.b32.xlu0 %v8063, 16
    %v8157 = vpop.permute.xlu0 %8156
    %8158 = vrot.lane.b32.xlu0 %v8067, 16
    %v8159 = vpop.permute.xlu0 %8158
    %8160 = vrot.lane.b32.xlu0 %v8071, 16
    %v8161 = vpop.permute.xlu0 %8160
    %8162 = vrot.lane.b32.xlu0 %v8060, 16
    %v8163 = vpop.permute.xlu0 %8162
    %8164 = vrot.lane.b32.xlu0 %v8064, 16
    %v8165 = vpop.permute.xlu0 %8164
    %8166 = vrot.lane.b32.xlu0 %v8068, 16
    %v8167 = vpop.permute.xlu0 %8166
    %8168 = vrot.lane.b32.xlu0 %v8072, 16
    %v8169 = vpop.permute.xlu0 %8168
    %8170 = vrot.lane.b32.xlu0 %v8061, 16
    %v8171 = vpop.permute.xlu0 %8170
    %8172 = vrot.lane.b32.xlu0 %v8065, 16
    %v8173 = vpop.permute.xlu0 %8172
    %8174 = vrot.lane.b32.xlu0 %v8069, 16
    %v8175 = vpop.permute.xlu0 %8174
    %8176 = vrot.lane.b32.xlu0 %v8073, 16
    %v8177 = vpop.permute.xlu0 %8176
    %v8178 = vsel %vm3110, %v8163, %v8171
    %v8179 = vsel %vm3110, %v8165, %v8173
    %v8180 = vsel %vm3110, %v8167, %v8175
    %v8181 = vsel %vm3110, %v8169, %v8177
    %v8182 = vsel %vm3110, %v8155, %v8163
    %v8183 = vsel %vm3110, %v8157, %v8165
    %v8184 = vsel %vm3110, %v8159, %v8167
    %v8185 = vsel %vm3110, %v8161, %v8169
    %v8186 = vsel %vm3110, %v8147, %v8155
    %v8187 = vsel %vm3110, %v8149, %v8157
    %v8188 = vsel %vm3110, %v8151, %v8159
    %v8189 = vsel %vm3110, %v8153, %v8161
    %v8190 = vsel %vm3110, %v8171, %v8147
    %v8191 = vsel %vm3110, %v8173, %v8149
    %v8192 = vsel %vm3110, %v8175, %v8151
    %v8193 = vsel %vm3110, %v8177, %v8153
    %v8194 = vmul.f32 %v8190, %v3149
    %v8195 = vmul.f32 %v8186, %v3153
    %v8196 = vmul.f32 %v8182, %v3157
    %v8197 = vmul.f32 %v8178, %v3161
    %v8198 = vmul.f32 %v8191, %v3149
    %v8199 = vmul.f32 %v8187, %v3153
    %v8200 = vmul.f32 %v8183, %v3157
    %v8201 = vmul.f32 %v8179, %v3161
    %v8202 = vmul.f32 %v8192, %v3149
    %v8203 = vmul.f32 %v8188, %v3153
    %v8204 = vmul.f32 %v8184, %v3157
    %v8205 = vmul.f32 %v8180, %v3161
    %v8206 = vmul.f32 %v8193, %v3149
    %v8207 = vmul.f32 %v8189, %v3153
    %v8208 = vmul.f32 %v8185, %v3157
    %v8209 = vmul.f32 %v8181, %v3161
    %8210 = vrot.lane.b32.xlu0 %v8058, 112
    %v8211 = vpop.permute.xlu0 %8210
    %8212 = vrot.lane.b32.xlu0 %v8062, 112
    %v8213 = vpop.permute.xlu0 %8212
    %8214 = vrot.lane.b32.xlu0 %v8066, 112
    %v8215 = vpop.permute.xlu0 %8214
    %8216 = vrot.lane.b32.xlu0 %v8070, 112
    %v8217 = vpop.permute.xlu0 %8216
    %8218 = vrot.lane.b32.xlu0 %v8059, 112
    %v8219 = vpop.permute.xlu0 %8218
    %8220 = vrot.lane.b32.xlu0 %v8063, 112
    %v8221 = vpop.permute.xlu0 %8220
    %8222 = vrot.lane.b32.xlu0 %v8067, 112
    %v8223 = vpop.permute.xlu0 %8222
    %8224 = vrot.lane.b32.xlu0 %v8071, 112
    %v8225 = vpop.permute.xlu0 %8224
    %8226 = vrot.lane.b32.xlu0 %v8060, 112
    %v8227 = vpop.permute.xlu0 %8226
    %8228 = vrot.lane.b32.xlu0 %v8064, 112
    %v8229 = vpop.permute.xlu0 %8228
    %8230 = vrot.lane.b32.xlu0 %v8068, 112
    %v8231 = vpop.permute.xlu0 %8230
    %8232 = vrot.lane.b32.xlu0 %v8072, 112
    %v8233 = vpop.permute.xlu0 %8232
    %8234 = vrot.lane.b32.xlu0 %v8061, 112
    %v8235 = vpop.permute.xlu0 %8234
    %8236 = vrot.lane.b32.xlu0 %v8065, 112
    %v8237 = vpop.permute.xlu0 %8236
    %8238 = vrot.lane.b32.xlu0 %v8069, 112
    %v8239 = vpop.permute.xlu0 %8238
    %8240 = vrot.lane.b32.xlu0 %v8073, 112
    %v8241 = vpop.permute.xlu0 %8240
    %v8242 = vsel %vm3262, %v8227, %v8235
    %v8243 = vsel %vm3262, %v8229, %v8237
    %v8244 = vsel %vm3262, %v8231, %v8239
    %v8245 = vsel %vm3262, %v8233, %v8241
    %v8246 = vsel %vm3262, %v8219, %v8227
    %v8247 = vsel %vm3262, %v8221, %v8229
    %v8248 = vsel %vm3262, %v8223, %v8231
    %v8249 = vsel %vm3262, %v8225, %v8233
    %v8250 = vsel %vm3262, %v8211, %v8219
    %v8251 = vsel %vm3262, %v8213, %v8221
    %v8252 = vsel %vm3262, %v8215, %v8223
    %v8253 = vsel %vm3262, %v8217, %v8225
    %v8254 = vsel %vm3262, %v8235, %v8211
    %v8255 = vsel %vm3262, %v8237, %v8213
    %v8256 = vsel %vm3262, %v8239, %v8215
    %v8257 = vsel %vm3262, %v8241, %v8217
    %v8258 = vmul.f32 %v8250, %v3301
    %v8259 = vmul.f32 %v8246, %v3305
    %v8260 = vmul.f32 %v8242, %v3309
    %v8261 = vmul.f32 %v8254, %v3313
    %v8262 = vmul.f32 %v8251, %v3301
    %v8263 = vmul.f32 %v8247, %v3305
    %v8264 = vmul.f32 %v8243, %v3309
    %v8265 = vmul.f32 %v8255, %v3313
    %v8266 = vmul.f32 %v8252, %v3301
    %v8267 = vmul.f32 %v8248, %v3305
    %v8268 = vmul.f32 %v8244, %v3309
    %v8269 = vmul.f32 %v8256, %v3313
    %v8270 = vmul.f32 %v8253, %v3301
    %v8271 = vmul.f32 %v8249, %v3305
    %v8272 = vmul.f32 %v8245, %v3309
    %v8273 = vmul.f32 %v8257, %v3313
    %8274 = vrot.lane.b32.xlu0 %v8058, 96
    %v8275 = vpop.permute.xlu0 %8274
    %8276 = vrot.lane.b32.xlu0 %v8062, 96
    %v8277 = vpop.permute.xlu0 %8276
    %8278 = vrot.lane.b32.xlu0 %v8066, 96
    %v8279 = vpop.permute.xlu0 %8278
    %8280 = vrot.lane.b32.xlu0 %v8070, 96
    %v8281 = vpop.permute.xlu0 %8280
    %8282 = vrot.lane.b32.xlu0 %v8059, 96
    %v8283 = vpop.permute.xlu0 %8282
    %8284 = vrot.lane.b32.xlu0 %v8063, 96
    %v8285 = vpop.permute.xlu0 %8284
    %8286 = vrot.lane.b32.xlu0 %v8067, 96
    %v8287 = vpop.permute.xlu0 %8286
    %8288 = vrot.lane.b32.xlu0 %v8071, 96
    %v8289 = vpop.permute.xlu0 %8288
    %8290 = vrot.lane.b32.xlu0 %v8060, 96
    %v8291 = vpop.permute.xlu0 %8290
    %8292 = vrot.lane.b32.xlu0 %v8064, 96
    %v8293 = vpop.permute.xlu0 %8292
    %8294 = vrot.lane.b32.xlu0 %v8068, 96
    %v8295 = vpop.permute.xlu0 %8294
    %8296 = vrot.lane.b32.xlu0 %v8072, 96
    %v8297 = vpop.permute.xlu0 %8296
    %8298 = vrot.lane.b32.xlu0 %v8061, 96
    %v8299 = vpop.permute.xlu0 %8298
    %8300 = vrot.lane.b32.xlu0 %v8065, 96
    %v8301 = vpop.permute.xlu0 %8300
    %8302 = vrot.lane.b32.xlu0 %v8069, 96
    %v8303 = vpop.permute.xlu0 %8302
    %8304 = vrot.lane.b32.xlu0 %v8073, 96
    %v8305 = vpop.permute.xlu0 %8304
    %v8306 = vsel %vm3414, %v8291, %v8299
    %v8307 = vsel %vm3414, %v8293, %v8301
    %v8308 = vsel %vm3414, %v8295, %v8303
    %v8309 = vsel %vm3414, %v8297, %v8305
    %v8310 = vsel %vm3414, %v8283, %v8291
    %v8311 = vsel %vm3414, %v8285, %v8293
    %v8312 = vsel %vm3414, %v8287, %v8295
    %v8313 = vsel %vm3414, %v8289, %v8297
    %v8314 = vsel %vm3414, %v8275, %v8283
    %v8315 = vsel %vm3414, %v8277, %v8285
    %v8316 = vsel %vm3414, %v8279, %v8287
    %v8317 = vsel %vm3414, %v8281, %v8289
    %v8318 = vsel %vm3414, %v8299, %v8275
    %v8319 = vsel %vm3414, %v8301, %v8277
    %v8320 = vsel %vm3414, %v8303, %v8279
    %v8321 = vsel %vm3414, %v8305, %v8281
    %v8322 = vmul.f32 %v8314, %v3453
    %v8323 = vmul.f32 %v8310, %v3457
    %v8324 = vmul.f32 %v8306, %v3461
    %v8325 = vmul.f32 %v8318, %v3465
    %v8326 = vmul.f32 %v8315, %v3453
    %v8327 = vmul.f32 %v8311, %v3457
    %v8328 = vmul.f32 %v8307, %v3461
    %v8329 = vmul.f32 %v8319, %v3465
    %v8330 = vmul.f32 %v8316, %v3453
    %v8331 = vmul.f32 %v8312, %v3457
    %v8332 = vmul.f32 %v8308, %v3461
    %v8333 = vmul.f32 %v8320, %v3465
    %v8334 = vmul.f32 %v8317, %v3453
    %v8335 = vmul.f32 %v8313, %v3457
    %v8336 = vmul.f32 %v8309, %v3461
    %v8337 = vmul.f32 %v8321, %v3465
    %v8338 = vld [vmem:[%s20] sm:$0xff]
    %v8339 = vld [vmem:[%s20 + $0x8] sm:$0xff]
    %v8340 = vld [vmem:[%s20 + $0x10] sm:$0xff]
    %v8341 = vld [vmem:[%s20 + $0x18] sm:$0xff]
    %8343 = vset.pattern.permute.xlu0 0
    %8344 = vperm.xlu0 %8343, %v8338
    %v8345 = vpop.permute.xlu0 %8344
    %8348 = vset.pattern.permute.xlu0 0
    %8349 = vperm.xlu0 %8348, %v8339
    %v8350 = vpop.permute.xlu0 %8349
    %8353 = vset.pattern.permute.xlu0 0
    %8354 = vperm.xlu0 %8353, %v8340
    %v8355 = vpop.permute.xlu0 %8354
    %8358 = vset.pattern.permute.xlu0 0
    %8359 = vperm.xlu0 %8358, %v8341
    %v8360 = vpop.permute.xlu0 %8359
    %v8363 = vsel %vm6163, %v8075, 0
    %v8366 = vsel %vm6163, %v8077, 0
    %v8369 = vsel %vm6163, %v8079, 0
    %v8372 = vsel %vm6163, %v8081, 0
    %8374 = vmatprep.subr.mxu0 %v8131
    %8375 = vmatpush1.msra.mxu0 %v8130
    %8376 = vmatprep.subr.mxu0 %v8135
    %8377 = vmatpush1.msra.mxu0 %v8134
    %8378 = vmatprep.subr.mxu0 %v8139
    %8379 = vmatpush1.msra.mxu0 %v8138
    %8380 = vmatprep.subr.mxu0 %v8143
    %8381 = vmatpush1.msra.mxu0 %v8142
    %8382 = vmatprep.subr.mxu0 %v8195
    %8383 = vmatpush1.msra.mxu0 %v8194
    %8384 = vmatprep.subr.mxu0 %v8199
    %8385 = vmatpush1.msra.mxu0 %v8198
    %8386 = vmatprep.subr.mxu0 %v8203
    %8387 = vmatpush1.msra.mxu0 %v8202
    %8388 = vmatprep.subr.mxu0 %v8207
    %8389 = vmatpush1.msra.mxu0 %v8206
    %8390 = vmatprep.subr.mxu0 %v8059
    %8391 = vmatpush1.msra.mxu0 %v8058
    %8392 = vmatprep.subr.mxu0 %v8063
    %8393 = vmatpush1.msra.mxu0 %v8062
    %8394 = vmatprep.subr.mxu0 %v8067
    %8395 = vmatpush1.msra.mxu0 %v8066
    %8396 = vmatprep.subr.mxu0 %v8071
    %8397 = vmatpush1.msra.mxu0 %v8070
    %8398 = vmatprep.subr.mxu0 %v8259
    %8399 = vmatpush1.msra.mxu0 %v8258
    %8400 = vmatprep.subr.mxu0 %v8263
    %8401 = vmatpush1.msra.mxu0 %v8262
    %8402 = vmatprep.subr.mxu0 %v8267
    %8403 = vmatpush1.msra.mxu0 %v8266
    %8404 = vmatprep.subr.mxu0 %v8271
    %8405 = vmatpush1.msra.mxu0 %v8270
    %8406 = vmatprep.subr.mxu0 %v8323
    %8407 = vmatpush1.msra.mxu0 %v8322
    %8408 = vmatprep.subr.mxu0 %v8327
    %8409 = vmatpush1.msra.mxu0 %v8326
    %8410 = vmatprep.subr.mxu0 %v8331
    %8411 = vmatpush1.msra.mxu0 %v8330
    %8412 = vmatprep.subr.mxu0 %v8335
    %8413 = vmatpush1.msra.mxu0 %v8334
    %8414 = vmatprep.subr.mxu0 0.0
    %8415 = vmatpush1.msra.mxu0 0.0
    %8416 = vmatprep.subr.mxu0 0.0
    %8417 = vmatpush1.msra.mxu0 0.0
    %8418 = vmatprep.subr.mxu0 0.0
    %8419 = vmatpush1.msra.mxu0 0.0
    %8420 = vmatprep.subr.mxu0 0.0
    %8421 = vmatpush1.msra.mxu0 0.0
    %8422 = vmatprep.subr.mxu0 0.0
    %8423 = vmatpush1.msra.mxu0 0.0
    %8424 = vmatprep.subr.mxu0 0.0
    %8425 = vmatpush1.msra.mxu0 0.0
    %8426 = vmatprep.subr.mxu0 0.0
    %8427 = vmatpush1.msra.mxu0 0.0
    %8428 = vmatprep.subr.mxu0 0.0
    %8429 = vmatpush1.msra.mxu0 0.0
    %8430 = vmatprep.subr.mxu0 0.0
    %8431 = vmatpush1.msra.mxu0 0.0
    %8432 = vmatprep.subr.mxu0 0.0
    %8433 = vmatpush1.msra.mxu0 0.0
    %8434 = vmatprep.subr.mxu0 0.0
    %8435 = vmatpush1.msra.mxu0 0.0
    %8436 = vmatprep.subr.mxu0 0.0
    %8437 = vmatpush1.msra.mxu0 0.0
    %8438 = vmatprep.mubr.f32.mxu0 %v8363
    %8439 = vmatmul.mubr.f32.gmra.mrb[0].mxu0 %v8074
    %v8440 = vpop.f32.mrb[0].mxu0
    %v8441 = vadd.f32 %v8345, %v8440
    %v8442 = vpop.f32.mrb[0].mxu0
    %v8443 = vadd.f32 %v8345, %v8442
    %8444 = vmatprep.mubr.f32.mxu0 %v8366
    %8445 = vmatmul.mubr.f32.gmra.mrb[0].mxu0 %v8076
    %v8446 = vpop.f32.mrb[0].mxu0
    %v8447 = vadd.f32 %v8350, %v8446
    %v8448 = vpop.f32.mrb[0].mxu0
    %v8449 = vadd.f32 %v8350, %v8448
    %8450 = vmatprep.mubr.f32.mxu0 %v8369
    %8451 = vmatmul.mubr.f32.gmra.mrb[0].mxu0 %v8078
    %v8452 = vpop.f32.mrb[0].mxu0
    %v8453 = vadd.f32 %v8355, %v8452
    %v8454 = vpop.f32.mrb[0].mxu0
    %v8455 = vadd.f32 %v8355, %v8454
    %8456 = vmatprep.mubr.f32.mxu0 %v8372
    %8457 = vmatmul.mubr.f32.gmra.mrb[0].mxu0 %v8080
    %v8458 = vpop.f32.mrb[0].mxu0
    %v8459 = vadd.f32 %v8360, %v8458
    %v8460 = vpop.f32.mrb[0].mxu0
    %v8461 = vadd.f32 %v8360, %v8460
    %8462 = vdwg.mxu0
    %8463 = vmatprep.subr.mxu0 %v8133
    %8464 = vmatpush1.msra.mxu0 %v8132
    %8465 = vmatprep.subr.mxu0 %v8137
    %8466 = vmatpush1.msra.mxu0 %v8136
    %8467 = vmatprep.subr.mxu0 %v8141
    %8468 = vmatpush1.msra.mxu0 %v8140
    %8469 = vmatprep.subr.mxu0 %v8145
    %8470 = vmatpush1.msra.mxu0 %v8144
    %8471 = vmatprep.subr.mxu0 %v8197
    %8472 = vmatpush1.msra.mxu0 %v8196
    %8473 = vmatprep.subr.mxu0 %v8201
    %8474 = vmatpush1.msra.mxu0 %v8200
    %8475 = vmatprep.subr.mxu0 %v8205
    %8476 = vmatpush1.msra.mxu0 %v8204
    %8477 = vmatprep.subr.mxu0 %v8209
    %8478 = vmatpush1.msra.mxu0 %v8208
    %8479 = vmatprep.subr.mxu0 %v8061
    %8480 = vmatpush1.msra.mxu0 %v8060
    %8481 = vmatprep.subr.mxu0 %v8065
    %8482 = vmatpush1.msra.mxu0 %v8064
    %8483 = vmatprep.subr.mxu0 %v8069
    %8484 = vmatpush1.msra.mxu0 %v8068
    %8485 = vmatprep.subr.mxu0 %v8073
    %8486 = vmatpush1.msra.mxu0 %v8072
    %8487 = vmatprep.subr.mxu0 %v8261
    %8488 = vmatpush1.msra.mxu0 %v8260
    %8489 = vmatprep.subr.mxu0 %v8265
    %8490 = vmatpush1.msra.mxu0 %v8264
    %8491 = vmatprep.subr.mxu0 %v8269
    %8492 = vmatpush1.msra.mxu0 %v8268
    %8493 = vmatprep.subr.mxu0 %v8273
    %8494 = vmatpush1.msra.mxu0 %v8272
    %8495 = vmatprep.subr.mxu0 %v8325
    %8496 = vmatpush1.msra.mxu0 %v8324
    %8497 = vmatprep.subr.mxu0 %v8329
    %8498 = vmatpush1.msra.mxu0 %v8328
    %8499 = vmatprep.subr.mxu0 %v8333
    %8500 = vmatpush1.msra.mxu0 %v8332
    %8501 = vmatprep.subr.mxu0 %v8337
    %8502 = vmatpush1.msra.mxu0 %v8336
    %8503 = vmatprep.subr.mxu0 0.0
    %8504 = vmatpush1.msra.mxu0 0.0
    %8505 = vmatprep.subr.mxu0 0.0
    %8506 = vmatpush1.msra.mxu0 0.0
    %8507 = vmatprep.subr.mxu0 0.0
    %8508 = vmatpush1.msra.mxu0 0.0
    %8509 = vmatprep.subr.mxu0 0.0
    %8510 = vmatpush1.msra.mxu0 0.0
    %8511 = vmatprep.subr.mxu0 0.0
    %8512 = vmatpush1.msra.mxu0 0.0
    %8513 = vmatprep.subr.mxu0 0.0
    %8514 = vmatpush1.msra.mxu0 0.0
    %8515 = vmatprep.subr.mxu0 0.0
    %8516 = vmatpush1.msra.mxu0 0.0
    %8517 = vmatprep.subr.mxu0 0.0
    %8518 = vmatpush1.msra.mxu0 0.0
    %8519 = vmatprep.subr.mxu0 0.0
    %8520 = vmatpush1.msra.mxu0 0.0
    %8521 = vmatprep.subr.mxu0 0.0
    %8522 = vmatpush1.msra.mxu0 0.0
    %8523 = vmatprep.subr.mxu0 0.0
    %8524 = vmatpush1.msra.mxu0 0.0
    %8525 = vmatprep.subr.mxu0 0.0
    %8526 = vmatpush1.msra.mxu0 0.0
    %8527 = vmatprep.mubr.f32.mxu0 %v8363
    %8528 = vmatmul.mubr.f32.gmra.mrb[0].mxu0 %v8074
    %v8529 = vpop.f32.mrb[0].mxu0
    %v8530 = vadd.f32 %v8345, %v8529
    %v8531 = vpop.f32.mrb[0].mxu0
    %v8532 = vadd.f32 %v8345, %v8531
    %8533 = vmatprep.mubr.f32.mxu0 %v8366
    %8534 = vmatmul.mubr.f32.gmra.mrb[0].mxu0 %v8076
    %v8535 = vpop.f32.mrb[0].mxu0
    %v8536 = vadd.f32 %v8350, %v8535
    %v8537 = vpop.f32.mrb[0].mxu0
    %v8538 = vadd.f32 %v8350, %v8537
    %8539 = vmatprep.mubr.f32.mxu0 %v8369
    %8540 = vmatmul.mubr.f32.gmra.mrb[0].mxu0 %v8078
    %v8541 = vpop.f32.mrb[0].mxu0
    %v8542 = vadd.f32 %v8355, %v8541
    %v8543 = vpop.f32.mrb[0].mxu0
    %v8544 = vadd.f32 %v8355, %v8543
    %8545 = vmatprep.mubr.f32.mxu0 %v8372
    %8546 = vmatmul.mubr.f32.gmra.mrb[0].mxu0 %v8080
    %v8547 = vpop.f32.mrb[0].mxu0
    %v8548 = vadd.f32 %v8360, %v8547
    %v8549 = vpop.f32.mrb[0].mxu0
    %v8550 = vadd.f32 %v8360, %v8549
    %8551 = vdwg.mxu0
    %v8552 = vadd.f32 %v8441, %v6588
    %v8553 = vadd.f32 %v8443, %v6589
    %v8554 = vadd.f32 %v8530, %v6590
    %v8555 = vadd.f32 %v8532, %v6591
    %v8556 = vadd.f32 %v8447, %v6592
    %v8557 = vadd.f32 %v8449, %v6593
    %v8558 = vadd.f32 %v8536, %v6594
    %v8559 = vadd.f32 %v8538, %v6595
    %v8560 = vadd.f32 %v8453, %v6596
    %v8561 = vadd.f32 %v8455, %v6597
    %v8562 = vadd.f32 %v8542, %v6598
    %v8563 = vadd.f32 %v8544, %v6599
    %v8564 = vadd.f32 %v8459, %v6600
    %v8565 = vadd.f32 %v8461, %v6601
    %v8566 = vadd.f32 %v8548, %v6602
    %v8567 = vadd.f32 %v8550, %v6603
    %v8568 = vmax.f32 %v8552, 0.0
    %v8569 = vmax.f32 %v8553, 0.0
    %v8570 = vmax.f32 %v8554, 0.0
    %v8571 = vmax.f32 %v8555, 0.0
    %v8572 = vmax.f32 %v8556, 0.0
    %v8573 = vmax.f32 %v8557, 0.0
    %v8574 = vmax.f32 %v8558, 0.0
    %v8575 = vmax.f32 %v8559, 0.0
    %v8576 = vmax.f32 %v8560, 0.0
    %v8577 = vmax.f32 %v8561, 0.0
    %v8578 = vmax.f32 %v8562, 0.0
    %v8579 = vmax.f32 %v8563, 0.0
    %v8580 = vmax.f32 %v8564, 0.0
    %v8581 = vmax.f32 %v8565, 0.0
    %v8582 = vmax.f32 %v8566, 0.0
    %v8583 = vmax.f32 %v8567, 0.0
    %v8584 = vadd.f32 %v8568, %v8569
    %8585 = vadd.xlane.f32.xlu0 %v8584
    %v8586 = vpop.xlane.xlu0 %8585
    %v8587 = vadd.f32 %v8572, %v8573
    %8588 = vadd.xlane.f32.xlu0 %v8587
    %v8589 = vpop.xlane.xlu0 %8588
    %v8590 = vadd.f32 %v8576, %v8577
    %8591 = vadd.xlane.f32.xlu0 %v8590
    %v8592 = vpop.xlane.xlu0 %8591
    %v8593 = vadd.f32 %v8580, %v8581
    %8594 = vadd.xlane.f32.xlu0 %v8593
    %v8595 = vpop.xlane.xlu0 %8594
    %v8596 = vrcp.pop 256.0
    %v8597 = vmul.f32 %v8586, %v8596
    %v8598 = vmul.f32 %v8589, %v8596
    %v8599 = vmul.f32 %v8592, %v8596
    %v8600 = vmul.f32 %v8595, %v8596
    %v8601 = vld [vmem:[#allocation22] sm:$0xff]
    %v8602 = vld [vmem:[#allocation22 + $0x8] sm:$0xff]
    %v8603 = vld [vmem:[#allocation22 + $0x10] sm:$0xff]
    %v8604 = vld [vmem:[#allocation22 + $0x18] sm:$0xff]
    %v8605 = vld [vmem:[#allocation22 + $0x20] sm:$0xff]
    %v8606 = vld [vmem:[#allocation22 + $0x28] sm:$0xff]
    %v8607 = vld [vmem:[#allocation22 + $0x30] sm:$0xff]
    %v8608 = vld [vmem:[#allocation22 + $0x38] sm:$0xff]
    %v8609 = vmul.f32 %v8597, %v8601
    %v8610 = vmul.f32 %v8597, %v8602
    %v8611 = vmul.f32 %v8598, %v8603
    %v8612 = vmul.f32 %v8598, %v8604
    %v8613 = vmul.f32 %v8599, %v8605
    %v8614 = vmul.f32 %v8599, %v8606
    %v8615 = vmul.f32 %v8600, %v8607
    %v8616 = vmul.f32 %v8600, %v8608
    %v8617 = vadd.f32 %v8609, %v8611
    %v8618 = vadd.f32 %v8617, %v8613
    %v8619 = vadd.f32 %v8618, %v8615
    %v8620 = vrot.slane %v8619, 4
    %v8621 = vadd.f32 %v8619, %v8620
    %v8622 = vrot.slane %v8621, 2
    %v8623 = vadd.f32 %v8621, %v8622
    %v8624 = vrot.slane %v8623, 1
    %v8625 = vadd.f32 %v8623, %v8624
    %v8626 = vadd.f32 %v8610, %v8612
    %v8627 = vadd.f32 %v8626, %v8614
    %v8628 = vadd.f32 %v8627, %v8616
    %v8629 = vrot.slane %v8628, 4
    %v8630 = vadd.f32 %v8628, %v8629
    %v8631 = vrot.slane %v8630, 2
    %v8632 = vadd.f32 %v8630, %v8631
    %v8633 = vrot.slane %v8632, 1
    %v8634 = vadd.f32 %v8632, %v8633
    %v8635 = vld [vmem:[#allocation23] sm:$0x3]
    %v8637 = vlaneseq
    %v8638 = vshrl.u32 %v8637, 7
    %v8639 = vsub.s32 0, %v8638
    %v8640 = vrot.slane %v8635, %v8639
    %v8641 = vlaneseq
    %v8642 = vshrl.u32 %v8641, 7
    %v8643 = vsub.s32 1, %v8642
    %v8644 = vrot.slane %v8635, %v8643
    %v8647 = vadd.f32 %v8625, %v8640
    %v8648 = vadd.f32 %v8634, %v8644
    %v8651 = vcombine.low %v8647, %v8648
    %v8653 = vunpack.c.l.s4 1966171168
    %v8654 = vunpack.c.0.s8 %v8653
    %v8655 = vlaneseq
    %v8656 = vshrl.u32 %v8655, 7
    %v8657 = vsub.s32 %v8654, %v8656
    %v8658 = vrot.slane %v8651, %v8657
    %v8660 = vunpack.c.l.s4 1966171168
    %v8661 = vunpack.c.0.s8 %v8660
    %v8662 = vlaneseq
    %v8663 = vshrl.u32 %v8662, 7
    %v8664 = vsub.s32 %v8661, %v8663
    %v8665 = vrot.slane %v8658, %v8664
    %v8667 = vlaneseq
    %vm8668 = vcmp.ge.s32.totalorder %v8667, 0
    %vm8669 = vcmp.lt.s32.totalorder %v8667, 256
    %vm8670 = vmand %vm8668, %vm8669
    %8671 = vst.msk [vmem:[#allocation25] ss:$2 sm:$0x3] %vm8670, %v8665
    %v8672 = vadd.f32 %v8570, %v8571
    %8673 = vadd.xlane.f32.xlu0 %v8672
    %v8674 = vpop.xlane.xlu0 %8673
    %v8675 = vadd.f32 %v8574, %v8575
    %8676 = vadd.xlane.f32.xlu0 %v8675
    %v8677 = vpop.xlane.xlu0 %8676
    %v8678 = vadd.f32 %v8578, %v8579
    %8679 = vadd.xlane.f32.xlu0 %v8678
    %v8680 = vpop.xlane.xlu0 %8679
    %v8681 = vadd.f32 %v8582, %v8583
    %8682 = vadd.xlane.f32.xlu0 %v8681
    %v8683 = vpop.xlane.xlu0 %8682
    %v8684 = vmul.f32 %v8674, %v8596
    %v8685 = vmul.f32 %v8677, %v8596
    %v8686 = vmul.f32 %v8680, %v8596
    %v8687 = vmul.f32 %v8683, %v8596
    %v8688 = vld [vmem:[#allocation22] sm:$0xff]
    %v8689 = vld [vmem:[#allocation22 + $0x8] sm:$0xff]
    %v8690 = vld [vmem:[#allocation22 + $0x10] sm:$0xff]
    %v8691 = vld [vmem:[#allocation22 + $0x18] sm:$0xff]
    %v8692 = vld [vmem:[#allocation22 + $0x20] sm:$0xff]
    %v8693 = vld [vmem:[#allocation22 + $0x28] sm:$0xff]
    %v8694 = vld [vmem:[#allocation22 + $0x30] sm:$0xff]
    %v8695 = vld [vmem:[#allocation22 + $0x38] sm:$0xff]
    %v8696 = vmul.f32 %v8684, %v8688
    %v8697 = vmul.f32 %v8684, %v8689
    %v8698 = vmul.f32 %v8685, %v8690
    %v8699 = vmul.f32 %v8685, %v8691
    %v8700 = vmul.f32 %v8686, %v8692
    %v8701 = vmul.f32 %v8686, %v8693
    %v8702 = vmul.f32 %v8687, %v8694
    %v8703 = vmul.f32 %v8687, %v8695
    %v8704 = vadd.f32 %v8696, %v8698
    %v8705 = vadd.f32 %v8704, %v8700
    %v8706 = vadd.f32 %v8705, %v8702
    %v8707 = vrot.slane %v8706, 4
    %v8708 = vadd.f32 %v8706, %v8707
    %v8709 = vrot.slane %v8708, 2
    %v8710 = vadd.f32 %v8708, %v8709
    %v8711 = vrot.slane %v8710, 1
    %v8712 = vadd.f32 %v8710, %v8711
    %v8713 = vadd.f32 %v8697, %v8699
    %v8714 = vadd.f32 %v8713, %v8701
    %v8715 = vadd.f32 %v8714, %v8703
    %v8716 = vrot.slane %v8715, 4
    %v8717 = vadd.f32 %v8715, %v8716
    %v8718 = vrot.slane %v8717, 2
    %v8719 = vadd.f32 %v8717, %v8718
    %v8720 = vrot.slane %v8719, 1
    %v8721 = vadd.f32 %v8719, %v8720
    %v8722 = vld [vmem:[#allocation23] sm:$0x3]
    %v8724 = vlaneseq
    %v8725 = vshrl.u32 %v8724, 7
    %v8726 = vsub.s32 0, %v8725
    %v8727 = vrot.slane %v8722, %v8726
    %v8728 = vlaneseq
    %v8729 = vshrl.u32 %v8728, 7
    %v8730 = vsub.s32 1, %v8729
    %v8731 = vrot.slane %v8722, %v8730
    %v8734 = vadd.f32 %v8712, %v8727
    %v8735 = vadd.f32 %v8721, %v8731
    %v8738 = vcombine.low %v8734, %v8735
    %v8740 = vunpack.c.l.s4 1966171168
    %v8741 = vunpack.c.0.s8 %v8740
    %v8742 = vlaneseq
    %v8743 = vshrl.u32 %v8742, 7
    %v8744 = vsub.s32 %v8741, %v8743
    %v8745 = vrot.slane %v8738, %v8744
    %v8747 = vunpack.c.l.s4 1966171168
    %v8748 = vunpack.c.0.s8 %v8747
    %v8749 = vlaneseq
    %v8750 = vshrl.u32 %v8749, 7
    %v8751 = vsub.s32 %v8748, %v8750
    %v8752 = vrot.slane %v8745, %v8751
    %s8754 = scalar_lea.vmem [#allocation25], 1
    %8755 = vst.msk [vmem:[%s8754] ss:$2 sm:$0x3] %vm8670, %v8752
    // Predicated region
    $region150: #{tpu_custom_call.1} parent=1 // pred_check
      _
    $region151: #{tpu_custom_call.1} parent=1 // pred_check_branch
      %8757 = sbr.rel (0) target = $region153
    $region152: #{tpu_custom_call.1} parent=1 // pred_region
      %s8759 = ssub.s32 64, 64
      %8760 = vsyncadd [#allocation4], %s8759
      %s8762 = sshll.u32 [#allocation25], 4
      %s8763 = int_to_ptr.vmem [resolvable:$true] %s8762
      %8765 = dma.vmem_to_hbm [thread:$0]  %s8763, 64, %s23, [#allocation4]
    $region153: #{tpu_custom_call.1} parent=1 // pred_fallthru
      _
    // Predicated region
    $region154: #{tpu_custom_call.1} parent=1 // pred_check
      _
    $region155: #{tpu_custom_call.1} parent=1 // pred_check_branch
      %8767 = sbr.rel (0) target = $region157
    $region156: #{tpu_custom_call.1} parent=1 // pred_region
      %8768 = dma.done [#allocation4], 64
    $region157: #{tpu_custom_call.1} parent=1 // pred_fallthru
      _
    %8769 = vsyncpa [#allocation3], 1
    %8770 = vsyncpa [#allocation6], 1
    %8771 = vsyncpa [#allocation9], 1
    %8772 = vsyncpa [#allocation12], 1
    %8773 = vsyncpa [#allocation15], 1
    %8774 = vsyncpa [#allocation18], 1
    %8775 = vsyncpa [#allocation21], 1
    %8776 = vsyncpa [#allocation24], 1
    %8777 = vsyncpa [#allocation4], 1

</llo_original>
